<compile_context>
chip_gen: v7x
topology: tpu7x:2x2x1
jax: 0.10.0
libtpu: 0.0.40
codegen_flags: <defaults>
</compile_context>

<pallas_src>
import functools
import math

import numpy as np
import jax
import jax.numpy as jnp
from jax.experimental import pallas as pl
from jax.experimental.pallas import tpu as pltpu


# ----------------------------------------------------------------------------
# Pallas kernels
# ----------------------------------------------------------------------------

def _mm_bias_kernel(x_ref, w_ref, b_ref, o_ref):
    """(M,K)@(K,N) + bias -- used only for the ConvUpsample 'begin' Linear."""
    o_ref[...] = jnp.dot(x_ref[...], w_ref[...],
                         preferred_element_type=jnp.float32) + b_ref[...]


def matmul_bias(x, w, b):
    m, k = x.shape
    n = w.shape[1]
    return pl.pallas_call(
        _mm_bias_kernel,
        out_shape=jax.ShapeDtypeStruct((m, n), jnp.float32),
        grid=(1,),
        in_specs=[pl.BlockSpec((m, k), lambda i: (0, 0)),
                  pl.BlockSpec((k, n), lambda i: (0, 0)),
                  pl.BlockSpec((1, n), lambda i: (0, 0))],
        out_specs=pl.BlockSpec((m, n), lambda i: (0, 0)),
    )(x, w, b.reshape(1, n))


def _conv_stack_kernel(*refs, n_layers, square_out):
    """Fused ConvUpsample stack for ONE batch element.

    Per layer: nearest x2 upsample + conv1d(k=3, pad=1) expressed as
    y = sum_k W_k @ (x @ M_k) + b, where M_k (L, 2L) is the 0/1 "upsample + shift"
    matrix built in-kernel from iota masks; LeakyReLU(0.2) on all but the last layer.
    Everything stays in VMEM; only the final (c_out, end_size) tile is stored.
    """
    x_ref = refs[0]
    w_refs = refs[1:1 + n_layers]                 # each (3, c_out, c_in)
    b_refs = refs[1 + n_layers:1 + 2 * n_layers]  # each (c_out, 1)
    out_ref = refs[1 + 2 * n_layers]

    x = x_ref[0]                                  # (c_in, L)
    for i in range(n_layers):
        length = x.shape[-1]
        two_l = 2 * length
        s_idx = jax.lax.broadcasted_iota(jnp.int32, (length, two_l), 0)
        t_idx = jax.lax.broadcasted_iota(jnp.int32, (length, two_l), 1)
        y = None
        for k in range(3):
            u = t_idx + (k - 1)
            # M_k[s, t] == 1 iff zero-padded, x2-nearest-upsampled sample (t+k-1) is frame s.
            hit = (u >= 0) & (u < two_l) & ((u == 2 * s_idx) | (u == 2 * s_idx + 1))
            mk = hit.astype(jnp.float32)
            xk = jnp.dot(x, mk, preferred_element_type=jnp.float32)                  # (c_in, 2L)
            term = jnp.dot(w_refs[i][k], xk, preferred_element_type=jnp.float32)     # (c_out, 2L)
            y = term if y is None else y + term
        y = y + b_refs[i][...]
        if i < n_layers - 1:
            y = jnp.where(y >= 0.0, y, 0.2 * y)   # LeakyReLU(0.2)
        x = y
    if square_out:
        x = x * x                                 # env ** 2 fused into the stack epilogue
    out_ref[0] = x


def _frames_kernel(logits_ref, gumbel_ref, decays_ref, out_ref):
    """Hard gumbel-softmax (forward value = one-hot argmax) @ exponential decays.

    Runs ONCE over the flattened (B*n_bands, R) logits (single MXU matmul).
    """
    y = logits_ref[...] + gumbel_ref[...]         # (B*n_bands, R)
    # TODO(synk): exact ties produce multiple ones (measure-zero for continuous gumbel
    #             noise); no straight-through softmax path (inference-only forward).
    onehot = (y == jnp.max(y, axis=-1, keepdims=True)).astype(jnp.float32)
    out_ref[...] = jnp.dot(onehot, decays_ref[...], preferred_element_type=jnp.float32)


def _tf_sample_kernel(fwin_ref, w_ref, bank_ref, out_ref, *, n_batch, n_bands,
                      inv_bands):
    """Banded linear interp (frame windows @ local matrix) * sine bank, band-MEAN folded in.

    All batch elements are processed in one grid step so the bf16 bank tile is loaded
    and cast to f32 exactly once per sample tile.
    """
    fw = fwin_ref[0]                                                   # (B*n_bands, k2)
    samples = jnp.dot(fw, w_ref[...], preferred_element_type=jnp.float32)  # (B*n_bands, tile)
    tile = samples.shape[-1]
    # n_bands is a multiple of 8, so this leading-dim split is layout-preserving.
    s3 = samples.reshape(n_batch, n_bands, tile)
    bank = bank_ref[...].astype(jnp.float32)                           # bank is bf16 in HBM
    weighted = s3 * bank[None, :, :]
    out_ref[...] = jnp.sum(weighted, axis=1) * inv_bands               # (B, tile)


def _env_interp_kernel(win_ref, w_ref, noise_ref, out_ref):
    """Banded linear interp of the squared envelope, times uniform noise."""
    up = jnp.dot(win_ref[0], w_ref[...], preferred_element_type=jnp.float32)  # (B, tile)
    out_ref[...] = up * noise_ref[...]


def _cmul_kernel(er_ref, ei_ref, tr_ref, ti_ref, or_ref, oi_ref):
    """Complex spectral multiply for fft_convolve (single channel after band-mean fold)."""
    er, ei = er_ref[...], ei_ref[...]
    tr, ti = tr_ref[...], ti_ref[...]
    or_ref[...] = er * tr - ei * ti
    oi_ref[...] = er * ti + ei * tr


# ----------------------------------------------------------------------------
# Kernel wrappers
# ----------------------------------------------------------------------------

def conv_upsample_stack(latent, p, channels, start_size, end_size, out_channels,
                        square_out):
    """Linear -> fused [nearest x2, conv1d k=3 pad=1, LeakyReLU]* stack (one pallas_call)."""
    b = latent.shape[0]
    h = matmul_bias(latent, p["w_begin"], p["b_begin"])            # (B, C*start)
    x0 = h.reshape(b, channels, start_size)                        # NCW (tiny glue reshape)
    n_layers = len(p["w_conv"])
    kernel = functools.partial(_conv_stack_kernel, n_layers=n_layers,
                               square_out=square_out)
    in_specs = [pl.BlockSpec((1, channels, start_size), lambda i: (i, 0, 0))]
    in_specs += [pl.BlockSpec(w.shape, lambda i: (0, 0, 0)) for w in p["w_conv"]]
    in_specs += [pl.BlockSpec(bb.shape, lambda i: (0, 0)) for bb in p["b_conv"]]
    return pl.pallas_call(
        kernel,
        out_shape=jax.ShapeDtypeStruct((b, out_channels, end_size), jnp.float32),
        grid=(b,),
        in_specs=in_specs,
        out_specs=pl.BlockSpec((1, out_channels, end_size), lambda i: (i, 0, 0)),
        compiler_params=pltpu.CompilerParams(dimension_semantics=("parallel",)),
    )(x0, *p["w_conv"], *p["b_conv"])


def gumbel_frames(tf_logits, gumbel, decays):
    """Single-step hard gumbel-softmax @ decays over flattened (B*n_bands, R)."""
    b, n_bands, r = tf_logits.shape
    n_frames = decays.shape[1]
    bn = b * n_bands
    spec_in = pl.BlockSpec((bn, r), lambda i: (0, 0))
    out = pl.pallas_call(
        _frames_kernel,
        out_shape=jax.ShapeDtypeStruct((bn, n_frames), jnp.float32),
        grid=(1,),
        in_specs=[spec_in, spec_in, pl.BlockSpec((r, n_frames), lambda i: (0, 0))],
        out_specs=pl.BlockSpec((bn, n_frames), lambda i: (0, 0)),
    )(tf_logits.reshape(bn, r), gumbel.reshape(bn, r), decays)
    return out.reshape(b, n_bands, n_frames)


def transfer_mean_samples(frame_windows, w_local, bank, n_samples, tile, n_batch,
                          n_bands):
    """Grid over sample tiles only; all batch elements handled inside each step so the
    bank tile is DMA'd + cast once per tile and the interp matmul is one big MXU op."""
    n_tiles, bn, k2 = frame_windows.shape
    kernel = functools.partial(_tf_sample_kernel, n_batch=n_batch, n_bands=n_bands,
                               inv_bands=1.0 / n_bands)
    out = pl.pallas_call(
        kernel,
        out_shape=jax.ShapeDtypeStruct((n_batch, n_samples), jnp.float32),
        grid=(n_tiles,),
        in_specs=[pl.BlockSpec((1, bn, k2), lambda j: (j, 0, 0)),
                  pl.BlockSpec((k2, tile), lambda j: (0, 0)),
                  pl.BlockSpec((n_bands, tile), lambda j: (0, j))],
        out_specs=pl.BlockSpec((n_batch, tile), lambda j: (0, j)),
        compiler_params=pltpu.CompilerParams(
            dimension_semantics=("parallel",),
            vmem_limit_bytes=32 * 1024 * 1024),
    )(frame_windows, w_local, bank)
    return out.reshape(n_batch, 1, n_samples)


def env_interp_samples(env_windows, w_local, noise, n_samples, tile):
    n_tiles, b, k = env_windows.shape
    return pl.pallas_call(
        _env_interp_kernel,
        out_shape=jax.ShapeDtypeStruct((b, n_samples), jnp.float32),
        grid=(n_tiles,),
        in_specs=[pl.BlockSpec((1, b, k), lambda j: (j, 0, 0)),
                  pl.BlockSpec((k, tile), lambda j: (0, 0)),
                  pl.BlockSpec((1, tile), lambda j: (0, j))],
        out_specs=pl.BlockSpec((b, tile), lambda j: (0, j)),
        compiler_params=pltpu.CompilerParams(
            dimension_semantics=("parallel",),
            vmem_limit_bytes=32 * 1024 * 1024),
    )(env_windows, w_local, noise)


def spectral_multiply(env_r, env_i, tf_r, tf_i):
    b, n_freq = tf_r.shape
    spec = pl.BlockSpec((b, n_freq), lambda i: (0, 0))
    return pl.pallas_call(
        _cmul_kernel,
        out_shape=(jax.ShapeDtypeStruct((b, n_freq), jnp.float32),
                   jax.ShapeDtypeStruct((b, n_freq), jnp.float32)),
        grid=(1,),
        in_specs=[spec, spec, spec, spec],
        out_specs=(spec, spec),
    )(env_r, env_i, tf_r, tf_i)


def fft_convolve_1ch(env, tf):
    """fft_convolve of two (B,1,N) signals (band mean already folded into tf)."""
    b, _, n = env.shape
    env_p = jnp.pad(env.reshape(b, n), ((0, 0), (0, n)))
    tf_p = jnp.pad(tf.reshape(b, n), ((0, 0), (0, n)))
    # TODO(synk): rfft/irfft have no Pallas equivalent; they run via jnp.fft (XLA).
    es = jnp.fft.rfft(env_p, axis=-1)
    ts = jnp.fft.rfft(tf_p, axis=-1)
    sr, si = spectral_multiply(jnp.real(es).astype(jnp.float32),
                               jnp.imag(es).astype(jnp.float32),
                               jnp.real(ts).astype(jnp.float32),
                               jnp.imag(ts).astype(jnp.float32))
    spec = jax.lax.complex(sr, si)
    full = jnp.fft.irfft(spec, n=2 * n, axis=-1)                  # (B, 2N)
    return full[..., :n].reshape(b, 1, n).astype(jnp.float32)     # (B, 1, N)


# ----------------------------------------------------------------------------
# Buffers / params
# ----------------------------------------------------------------------------

def make_local_interp(in_size, out_size, tile):
    """Banded F.interpolate(mode='linear', align_corners=False) as a FIXED per-tile
    local matrix (k, tile) applied to overlapping edge-padded frame windows."""
    assert out_size % in_size == 0, "integer upsample factor required"
    up = out_size // in_size
    assert tile % up == 0 and out_size % tile == 0
    fpt = tile // up                      # input frames per output tile
    k = fpt + 2                           # +1 replicated frame of slack on each side
    w_local = np.zeros((k, tile), dtype=np.float64)
    for r in range(tile):
        src = (r + 0.5) / up - 0.5
        lo = int(math.floor(src))
        frac = src - lo
        w_local[lo + 1, r] += 1.0 - frac
        w_local[lo + 2, r] += frac
    n_tiles = out_size // tile
    win_idx = (np.arange(n_tiles)[:, None] * fpt
               + np.arange(k)[None, :]).astype(np.int32)           # indices into padded frames
    return w_local.astype(np.float32), win_idx


def _hz_to_mel(f):
    return 2595.0 * np.log10(1.0 + f / 700.0)


def _mel_to_hz(m):
    return 700.0 * (10.0 ** (m / 2595.0) - 1.0)


def make_buffers(cfg):
    n_samples, n_frames = cfg["n_samples"], cfg["n_frames"]
    n_bands, resolution, sr = cfg["n_bands"], cfg["resolution"], cfg["samplerate"]
    tile = cfg["tile"]
    # TransferFunction.decays: per-resolution exponential decay envelopes over n_frames.
    res_vals = np.linspace(0.0, 0.999, resolution)
    decays = (res_vals[:, None] ** np.arange(1, n_frames + 1)[None, :]).astype(np.float32)
    # TODO(synk): zounds morlet_filter_bank approximated by a mel-spaced sine resonance bank.
    mels = np.linspace(_hz_to_mel(30.0), _hz_to_mel(sr / 2.0), n_bands)
    freqs = _mel_to_hz(mels)
    t = np.arange(n_samples) / sr
    bank = (0.1 * np.sin(2.0 * np.pi * freqs[:, None] * t[None, :])).astype(np.float32)
    w_env_local, win_idx_env = make_local_interp(2 * n_frames, n_samples, tile)
    w_tf_local, win_idx_tf = make_local_interp(n_frames, n_samples, tile)
    return dict(
        decays=jnp.asarray(decays),
        bank=jnp.asarray(bank, dtype=jnp.bfloat16),     # bf16: halves the dominant HBM stream
        w_env_local=jnp.asarray(w_env_local),
        win_idx_env=jnp.asarray(win_idx_env, dtype=jnp.int32),
        w_tf_local=jnp.asarray(w_tf_local),
        win_idx_tf=jnp.asarray(win_idx_tf, dtype=jnp.int32),
    )


def init_conv_upsample_params(key, latent_dim, channels, start_size, end_size,
                              out_channels, w_scale=0.1):
    n_layers = int(round(math.log2(end_size) - math.log2(start_size)))
    keys = jax.random.split(key, 1 + n_layers)
    p = {"w_begin": jax.random.normal(keys[0], (latent_dim, channels * start_size),
                                      dtype=jnp.float32) * w_scale,
         "b_begin": jnp.zeros((channels * start_size,), jnp.float32),
         "w_conv": [], "b_conv": []}
    for i in range(n_layers):
        c_out = channels if i < n_layers - 1 else out_channels
        # (3 taps, c_out, c_in) -- conv1d weight[co, ci, k] -> w_conv[k, co, ci]
        p["w_conv"].append(jax.random.normal(keys[1 + i], (3, c_out, channels),
                                             dtype=jnp.float32) * w_scale)
        p["b_conv"].append(jnp.zeros((c_out, 1), jnp.float32))
    return p


# ----------------------------------------------------------------------------
# SegmentGenerator.forward
# ----------------------------------------------------------------------------

def segment_generator_forward(params, buffers, transfer, noise, gumbel, cfg):
    d = cfg["model_dim"]
    tile = cfg["tile"]
    n_samples = cfg["n_samples"]
    n_bands = cfg["n_bands"]
    lf = 2 * cfg["n_frames"]
    transfer = transfer.reshape(-1, d)
    b = transfer.shape[0]

    # envelope path: ConvUpsample(d, d, 4, 2F, out_ch=1) -> **2 (fused) -> linear lerp -> * noise
    orig_env = conv_upsample_stack(transfer, params["env"], d, 4, lf, 1,
                                   square_out=True)                          # (B,1,2F) == env**2
    e2 = orig_env.reshape(b, lf)
    e2_pad = jnp.concatenate([e2[:, :1], e2, e2[:, -1:]], axis=-1)           # edge replicate
    env_win = jnp.transpose(jnp.take(e2_pad, buffers["win_idx_env"], axis=-1),
                            (1, 0, 2))                                       # (T, B, K)
    env_samples = env_interp_samples(env_win, buffers["w_env_local"], noise,
                                     n_samples, tile)                        # (B, N)

    loss = 0

    # transfer path: ConvUpsample(d, d, 8, n_bands, out_ch=resolution) -> TransferFunction
    tf_logits = conv_upsample_stack(transfer, params["transfer"], d, 8,
                                    n_bands, cfg["resolution"],
                                    square_out=False)                        # (B, R, n_bands)
    tf_logits = jnp.transpose(tf_logits, (0, 2, 1))                          # (B, n_bands, R)
    frames = gumbel_frames(tf_logits, gumbel, buffers["decays"])             # (B, n_bands, F)
    frames_pad = jnp.concatenate([frames[..., :1], frames, frames[..., -1:]], axis=-1)
    fwin = jnp.transpose(jnp.take(frames_pad, buffers["win_idx_tf"], axis=-1),
                         (2, 0, 1, 3))                                       # (T, B, n_bands, K2)
    n_tiles, _, _, k2 = fwin.shape
    fwin = fwin.reshape(n_tiles, b * n_bands, k2)                            # batch-major rows
    # band mean of (frames @ interp * bank) computed INSIDE the kernel (mean commutes
    # with the linear fft_convolve, so per-band tf never hits HBM).
    tf_mean = transfer_mean_samples(fwin, buffers["w_tf_local"], buffers["bank"],
                                    n_samples, tile, b, n_bands)             # (B, 1, N)
    orig_tf = None

    final = fft_convolve_1ch(env_samples.reshape(b, 1, n_samples), tf_mean)  # (B, 1, N)
    return final, orig_env, loss, orig_tf


if __name__ == "__main__":
    # Structurally identical, scaled-down config.
    # (original: model_dim=128, n_samples=2**15, n_frames=128, n_bands=128, resolution=32)
    cfg = dict(model_dim=32, n_samples=4096, n_frames=16, n_bands=32,
               resolution=8, samplerate=22050.0, tile=2048)
    batch = 2

    key = jax.random.PRNGKey(0)
    k_env, k_tf, k_x, k_noise, k_gumbel = jax.random.split(key, 5)

    params = {
        "env": init_conv_upsample_params(k_env, cfg["model_dim"], cfg["model_dim"],
                                         4, 2 * cfg["n_frames"], 1),
        "transfer": init_conv_upsample_params(k_tf, cfg["model_dim"], cfg["model_dim"],
                                              8, cfg["n_bands"], cfg["resolution"]),
    }
    buffers = make_buffers(cfg)

    x = jax.random.normal(k_x, (batch, cfg["model_dim"]), dtype=jnp.float32)
    # torch.zeros(1,1,N).uniform_(-1,1) equivalent (deterministic key)
    noise = jax.random.uniform(k_noise, (1, cfg["n_samples"]),
                               minval=-1.0, maxval=1.0, dtype=jnp.float32)
    # gumbel noise for F.gumbel_softmax(hard=True), sampled in the wrapper (glue)
    gumbel = jax.random.gumbel(k_gumbel, (batch, cfg["n_bands"], cfg["resolution"]),
                               dtype=jnp.float32)

    fwd = jax.jit(functools.partial(segment_generator_forward, cfg=cfg))
    final, orig_env, loss, orig_tf = fwd(params, buffers, x, noise, gumbel)
    jax.block_until_ready(final)
    jax.block_until_ready(orig_env)

    assert final.shape == (batch, 1, cfg["n_samples"])
    assert orig_env.shape == (batch, 1, 2 * cfg["n_frames"])
    assert orig_tf is None
    print("KERNEL_OK")
</pallas_src>

<mosaic_0001>
module attributes {stable_mosaic.version = 11 : i64} {
  func.func @_mm_bias_kernel(%arg0: i32, %arg1: memref<2x32xf32, #tpu.memory_space<vmem>>, %arg2: memref<32x128xf32, #tpu.memory_space<vmem>>, %arg3: memref<1x128xf32, #tpu.memory_space<vmem>>, %arg4: memref<2x128xf32, #tpu.memory_space<vmem>>) attributes {dimension_semantics = [#tpu.dimension_semantics<arbitrary>], iteration_bounds = array<i64: 1>, scalar_prefetch = 0 : i64, scratch_operands = 0 : i64, tpu.core_type = #tpu.core_type<tc>, window_params = [{pipeline_mode = #tpu.pipeline_mode<synchronous>, transform_indices = @transform_0, window_bounds = array<i64: 2, 32>}, {pipeline_mode = #tpu.pipeline_mode<synchronous>, transform_indices = @transform_1, window_bounds = array<i64: 32, 128>}, {pipeline_mode = #tpu.pipeline_mode<synchronous>, transform_indices = @transform_2, window_bounds = array<i64: 1, 128>}, {pipeline_mode = #tpu.pipeline_mode<synchronous>, transform_indices = @transform_3, window_bounds = array<i64: 2, 128>}]} {
    %c0 = arith.constant 0 : index
    %c0_0 = arith.constant 0 : index
    %0 = vector.load %arg1[%c0, %c0_0] : memref<2x32xf32, #tpu.memory_space<vmem>>, vector<2x32xf32>
    %c0_1 = arith.constant 0 : index
    %c0_2 = arith.constant 0 : index
    %1 = vector.load %arg2[%c0_1, %c0_2] : memref<32x128xf32, #tpu.memory_space<vmem>>, vector<32x128xf32>
    %cst = arith.constant dense<0.000000e+00> : vector<2x128xf32>
    %2 = tpu.matmul %0, %1, %cst {dimension_numbers = #tpu.dot_dimension_numbers<[1], [0], [0], [1], [0, 0, 1, 1], [], []>} : vector<2x32xf32>, vector<32x128xf32>, vector<2x128xf32> -> vector<2x128xf32>
    %c0_3 = arith.constant 0 : index
    %c0_4 = arith.constant 0 : index
    %3 = vector.load %arg3[%c0_3, %c0_4] : memref<1x128xf32, #tpu.memory_space<vmem>>, vector<1x128xf32>
    %4 = vector.broadcast %3 : vector<1x128xf32> to vector<2x128xf32>
    %5 = arith.addf %2, %4 : vector<2x128xf32>
    %c0_5 = arith.constant 0 : index
    %c0_6 = arith.constant 0 : index
    %6 = vector.load %arg4[%c0_5, %c0_6] : memref<2x128xf32, #tpu.memory_space<vmem>>, vector<2x128xf32>
    tpu.vector_store %arg4[%c0_5, %c0_6], %5 {strides = array<i32>} : memref<2x128xf32, #tpu.memory_space<vmem>>, vector<2x128xf32>,
    return
  }
  func.func @transform_0(%arg0: i32) -> (i32, i32) {
    %c0_i32 = arith.constant 0 : i32
    %c0_i32_0 = arith.constant 0 : i32
    %c0_i32_1 = arith.constant 0 : i32
    return %c0_i32, %c0_i32_0 : i32, i32
  }
  func.func @transform_1(%arg0: i32) -> (i32, i32) {
    %c0_i32 = arith.constant 0 : i32
    %c0_i32_0 = arith.constant 0 : i32
    %c0_i32_1 = arith.constant 0 : i32
    return %c0_i32, %c0_i32_0 : i32, i32
  }
  func.func @transform_2(%arg0: i32) -> (i32, i32) {
    %c0_i32 = arith.constant 0 : i32
    %c0_i32_0 = arith.constant 0 : i32
    %c0_i32_1 = arith.constant 0 : i32
    return %c0_i32, %c0_i32_0 : i32, i32
  }
  func.func @transform_3(%arg0: i32) -> (i32, i32) {
    %c0_i32 = arith.constant 0 : i32
    %c0_i32_0 = arith.constant 0 : i32
    %c0_i32_1 = arith.constant 0 : i32
    return %c0_i32, %c0_i32_0 : i32, i32
  }
}

module attributes {stable_mosaic.version = 11 : i64} {
  func.func @_conv_stack_kernel(%arg0: i32, %arg1: memref<1x32x4xf32, #tpu.memory_space<vmem>>, %arg2: memref<3x32x32xf32, #tpu.memory_space<vmem>>, %arg3: memref<3x32x32xf32, #tpu.memory_space<vmem>>, %arg4: memref<3x1x32xf32, #tpu.memory_space<vmem>>, %arg5: memref<32x1xf32, #tpu.memory_space<vmem>>, %arg6: memref<32x1xf32, #tpu.memory_space<vmem>>, %arg7: memref<1x1xf32, #tpu.memory_space<vmem>>, %arg8: memref<1x1x32xf32, #tpu.memory_space<vmem>>) attributes {dimension_semantics = [#tpu.dimension_semantics<parallel>], iteration_bounds = array<i64: 2>, scalar_prefetch = 0 : i64, scratch_operands = 0 : i64, tpu.core_type = #tpu.core_type<tc>, window_params = [{transform_indices = @transform_0, window_bounds = array<i64: 1, 32, 4>}, {pipeline_mode = #tpu.pipeline_mode<synchronous>, transform_indices = @transform_1, window_bounds = array<i64: 3, 32, 32>}, {pipeline_mode = #tpu.pipeline_mode<synchronous>, transform_indices = @transform_2, window_bounds = array<i64: 3, 32, 32>}, {pipeline_mode = #tpu.pipeline_mode<synchronous>, transform_indices = @transform_3, window_bounds = array<i64: 3, 1, 32>}, {pipeline_mode = #tpu.pipeline_mode<synchronous>, transform_indices = @transform_4, window_bounds = array<i64: 32, 1>}, {pipeline_mode = #tpu.pipeline_mode<synchronous>, transform_indices = @transform_5, window_bounds = array<i64: 32, 1>}, {pipeline_mode = #tpu.pipeline_mode<synchronous>, transform_indices = @transform_6, window_bounds = array<i64: 1, 1>}, {transform_indices = @transform_7, window_bounds = array<i64: 1, 1, 32>}]} {
    %c0 = arith.constant 0 : index
    %c0_0 = arith.constant 0 : index
    %c0_1 = arith.constant 0 : index
    %0 = vector.load %arg1[%c0, %c0_0, %c0_1] : memref<1x32x4xf32, #tpu.memory_space<vmem>>, vector<1x32x4xf32>
    %1 = vector.shape_cast %0 : vector<1x32x4xf32> to vector<32x4xf32>
    %2 = tpu.iota {dimensions = array<i32: 0>} : vector<4x8xi32>
    %3 = tpu.iota {dimensions = array<i32: 1>} : vector<4x8xi32>
    %c-1_i32 = arith.constant -1 : i32
    %4 = vector.broadcast %c-1_i32 : i32 to vector<4x8xi32>
    %5 = arith.addi %3, %4 : vector<4x8xi32>
    %c0_i32 = arith.constant 0 : i32
    %6 = vector.broadcast %c0_i32 : i32 to vector<4x8xi32>
    %7 = arith.cmpi sge, %5, %6 : vector<4x8xi32>
    %c8_i32 = arith.constant 8 : i32
    %8 = vector.broadcast %c8_i32 : i32 to vector<4x8xi32>
    %9 = arith.cmpi slt, %5, %8 : vector<4x8xi32>
    %10 = arith.andi %7, %9 : vector<4x8xi1>
    %c2_i32 = arith.constant 2 : i32
    %11 = vector.broadcast %c2_i32 : i32 to vector<4x8xi32>
    %12 = arith.muli %11, %2 : vector<4x8xi32>
    %13 = arith.cmpi eq, %5, %12 : vector<4x8xi32>
    %c2_i32_2 = arith.constant 2 : i32
    %14 = vector.broadcast %c2_i32_2 : i32 to vector<4x8xi32>
    %15 = arith.muli %14, %2 : vector<4x8xi32>
    %c1_i32 = arith.constant 1 : i32
    %16 = vector.broadcast %c1_i32 : i32 to vector<4x8xi32>
    %17 = arith.addi %15, %16 : vector<4x8xi32>
    %18 = arith.cmpi eq, %5, %17 : vector<4x8xi32>
    %19 = arith.ori %13, %18 : vector<4x8xi1>
    %20 = arith.andi %10, %19 : vector<4x8xi1>
    %21 = arith.extui %20 : vector<4x8xi1> to vector<4x8xi32>
    %22 = arith.sitofp %21 : vector<4x8xi32> to vector<4x8xf32>
    %cst = arith.constant dense<0.000000e+00> : vector<32x8xf32>
    %23 = tpu.matmul %1, %22, %cst {dimension_numbers = #tpu.dot_dimension_numbers<[1], [0], [0], [1], [0, 0, 1, 1], [], []>} : vector<32x4xf32>, vector<4x8xf32>, vector<32x8xf32> -> vector<32x8xf32>
    %c0_3 = arith.constant 0 : index
    %c0_4 = arith.constant 0 : index
    %c0_5 = arith.constant 0 : index
    %24 = vector.load %arg2[%c0_3, %c0_4, %c0_5] : memref<3x32x32xf32, #tpu.memory_space<vmem>>, vector<1x32x32xf32>
    %25 = vector.shape_cast %24 : vector<1x32x32xf32> to vector<32x32xf32>
    %cst_6 = arith.constant dense<0.000000e+00> : vector<32x8xf32>
    %26 = tpu.matmul %25, %23, %cst_6 {dimension_numbers = #tpu.dot_dimension_numbers<[1], [0], [0], [1], [0, 0, 1, 1], [], []>} : vector<32x32xf32>, vector<32x8xf32>, vector<32x8xf32> -> vector<32x8xf32>
    %c0_i32_7 = arith.constant 0 : i32
    %27 = vector.broadcast %c0_i32_7 : i32 to vector<4x8xi32>
    %28 = arith.addi %3, %27 : vector<4x8xi32>
    %c0_i32_8 = arith.constant 0 : i32
    %29 = vector.broadcast %c0_i32_8 : i32 to vector<4x8xi32>
    %30 = arith.cmpi sge, %28, %29 : vector<4x8xi32>
    %c8_i32_9 = arith.constant 8 : i32
    %31 = vector.broadcast %c8_i32_9 : i32 to vector<4x8xi32>
    %32 = arith.cmpi slt, %28, %31 : vector<4x8xi32>
    %33 = arith.andi %30, %32 : vector<4x8xi1>
    %c2_i32_10 = arith.constant 2 : i32
    %34 = vector.broadcast %c2_i32_10 : i32 to vector<4x8xi32>
    %35 = arith.muli %34, %2 : vector<4x8xi32>
    %36 = arith.cmpi eq, %28, %35 : vector<4x8xi32>
    %c2_i32_11 = arith.constant 2 : i32
    %37 = vector.broadcast %c2_i32_11 : i32 to vector<4x8xi32>
    %38 = arith.muli %37, %2 : vector<4x8xi32>
    %c1_i32_12 = arith.constant 1 : i32
    %39 = vector.broadcast %c1_i32_12 : i32 to vector<4x8xi32>
    %40 = arith.addi %38, %39 : vector<4x8xi32>
    %41 = arith.cmpi eq, %28, %40 : vector<4x8xi32>
    %42 = arith.ori %36, %41 : vector<4x8xi1>
    %43 = arith.andi %33, %42 : vector<4x8xi1>
    %44 = arith.extui %43 : vector<4x8xi1> to vector<4x8xi32>
    %45 = arith.sitofp %44 : vector<4x8xi32> to vector<4x8xf32>
    %cst_13 = arith.constant dense<0.000000e+00> : vector<32x8xf32>
    %46 = tpu.matmul %1, %45, %cst_13 {dimension_numbers = #tpu.dot_dimension_numbers<[1], [0], [0], [1], [0, 0, 1, 1], [], []>} : vector<32x4xf32>, vector<4x8xf32>, vector<32x8xf32> -> vector<32x8xf32>
    %c1 = arith.constant 1 : index
    %c0_14 = arith.constant 0 : index
    %c0_15 = arith.constant 0 : index
    %47 = vector.load %arg2[%c1, %c0_14, %c0_15] : memref<3x32x32xf32, #tpu.memory_space<vmem>>, vector<1x32x32xf32>
    %48 = vector.shape_cast %47 : vector<1x32x32xf32> to vector<32x32xf32>
    %cst_16 = arith.constant dense<0.000000e+00> : vector<32x8xf32>
    %49 = tpu.matmul %48, %46, %cst_16 {dimension_numbers = #tpu.dot_dimension_numbers<[1], [0], [0], [1], [0, 0, 1, 1], [], []>} : vector<32x32xf32>, vector<32x8xf32>, vector<32x8xf32> -> vector<32x8xf32>
    %50 = arith.addf %26, %49 : vector<32x8xf32>
    %c1_i32_17 = arith.constant 1 : i32
    %51 = vector.broadcast %c1_i32_17 : i32 to vector<4x8xi32>
    %52 = arith.addi %3, %51 : vector<4x8xi32>
    %c0_i32_18 = arith.constant 0 : i32
    %53 = vector.broadcast %c0_i32_18 : i32 to vector<4x8xi32>
    %54 = arith.cmpi sge, %52, %53 : vector<4x8xi32>
    %c8_i32_19 = arith.constant 8 : i32
    %55 = vector.broadcast %c8_i32_19 : i32 to vector<4x8xi32>
    %56 = arith.cmpi slt, %52, %55 : vector<4x8xi32>
    %57 = arith.andi %54, %56 : vector<4x8xi1>
    %c2_i32_20 = arith.constant 2 : i32
    %58 = vector.broadcast %c2_i32_20 : i32 to vector<4x8xi32>
    %59 = arith.muli %58, %2 : vector<4x8xi32>
    %60 = arith.cmpi eq, %52, %59 : vector<4x8xi32>
    %c2_i32_21 = arith.constant 2 : i32
    %61 = vector.broadcast %c2_i32_21 : i32 to vector<4x8xi32>
    %62 = arith.muli %61, %2 : vector<4x8xi32>
    %c1_i32_22 = arith.constant 1 : i32
    %63 = vector.broadcast %c1_i32_22 : i32 to vector<4x8xi32>
    %64 = arith.addi %62, %63 : vector<4x8xi32>
    %65 = arith.cmpi eq, %52, %64 : vector<4x8xi32>
    %66 = arith.ori %60, %65 : vector<4x8xi1>
    %67 = arith.andi %57, %66 : vector<4x8xi1>
    %68 = arith.extui %67 : vector<4x8xi1> to vector<4x8xi32>
    %69 = arith.sitofp %68 : vector<4x8xi32> to vector<4x8xf32>
    %cst_23 = arith.constant dense<0.000000e+00> : vector<32x8xf32>
    %70 = tpu.matmul %1, %69, %cst_23 {dimension_numbers = #tpu.dot_dimension_numbers<[1], [0], [0], [1], [0, 0, 1, 1], [], []>} : vector<32x4xf32>, vector<4x8xf32>, vector<32x8xf32> -> vector<32x8xf32>
    %c2 = arith.constant 2 : index
    %c0_24 = arith.constant 0 : index
    %c0_25 = arith.constant 0 : index
    %71 = vector.load %arg2[%c2, %c0_24, %c0_25] : memref<3x32x32xf32, #tpu.memory_space<vmem>>, vector<1x32x32xf32>
    %72 = vector.shape_cast %71 : vector<1x32x32xf32> to vector<32x32xf32>
    %cst_26 = arith.constant dense<0.000000e+00> : vector<32x8xf32>
    %73 = tpu.matmul %72, %70, %cst_26 {dimension_numbers = #tpu.dot_dimension_numbers<[1], [0], [0], [1], [0, 0, 1, 1], [], []>} : vector<32x32xf32>, vector<32x8xf32>, vector<32x8xf32> -> vector<32x8xf32>
    %74 = arith.addf %50, %73 : vector<32x8xf32>
    %c0_27 = arith.constant 0 : index
    %c0_28 = arith.constant 0 : index
    %75 = vector.load %arg5[%c0_27, %c0_28] : memref<32x1xf32, #tpu.memory_space<vmem>>, vector<32x1xf32>
    %76 = vector.broadcast %75 : vector<32x1xf32> to vector<32x8xf32>
    %77 = arith.addf %74, %76 : vector<32x8xf32>
    %cst_29 = arith.constant 0.000000e+00 : f32
    %78 = vector.broadcast %cst_29 : f32 to vector<32x8xf32>
    %79 = arith.cmpf oge, %77, %78 : vector<32x8xf32>
    %cst_30 = arith.constant 2.000000e-01 : f32
    %80 = vector.broadcast %cst_30 : f32 to vector<32x8xf32>
    %81 = arith.mulf %80, %77 : vector<32x8xf32>
    %82 = arith.select %79, %77, %81 : vector<32x8xi1>, vector<32x8xf32>
    %83 = tpu.iota {dimensions = array<i32: 0>} : vector<8x16xi32>
    %84 = tpu.iota {dimensions = array<i32: 1>} : vector<8x16xi32>
    %c-1_i32_31 = arith.constant -1 : i32
    %85 = vector.broadcast %c-1_i32_31 : i32 to vector<8x16xi32>
    %86 = arith.addi %84, %85 : vector<8x16xi32>
    %c0_i32_32 = arith.constant 0 : i32
    %87 = vector.broadcast %c0_i32_32 : i32 to vector<8x16xi32>
    %88 = arith.cmpi sge, %86, %87 : vector<8x16xi32>
    %c16_i32 = arith.constant 16 : i32
    %89 = vector.broadcast %c16_i32 : i32 to vector<8x16xi32>
    %90 = arith.cmpi slt, %86, %89 : vector<8x16xi32>
    %91 = arith.andi %88, %90 : vector<8x16xi1>
    %c2_i32_33 = arith.constant 2 : i32
    %92 = vector.broadcast %c2_i32_33 : i32 to vector<8x16xi32>
    %93 = arith.muli %92, %83 : vector<8x16xi32>
    %94 = arith.cmpi eq, %86, %93 : vector<8x16xi32>
    %c2_i32_34 = arith.constant 2 : i32
    %95 = vector.broadcast %c2_i32_34 : i32 to vector<8x16xi32>
    %96 = arith.muli %95, %83 : vector<8x16xi32>
    %c1_i32_35 = arith.constant 1 : i32
    %97 = vector.broadcast %c1_i32_35 : i32 to vector<8x16xi32>
    %98 = arith.addi %96, %97 : vector<8x16xi32>
    %99 = arith.cmpi eq, %86, %98 : vector<8x16xi32>
    %100 = arith.ori %94, %99 : vector<8x16xi1>
    %101 = arith.andi %91, %100 : vector<8x16xi1>
    %102 = arith.extui %101 : vector<8x16xi1> to vector<8x16xi32>
    %103 = arith.sitofp %102 : vector<8x16xi32> to vector<8x16xf32>
    %cst_36 = arith.constant dense<0.000000e+00> : vector<32x16xf32>
    %104 = tpu.matmul %82, %103, %cst_36 {dimension_numbers = #tpu.dot_dimension_numbers<[1], [0], [0], [1], [0, 0, 1, 1], [], []>} : vector<32x8xf32>, vector<8x16xf32>, vector<32x16xf32> -> vector<32x16xf32>
    %c0_37 = arith.constant 0 : index
    %c0_38 = arith.constant 0 : index
    %c0_39 = arith.constant 0 : index
    %105 = vector.load %arg3[%c0_37, %c0_38, %c0_39] : memref<3x32x32xf32, #tpu.memory_space<vmem>>, vector<1x32x32xf32>
    %106 = vector.shape_cast %105 : vector<1x32x32xf32> to vector<32x32xf32>
    %cst_40 = arith.constant dense<0.000000e+00> : vector<32x16xf32>
    %107 = tpu.matmul %106, %104, %cst_40 {dimension_numbers = #tpu.dot_dimension_numbers<[1], [0], [0], [1], [0, 0, 1, 1], [], []>} : vector<32x32xf32>, vector<32x16xf32>, vector<32x16xf32> -> vector<32x16xf32>
    %c0_i32_41 = arith.constant 0 : i32
    %108 = vector.broadcast %c0_i32_41 : i32 to vector<8x16xi32>
    %109 = arith.addi %84, %108 : vector<8x16xi32>
    %c0_i32_42 = arith.constant 0 : i32
    %110 = vector.broadcast %c0_i32_42 : i32 to vector<8x16xi32>
    %111 = arith.cmpi sge, %109, %110 : vector<8x16xi32>
    %c16_i32_43 = arith.constant 16 : i32
    %112 = vector.broadcast %c16_i32_43 : i32 to vector<8x16xi32>
    %113 = arith.cmpi slt, %109, %112 : vector<8x16xi32>
    %114 = arith.andi %111, %113 : vector<8x16xi1>
    %c2_i32_44 = arith.constant 2 : i32
    %115 = vector.broadcast %c2_i32_44 : i32 to vector<8x16xi32>
    %116 = arith.muli %115, %83 : vector<8x16xi32>
    %117 = arith.cmpi eq, %109, %116 : vector<8x16xi32>
    %c2_i32_45 = arith.constant 2 : i32
    %118 = vector.broadcast %c2_i32_45 : i32 to vector<8x16xi32>
    %119 = arith.muli %118, %83 : vector<8x16xi32>
    %c1_i32_46 = arith.constant 1 : i32
    %120 = vector.broadcast %c1_i32_46 : i32 to vector<8x16xi32>
    %121 = arith.addi %119, %120 : vector<8x16xi32>
    %122 = arith.cmpi eq, %109, %121 : vector<8x16xi32>
    %123 = arith.ori %117, %122 : vector<8x16xi1>
    %124 = arith.andi %114, %123 : vector<8x16xi1>
    %125 = arith.extui %124 : vector<8x16xi1> to vector<8x16xi32>
    %126 = arith.sitofp %125 : vector<8x16xi32> to vector<8x16xf32>
    %cst_47 = arith.constant dense<0.000000e+00> : vector<32x16xf32>
    %127 = tpu.matmul %82, %126, %cst_47 {dimension_numbers = #tpu.dot_dimension_numbers<[1], [0], [0], [1], [0, 0, 1, 1], [], []>} : vector<32x8xf32>, vector<8x16xf32>, vector<32x16xf32> -> vector<32x16xf32>
    %c1_48 = arith.constant 1 : index
    %c0_49 = arith.constant 0 : index
    %c0_50 = arith.constant 0 : index
    %128 = vector.load %arg3[%c1_48, %c0_49, %c0_50] : memref<3x32x32xf32, #tpu.memory_space<vmem>>, vector<1x32x32xf32>
    %129 = vector.shape_cast %128 : vector<1x32x32xf32> to vector<32x32xf32>
    %cst_51 = arith.constant dense<0.000000e+00> : vector<32x16xf32>
    %130 = tpu.matmul %129, %127, %cst_51 {dimension_numbers = #tpu.dot_dimension_numbers<[1], [0], [0], [1], [0, 0, 1, 1], [], []>} : vector<32x32xf32>, vector<32x16xf32>, vector<32x16xf32> -> vector<32x16xf32>
    %131 = arith.addf %107, %130 : vector<32x16xf32>
    %c1_i32_52 = arith.constant 1 : i32
    %132 = vector.broadcast %c1_i32_52 : i32 to vector<8x16xi32>
    %133 = arith.addi %84, %132 : vector<8x16xi32>
    %c0_i32_53 = arith.constant 0 : i32
    %134 = vector.broadcast %c0_i32_53 : i32 to vector<8x16xi32>
    %135 = arith.cmpi sge, %133, %134 : vector<8x16xi32>
    %c16_i32_54 = arith.constant 16 : i32
    %136 = vector.broadcast %c16_i32_54 : i32 to vector<8x16xi32>
    %137 = arith.cmpi slt, %133, %136 : vector<8x16xi32>
    %138 = arith.andi %135, %137 : vector<8x16xi1>
    %c2_i32_55 = arith.constant 2 : i32
    %139 = vector.broadcast %c2_i32_55 : i32 to vector<8x16xi32>
    %140 = arith.muli %139, %83 : vector<8x16xi32>
    %141 = arith.cmpi eq, %133, %140 : vector<8x16xi32>
    %c2_i32_56 = arith.constant 2 : i32
    %142 = vector.broadcast %c2_i32_56 : i32 to vector<8x16xi32>
    %143 = arith.muli %142, %83 : vector<8x16xi32>
    %c1_i32_57 = arith.constant 1 : i32
    %144 = vector.broadcast %c1_i32_57 : i32 to vector<8x16xi32>
    %145 = arith.addi %143, %144 : vector<8x16xi32>
    %146 = arith.cmpi eq, %133, %145 : vector<8x16xi32>
    %147 = arith.ori %141, %146 : vector<8x16xi1>
    %148 = arith.andi %138, %147 : vector<8x16xi1>
    %149 = arith.extui %148 : vector<8x16xi1> to vector<8x16xi32>
    %150 = arith.sitofp %149 : vector<8x16xi32> to vector<8x16xf32>
    %cst_58 = arith.constant dense<0.000000e+00> : vector<32x16xf32>
    %151 = tpu.matmul %82, %150, %cst_58 {dimension_numbers = #tpu.dot_dimension_numbers<[1], [0], [0], [1], [0, 0, 1, 1], [], []>} : vector<32x8xf32>, vector<8x16xf32>, vector<32x16xf32> -> vector<32x16xf32>
    %c2_59 = arith.constant 2 : index
    %c0_60 = arith.constant 0 : index
    %c0_61 = arith.constant 0 : index
    %152 = vector.load %arg3[%c2_59, %c0_60, %c0_61] : memref<3x32x32xf32, #tpu.memory_space<vmem>>, vector<1x32x32xf32>
    %153 = vector.shape_cast %152 : vector<1x32x32xf32> to vector<32x32xf32>
    %cst_62 = arith.constant dense<0.000000e+00> : vector<32x16xf32>
    %154 = tpu.matmul %153, %151, %cst_62 {dimension_numbers = #tpu.dot_dimension_numbers<[1], [0], [0], [1], [0, 0, 1, 1], [], []>} : vector<32x32xf32>, vector<32x16xf32>, vector<32x16xf32> -> vector<32x16xf32>
    %155 = arith.addf %131, %154 : vector<32x16xf32>
    %c0_63 = arith.constant 0 : index
    %c0_64 = arith.constant 0 : index
    %156 = vector.load %arg6[%c0_63, %c0_64] : memref<32x1xf32, #tpu.memory_space<vmem>>, vector<32x1xf32>
    %157 = vector.broadcast %156 : vector<32x1xf32> to vector<32x16xf32>
    %158 = arith.addf %155, %157 : vector<32x16xf32>
    %cst_65 = arith.constant 0.000000e+00 : f32
    %159 = vector.broadcast %cst_65 : f32 to vector<32x16xf32>
    %160 = arith.cmpf oge, %158, %159 : vector<32x16xf32>
    %cst_66 = arith.constant 2.000000e-01 : f32
    %161 = vector.broadcast %cst_66 : f32 to vector<32x16xf32>
    %162 = arith.mulf %161, %158 : vector<32x16xf32>
    %163 = arith.select %160, %158, %162 : vector<32x16xi1>, vector<32x16xf32>
    %164 = tpu.iota {dimensions = array<i32: 0>} : vector<16x32xi32>
    %165 = tpu.iota {dimensions = array<i32: 1>} : vector<16x32xi32>
    %c-1_i32_67 = arith.constant -1 : i32
    %166 = vector.broadcast %c-1_i32_67 : i32 to vector<16x32xi32>
    %167 = arith.addi %165, %166 : vector<16x32xi32>
    %c0_i32_68 = arith.constant 0 : i32
    %168 = vector.broadcast %c0_i32_68 : i32 to vector<16x32xi32>
    %169 = arith.cmpi sge, %167, %168 : vector<16x32xi32>
    %c32_i32 = arith.constant 32 : i32
    %170 = vector.broadcast %c32_i32 : i32 to vector<16x32xi32>
    %171 = arith.cmpi slt, %167, %170 : vector<16x32xi32>
    %172 = arith.andi %169, %171 : vector<16x32xi1>
    %c2_i32_69 = arith.constant 2 : i32
    %173 = vector.broadcast %c2_i32_69 : i32 to vector<16x32xi32>
    %174 = arith.muli %173, %164 : vector<16x32xi32>
    %175 = arith.cmpi eq, %167, %174 : vector<16x32xi32>
    %c2_i32_70 = arith.constant 2 : i32
    %176 = vector.broadcast %c2_i32_70 : i32 to vector<16x32xi32>
    %177 = arith.muli %176, %164 : vector<16x32xi32>
    %c1_i32_71 = arith.constant 1 : i32
    %178 = vector.broadcast %c1_i32_71 : i32 to vector<16x32xi32>
    %179 = arith.addi %177, %178 : vector<16x32xi32>
    %180 = arith.cmpi eq, %167, %179 : vector<16x32xi32>
    %181 = arith.ori %175, %180 : vector<16x32xi1>
    %182 = arith.andi %172, %181 : vector<16x32xi1>
    %183 = arith.extui %182 : vector<16x32xi1> to vector<16x32xi32>
    %184 = arith.sitofp %183 : vector<16x32xi32> to vector<16x32xf32>
    %cst_72 = arith.constant dense<0.000000e+00> : vector<32x32xf32>
    %185 = tpu.matmul %163, %184, %cst_72 {dimension_numbers = #tpu.dot_dimension_numbers<[1], [0], [0], [1], [0, 0, 1, 1], [], []>} : vector<32x16xf32>, vector<16x32xf32>, vector<32x32xf32> -> vector<32x32xf32>
    %c0_73 = arith.constant 0 : index
    %c0_74 = arith.constant 0 : index
    %c0_75 = arith.constant 0 : index
    %186 = vector.load %arg4[%c0_73, %c0_74, %c0_75] : memref<3x1x32xf32, #tpu.memory_space<vmem>>, vector<1x1x32xf32>
    %187 = vector.shape_cast %186 : vector<1x1x32xf32> to vector<1x32xf32>
    %cst_76 = arith.constant dense<0.000000e+00> : vector<1x32xf32>
    %188 = tpu.matmul %187, %185, %cst_76 {dimension_numbers = #tpu.dot_dimension_numbers<[1], [0], [0], [1], [0, 0, 1, 1], [], []>} : vector<1x32xf32>, vector<32x32xf32>, vector<1x32xf32> -> vector<1x32xf32>
    %c0_i32_77 = arith.constant 0 : i32
    %189 = vector.broadcast %c0_i32_77 : i32 to vector<16x32xi32>
    %190 = arith.addi %165, %189 : vector<16x32xi32>
    %c0_i32_78 = arith.constant 0 : i32
    %191 = vector.broadcast %c0_i32_78 : i32 to vector<16x32xi32>
    %192 = arith.cmpi sge, %190, %191 : vector<16x32xi32>
    %c32_i32_79 = arith.constant 32 : i32
    %193 = vector.broadcast %c32_i32_79 : i32 to vector<16x32xi32>
    %194 = arith.cmpi slt, %190, %193 : vector<16x32xi32>
    %195 = arith.andi %192, %194 : vector<16x32xi1>
    %c2_i32_80 = arith.constant 2 : i32
    %196 = vector.broadcast %c2_i32_80 : i32 to vector<16x32xi32>
    %197 = arith.muli %196, %164 : vector<16x32xi32>
    %198 = arith.cmpi eq, %190, %197 : vector<16x32xi32>
    %c2_i32_81 = arith.constant 2 : i32
    %199 = vector.broadcast %c2_i32_81 : i32 to vector<16x32xi32>
    %200 = arith.muli %199, %164 : vector<16x32xi32>
    %c1_i32_82 = arith.constant 1 : i32
    %201 = vector.broadcast %c1_i32_82 : i32 to vector<16x32xi32>
    %202 = arith.addi %200, %201 : vector<16x32xi32>
    %203 = arith.cmpi eq, %190, %202 : vector<16x32xi32>
    %204 = arith.ori %198, %203 : vector<16x32xi1>
    %205 = arith.andi %195, %204 : vector<16x32xi1>
    %206 = arith.extui %205 : vector<16x32xi1> to vector<16x32xi32>
    %207 = arith.sitofp %206 : vector<16x32xi32> to vector<16x32xf32>
    %cst_83 = arith.constant dense<0.000000e+00> : vector<32x32xf32>
    %208 = tpu.matmul %163, %207, %cst_83 {dimension_numbers = #tpu.dot_dimension_numbers<[1], [0], [0], [1], [0, 0, 1, 1], [], []>} : vector<32x16xf32>, vector<16x32xf32>, vector<32x32xf32> -> vector<32x32xf32>
    %c1_84 = arith.constant 1 : index
    %c0_85 = arith.constant 0 : index
    %c0_86 = arith.constant 0 : index
    %209 = vector.load %arg4[%c1_84, %c0_85, %c0_86] : memref<3x1x32xf32, #tpu.memory_space<vmem>>, vector<1x1x32xf32>
    %210 = vector.shape_cast %209 : vector<1x1x32xf32> to vector<1x32xf32>
    %cst_87 = arith.constant dense<0.000000e+00> : vector<1x32xf32>
    %211 = tpu.matmul %210, %208, %cst_87 {dimension_numbers = #tpu.dot_dimension_numbers<[1], [0], [0], [1], [0, 0, 1, 1], [], []>} : vector<1x32xf32>, vector<32x32xf32>, vector<1x32xf32> -> vector<1x32xf32>
    %212 = arith.addf %188, %211 : vector<1x32xf32>
    %c1_i32_88 = arith.constant 1 : i32
    %213 = vector.broadcast %c1_i32_88 : i32 to vector<16x32xi32>
    %214 = arith.addi %165, %213 : vector<16x32xi32>
    %c0_i32_89 = arith.constant 0 : i32
    %215 = vector.broadcast %c0_i32_89 : i32 to vector<16x32xi32>
    %216 = arith.cmpi sge, %214, %215 : vector<16x32xi32>
    %c32_i32_90 = arith.constant 32 : i32
    %217 = vector.broadcast %c32_i32_90 : i32 to vector<16x32xi32>
    %218 = arith.cmpi slt, %214, %217 : vector<16x32xi32>
    %219 = arith.andi %216, %218 : vector<16x32xi1>
    %c2_i32_91 = arith.constant 2 : i32
    %220 = vector.broadcast %c2_i32_91 : i32 to vector<16x32xi32>
    %221 = arith.muli %220, %164 : vector<16x32xi32>
    %222 = arith.cmpi eq, %214, %221 : vector<16x32xi32>
    %c2_i32_92 = arith.constant 2 : i32
    %223 = vector.broadcast %c2_i32_92 : i32 to vector<16x32xi32>
    %224 = arith.muli %223, %164 : vector<16x32xi32>
    %c1_i32_93 = arith.constant 1 : i32
    %225 = vector.broadcast %c1_i32_93 : i32 to vector<16x32xi32>
    %226 = arith.addi %224, %225 : vector<16x32xi32>
    %227 = arith.cmpi eq, %214, %226 : vector<16x32xi32>
    %228 = arith.ori %222, %227 : vector<16x32xi1>
    %229 = arith.andi %219, %228 : vector<16x32xi1>
    %230 = arith.extui %229 : vector<16x32xi1> to vector<16x32xi32>
    %231 = arith.sitofp %230 : vector<16x32xi32> to vector<16x32xf32>
    %cst_94 = arith.constant dense<0.000000e+00> : vector<32x32xf32>
    %232 = tpu.matmul %163, %231, %cst_94 {dimension_numbers = #tpu.dot_dimension_numbers<[1], [0], [0], [1], [0, 0, 1, 1], [], []>} : vector<32x16xf32>, vector<16x32xf32>, vector<32x32xf32> -> vector<32x32xf32>
    %c2_95 = arith.constant 2 : index
    %c0_96 = arith.constant 0 : index
    %c0_97 = arith.constant 0 : index
    %233 = vector.load %arg4[%c2_95, %c0_96, %c0_97] : memref<3x1x32xf32, #tpu.memory_space<vmem>>, vector<1x1x32xf32>
    %234 = vector.shape_cast %233 : vector<1x1x32xf32> to vector<1x32xf32>
    %cst_98 = arith.constant dense<0.000000e+00> : vector<1x32xf32>
    %235 = tpu.matmul %234, %232, %cst_98 {dimension_numbers = #tpu.dot_dimension_numbers<[1], [0], [0], [1], [0, 0, 1, 1], [], []>} : vector<1x32xf32>, vector<32x32xf32>, vector<1x32xf32> -> vector<1x32xf32>
    %236 = arith.addf %212, %235 : vector<1x32xf32>
    %c0_99 = arith.constant 0 : index
    %c0_100 = arith.constant 0 : index
    %237 = vector.load %arg7[%c0_99, %c0_100] : memref<1x1xf32, #tpu.memory_space<vmem>>, vector<1x1xf32>
    %238 = vector.broadcast %237 : vector<1x1xf32> to vector<1x32xf32>
    %239 = arith.addf %236, %238 : vector<1x32xf32>
    %240 = arith.mulf %239, %239 : vector<1x32xf32>
    %c0_101 = arith.constant 0 : index
    %c0_102 = arith.constant 0 : index
    %c0_103 = arith.constant 0 : index
    %241 = vector.load %arg8[%c0_101, %c0_102, %c0_103] : memref<1x1x32xf32, #tpu.memory_space<vmem>>, vector<1x1x32xf32>
    %242 = vector.shape_cast %241 : vector<1x1x32xf32> to vector<1x32xf32>
    %243 = vector.shape_cast %240 : vector<1x32xf32> to vector<1x1x32xf32>
    tpu.vector_store %arg8[%c0_101, %c0_102, %c0_103], %243 {strides = array<i32>} : memref<1x1x32xf32, #tpu.memory_space<vmem>>, vector<1x1x32xf32>,
    return
  }
  func.func @transform_0(%arg0: i32) -> (i32, i32, i32) {
    %c0_i32 = arith.constant 0 : i32
    %c0_i32_0 = arith.constant 0 : i32
    %c0_i32_1 = arith.constant 0 : i32
    return %arg0, %c0_i32, %c0_i32_0 : i32, i32, i32
  }
  func.func @transform_1(%arg0: i32) -> (i32, i32, i32) {
    %c0_i32 = arith.constant 0 : i32
    %c0_i32_0 = arith.constant 0 : i32
    %c0_i32_1 = arith.constant 0 : i32
    %c0_i32_2 = arith.constant 0 : i32
    return %c0_i32, %c0_i32_0, %c0_i32_1 : i32, i32, i32
  }
  func.func @transform_2(%arg0: i32) -> (i32, i32, i32) {
    %c0_i32 = arith.constant 0 : i32
    %c0_i32_0 = arith.constant 0 : i32
    %c0_i32_1 = arith.constant 0 : i32
    %c0_i32_2 = arith.constant 0 : i32
    return %c0_i32, %c0_i32_0, %c0_i32_1 : i32, i32, i32
  }
  func.func @transform_3(%arg0: i32) -> (i32, i32, i32) {
    %c0_i32 = arith.constant 0 : i32
    %c0_i32_0 = arith.constant 0 : i32
    %c0_i32_1 = arith.constant 0 : i32
    %c0_i32_2 = arith.constant 0 : i32
    return %c0_i32, %c0_i32_0, %c0_i32_1 : i32, i32, i32
  }
  func.func @transform_4(%arg0: i32) -> (i32, i32) {
    %c0_i32 = arith.constant 0 : i32
    %c0_i32_0 = arith.constant 0 : i32
    %c0_i32_1 = arith.constant 0 : i32
    return %c0_i32, %c0_i32_0 : i32, i32
  }
  func.func @transform_5(%arg0: i32) -> (i32, i32) {
    %c0_i32 = arith.constant 0 : i32
    %c0_i32_0 = arith.constant 0 : i32
    %c0_i32_1 = arith.constant 0 : i32
    return %c0_i32, %c0_i32_0 : i32, i32
  }
  func.func @transform_6(%arg0: i32) -> (i32, i32) {
    %c0_i32 = arith.constant 0 : i32
    %c0_i32_0 = arith.constant 0 : i32
    %c0_i32_1 = arith.constant 0 : i32
    return %c0_i32, %c0_i32_0 : i32, i32
  }
  func.func @transform_7(%arg0: i32) -> (i32, i32, i32) {
    %c0_i32 = arith.constant 0 : i32
    %c0_i32_0 = arith.constant 0 : i32
    %c0_i32_1 = arith.constant 0 : i32
    return %arg0, %c0_i32, %c0_i32_0 : i32, i32, i32
  }
}

module attributes {stable_mosaic.version = 11 : i64} {
  func.func @_env_interp_kernel(%arg0: i32, %arg1: memref<1x2x18xf32, #tpu.memory_space<vmem>>, %arg2: memref<18x2048xf32, #tpu.memory_space<vmem>>, %arg3: memref<1x2048xf32, #tpu.memory_space<vmem>>, %arg4: memref<2x2048xf32, #tpu.memory_space<vmem>>) attributes {dimension_semantics = [#tpu.dimension_semantics<parallel>], iteration_bounds = array<i64: 2>, scalar_prefetch = 0 : i64, scratch_operands = 0 : i64, tpu.core_type = #tpu.core_type<tc>, window_params = [{transform_indices = @transform_0, window_bounds = array<i64: 1, 2, 18>}, {pipeline_mode = #tpu.pipeline_mode<synchronous>, transform_indices = @transform_1, window_bounds = array<i64: 18, 2048>}, {transform_indices = @transform_2, window_bounds = array<i64: 1, 2048>}, {transform_indices = @transform_3, window_bounds = array<i64: 2, 2048>}]} {
    %c0 = arith.constant 0 : index
    %c0_0 = arith.constant 0 : index
    %c0_1 = arith.constant 0 : index
    %0 = vector.load %arg1[%c0, %c0_0, %c0_1] : memref<1x2x18xf32, #tpu.memory_space<vmem>>, vector<1x2x18xf32>
    %1 = vector.shape_cast %0 : vector<1x2x18xf32> to vector<2x18xf32>
    %c0_2 = arith.constant 0 : index
    %c0_3 = arith.constant 0 : index
    %2 = vector.load %arg2[%c0_2, %c0_3] : memref<18x2048xf32, #tpu.memory_space<vmem>>, vector<18x2048xf32>
    %cst = arith.constant dense<0.000000e+00> : vector<2x2048xf32>
    %3 = tpu.matmul %1, %2, %cst {dimension_numbers = #tpu.dot_dimension_numbers<[1], [0], [0], [1], [0, 0, 1, 1], [], []>} : vector<2x18xf32>, vector<18x2048xf32>, vector<2x2048xf32> -> vector<2x2048xf32>
    %c0_4 = arith.constant 0 : index
    %c0_5 = arith.constant 0 : index
    %4 = vector.load %arg3[%c0_4, %c0_5] : memref<1x2048xf32, #tpu.memory_space<vmem>>, vector<1x2048xf32>
    %5 = vector.broadcast %4 : vector<1x2048xf32> to vector<2x2048xf32>
    %6 = arith.mulf %3, %5 : vector<2x2048xf32>
    %c0_6 = arith.constant 0 : index
    %c0_7 = arith.constant 0 : index
    %7 = vector.load %arg4[%c0_6, %c0_7] : memref<2x2048xf32, #tpu.memory_space<vmem>>, vector<2x2048xf32>
    tpu.vector_store %arg4[%c0_6, %c0_7], %6 {strides = array<i32>} : memref<2x2048xf32, #tpu.memory_space<vmem>>, vector<2x2048xf32>,
    return
  }
  func.func @transform_0(%arg0: i32) -> (i32, i32, i32) {
    %c0_i32 = arith.constant 0 : i32
    %c0_i32_0 = arith.constant 0 : i32
    %c0_i32_1 = arith.constant 0 : i32
    return %arg0, %c0_i32, %c0_i32_0 : i32, i32, i32
  }
  func.func @transform_1(%arg0: i32) -> (i32, i32) {
    %c0_i32 = arith.constant 0 : i32
    %c0_i32_0 = arith.constant 0 : i32
    %c0_i32_1 = arith.constant 0 : i32
    return %c0_i32, %c0_i32_0 : i32, i32
  }
  func.func @transform_2(%arg0: i32) -> (i32, i32) {
    %c0_i32 = arith.constant 0 : i32
    %c0_i32_0 = arith.constant 0 : i32
    return %c0_i32, %arg0 : i32, i32
  }
  func.func @transform_3(%arg0: i32) -> (i32, i32) {
    %c0_i32 = arith.constant 0 : i32
    %c0_i32_0 = arith.constant 0 : i32
    return %c0_i32, %arg0 : i32, i32
  }
}

module attributes {stable_mosaic.version = 11 : i64} {
  func.func @_conv_stack_kernel(%arg0: i32, %arg1: memref<1x32x8xf32, #tpu.memory_space<vmem>>, %arg2: memref<3x32x32xf32, #tpu.memory_space<vmem>>, %arg3: memref<3x8x32xf32, #tpu.memory_space<vmem>>, %arg4: memref<32x1xf32, #tpu.memory_space<vmem>>, %arg5: memref<8x1xf32, #tpu.memory_space<vmem>>, %arg6: memref<1x8x32xf32, #tpu.memory_space<vmem>>) attributes {dimension_semantics = [#tpu.dimension_semantics<parallel>], iteration_bounds = array<i64: 2>, scalar_prefetch = 0 : i64, scratch_operands = 0 : i64, tpu.core_type = #tpu.core_type<tc>, window_params = [{transform_indices = @transform_0, window_bounds = array<i64: 1, 32, 8>}, {pipeline_mode = #tpu.pipeline_mode<synchronous>, transform_indices = @transform_1, window_bounds = array<i64: 3, 32, 32>}, {pipeline_mode = #tpu.pipeline_mode<synchronous>, transform_indices = @transform_2, window_bounds = array<i64: 3, 8, 32>}, {pipeline_mode = #tpu.pipeline_mode<synchronous>, transform_indices = @transform_3, window_bounds = array<i64: 32, 1>}, {pipeline_mode = #tpu.pipeline_mode<synchronous>, transform_indices = @transform_4, window_bounds = array<i64: 8, 1>}, {transform_indices = @transform_5, window_bounds = array<i64: 1, 8, 32>}]} {
    %c0 = arith.constant 0 : index
    %c0_0 = arith.constant 0 : index
    %c0_1 = arith.constant 0 : index
    %0 = vector.load %arg1[%c0, %c0_0, %c0_1] : memref<1x32x8xf32, #tpu.memory_space<vmem>>, vector<1x32x8xf32>
    %1 = vector.shape_cast %0 : vector<1x32x8xf32> to vector<32x8xf32>
    %2 = tpu.iota {dimensions = array<i32: 0>} : vector<8x16xi32>
    %3 = tpu.iota {dimensions = array<i32: 1>} : vector<8x16xi32>
    %c-1_i32 = arith.constant -1 : i32
    %4 = vector.broadcast %c-1_i32 : i32 to vector<8x16xi32>
    %5 = arith.addi %3, %4 : vector<8x16xi32>
    %c0_i32 = arith.constant 0 : i32
    %6 = vector.broadcast %c0_i32 : i32 to vector<8x16xi32>
    %7 = arith.cmpi sge, %5, %6 : vector<8x16xi32>
    %c16_i32 = arith.constant 16 : i32
    %8 = vector.broadcast %c16_i32 : i32 to vector<8x16xi32>
    %9 = arith.cmpi slt, %5, %8 : vector<8x16xi32>
    %10 = arith.andi %7, %9 : vector<8x16xi1>
    %c2_i32 = arith.constant 2 : i32
    %11 = vector.broadcast %c2_i32 : i32 to vector<8x16xi32>
    %12 = arith.muli %11, %2 : vector<8x16xi32>
    %13 = arith.cmpi eq, %5, %12 : vector<8x16xi32>
    %c2_i32_2 = arith.constant 2 : i32
    %14 = vector.broadcast %c2_i32_2 : i32 to vector<8x16xi32>
    %15 = arith.muli %14, %2 : vector<8x16xi32>
    %c1_i32 = arith.constant 1 : i32
    %16 = vector.broadcast %c1_i32 : i32 to vector<8x16xi32>
    %17 = arith.addi %15, %16 : vector<8x16xi32>
    %18 = arith.cmpi eq, %5, %17 : vector<8x16xi32>
    %19 = arith.ori %13, %18 : vector<8x16xi1>
    %20 = arith.andi %10, %19 : vector<8x16xi1>
    %21 = arith.extui %20 : vector<8x16xi1> to vector<8x16xi32>
    %22 = arith.sitofp %21 : vector<8x16xi32> to vector<8x16xf32>
    %cst = arith.constant dense<0.000000e+00> : vector<32x16xf32>
    %23 = tpu.matmul %1, %22, %cst {dimension_numbers = #tpu.dot_dimension_numbers<[1], [0], [0], [1], [0, 0, 1, 1], [], []>} : vector<32x8xf32>, vector<8x16xf32>, vector<32x16xf32> -> vector<32x16xf32>
    %c0_3 = arith.constant 0 : index
    %c0_4 = arith.constant 0 : index
    %c0_5 = arith.constant 0 : index
    %24 = vector.load %arg2[%c0_3, %c0_4, %c0_5] : memref<3x32x32xf32, #tpu.memory_space<vmem>>, vector<1x32x32xf32>
    %25 = vector.shape_cast %24 : vector<1x32x32xf32> to vector<32x32xf32>
    %cst_6 = arith.constant dense<0.000000e+00> : vector<32x16xf32>
    %26 = tpu.matmul %25, %23, %cst_6 {dimension_numbers = #tpu.dot_dimension_numbers<[1], [0], [0], [1], [0, 0, 1, 1], [], []>} : vector<32x32xf32>, vector<32x16xf32>, vector<32x16xf32> -> vector<32x16xf32>
    %c0_i32_7 = arith.constant 0 : i32
    %27 = vector.broadcast %c0_i32_7 : i32 to vector<8x16xi32>
    %28 = arith.addi %3, %27 : vector<8x16xi32>
    %c0_i32_8 = arith.constant 0 : i32
    %29 = vector.broadcast %c0_i32_8 : i32 to vector<8x16xi32>
    %30 = arith.cmpi sge, %28, %29 : vector<8x16xi32>
    %c16_i32_9 = arith.constant 16 : i32
    %31 = vector.broadcast %c16_i32_9 : i32 to vector<8x16xi32>
    %32 = arith.cmpi slt, %28, %31 : vector<8x16xi32>
    %33 = arith.andi %30, %32 : vector<8x16xi1>
    %c2_i32_10 = arith.constant 2 : i32
    %34 = vector.broadcast %c2_i32_10 : i32 to vector<8x16xi32>
    %35 = arith.muli %34, %2 : vector<8x16xi32>
    %36 = arith.cmpi eq, %28, %35 : vector<8x16xi32>
    %c2_i32_11 = arith.constant 2 : i32
    %37 = vector.broadcast %c2_i32_11 : i32 to vector<8x16xi32>
    %38 = arith.muli %37, %2 : vector<8x16xi32>
    %c1_i32_12 = arith.constant 1 : i32
    %39 = vector.broadcast %c1_i32_12 : i32 to vector<8x16xi32>
    %40 = arith.addi %38, %39 : vector<8x16xi32>
    %41 = arith.cmpi eq, %28, %40 : vector<8x16xi32>
    %42 = arith.ori %36, %41 : vector<8x16xi1>
    %43 = arith.andi %33, %42 : vector<8x16xi1>
    %44 = arith.extui %43 : vector<8x16xi1> to vector<8x16xi32>
    %45 = arith.sitofp %44 : vector<8x16xi32> to vector<8x16xf32>
    %cst_13 = arith.constant dense<0.000000e+00> : vector<32x16xf32>
    %46 = tpu.matmul %1, %45, %cst_13 {dimension_numbers = #tpu.dot_dimension_numbers<[1], [0], [0], [1], [0, 0, 1, 1], [], []>} : vector<32x8xf32>, vector<8x16xf32>, vector<32x16xf32> -> vector<32x16xf32>
    %c1 = arith.constant 1 : index
    %c0_14 = arith.constant 0 : index
    %c0_15 = arith.constant 0 : index
    %47 = vector.load %arg2[%c1, %c0_14, %c0_15] : memref<3x32x32xf32, #tpu.memory_space<vmem>>, vector<1x32x32xf32>
    %48 = vector.shape_cast %47 : vector<1x32x32xf32> to vector<32x32xf32>
    %cst_16 = arith.constant dense<0.000000e+00> : vector<32x16xf32>
    %49 = tpu.matmul %48, %46, %cst_16 {dimension_numbers = #tpu.dot_dimension_numbers<[1], [0], [0], [1], [0, 0, 1, 1], [], []>} : vector<32x32xf32>, vector<32x16xf32>, vector<32x16xf32> -> vector<32x16xf32>
    %50 = arith.addf %26, %49 : vector<32x16xf32>
    %c1_i32_17 = arith.constant 1 : i32
    %51 = vector.broadcast %c1_i32_17 : i32 to vector<8x16xi32>
    %52 = arith.addi %3, %51 : vector<8x16xi32>
    %c0_i32_18 = arith.constant 0 : i32
    %53 = vector.broadcast %c0_i32_18 : i32 to vector<8x16xi32>
    %54 = arith.cmpi sge, %52, %53 : vector<8x16xi32>
    %c16_i32_19 = arith.constant 16 : i32
    %55 = vector.broadcast %c16_i32_19 : i32 to vector<8x16xi32>
    %56 = arith.cmpi slt, %52, %55 : vector<8x16xi32>
    %57 = arith.andi %54, %56 : vector<8x16xi1>
    %c2_i32_20 = arith.constant 2 : i32
    %58 = vector.broadcast %c2_i32_20 : i32 to vector<8x16xi32>
    %59 = arith.muli %58, %2 : vector<8x16xi32>
    %60 = arith.cmpi eq, %52, %59 : vector<8x16xi32>
    %c2_i32_21 = arith.constant 2 : i32
    %61 = vector.broadcast %c2_i32_21 : i32 to vector<8x16xi32>
    %62 = arith.muli %61, %2 : vector<8x16xi32>
    %c1_i32_22 = arith.constant 1 : i32
    %63 = vector.broadcast %c1_i32_22 : i32 to vector<8x16xi32>
    %64 = arith.addi %62, %63 : vector<8x16xi32>
    %65 = arith.cmpi eq, %52, %64 : vector<8x16xi32>
    %66 = arith.ori %60, %65 : vector<8x16xi1>
    %67 = arith.andi %57, %66 : vector<8x16xi1>
    %68 = arith.extui %67 : vector<8x16xi1> to vector<8x16xi32>
    %69 = arith.sitofp %68 : vector<8x16xi32> to vector<8x16xf32>
    %cst_23 = arith.constant dense<0.000000e+00> : vector<32x16xf32>
    %70 = tpu.matmul %1, %69, %cst_23 {dimension_numbers = #tpu.dot_dimension_numbers<[1], [0], [0], [1], [0, 0, 1, 1], [], []>} : vector<32x8xf32>, vector<8x16xf32>, vector<32x16xf32> -> vector<32x16xf32>
    %c2 = arith.constant 2 : index
    %c0_24 = arith.constant 0 : index
    %c0_25 = arith.constant 0 : index
    %71 = vector.load %arg2[%c2, %c0_24, %c0_25] : memref<3x32x32xf32, #tpu.memory_space<vmem>>, vector<1x32x32xf32>
    %72 = vector.shape_cast %71 : vector<1x32x32xf32> to vector<32x32xf32>
    %cst_26 = arith.constant dense<0.000000e+00> : vector<32x16xf32>
    %73 = tpu.matmul %72, %70, %cst_26 {dimension_numbers = #tpu.dot_dimension_numbers<[1], [0], [0], [1], [0, 0, 1, 1], [], []>} : vector<32x32xf32>, vector<32x16xf32>, vector<32x16xf32> -> vector<32x16xf32>
    %74 = arith.addf %50, %73 : vector<32x16xf32>
    %c0_27 = arith.constant 0 : index
    %c0_28 = arith.constant 0 : index
    %75 = vector.load %arg4[%c0_27, %c0_28] : memref<32x1xf32, #tpu.memory_space<vmem>>, vector<32x1xf32>
    %76 = vector.broadcast %75 : vector<32x1xf32> to vector<32x16xf32>
    %77 = arith.addf %74, %76 : vector<32x16xf32>
    %cst_29 = arith.constant 0.000000e+00 : f32
    %78 = vector.broadcast %cst_29 : f32 to vector<32x16xf32>
    %79 = arith.cmpf oge, %77, %78 : vector<32x16xf32>
    %cst_30 = arith.constant 2.000000e-01 : f32
    %80 = vector.broadcast %cst_30 : f32 to vector<32x16xf32>
    %81 = arith.mulf %80, %77 : vector<32x16xf32>
    %82 = arith.select %79, %77, %81 : vector<32x16xi1>, vector<32x16xf32>
    %83 = tpu.iota {dimensions = array<i32: 0>} : vector<16x32xi32>
    %84 = tpu.iota {dimensions = array<i32: 1>} : vector<16x32xi32>
    %c-1_i32_31 = arith.constant -1 : i32
    %85 = vector.broadcast %c-1_i32_31 : i32 to vector<16x32xi32>
    %86 = arith.addi %84, %85 : vector<16x32xi32>
    %c0_i32_32 = arith.constant 0 : i32
    %87 = vector.broadcast %c0_i32_32 : i32 to vector<16x32xi32>
    %88 = arith.cmpi sge, %86, %87 : vector<16x32xi32>
    %c32_i32 = arith.constant 32 : i32
    %89 = vector.broadcast %c32_i32 : i32 to vector<16x32xi32>
    %90 = arith.cmpi slt, %86, %89 : vector<16x32xi32>
    %91 = arith.andi %88, %90 : vector<16x32xi1>
    %c2_i32_33 = arith.constant 2 : i32
    %92 = vector.broadcast %c2_i32_33 : i32 to vector<16x32xi32>
    %93 = arith.muli %92, %83 : vector<16x32xi32>
    %94 = arith.cmpi eq, %86, %93 : vector<16x32xi32>
    %c2_i32_34 = arith.constant 2 : i32
    %95 = vector.broadcast %c2_i32_34 : i32 to vector<16x32xi32>
    %96 = arith.muli %95, %83 : vector<16x32xi32>
    %c1_i32_35 = arith.constant 1 : i32
    %97 = vector.broadcast %c1_i32_35 : i32 to vector<16x32xi32>
    %98 = arith.addi %96, %97 : vector<16x32xi32>
    %99 = arith.cmpi eq, %86, %98 : vector<16x32xi32>
    %100 = arith.ori %94, %99 : vector<16x32xi1>
    %101 = arith.andi %91, %100 : vector<16x32xi1>
    %102 = arith.extui %101 : vector<16x32xi1> to vector<16x32xi32>
    %103 = arith.sitofp %102 : vector<16x32xi32> to vector<16x32xf32>
    %cst_36 = arith.constant dense<0.000000e+00> : vector<32x32xf32>
    %104 = tpu.matmul %82, %103, %cst_36 {dimension_numbers = #tpu.dot_dimension_numbers<[1], [0], [0], [1], [0, 0, 1, 1], [], []>} : vector<32x16xf32>, vector<16x32xf32>, vector<32x32xf32> -> vector<32x32xf32>
    %c0_37 = arith.constant 0 : index
    %c0_38 = arith.constant 0 : index
    %c0_39 = arith.constant 0 : index
    %105 = vector.load %arg3[%c0_37, %c0_38, %c0_39] : memref<3x8x32xf32, #tpu.memory_space<vmem>>, vector<1x8x32xf32>
    %106 = vector.shape_cast %105 : vector<1x8x32xf32> to vector<8x32xf32>
    %cst_40 = arith.constant dense<0.000000e+00> : vector<8x32xf32>
    %107 = tpu.matmul %106, %104, %cst_40 {dimension_numbers = #tpu.dot_dimension_numbers<[1], [0], [0], [1], [0, 0, 1, 1], [], []>} : vector<8x32xf32>, vector<32x32xf32>, vector<8x32xf32> -> vector<8x32xf32>
    %c0_i32_41 = arith.constant 0 : i32
    %108 = vector.broadcast %c0_i32_41 : i32 to vector<16x32xi32>
    %109 = arith.addi %84, %108 : vector<16x32xi32>
    %c0_i32_42 = arith.constant 0 : i32
    %110 = vector.broadcast %c0_i32_42 : i32 to vector<16x32xi32>
    %111 = arith.cmpi sge, %109, %110 : vector<16x32xi32>
    %c32_i32_43 = arith.constant 32 : i32
    %112 = vector.broadcast %c32_i32_43 : i32 to vector<16x32xi32>
    %113 = arith.cmpi slt, %109, %112 : vector<16x32xi32>
    %114 = arith.andi %111, %113 : vector<16x32xi1>
    %c2_i32_44 = arith.constant 2 : i32
    %115 = vector.broadcast %c2_i32_44 : i32 to vector<16x32xi32>
    %116 = arith.muli %115, %83 : vector<16x32xi32>
    %117 = arith.cmpi eq, %109, %116 : vector<16x32xi32>
    %c2_i32_45 = arith.constant 2 : i32
    %118 = vector.broadcast %c2_i32_45 : i32 to vector<16x32xi32>
    %119 = arith.muli %118, %83 : vector<16x32xi32>
    %c1_i32_46 = arith.constant 1 : i32
    %120 = vector.broadcast %c1_i32_46 : i32 to vector<16x32xi32>
    %121 = arith.addi %119, %120 : vector<16x32xi32>
    %122 = arith.cmpi eq, %109, %121 : vector<16x32xi32>
    %123 = arith.ori %117, %122 : vector<16x32xi1>
    %124 = arith.andi %114, %123 : vector<16x32xi1>
    %125 = arith.extui %124 : vector<16x32xi1> to vector<16x32xi32>
    %126 = arith.sitofp %125 : vector<16x32xi32> to vector<16x32xf32>
    %cst_47 = arith.constant dense<0.000000e+00> : vector<32x32xf32>
    %127 = tpu.matmul %82, %126, %cst_47 {dimension_numbers = #tpu.dot_dimension_numbers<[1], [0], [0], [1], [0, 0, 1, 1], [], []>} : vector<32x16xf32>, vector<16x32xf32>, vector<32x32xf32> -> vector<32x32xf32>
    %c1_48 = arith.constant 1 : index
    %c0_49 = arith.constant 0 : index
    %c0_50 = arith.constant 0 : index
    %128 = vector.load %arg3[%c1_48, %c0_49, %c0_50] : memref<3x8x32xf32, #tpu.memory_space<vmem>>, vector<1x8x32xf32>
    %129 = vector.shape_cast %128 : vector<1x8x32xf32> to vector<8x32xf32>
    %cst_51 = arith.constant dense<0.000000e+00> : vector<8x32xf32>
    %130 = tpu.matmul %129, %127, %cst_51 {dimension_numbers = #tpu.dot_dimension_numbers<[1], [0], [0], [1], [0, 0, 1, 1], [], []>} : vector<8x32xf32>, vector<32x32xf32>, vector<8x32xf32> -> vector<8x32xf32>
    %131 = arith.addf %107, %130 : vector<8x32xf32>
    %c1_i32_52 = arith.constant 1 : i32
    %132 = vector.broadcast %c1_i32_52 : i32 to vector<16x32xi32>
    %133 = arith.addi %84, %132 : vector<16x32xi32>
    %c0_i32_53 = arith.constant 0 : i32
    %134 = vector.broadcast %c0_i32_53 : i32 to vector<16x32xi32>
    %135 = arith.cmpi sge, %133, %134 : vector<16x32xi32>
    %c32_i32_54 = arith.constant 32 : i32
    %136 = vector.broadcast %c32_i32_54 : i32 to vector<16x32xi32>
    %137 = arith.cmpi slt, %133, %136 : vector<16x32xi32>
    %138 = arith.andi %135, %137 : vector<16x32xi1>
    %c2_i32_55 = arith.constant 2 : i32
    %139 = vector.broadcast %c2_i32_55 : i32 to vector<16x32xi32>
    %140 = arith.muli %139, %83 : vector<16x32xi32>
    %141 = arith.cmpi eq, %133, %140 : vector<16x32xi32>
    %c2_i32_56 = arith.constant 2 : i32
    %142 = vector.broadcast %c2_i32_56 : i32 to vector<16x32xi32>
    %143 = arith.muli %142, %83 : vector<16x32xi32>
    %c1_i32_57 = arith.constant 1 : i32
    %144 = vector.broadcast %c1_i32_57 : i32 to vector<16x32xi32>
    %145 = arith.addi %143, %144 : vector<16x32xi32>
    %146 = arith.cmpi eq, %133, %145 : vector<16x32xi32>
    %147 = arith.ori %141, %146 : vector<16x32xi1>
    %148 = arith.andi %138, %147 : vector<16x32xi1>
    %149 = arith.extui %148 : vector<16x32xi1> to vector<16x32xi32>
    %150 = arith.sitofp %149 : vector<16x32xi32> to vector<16x32xf32>
    %cst_58 = arith.constant dense<0.000000e+00> : vector<32x32xf32>
    %151 = tpu.matmul %82, %150, %cst_58 {dimension_numbers = #tpu.dot_dimension_numbers<[1], [0], [0], [1], [0, 0, 1, 1], [], []>} : vector<32x16xf32>, vector<16x32xf32>, vector<32x32xf32> -> vector<32x32xf32>
    %c2_59 = arith.constant 2 : index
    %c0_60 = arith.constant 0 : index
    %c0_61 = arith.constant 0 : index
    %152 = vector.load %arg3[%c2_59, %c0_60, %c0_61] : memref<3x8x32xf32, #tpu.memory_space<vmem>>, vector<1x8x32xf32>
    %153 = vector.shape_cast %152 : vector<1x8x32xf32> to vector<8x32xf32>
    %cst_62 = arith.constant dense<0.000000e+00> : vector<8x32xf32>
    %154 = tpu.matmul %153, %151, %cst_62 {dimension_numbers = #tpu.dot_dimension_numbers<[1], [0], [0], [1], [0, 0, 1, 1], [], []>} : vector<8x32xf32>, vector<32x32xf32>, vector<8x32xf32> -> vector<8x32xf32>
    %155 = arith.addf %131, %154 : vector<8x32xf32>
    %c0_63 = arith.constant 0 : index
    %c0_64 = arith.constant 0 : index
    %156 = vector.load %arg5[%c0_63, %c0_64] : memref<8x1xf32, #tpu.memory_space<vmem>>, vector<8x1xf32>
    %157 = vector.broadcast %156 : vector<8x1xf32> to vector<8x32xf32>
    %158 = arith.addf %155, %157 : vector<8x32xf32>
    %c0_65 = arith.constant 0 : index
    %c0_66 = arith.constant 0 : index
    %c0_67 = arith.constant 0 : index
    %159 = vector.load %arg6[%c0_65, %c0_66, %c0_67] : memref<1x8x32xf32, #tpu.memory_space<vmem>>, vector<1x8x32xf32>
    %160 = vector.shape_cast %159 : vector<1x8x32xf32> to vector<8x32xf32>
    %161 = vector.shape_cast %158 : vector<8x32xf32> to vector<1x8x32xf32>
    tpu.vector_store %arg6[%c0_65, %c0_66, %c0_67], %161 {strides = array<i32>} : memref<1x8x32xf32, #tpu.memory_space<vmem>>, vector<1x8x32xf32>,
    return
  }
  func.func @transform_0(%arg0: i32) -> (i32, i32, i32) {
    %c0_i32 = arith.constant 0 : i32
    %c0_i32_0 = arith.constant 0 : i32
    %c0_i32_1 = arith.constant 0 : i32
    return %arg0, %c0_i32, %c0_i32_0 : i32, i32, i32
  }
  func.func @transform_1(%arg0: i32) -> (i32, i32, i32) {
    %c0_i32 = arith.constant 0 : i32
    %c0_i32_0 = arith.constant 0 : i32
    %c0_i32_1 = arith.constant 0 : i32
    %c0_i32_2 = arith.constant 0 : i32
    return %c0_i32, %c0_i32_0, %c0_i32_1 : i32, i32, i32
  }
  func.func @transform_2(%arg0: i32) -> (i32, i32, i32) {
    %c0_i32 = arith.constant 0 : i32
    %c0_i32_0 = arith.constant 0 : i32
    %c0_i32_1 = arith.constant 0 : i32
    %c0_i32_2 = arith.constant 0 : i32
    return %c0_i32, %c0_i32_0, %c0_i32_1 : i32, i32, i32
  }
  func.func @transform_3(%arg0: i32) -> (i32, i32) {
    %c0_i32 = arith.constant 0 : i32
    %c0_i32_0 = arith.constant 0 : i32
    %c0_i32_1 = arith.constant 0 : i32
    return %c0_i32, %c0_i32_0 : i32, i32
  }
  func.func @transform_4(%arg0: i32) -> (i32, i32) {
    %c0_i32 = arith.constant 0 : i32
    %c0_i32_0 = arith.constant 0 : i32
    %c0_i32_1 = arith.constant 0 : i32
    return %c0_i32, %c0_i32_0 : i32, i32
  }
  func.func @transform_5(%arg0: i32) -> (i32, i32, i32) {
    %c0_i32 = arith.constant 0 : i32
    %c0_i32_0 = arith.constant 0 : i32
    %c0_i32_1 = arith.constant 0 : i32
    return %arg0, %c0_i32, %c0_i32_0 : i32, i32, i32
  }
}

module attributes {stable_mosaic.version = 11 : i64} {
  func.func @_mm_bias_kernel(%arg0: i32, %arg1: memref<2x32xf32, #tpu.memory_space<vmem>>, %arg2: memref<32x256xf32, #tpu.memory_space<vmem>>, %arg3: memref<1x256xf32, #tpu.memory_space<vmem>>, %arg4: memref<2x256xf32, #tpu.memory_space<vmem>>) attributes {dimension_semantics = [#tpu.dimension_semantics<arbitrary>], iteration_bounds = array<i64: 1>, scalar_prefetch = 0 : i64, scratch_operands = 0 : i64, tpu.core_type = #tpu.core_type<tc>, window_params = [{pipeline_mode = #tpu.pipeline_mode<synchronous>, transform_indices = @transform_0, window_bounds = array<i64: 2, 32>}, {pipeline_mode = #tpu.pipeline_mode<synchronous>, transform_indices = @transform_1, window_bounds = array<i64: 32, 256>}, {pipeline_mode = #tpu.pipeline_mode<synchronous>, transform_indices = @transform_2, window_bounds = array<i64: 1, 256>}, {pipeline_mode = #tpu.pipeline_mode<synchronous>, transform_indices = @transform_3, window_bounds = array<i64: 2, 256>}]} {
    %c0 = arith.constant 0 : index
    %c0_0 = arith.constant 0 : index
    %0 = vector.load %arg1[%c0, %c0_0] : memref<2x32xf32, #tpu.memory_space<vmem>>, vector<2x32xf32>
    %c0_1 = arith.constant 0 : index
    %c0_2 = arith.constant 0 : index
    %1 = vector.load %arg2[%c0_1, %c0_2] : memref<32x256xf32, #tpu.memory_space<vmem>>, vector<32x256xf32>
    %cst = arith.constant dense<0.000000e+00> : vector<2x256xf32>
    %2 = tpu.matmul %0, %1, %cst {dimension_numbers = #tpu.dot_dimension_numbers<[1], [0], [0], [1], [0, 0, 1, 1], [], []>} : vector<2x32xf32>, vector<32x256xf32>, vector<2x256xf32> -> vector<2x256xf32>
    %c0_3 = arith.constant 0 : index
    %c0_4 = arith.constant 0 : index
    %3 = vector.load %arg3[%c0_3, %c0_4] : memref<1x256xf32, #tpu.memory_space<vmem>>, vector<1x256xf32>
    %4 = vector.broadcast %3 : vector<1x256xf32> to vector<2x256xf32>
    %5 = arith.addf %2, %4 : vector<2x256xf32>
    %c0_5 = arith.constant 0 : index
    %c0_6 = arith.constant 0 : index
    %6 = vector.load %arg4[%c0_5, %c0_6] : memref<2x256xf32, #tpu.memory_space<vmem>>, vector<2x256xf32>
    tpu.vector_store %arg4[%c0_5, %c0_6], %5 {strides = array<i32>} : memref<2x256xf32, #tpu.memory_space<vmem>>, vector<2x256xf32>,
    return
  }
  func.func @transform_0(%arg0: i32) -> (i32, i32) {
    %c0_i32 = arith.constant 0 : i32
    %c0_i32_0 = arith.constant 0 : i32
    %c0_i32_1 = arith.constant 0 : i32
    return %c0_i32, %c0_i32_0 : i32, i32
  }
  func.func @transform_1(%arg0: i32) -> (i32, i32) {
    %c0_i32 = arith.constant 0 : i32
    %c0_i32_0 = arith.constant 0 : i32
    %c0_i32_1 = arith.constant 0 : i32
    return %c0_i32, %c0_i32_0 : i32, i32
  }
  func.func @transform_2(%arg0: i32) -> (i32, i32) {
    %c0_i32 = arith.constant 0 : i32
    %c0_i32_0 = arith.constant 0 : i32
    %c0_i32_1 = arith.constant 0 : i32
    return %c0_i32, %c0_i32_0 : i32, i32
  }
  func.func @transform_3(%arg0: i32) -> (i32, i32) {
    %c0_i32 = arith.constant 0 : i32
    %c0_i32_0 = arith.constant 0 : i32
    %c0_i32_1 = arith.constant 0 : i32
    return %c0_i32, %c0_i32_0 : i32, i32
  }
}

module attributes {stable_mosaic.version = 11 : i64} {
  func.func @_frames_kernel(%arg0: i32, %arg1: memref<64x8xf32, #tpu.memory_space<vmem>>, %arg2: memref<64x8xf32, #tpu.memory_space<vmem>>, %arg3: memref<8x16xf32, #tpu.memory_space<vmem>>, %arg4: memref<64x16xf32, #tpu.memory_space<vmem>>) attributes {dimension_semantics = [#tpu.dimension_semantics<arbitrary>], iteration_bounds = array<i64: 1>, scalar_prefetch = 0 : i64, scratch_operands = 0 : i64, tpu.core_type = #tpu.core_type<tc>, window_params = [{pipeline_mode = #tpu.pipeline_mode<synchronous>, transform_indices = @transform_0, window_bounds = array<i64: 64, 8>}, {pipeline_mode = #tpu.pipeline_mode<synchronous>, transform_indices = @transform_1, window_bounds = array<i64: 64, 8>}, {pipeline_mode = #tpu.pipeline_mode<synchronous>, transform_indices = @transform_2, window_bounds = array<i64: 8, 16>}, {pipeline_mode = #tpu.pipeline_mode<synchronous>, transform_indices = @transform_3, window_bounds = array<i64: 64, 16>}]} {
    %c0 = arith.constant 0 : index
    %c0_0 = arith.constant 0 : index
    %0 = vector.load %arg1[%c0, %c0_0] : memref<64x8xf32, #tpu.memory_space<vmem>>, vector<64x8xf32>
    %c0_1 = arith.constant 0 : index
    %c0_2 = arith.constant 0 : index
    %1 = vector.load %arg2[%c0_1, %c0_2] : memref<64x8xf32, #tpu.memory_space<vmem>>, vector<64x8xf32>
    %2 = arith.addf %0, %1 : vector<64x8xf32>
    %cst = arith.constant dense<0xFF800000> : vector<64xf32>
    %3 = vector.multi_reduction <maximumf>, %2, %cst [1] : vector<64x8xf32> to vector<64xf32>
    %4 = vector.shape_cast %3 : vector<64xf32> to vector<64x1xf32>
    %5 = vector.broadcast %4 : vector<64x1xf32> to vector<64x8xf32>
    %6 = arith.cmpf oeq, %2, %5 : vector<64x8xf32>
    %7 = arith.extui %6 : vector<64x8xi1> to vector<64x8xi32>
    %8 = arith.sitofp %7 : vector<64x8xi32> to vector<64x8xf32>
    %c0_3 = arith.constant 0 : index
    %c0_4 = arith.constant 0 : index
    %9 = vector.load %arg3[%c0_3, %c0_4] : memref<8x16xf32, #tpu.memory_space<vmem>>, vector<8x16xf32>
    %cst_5 = arith.constant dense<0.000000e+00> : vector<64x16xf32>
    %10 = tpu.matmul %8, %9, %cst_5 {dimension_numbers = #tpu.dot_dimension_numbers<[1], [0], [0], [1], [0, 0, 1, 1], [], []>} : vector<64x8xf32>, vector<8x16xf32>, vector<64x16xf32> -> vector<64x16xf32>
    %c0_6 = arith.constant 0 : index
    %c0_7 = arith.constant 0 : index
    %11 = vector.load %arg4[%c0_6, %c0_7] : memref<64x16xf32, #tpu.memory_space<vmem>>, vector<64x16xf32>
    tpu.vector_store %arg4[%c0_6, %c0_7], %10 {strides = array<i32>} : memref<64x16xf32, #tpu.memory_space<vmem>>, vector<64x16xf32>,
    return
  }
  func.func @transform_0(%arg0: i32) -> (i32, i32) {
    %c0_i32 = arith.constant 0 : i32
    %c0_i32_0 = arith.constant 0 : i32
    %c0_i32_1 = arith.constant 0 : i32
    return %c0_i32, %c0_i32_0 : i32, i32
  }
  func.func @transform_1(%arg0: i32) -> (i32, i32) {
    %c0_i32 = arith.constant 0 : i32
    %c0_i32_0 = arith.constant 0 : i32
    %c0_i32_1 = arith.constant 0 : i32
    return %c0_i32, %c0_i32_0 : i32, i32
  }
  func.func @transform_2(%arg0: i32) -> (i32, i32) {
    %c0_i32 = arith.constant 0 : i32
    %c0_i32_0 = arith.constant 0 : i32
    %c0_i32_1 = arith.constant 0 : i32
    return %c0_i32, %c0_i32_0 : i32, i32
  }
  func.func @transform_3(%arg0: i32) -> (i32, i32) {
    %c0_i32 = arith.constant 0 : i32
    %c0_i32_0 = arith.constant 0 : i32
    %c0_i32_1 = arith.constant 0 : i32
    return %c0_i32, %c0_i32_0 : i32, i32
  }
}

module attributes {stable_mosaic.version = 11 : i64} {
  func.func @_tf_sample_kernel(%arg0: i32, %arg1: memref<1x64x10xf32, #tpu.memory_space<vmem>>, %arg2: memref<10x2048xf32, #tpu.memory_space<vmem>>, %arg3: memref<32x2048xbf16, #tpu.memory_space<vmem>>, %arg4: memref<2x2048xf32, #tpu.memory_space<vmem>>) attributes {dimension_semantics = [#tpu.dimension_semantics<parallel>], iteration_bounds = array<i64: 2>, scalar_prefetch = 0 : i64, scratch_operands = 0 : i64, tpu.core_type = #tpu.core_type<tc>, window_params = [{transform_indices = @transform_0, window_bounds = array<i64: 1, 64, 10>}, {pipeline_mode = #tpu.pipeline_mode<synchronous>, transform_indices = @transform_1, window_bounds = array<i64: 10, 2048>}, {transform_indices = @transform_2, window_bounds = array<i64: 32, 2048>}, {transform_indices = @transform_3, window_bounds = array<i64: 2, 2048>}]} {
    %c0 = arith.constant 0 : index
    %c0_0 = arith.constant 0 : index
    %c0_1 = arith.constant 0 : index
    %0 = vector.load %arg1[%c0, %c0_0, %c0_1] : memref<1x64x10xf32, #tpu.memory_space<vmem>>, vector<1x64x10xf32>
    %1 = vector.shape_cast %0 : vector<1x64x10xf32> to vector<64x10xf32>
    %c0_2 = arith.constant 0 : index
    %c0_3 = arith.constant 0 : index
    %2 = vector.load %arg2[%c0_2, %c0_3] : memref<10x2048xf32, #tpu.memory_space<vmem>>, vector<10x2048xf32>
    %cst = arith.constant dense<0.000000e+00> : vector<64x2048xf32>
    %3 = tpu.matmul %1, %2, %cst {dimension_numbers = #tpu.dot_dimension_numbers<[1], [0], [0], [1], [0, 0, 1, 1], [], []>} : vector<64x10xf32>, vector<10x2048xf32>, vector<64x2048xf32> -> vector<64x2048xf32>
    %4 = vector.shape_cast %3 : vector<64x2048xf32> to vector<2x32x2048xf32>
    %c0_4 = arith.constant 0 : index
    %c0_5 = arith.constant 0 : index
    %5 = vector.load %arg3[%c0_4, %c0_5] : memref<32x2048xbf16, #tpu.memory_space<vmem>>, vector<32x2048xbf16>
    %6 = arith.extf %5 : vector<32x2048xbf16> to vector<32x2048xf32>
    %7 = vector.shape_cast %6 : vector<32x2048xf32> to vector<1x32x2048xf32>
    %8 = vector.broadcast %7 : vector<1x32x2048xf32> to vector<2x32x2048xf32>
    %9 = arith.mulf %4, %8 : vector<2x32x2048xf32>
    %cst_6 = arith.constant dense<0.000000e+00> : vector<2x2048xf32>
    %10 = vector.multi_reduction <add>, %9, %cst_6 [1] : vector<2x32x2048xf32> to vector<2x2048xf32>
    %cst_7 = arith.constant 3.125000e-02 : f32
    %11 = vector.broadcast %cst_7 : f32 to vector<2x2048xf32>
    %12 = arith.mulf %10, %11 : vector<2x2048xf32>
    %c0_8 = arith.constant 0 : index
    %c0_9 = arith.constant 0 : index
    %13 = vector.load %arg4[%c0_8, %c0_9] : memref<2x2048xf32, #tpu.memory_space<vmem>>, vector<2x2048xf32>
    tpu.vector_store %arg4[%c0_8, %c0_9], %12 {strides = array<i32>} : memref<2x2048xf32, #tpu.memory_space<vmem>>, vector<2x2048xf32>,
    return
  }
  func.func @transform_0(%arg0: i32) -> (i32, i32, i32) {
    %c0_i32 = arith.constant 0 : i32
    %c0_i32_0 = arith.constant 0 : i32
    %c0_i32_1 = arith.constant 0 : i32
    return %arg0, %c0_i32, %c0_i32_0 : i32, i32, i32
  }
  func.func @transform_1(%arg0: i32) -> (i32, i32) {
    %c0_i32 = arith.constant 0 : i32
    %c0_i32_0 = arith.constant 0 : i32
    %c0_i32_1 = arith.constant 0 : i32
    return %c0_i32, %c0_i32_0 : i32, i32
  }
  func.func @transform_2(%arg0: i32) -> (i32, i32) {
    %c0_i32 = arith.constant 0 : i32
    %c0_i32_0 = arith.constant 0 : i32
    return %c0_i32, %arg0 : i32, i32
  }
  func.func @transform_3(%arg0: i32) -> (i32, i32) {
    %c0_i32 = arith.constant 0 : i32
    %c0_i32_0 = arith.constant 0 : i32
    return %c0_i32, %arg0 : i32, i32
  }
}

module attributes {stable_mosaic.version = 11 : i64} {
  func.func @_cmul_kernel(%arg0: i32, %arg1: memref<2x4097xf32, #tpu.memory_space<vmem>>, %arg2: memref<2x4097xf32, #tpu.memory_space<vmem>>, %arg3: memref<2x4097xf32, #tpu.memory_space<vmem>>, %arg4: memref<2x4097xf32, #tpu.memory_space<vmem>>, %arg5: memref<2x4097xf32, #tpu.memory_space<vmem>>, %arg6: memref<2x4097xf32, #tpu.memory_space<vmem>>) attributes {dimension_semantics = [#tpu.dimension_semantics<arbitrary>], iteration_bounds = array<i64: 1>, scalar_prefetch = 0 : i64, scratch_operands = 0 : i64, tpu.core_type = #tpu.core_type<tc>, window_params = [{pipeline_mode = #tpu.pipeline_mode<synchronous>, transform_indices = @transform_0, window_bounds = array<i64: 2, 4097>}, {pipeline_mode = #tpu.pipeline_mode<synchronous>, transform_indices = @transform_1, window_bounds = array<i64: 2, 4097>}, {pipeline_mode = #tpu.pipeline_mode<synchronous>, transform_indices = @transform_2, window_bounds = array<i64: 2, 4097>}, {pipeline_mode = #tpu.pipeline_mode<synchronous>, transform_indices = @transform_3, window_bounds = array<i64: 2, 4097>}, {pipeline_mode = #tpu.pipeline_mode<synchronous>, transform_indices = @transform_4, window_bounds = array<i64: 2, 4097>}, {pipeline_mode = #tpu.pipeline_mode<synchronous>, transform_indices = @transform_5, window_bounds = array<i64: 2, 4097>}]} {
    %c0 = arith.constant 0 : index
    %c0_0 = arith.constant 0 : index
    %0 = vector.load %arg1[%c0, %c0_0] : memref<2x4097xf32, #tpu.memory_space<vmem>>, vector<2x4097xf32>
    %c0_1 = arith.constant 0 : index
    %c0_2 = arith.constant 0 : index
    %1 = vector.load %arg2[%c0_1, %c0_2] : memref<2x4097xf32, #tpu.memory_space<vmem>>, vector<2x4097xf32>
    %c0_3 = arith.constant 0 : index
    %c0_4 = arith.constant 0 : index
    %2 = vector.load %arg3[%c0_3, %c0_4] : memref<2x4097xf32, #tpu.memory_space<vmem>>, vector<2x4097xf32>
    %c0_5 = arith.constant 0 : index
    %c0_6 = arith.constant 0 : index
    %3 = vector.load %arg4[%c0_5, %c0_6] : memref<2x4097xf32, #tpu.memory_space<vmem>>, vector<2x4097xf32>
    %4 = arith.mulf %0, %2 : vector<2x4097xf32>
    %5 = arith.mulf %1, %3 : vector<2x4097xf32>
    %6 = arith.subf %4, %5 : vector<2x4097xf32>
    %c0_7 = arith.constant 0 : index
    %c0_8 = arith.constant 0 : index
    %7 = vector.load %arg5[%c0_7, %c0_8] : memref<2x4097xf32, #tpu.memory_space<vmem>>, vector<2x4097xf32>
    tpu.vector_store %arg5[%c0_7, %c0_8], %6 {strides = array<i32>} : memref<2x4097xf32, #tpu.memory_space<vmem>>, vector<2x4097xf32>,
    %8 = arith.mulf %0, %3 : vector<2x4097xf32>
    %9 = arith.mulf %1, %2 : vector<2x4097xf32>
    %10 = arith.addf %8, %9 : vector<2x4097xf32>
    %c0_9 = arith.constant 0 : index
    %c0_10 = arith.constant 0 : index
    %11 = vector.load %arg6[%c0_9, %c0_10] : memref<2x4097xf32, #tpu.memory_space<vmem>>, vector<2x4097xf32>
    tpu.vector_store %arg6[%c0_9, %c0_10], %10 {strides = array<i32>} : memref<2x4097xf32, #tpu.memory_space<vmem>>, vector<2x4097xf32>,
    return
  }
  func.func @transform_0(%arg0: i32) -> (i32, i32) {
    %c0_i32 = arith.constant 0 : i32
    %c0_i32_0 = arith.constant 0 : i32
    %c0_i32_1 = arith.constant 0 : i32
    return %c0_i32, %c0_i32_0 : i32, i32
  }
  func.func @transform_1(%arg0: i32) -> (i32, i32) {
    %c0_i32 = arith.constant 0 : i32
    %c0_i32_0 = arith.constant 0 : i32
    %c0_i32_1 = arith.constant 0 : i32
    return %c0_i32, %c0_i32_0 : i32, i32
  }
  func.func @transform_2(%arg0: i32) -> (i32, i32) {
    %c0_i32 = arith.constant 0 : i32
    %c0_i32_0 = arith.constant 0 : i32
    %c0_i32_1 = arith.constant 0 : i32
    return %c0_i32, %c0_i32_0 : i32, i32
  }
  func.func @transform_3(%arg0: i32) -> (i32, i32) {
    %c0_i32 = arith.constant 0 : i32
    %c0_i32_0 = arith.constant 0 : i32
    %c0_i32_1 = arith.constant 0 : i32
    return %c0_i32, %c0_i32_0 : i32, i32
  }
  func.func @transform_4(%arg0: i32) -> (i32, i32) {
    %c0_i32 = arith.constant 0 : i32
    %c0_i32_0 = arith.constant 0 : i32
    %c0_i32_1 = arith.constant 0 : i32
    return %c0_i32, %c0_i32_0 : i32, i32
  }
  func.func @transform_5(%arg0: i32) -> (i32, i32) {
    %c0_i32 = arith.constant 0 : i32
    %c0_i32_0 = arith.constant 0 : i32
    %c0_i32_1 = arith.constant 0 : i32
    return %c0_i32, %c0_i32_0 : i32, i32
  }
}

</mosaic_0001>

<llo_original>
// kernel: segment_generator_forward.8
$region0: #{segment_generator_forward.8}
  #allocation0 [shape = 'u32[]', space=smem, size = 0x4, offset = 0x4, fixed_abs, tag = 'smem constant byte address 0x4 - core index']
  #allocation1 [shape = 'u32[144,128]{1,0:T(1,128)}', space=vmem, size = 0x12000, scoped, tag = 'internal scratch']
  %s0 = inlined_call_operand.vmem [shape: f32[2,32], index: 0, kind: input, shape index: {}]
  %s1 = inlined_call_operand.vmem [shape: f32[32,128], index: 1, kind: input, shape index: {}]
  %s2 = inlined_call_operand.vmem [shape: f32[1,128], index: 2, kind: input, shape index: {}]
  %s3 = inlined_call_operand.vmem [shape: f32[2,128], index: 3, kind: output, shape index: {}]
  %s4 = sld [smem:[#allocation0]]
  $region22: #{segment_generator_forward.8} parent=0
    _
  %s6 = ssub.s32 1, %s4
  %s7 = scalar_select 0, %s6, %s4
  // Predicated region
  $region2: #{segment_generator_forward.8} parent=0 // pred_check
    _
  $region3: #{segment_generator_forward.8} parent=0 // pred_check_branch
    %9 = sbr.rel (0) target = $region5
  $region4: #{segment_generator_forward.8} parent=0 // pred_region
    _
  $region5: #{segment_generator_forward.8} parent=0 // pred_fallthru
    _
  // Predicated region
  $region6: #{segment_generator_forward.8} parent=0 // pred_check
    _
  $region7: #{segment_generator_forward.8} parent=0 // pred_check_branch
    %11 = sbr.rel (0) target = $region9
  $region8: #{segment_generator_forward.8} parent=0 // pred_region
    _
  $region9: #{segment_generator_forward.8} parent=0 // pred_fallthru
    _
  // Predicated region
  $region10: #{segment_generator_forward.8} parent=0 // pred_check
    _
  $region11: #{segment_generator_forward.8} parent=0 // pred_check_branch
    %13 = sbr.rel (0) target = $region13
  $region12: #{segment_generator_forward.8} parent=0 // pred_region
    _
  $region13: #{segment_generator_forward.8} parent=0 // pred_fallthru
    _
  %v14 = vld [vmem:[%s0] sm:$0x3]
  %v15 = vld [vmem:[%s1] sm:$0xff]
  %v16 = vld [vmem:[%s1 + $0x8] sm:$0xff]
  %v17 = vld [vmem:[%s1 + $0x10] sm:$0xff]
  %v18 = vld [vmem:[%s1 + $0x18] sm:$0xff]
  %v19 = vld [vmem:[%s2] sm:$0x1]
  %v21 = vlaneseq
  %v22 = vshrl.u32 %v21, 7
  %v23 = vsub.s32 0, %v22
  %v24 = vrot.slane %v19, %v23
  %vm26 = vcmask 261120
  %v28 = vsel %vm26, %v14, 0
  %30 = vmatprep.subr.mxu0 0.0
  %31 = vmatpush1.msra.mxu0 %v15
  %32 = vmatprep.subr.mxu0 0.0
  %33 = vmatpush1.msra.mxu0 %v16
  %34 = vmatprep.subr.mxu0 0.0
  %35 = vmatpush1.msra.mxu0 %v17
  %36 = vmatprep.subr.mxu0 0.0
  %37 = vmatpush1.msra.mxu0 %v18
  %38 = vmatprep.subr.mxu0 0.0
  %39 = vmatpush1.msra.mxu0 0.0
  %40 = vmatprep.subr.mxu0 0.0
  %41 = vmatpush1.msra.mxu0 0.0
  %42 = vmatprep.subr.mxu0 0.0
  %43 = vmatpush1.msra.mxu0 0.0
  %44 = vmatprep.subr.mxu0 0.0
  %45 = vmatpush1.msra.mxu0 0.0
  %46 = vmatprep.subr.mxu0 0.0
  %47 = vmatpush1.msra.mxu0 0.0
  %48 = vmatprep.subr.mxu0 0.0
  %49 = vmatpush1.msra.mxu0 0.0
  %50 = vmatprep.subr.mxu0 0.0
  %51 = vmatpush1.msra.mxu0 0.0
  %52 = vmatprep.subr.mxu0 0.0
  %53 = vmatpush1.msra.mxu0 0.0
  %54 = vmatprep.subr.mxu0 0.0
  %55 = vmatpush1.msra.mxu0 0.0
  %56 = vmatprep.subr.mxu0 0.0
  %57 = vmatpush1.msra.mxu0 0.0
  %58 = vmatprep.subr.mxu0 0.0
  %59 = vmatpush1.msra.mxu0 0.0
  %60 = vmatprep.subr.mxu0 0.0
  %61 = vmatpush1.msra.mxu0 0.0
  %62 = vmatprep.subr.mxu0 0.0
  %63 = vmatpush1.msra.mxu0 0.0
  %64 = vmatprep.subr.mxu0 0.0
  %65 = vmatpush1.msra.mxu0 0.0
  %66 = vmatprep.subr.mxu0 0.0
  %67 = vmatpush1.msra.mxu0 0.0
  %68 = vmatprep.subr.mxu0 0.0
  %69 = vmatpush1.msra.mxu0 0.0
  %70 = vmatprep.subr.mxu0 0.0
  %71 = vmatpush1.msra.mxu0 0.0
  %72 = vmatprep.subr.mxu0 0.0
  %73 = vmatpush1.msra.mxu0 0.0
  %74 = vmatprep.subr.mxu0 0.0
  %75 = vmatpush1.msra.mxu0 0.0
  %76 = vmatprep.subr.mxu0 0.0
  %77 = vmatpush1.msra.mxu0 0.0
  %78 = vmatprep.subr.mxu0 0.0
  %79 = vmatpush1.msra.mxu0 0.0
  %80 = vmatprep.subr.mxu0 0.0
  %81 = vmatpush1.msra.mxu0 0.0
  %82 = vmatprep.subr.mxu0 0.0
  %83 = vmatpush1.msra.mxu0 0.0
  %84 = vmatprep.subr.mxu0 0.0
  %85 = vmatpush1.msra.mxu0 0.0
  %86 = vmatprep.subr.mxu0 0.0
  %87 = vmatpush1.msra.mxu0 0.0
  %88 = vmatprep.subr.mxu0 0.0
  %89 = vmatpush1.msra.mxu0 0.0
  %90 = vmatprep.subr.mxu0 0.0
  %91 = vmatpush1.msra.mxu0 0.0
  %92 = vmatprep.subr.mxu0 0.0
  %93 = vmatpush1.msra.mxu0 0.0
  %94 = vmatprep.mubr.f32.mxu0 0.0
  %95 = vmatmul.mubr.f32.gmra.mrb[0].mxu0 %v28
  %v96 = vpop.f32.mrb[0].mxu0
  %v97 = vadd.f32 %v24, %v96
  %v98 = vpop.f32.mrb[0].mxu0
  %99 = vdwg.mxu0
  %100 = vst [vmem:[%s3] sm:$0x3] %v97
  // Predicated region
  $region14: #{segment_generator_forward.8} parent=0 // pred_check
    _
  $region15: #{segment_generator_forward.8} parent=0 // pred_check_branch
    %102 = sbr.rel (0) target = $region17
  $region16: #{segment_generator_forward.8} parent=0 // pred_region
    _
  $region17: #{segment_generator_forward.8} parent=0 // pred_fallthru
    _
  // Predicated region
  $region18: #{segment_generator_forward.8} parent=0 // pred_check
    _
  $region19: #{segment_generator_forward.8} parent=0 // pred_check_branch
    %104 = sbr.rel (0) target = $region21
  $region20: #{segment_generator_forward.8} parent=0 // pred_region
    _
  $region21: #{segment_generator_forward.8} parent=0 // pred_fallthru
    _

// kernel: segment_generator_forward.9
$region0: #{segment_generator_forward.9}
  #allocation0 [shape = 'u32[]', space=smem, size = 0x4, offset = 0x4, fixed_abs, tag = 'smem constant byte address 0x4 - core index']
  #allocation1 [shape = 'u32[144,128]{1,0:T(1,128)}', space=vmem, size = 0x12000, scoped, tag = 'internal scratch']
  #allocation2 [shape = 'f32[1,1]{1,0:T(1,128)S(1)}', space=vmem, size = 0x200, scoped, tag = 'scoped memory for segment_generator_forward.9']
  %s0 = inlined_call_operand.vmem [shape: f32[2,32,4], index: 0, kind: input, shape index: {}]
  %s1 = inlined_call_operand.vmem [shape: f32[3,32,32], index: 1, kind: input, shape index: {}]
  %s2 = inlined_call_operand.vmem [shape: f32[3,32,32], index: 2, kind: input, shape index: {}]
  %s3 = inlined_call_operand.vmem [shape: f32[3,1,32], index: 3, kind: input, shape index: {}]
  %s4 = inlined_call_operand.vmem [shape: f32[32,1], index: 4, kind: input, shape index: {}]
  %s5 = inlined_call_operand.vmem [shape: f32[32,1], index: 5, kind: input, shape index: {}]
  %s6 = inlined_call_operand.<no memory space> [shape: f32[1,1], index: 6, kind: input, shape index: {}]
  %s7 = inlined_call_operand.vmem [shape: f32[2,1,32], index: 7, kind: output, shape index: {}]
  %s8 = sld [smem:[#allocation0]]
  $region61: #{segment_generator_forward.9} parent=0
    _
  %s10 = ssub.s32 1, %s8
  %s11 = scalar_select 0, %s10, %s8
  %v12 = vstv %s6
  %13 = vst [vmem:[#allocation2] sm:$0x1] %v12
  loop: start=0, step=1, limit=4
  $region2: #{segment_generator_forward.9} parent=0 // loop_pre_header
    _
  $region3: #{segment_generator_forward.9} parent=0 // loop_header
    %s15 = sphi 0, %s19
    %p16 = scmp.ge.s32.totalorder %s15, 4
    %s25 = sphi 0, %s27
    %s28 = sphi 0, %s25
    %s29 = sphi 0, %s28
    %s45 = sphi 0, %s29
    %s49 = sphi 0, %s49
    %s51 = sphi 0, %s49
    %s52 = sphi 0, %s51
    %s66 = sphi 0, %s52
    %s70 = sphi 0, %s70
    %s72 = sphi 0, %s70
    %s73 = sphi 0, %s72
    %s87 = sphi 0, %s73
    %s91 = sphi 0, %s91
    %s93 = sphi 0, %s91
    %s94 = sphi 0, %s93
    %s108 = sphi 0, %s94
    %s112 = sphi 0, %s112
    %s114 = sphi 0, %s112
    %s115 = sphi 0, %s114
    %s129 = sphi 0, %s115
    %s133 = sphi 0, %s133
    %s135 = sphi 0, %s133
    %s136 = sphi 0, %s135
    %s150 = sphi 0, %s136
    %s154 = sphi 0, %s154
    %s156 = sphi 0, %s154
    %s157 = sphi 0, %s156
    %s171 = sphi 0, %s157
    %s177 = sphi 0, %s179
    %s180 = sphi 0, %s177
    %s181 = sphi 0, %s180
    %s197 = sphi 0, %s181
  $region4: #{segment_generator_forward.9} parent=0 // loop_header_branch
    %18 = sbr.rel (%p16) target = $region8
  $region5: #{segment_generator_forward.9} parent=0 // loop_body
    %s20 = ssub.s32 %s15, 1
    %s21 = ssub.s32 %s15, 2
    %s22 = sadd.s32 %s15, 1
    %s23 = ssub.s32 %s15, %s22
    %p24 = scmp.eq.s32.totalorder %s23, 0
    %s26 = sadd.s32 %s25, 1
    %s27 = scalar_select %p24, %s25, %s26
    %p30 = pneg %p24
    %p31 = scmp.eq.s32.totalorder %s15, 1
    %p32 = por %p30, %p31
    %p33 = scmp.ne.s32.totalorder %s25, %s28
    %p34 = scmp.eq.s32.totalorder %s15, 0
    %p35 = por %p33, %p34
    %p36 = scmp.ne.s32.totalorder %s25, %s28
    %p37 = scmp.eq.s32.totalorder %s20, 1
    %p38 = por %p36, %p37
    %p39 = scmp.ne.s32.totalorder %s28, %s29
    %p40 = scmp.eq.s32.totalorder %s20, 0
    %p41 = por %p39, %p40
    %p42 = scmp.ne.s32.totalorder %s28, %s29
    %p43 = scmp.eq.s32.totalorder %s21, 1
    %p44 = por %p42, %p43
    %p46 = scmp.ne.s32.totalorder %s29, %s45
    %p47 = scmp.eq.s32.totalorder %s21, 0
    %p48 = por %p46, %p47
    %s50 = sadd.s32 %s49, 1
    %p53 = scmp.eq.s32.totalorder %s15, 1
    %p54 = scmp.ne.s32.totalorder %s49, %s51
    %p55 = scmp.eq.s32.totalorder %s15, 0
    %p56 = por %p54, %p55
    %p57 = scmp.ne.s32.totalorder %s49, %s51
    %p58 = scmp.eq.s32.totalorder %s20, 1
    %p59 = por %p57, %p58
    %p60 = scmp.ne.s32.totalorder %s51, %s52
    %p61 = scmp.eq.s32.totalorder %s20, 0
    %p62 = por %p60, %p61
    %p63 = scmp.ne.s32.totalorder %s51, %s52
    %p64 = scmp.eq.s32.totalorder %s21, 1
    %p65 = por %p63, %p64
    %p67 = scmp.ne.s32.totalorder %s52, %s66
    %p68 = scmp.eq.s32.totalorder %s21, 0
    %p69 = por %p67, %p68
    %s71 = sadd.s32 %s70, 1
    %p74 = scmp.eq.s32.totalorder %s15, 1
    %p75 = scmp.ne.s32.totalorder %s70, %s72
    %p76 = scmp.eq.s32.totalorder %s15, 0
    %p77 = por %p75, %p76
    %p78 = scmp.ne.s32.totalorder %s70, %s72
    %p79 = scmp.eq.s32.totalorder %s20, 1
    %p80 = por %p78, %p79
    %p81 = scmp.ne.s32.totalorder %s72, %s73
    %p82 = scmp.eq.s32.totalorder %s20, 0
    %p83 = por %p81, %p82
    %p84 = scmp.ne.s32.totalorder %s72, %s73
    %p85 = scmp.eq.s32.totalorder %s21, 1
    %p86 = por %p84, %p85
    %p88 = scmp.ne.s32.totalorder %s73, %s87
    %p89 = scmp.eq.s32.totalorder %s21, 0
    %p90 = por %p88, %p89
    %s92 = sadd.s32 %s91, 1
    %p95 = scmp.eq.s32.totalorder %s15, 1
    %p96 = scmp.ne.s32.totalorder %s91, %s93
    %p97 = scmp.eq.s32.totalorder %s15, 0
    %p98 = por %p96, %p97
    %p99 = scmp.ne.s32.totalorder %s91, %s93
    %p100 = scmp.eq.s32.totalorder %s20, 1
    %p101 = por %p99, %p100
    %p102 = scmp.ne.s32.totalorder %s93, %s94
    %p103 = scmp.eq.s32.totalorder %s20, 0
    %p104 = por %p102, %p103
    %p105 = scmp.ne.s32.totalorder %s93, %s94
    %p106 = scmp.eq.s32.totalorder %s21, 1
    %p107 = por %p105, %p106
    %p109 = scmp.ne.s32.totalorder %s94, %s108
    %p110 = scmp.eq.s32.totalorder %s21, 0
    %p111 = por %p109, %p110
    %s113 = sadd.s32 %s112, 1
    %p116 = scmp.eq.s32.totalorder %s15, 1
    %p117 = scmp.ne.s32.totalorder %s112, %s114
    %p118 = scmp.eq.s32.totalorder %s15, 0
    %p119 = por %p117, %p118
    %p120 = scmp.ne.s32.totalorder %s112, %s114
    %p121 = scmp.eq.s32.totalorder %s20, 1
    %p122 = por %p120, %p121
    %p123 = scmp.ne.s32.totalorder %s114, %s115
    %p124 = scmp.eq.s32.totalorder %s20, 0
    %p125 = por %p123, %p124
    %p126 = scmp.ne.s32.totalorder %s114, %s115
    %p127 = scmp.eq.s32.totalorder %s21, 1
    %p128 = por %p126, %p127
    %p130 = scmp.ne.s32.totalorder %s115, %s129
    %p131 = scmp.eq.s32.totalorder %s21, 0
    %p132 = por %p130, %p131
    %s134 = sadd.s32 %s133, 1
    %p137 = scmp.eq.s32.totalorder %s15, 1
    %p138 = scmp.ne.s32.totalorder %s133, %s135
    %p139 = scmp.eq.s32.totalorder %s15, 0
    %p140 = por %p138, %p139
    %p141 = scmp.ne.s32.totalorder %s133, %s135
    %p142 = scmp.eq.s32.totalorder %s20, 1
    %p143 = por %p141, %p142
    %p144 = scmp.ne.s32.totalorder %s135, %s136
    %p145 = scmp.eq.s32.totalorder %s20, 0
    %p146 = por %p144, %p145
    %p147 = scmp.ne.s32.totalorder %s135, %s136
    %p148 = scmp.eq.s32.totalorder %s21, 1
    %p149 = por %p147, %p148
    %p151 = scmp.ne.s32.totalorder %s136, %s150
    %p152 = scmp.eq.s32.totalorder %s21, 0
    %p153 = por %p151, %p152
    %s155 = sadd.s32 %s154, 1
    %p158 = scmp.eq.s32.totalorder %s15, 1
    %p159 = scmp.ne.s32.totalorder %s154, %s156
    %p160 = scmp.eq.s32.totalorder %s15, 0
    %p161 = por %p159, %p160
    %p162 = scmp.ne.s32.totalorder %s154, %s156
    %p163 = scmp.eq.s32.totalorder %s20, 1
    %p164 = por %p162, %p163
    %p165 = scmp.ne.s32.totalorder %s156, %s157
    %p166 = scmp.eq.s32.totalorder %s20, 0
    %p167 = por %p165, %p166
    %p168 = scmp.ne.s32.totalorder %s156, %s157
    %p169 = scmp.eq.s32.totalorder %s21, 1
    %p170 = por %p168, %p169
    %p172 = scmp.ne.s32.totalorder %s157, %s171
    %p173 = scmp.eq.s32.totalorder %s21, 0
    %p174 = por %p172, %p173
    %s175 = ssub.s32 %s15, %s22
    %p176 = scmp.eq.s32.totalorder %s175, 0
    %s178 = sadd.s32 %s177, 1
    %s179 = scalar_select %p176, %s177, %s178
    %p182 = pneg %p176
    %p183 = scmp.eq.s32.totalorder %s15, 1
    %p184 = por %p182, %p183
    %p185 = scmp.ne.s32.totalorder %s177, %s180
    %p186 = scmp.eq.s32.totalorder %s15, 0
    %p187 = por %p185, %p186
    %p188 = scmp.ne.s32.totalorder %s177, %s180
    %p189 = scmp.eq.s32.totalorder %s20, 1
    %p190 = por %p188, %p189
    %p191 = scmp.ne.s32.totalorder %s180, %s181
    %p192 = scmp.eq.s32.totalorder %s20, 0
    %p193 = por %p191, %p192
    %p194 = scmp.ne.s32.totalorder %s180, %s181
    %p195 = scmp.eq.s32.totalorder %s21, 1
    %p196 = por %p194, %p195
    %p198 = scmp.ne.s32.totalorder %s181, %s197
    %p199 = scmp.eq.s32.totalorder %s21, 0
    %p200 = por %p198, %p199
    %p201 = scmp.le.s32.totalorder 1, %s15
    %p202 = scmp.lt.s32.totalorder %s15, 3
    %p203 = pnand %p201, %p202
    %p204 = pneg %p203
    // Predicated region
    $region9: #{segment_generator_forward.9} parent=5 // pred_check
      _
    $region10: #{segment_generator_forward.9} parent=5 // pred_check_branch
      %206 = sbr.rel (%p203) target = $region12
    $region11: #{segment_generator_forward.9} parent=5 // pred_region
      %s207 = ssub.s32 %s15, 1
      // Predicated region
      $region13: #{segment_generator_forward.9} parent=11 // pred_check
        %p208 = pneg %p62
      $region14: #{segment_generator_forward.9} parent=11 // pred_check_branch
        %210 = sbr.rel (%p208) target = $region16
      $region15: #{segment_generator_forward.9} parent=11 // pred_region
        _
      $region16: #{segment_generator_forward.9} parent=11 // pred_fallthru
        _
      // Predicated region
      $region17: #{segment_generator_forward.9} parent=11 // pred_check
        %p211 = pneg %p83
      $region18: #{segment_generator_forward.9} parent=11 // pred_check_branch
        %213 = sbr.rel (%p211) target = $region20
      $region19: #{segment_generator_forward.9} parent=11 // pred_region
        _
      $region20: #{segment_generator_forward.9} parent=11 // pred_fallthru
        _
      // Predicated region
      $region21: #{segment_generator_forward.9} parent=11 // pred_check
        %p214 = pneg %p104
      $region22: #{segment_generator_forward.9} parent=11 // pred_check_branch
        %216 = sbr.rel (%p214) target = $region24
      $region23: #{segment_generator_forward.9} parent=11 // pred_region
        _
      $region24: #{segment_generator_forward.9} parent=11 // pred_fallthru
        _
      // Predicated region
      $region25: #{segment_generator_forward.9} parent=11 // pred_check
        %p217 = pneg %p125
      $region26: #{segment_generator_forward.9} parent=11 // pred_check_branch
        %219 = sbr.rel (%p217) target = $region28
      $region27: #{segment_generator_forward.9} parent=11 // pred_region
        _
      $region28: #{segment_generator_forward.9} parent=11 // pred_fallthru
        _
      // Predicated region
      $region29: #{segment_generator_forward.9} parent=11 // pred_check
        %p220 = pneg %p146
      $region30: #{segment_generator_forward.9} parent=11 // pred_check_branch
        %222 = sbr.rel (%p220) target = $region32
      $region31: #{segment_generator_forward.9} parent=11 // pred_region
        _
      $region32: #{segment_generator_forward.9} parent=11 // pred_fallthru
        _
      // Predicated region
      $region33: #{segment_generator_forward.9} parent=11 // pred_check
        %p223 = pneg %p167
      $region34: #{segment_generator_forward.9} parent=11 // pred_check_branch
        %225 = sbr.rel (%p223) target = $region36
      $region35: #{segment_generator_forward.9} parent=11 // pred_region
        _
      $region36: #{segment_generator_forward.9} parent=11 // pred_fallthru
        _
    $region12: #{segment_generator_forward.9} parent=5 // pred_fallthru
      _
    %p226 = scmp.lt.s32.totalorder %s15, 2
    // Predicated region
    $region37: #{segment_generator_forward.9} parent=5 // pred_check
      %p227 = pneg %p226
    $region38: #{segment_generator_forward.9} parent=5 // pred_check_branch
      %229 = sbr.rel (%p227) target = $region40
    $region39: #{segment_generator_forward.9} parent=5 // pred_region
      // Predicated region
      $region41: #{segment_generator_forward.9} parent=39 // pred_check
        %p230 = pneg %p35
      $region42: #{segment_generator_forward.9} parent=39 // pred_check_branch
        %232 = sbr.rel (%p230) target = $region44
      $region43: #{segment_generator_forward.9} parent=39 // pred_region
        %p233 = scmp.lt.s32.totalorder %s15, 1
        %s234 = scalar_select %p233, %s15, 1
        %s235 = smul.addr %s234, 4
        %s236 = smul.addr %s235, 8
        %s237 = scalar_lea.vmem %s0, %s236
      $region44: #{segment_generator_forward.9} parent=39 // pred_fallthru
        _
    $region40: #{segment_generator_forward.9} parent=5 // pred_fallthru
      _
    %p238 = scmp.le.s32.totalorder 1, %s15
    %p239 = scmp.lt.s32.totalorder %s15, 3
    %p240 = pnand %p238, %p239
    %p241 = pneg %p240
    // Predicated region
    $region45: #{segment_generator_forward.9} parent=5 // pred_check
      _
    $region46: #{segment_generator_forward.9} parent=5 // pred_check_branch
      %243 = sbr.rel (%p240) target = $region48
    $region47: #{segment_generator_forward.9} parent=5 // pred_region
      %s244 = ssub.s32 %s15, 1
      %p245 = scmp.lt.s32.totalorder %s20, 1
      %s246 = scalar_select %p245, %s20, 1
      %s247 = smul.addr %s246, 4
      %s248 = smul.addr %s247, 8
      %s249 = scalar_lea.vmem %s0, %s248
      %p250 = pneg %p41
      %p251 = pneg %p38
      %p252 = pneg %p62
      %p253 = pneg %p59
      %p254 = pneg %p83
      %p255 = pneg %p80
      %p256 = pneg %p104
      %p257 = pneg %p101
      %p258 = pneg %p125
      %p259 = pneg %p122
      %p260 = pneg %p146
      %p261 = pneg %p143
      %p262 = pneg %p167
      %p263 = pneg %p164
      %p264 = pneg %p193
      %p265 = pneg %p190
      %p266 = scmp.lt.s32.totalorder %s20, 1
      %s267 = scalar_select %p266, %s20, 1
      %s268 = scalar_lea.vmem %s7, %s267
      %p269 = scmp.lt.s32.totalorder %s20, 1
      %s270 = scalar_select %p269, %s20, 1
      %s271 = smul.addr %s270, 4
      %s272 = smul.addr %s271, 8
      %s273 = scalar_lea.vmem %s0, %s272
      %p274 = scmp.lt.s32.totalorder %s20, 1
      %s275 = scalar_select %p274, %s20, 1
      %s276 = scalar_lea.vmem %s7, %s275
      %v277 = vld [vmem:[%s273] sm:$0xff]
      %v278 = vld [vmem:[%s273 + $0x8] sm:$0xff]
      %v279 = vld [vmem:[%s273 + $0x10] sm:$0xff]
      %v280 = vld [vmem:[%s273 + $0x18] sm:$0xff]
      %v281 = vlaneseq
      %v282 = vshrl.u32 %v281, 7
      %v283 = vlaneseq
      %v284 = vand.u32 %v283, 127
      %v285 = vadd.s32 %v284, 4294967295
      %vm286 = vcmp.ge.s32.totalorder %v285, 0
      %vm287 = vcmp.lt.s32.totalorder %v285, 8
      %vm288 = vmand %vm286, %vm287
      %v289 = vmul.u32 %v282, 2
      %vm290 = vcmp.eq.s32.totalorder %v285, %v289
      %v291 = vadd.s32 %v289, 1
      %vm292 = vcmp.eq.s32.totalorder %v285, %v291
      %vm293 = vmor %vm290, %vm292
      %vm294 = vmand %vm288, %vm293
      %v295 = vsel %vm294, 1, 0
      %v296 = vcvt.s32.f32 %v295
      %vm297 = vcmask 31744
      %v299 = vsel %vm297, %v277, 0
      %v302 = vsel %vm297, %v278, 0
      %v305 = vsel %vm297, %v279, 0
      %v308 = vsel %vm297, %v280, 0
      %vm310 = vcmask 1043456
      %v312 = vsel %vm310, %v296, 0
      %314 = vmatprep.subr.mxu0 0.0
      %315 = vmatpush1.msra.mxu0 %v312
      %316 = vmatprep.subr.mxu0 0.0
      %317 = vmatpush1.msra.mxu0 0.0
      %318 = vmatprep.subr.mxu0 0.0
      %319 = vmatpush1.msra.mxu0 0.0
      %320 = vmatprep.subr.mxu0 0.0
      %321 = vmatpush1.msra.mxu0 0.0
      %322 = vmatprep.subr.mxu0 0.0
      %323 = vmatpush1.msra.mxu0 0.0
      %324 = vmatprep.subr.mxu0 0.0
      %325 = vmatpush1.msra.mxu0 0.0
      %326 = vmatprep.subr.mxu0 0.0
      %327 = vmatpush1.msra.mxu0 0.0
      %328 = vmatprep.subr.mxu0 0.0
      %329 = vmatpush1.msra.mxu0 0.0
      %330 = vmatprep.subr.mxu0 0.0
      %331 = vmatpush1.msra.mxu0 0.0
      %332 = vmatprep.subr.mxu0 0.0
      %333 = vmatpush1.msra.mxu0 0.0
      %334 = vmatprep.subr.mxu0 0.0
      %335 = vmatpush1.msra.mxu0 0.0
      %336 = vmatprep.subr.mxu0 0.0
      %337 = vmatpush1.msra.mxu0 0.0
      %338 = vmatprep.subr.mxu0 0.0
      %339 = vmatpush1.msra.mxu0 0.0
      %340 = vmatprep.subr.mxu0 0.0
      %341 = vmatpush1.msra.mxu0 0.0
      %342 = vmatprep.subr.mxu0 0.0
      %343 = vmatpush1.msra.mxu0 0.0
      %344 = vmatprep.subr.mxu0 0.0
      %345 = vmatpush1.msra.mxu0 0.0
      %346 = vmatprep.subr.mxu0 0.0
      %347 = vmatpush1.msra.mxu0 0.0
      %348 = vmatprep.subr.mxu0 0.0
      %349 = vmatpush1.msra.mxu0 0.0
      %350 = vmatprep.subr.mxu0 0.0
      %351 = vmatpush1.msra.mxu0 0.0
      %352 = vmatprep.subr.mxu0 0.0
      %353 = vmatpush1.msra.mxu0 0.0
      %354 = vmatprep.subr.mxu0 0.0
      %355 = vmatpush1.msra.mxu0 0.0
      %356 = vmatprep.subr.mxu0 0.0
      %357 = vmatpush1.msra.mxu0 0.0
      %358 = vmatprep.subr.mxu0 0.0
      %359 = vmatpush1.msra.mxu0 0.0
      %360 = vmatprep.subr.mxu0 0.0
      %361 = vmatpush1.msra.mxu0 0.0
      %362 = vmatprep.subr.mxu0 0.0
      %363 = vmatpush1.msra.mxu0 0.0
      %364 = vmatprep.subr.mxu0 0.0
      %365 = vmatpush1.msra.mxu0 0.0
      %366 = vmatprep.subr.mxu0 0.0
      %367 = vmatpush1.msra.mxu0 0.0
      %368 = vmatprep.subr.mxu0 0.0
      %369 = vmatpush1.msra.mxu0 0.0
      %370 = vmatprep.subr.mxu0 0.0
      %371 = vmatpush1.msra.mxu0 0.0
      %372 = vmatprep.subr.mxu0 0.0
      %373 = vmatpush1.msra.mxu0 0.0
      %374 = vmatprep.subr.mxu0 0.0
      %375 = vmatpush1.msra.mxu0 0.0
      %376 = vmatprep.subr.mxu0 0.0
      %377 = vmatpush1.msra.mxu0 0.0
      %378 = vmatprep.mubr.f32.mxu0 0.0
      %379 = vmatmul.mubr.f32.gmra.mrb[0].mxu0 %v299
      %v380 = vpop.f32.mrb[0].mxu0
      %v381 = vadd.f32 0.0, %v380
      %v382 = vpop.f32.mrb[0].mxu0
      %383 = vmatprep.mubr.f32.mxu0 0.0
      %384 = vmatmul.mubr.f32.gmra.mrb[0].mxu0 %v302
      %v385 = vpop.f32.mrb[0].mxu0
      %v386 = vadd.f32 0.0, %v385
      %v387 = vpop.f32.mrb[0].mxu0
      %388 = vmatprep.mubr.f32.mxu0 0.0
      %389 = vmatmul.mubr.f32.gmra.mrb[0].mxu0 %v305
      %v390 = vpop.f32.mrb[0].mxu0
      %v391 = vadd.f32 0.0, %v390
      %v392 = vpop.f32.mrb[0].mxu0
      %393 = vmatprep.mubr.f32.mxu0 0.0
      %394 = vmatmul.mubr.f32.gmra.mrb[0].mxu0 %v308
      %v395 = vpop.f32.mrb[0].mxu0
      %v396 = vadd.f32 0.0, %v395
      %v397 = vpop.f32.mrb[0].mxu0
      %398 = vdwg.mxu0
      %v399 = vld [vmem:[%s1] sm:$0xff]
      %v400 = vld [vmem:[%s1 + $0x8] sm:$0xff]
      %v401 = vld [vmem:[%s1 + $0x10] sm:$0xff]
      %v402 = vld [vmem:[%s1 + $0x18] sm:$0xff]
      %vm403 = vcmp.ge.s32.totalorder %v284, 0
      %vm404 = vcmp.lt.s32.totalorder %v284, 8
      %vm405 = vmand %vm403, %vm404
      %vm406 = vcmp.eq.s32.totalorder %v284, %v289
      %vm407 = vcmp.eq.s32.totalorder %v284, %v291
      %vm408 = vmor %vm406, %vm407
      %vm409 = vmand %vm405, %vm408
      %v410 = vsel %vm409, 1, 0
      %v411 = vcvt.s32.f32 %v410
      %v413 = vsel %vm310, %v411, 0
      %415 = vmatprep.subr.mxu0 0.0
      %416 = vmatpush1.msra.mxu0 %v413
      %417 = vmatprep.subr.mxu0 0.0
      %418 = vmatpush1.msra.mxu0 0.0
      %419 = vmatprep.subr.mxu0 0.0
      %420 = vmatpush1.msra.mxu0 0.0
      %421 = vmatprep.subr.mxu0 0.0
      %422 = vmatpush1.msra.mxu0 0.0
      %423 = vmatprep.subr.mxu0 0.0
      %424 = vmatpush1.msra.mxu0 0.0
      %425 = vmatprep.subr.mxu0 0.0
      %426 = vmatpush1.msra.mxu0 0.0
      %427 = vmatprep.subr.mxu0 0.0
      %428 = vmatpush1.msra.mxu0 0.0
      %429 = vmatprep.subr.mxu0 0.0
      %430 = vmatpush1.msra.mxu0 0.0
      %431 = vmatprep.subr.mxu0 0.0
      %432 = vmatpush1.msra.mxu0 0.0
      %433 = vmatprep.subr.mxu0 0.0
      %434 = vmatpush1.msra.mxu0 0.0
      %435 = vmatprep.subr.mxu0 0.0
      %436 = vmatpush1.msra.mxu0 0.0
      %437 = vmatprep.subr.mxu0 0.0
      %438 = vmatpush1.msra.mxu0 0.0
      %439 = vmatprep.subr.mxu0 0.0
      %440 = vmatpush1.msra.mxu0 0.0
      %441 = vmatprep.subr.mxu0 0.0
      %442 = vmatpush1.msra.mxu0 0.0
      %443 = vmatprep.subr.mxu0 0.0
      %444 = vmatpush1.msra.mxu0 0.0
      %445 = vmatprep.subr.mxu0 0.0
      %446 = vmatpush1.msra.mxu0 0.0
      %447 = vmatprep.subr.mxu0 0.0
      %448 = vmatpush1.msra.mxu0 0.0
      %449 = vmatprep.subr.mxu0 0.0
      %450 = vmatpush1.msra.mxu0 0.0
      %451 = vmatprep.subr.mxu0 0.0
      %452 = vmatpush1.msra.mxu0 0.0
      %453 = vmatprep.subr.mxu0 0.0
      %454 = vmatpush1.msra.mxu0 0.0
      %455 = vmatprep.subr.mxu0 0.0
      %456 = vmatpush1.msra.mxu0 0.0
      %457 = vmatprep.subr.mxu0 0.0
      %458 = vmatpush1.msra.mxu0 0.0
      %459 = vmatprep.subr.mxu0 0.0
      %460 = vmatpush1.msra.mxu0 0.0
      %461 = vmatprep.subr.mxu0 0.0
      %462 = vmatpush1.msra.mxu0 0.0
      %463 = vmatprep.subr.mxu0 0.0
      %464 = vmatpush1.msra.mxu0 0.0
      %465 = vmatprep.subr.mxu0 0.0
      %466 = vmatpush1.msra.mxu0 0.0
      %467 = vmatprep.subr.mxu0 0.0
      %468 = vmatpush1.msra.mxu0 0.0
      %469 = vmatprep.subr.mxu0 0.0
      %470 = vmatpush1.msra.mxu0 0.0
      %471 = vmatprep.subr.mxu0 0.0
      %472 = vmatpush1.msra.mxu0 0.0
      %473 = vmatprep.subr.mxu0 0.0
      %474 = vmatpush1.msra.mxu0 0.0
      %475 = vmatprep.subr.mxu0 0.0
      %476 = vmatpush1.msra.mxu0 0.0
      %477 = vmatprep.subr.mxu0 0.0
      %478 = vmatpush1.msra.mxu0 0.0
      %479 = vmatprep.mubr.f32.mxu0 0.0
      %480 = vmatmul.mubr.f32.gmra.mrb[0].mxu0 %v299
      %v481 = vpop.f32.mrb[0].mxu0
      %v482 = vadd.f32 0.0, %v481
      %v483 = vpop.f32.mrb[0].mxu0
      %484 = vmatprep.mubr.f32.mxu0 0.0
      %485 = vmatmul.mubr.f32.gmra.mrb[0].mxu0 %v302
      %v486 = vpop.f32.mrb[0].mxu0
      %v487 = vadd.f32 0.0, %v486
      %v488 = vpop.f32.mrb[0].mxu0
      %489 = vmatprep.mubr.f32.mxu0 0.0
      %490 = vmatmul.mubr.f32.gmra.mrb[0].mxu0 %v305
      %v491 = vpop.f32.mrb[0].mxu0
      %v492 = vadd.f32 0.0, %v491
      %v493 = vpop.f32.mrb[0].mxu0
      %494 = vmatprep.mubr.f32.mxu0 0.0
      %495 = vmatmul.mubr.f32.gmra.mrb[0].mxu0 %v308
      %v496 = vpop.f32.mrb[0].mxu0
      %v497 = vadd.f32 0.0, %v496
      %v498 = vpop.f32.mrb[0].mxu0
      %499 = vdwg.mxu0
      %s500 = scalar_lea.vmem %s1, 32
      %v501 = vld [vmem:[%s500] sm:$0xff]
      %v502 = vld [vmem:[%s500 + $0x8] sm:$0xff]
      %v503 = vld [vmem:[%s500 + $0x10] sm:$0xff]
      %v504 = vld [vmem:[%s500 + $0x18] sm:$0xff]
      %vm505 = vcmask 261120
      %v507 = vsel %vm505, %v501, 0
      %v510 = vsel %vm505, %v502, 0
      %v513 = vsel %vm505, %v503, 0
      %v516 = vsel %vm505, %v504, 0
      %518 = vmatprep.subr.mxu0 0.0
      %519 = vmatpush1.msra.mxu0 %v482
      %520 = vmatprep.subr.mxu0 0.0
      %521 = vmatpush1.msra.mxu0 %v487
      %522 = vmatprep.subr.mxu0 0.0
      %523 = vmatpush1.msra.mxu0 %v492
      %524 = vmatprep.subr.mxu0 0.0
      %525 = vmatpush1.msra.mxu0 %v497
      %526 = vmatprep.subr.mxu0 0.0
      %527 = vmatpush1.msra.mxu0 0.0
      %528 = vmatprep.subr.mxu0 0.0
      %529 = vmatpush1.msra.mxu0 0.0
      %530 = vmatprep.subr.mxu0 0.0
      %531 = vmatpush1.msra.mxu0 0.0
      %532 = vmatprep.subr.mxu0 0.0
      %533 = vmatpush1.msra.mxu0 0.0
      %534 = vmatprep.subr.mxu0 0.0
      %535 = vmatpush1.msra.mxu0 0.0
      %536 = vmatprep.subr.mxu0 0.0
      %537 = vmatpush1.msra.mxu0 0.0
      %538 = vmatprep.subr.mxu0 0.0
      %539 = vmatpush1.msra.mxu0 0.0
      %540 = vmatprep.subr.mxu0 0.0
      %541 = vmatpush1.msra.mxu0 0.0
      %542 = vmatprep.subr.mxu0 0.0
      %543 = vmatpush1.msra.mxu0 0.0
      %544 = vmatprep.subr.mxu0 0.0
      %545 = vmatpush1.msra.mxu0 0.0
      %546 = vmatprep.subr.mxu0 0.0
      %547 = vmatpush1.msra.mxu0 0.0
      %548 = vmatprep.subr.mxu0 0.0
      %549 = vmatpush1.msra.mxu0 0.0
      %550 = vmatprep.subr.mxu0 0.0
      %551 = vmatpush1.msra.mxu0 0.0
      %552 = vmatprep.subr.mxu0 0.0
      %553 = vmatpush1.msra.mxu0 0.0
      %554 = vmatprep.subr.mxu0 0.0
      %555 = vmatpush1.msra.mxu0 0.0
      %556 = vmatprep.subr.mxu0 0.0
      %557 = vmatpush1.msra.mxu0 0.0
      %558 = vmatprep.subr.mxu0 0.0
      %559 = vmatpush1.msra.mxu0 0.0
      %560 = vmatprep.subr.mxu0 0.0
      %561 = vmatpush1.msra.mxu0 0.0
      %562 = vmatprep.subr.mxu0 0.0
      %563 = vmatpush1.msra.mxu0 0.0
      %564 = vmatprep.subr.mxu0 0.0
      %565 = vmatpush1.msra.mxu0 0.0
      %566 = vmatprep.subr.mxu0 0.0
      %567 = vmatpush1.msra.mxu0 0.0
      %568 = vmatprep.subr.mxu0 0.0
      %569 = vmatpush1.msra.mxu0 0.0
      %570 = vmatprep.subr.mxu0 0.0
      %571 = vmatpush1.msra.mxu0 0.0
      %572 = vmatprep.subr.mxu0 0.0
      %573 = vmatpush1.msra.mxu0 0.0
      %574 = vmatprep.subr.mxu0 0.0
      %575 = vmatpush1.msra.mxu0 0.0
      %576 = vmatprep.subr.mxu0 0.0
      %577 = vmatpush1.msra.mxu0 0.0
      %578 = vmatprep.subr.mxu0 0.0
      %579 = vmatpush1.msra.mxu0 0.0
      %580 = vmatprep.subr.mxu0 0.0
      %581 = vmatpush1.msra.mxu0 0.0
      %582 = vmatprep.mubr.f32.mxu0 0.0
      %583 = vmatmul.mubr.f32.gmra.mrb[0].mxu0 %v507
      %v584 = vpop.f32.mrb[0].mxu0
      %v585 = vadd.f32 0.0, %v584
      %v586 = vpop.f32.mrb[0].mxu0
      %587 = vmatprep.mubr.f32.mxu0 0.0
      %588 = vmatmul.mubr.f32.gmra.mrb[0].mxu0 %v510
      %v589 = vpop.f32.mrb[0].mxu0
      %v590 = vadd.f32 0.0, %v589
      %v591 = vpop.f32.mrb[0].mxu0
      %592 = vmatprep.mubr.f32.mxu0 0.0
      %593 = vmatmul.mubr.f32.gmra.mrb[0].mxu0 %v513
      %v594 = vpop.f32.mrb[0].mxu0
      %v595 = vadd.f32 0.0, %v594
      %v596 = vpop.f32.mrb[0].mxu0
      %597 = vmatprep.mubr.f32.mxu0 0.0
      %598 = vmatmul.mubr.f32.gmra.mrb[0].mxu0 %v516
      %v599 = vpop.f32.mrb[0].mxu0
      %v600 = vadd.f32 0.0, %v599
      %v601 = vpop.f32.mrb[0].mxu0
      %602 = vdwg.mxu0
      %v604 = vsel %vm505, %v399, 0
      %v607 = vsel %vm505, %v400, 0
      %v610 = vsel %vm505, %v401, 0
      %v613 = vsel %vm505, %v402, 0
      %615 = vmatprep.subr.mxu0 0.0
      %616 = vmatpush1.msra.mxu0 %v381
      %617 = vmatprep.subr.mxu0 0.0
      %618 = vmatpush1.msra.mxu0 %v386
      %619 = vmatprep.subr.mxu0 0.0
      %620 = vmatpush1.msra.mxu0 %v391
      %621 = vmatprep.subr.mxu0 0.0
      %622 = vmatpush1.msra.mxu0 %v396
      %623 = vmatprep.subr.mxu0 0.0
      %624 = vmatpush1.msra.mxu0 0.0
      %625 = vmatprep.subr.mxu0 0.0
      %626 = vmatpush1.msra.mxu0 0.0
      %627 = vmatprep.subr.mxu0 0.0
      %628 = vmatpush1.msra.mxu0 0.0
      %629 = vmatprep.subr.mxu0 0.0
      %630 = vmatpush1.msra.mxu0 0.0
      %631 = vmatprep.subr.mxu0 0.0
      %632 = vmatpush1.msra.mxu0 0.0
      %633 = vmatprep.subr.mxu0 0.0
      %634 = vmatpush1.msra.mxu0 0.0
      %635 = vmatprep.subr.mxu0 0.0
      %636 = vmatpush1.msra.mxu0 0.0
      %637 = vmatprep.subr.mxu0 0.0
      %638 = vmatpush1.msra.mxu0 0.0
      %639 = vmatprep.subr.mxu0 0.0
      %640 = vmatpush1.msra.mxu0 0.0
      %641 = vmatprep.subr.mxu0 0.0
      %642 = vmatpush1.msra.mxu0 0.0
      %643 = vmatprep.subr.mxu0 0.0
      %644 = vmatpush1.msra.mxu0 0.0
      %645 = vmatprep.subr.mxu0 0.0
      %646 = vmatpush1.msra.mxu0 0.0
      %647 = vmatprep.subr.mxu0 0.0
      %648 = vmatpush1.msra.mxu0 0.0
      %649 = vmatprep.subr.mxu0 0.0
      %650 = vmatpush1.msra.mxu0 0.0
      %651 = vmatprep.subr.mxu0 0.0
      %652 = vmatpush1.msra.mxu0 0.0
      %653 = vmatprep.subr.mxu0 0.0
      %654 = vmatpush1.msra.mxu0 0.0
      %655 = vmatprep.subr.mxu0 0.0
      %656 = vmatpush1.msra.mxu0 0.0
      %657 = vmatprep.subr.mxu0 0.0
      %658 = vmatpush1.msra.mxu0 0.0
      %659 = vmatprep.subr.mxu0 0.0
      %660 = vmatpush1.msra.mxu0 0.0
      %661 = vmatprep.subr.mxu0 0.0
      %662 = vmatpush1.msra.mxu0 0.0
      %663 = vmatprep.subr.mxu0 0.0
      %664 = vmatpush1.msra.mxu0 0.0
      %665 = vmatprep.subr.mxu0 0.0
      %666 = vmatpush1.msra.mxu0 0.0
      %667 = vmatprep.subr.mxu0 0.0
      %668 = vmatpush1.msra.mxu0 0.0
      %669 = vmatprep.subr.mxu0 0.0
      %670 = vmatpush1.msra.mxu0 0.0
      %671 = vmatprep.subr.mxu0 0.0
      %672 = vmatpush1.msra.mxu0 0.0
      %673 = vmatprep.subr.mxu0 0.0
      %674 = vmatpush1.msra.mxu0 0.0
      %675 = vmatprep.subr.mxu0 0.0
      %676 = vmatpush1.msra.mxu0 0.0
      %677 = vmatprep.subr.mxu0 0.0
      %678 = vmatpush1.msra.mxu0 0.0
      %679 = vmatprep.mubr.f32.mxu0 0.0
      %680 = vmatmul.mubr.f32.gmra.mrb[0].mxu0 %v604
      %v681 = vpop.f32.mrb[0].mxu0
      %v682 = vadd.f32 %v585, %v681
      %v683 = vpop.f32.mrb[0].mxu0
      %684 = vmatprep.mubr.f32.mxu0 0.0
      %685 = vmatmul.mubr.f32.gmra.mrb[0].mxu0 %v607
      %v686 = vpop.f32.mrb[0].mxu0
      %v687 = vadd.f32 %v590, %v686
      %v688 = vpop.f32.mrb[0].mxu0
      %689 = vmatprep.mubr.f32.mxu0 0.0
      %690 = vmatmul.mubr.f32.gmra.mrb[0].mxu0 %v610
      %v691 = vpop.f32.mrb[0].mxu0
      %v692 = vadd.f32 %v595, %v691
      %v693 = vpop.f32.mrb[0].mxu0
      %694 = vmatprep.mubr.f32.mxu0 0.0
      %695 = vmatmul.mubr.f32.gmra.mrb[0].mxu0 %v613
      %v696 = vpop.f32.mrb[0].mxu0
      %v697 = vadd.f32 %v600, %v696
      %v698 = vpop.f32.mrb[0].mxu0
      %699 = vdwg.mxu0
      %v700 = vadd.s32 %v284, 1
      %vm701 = vcmp.ge.s32.totalorder %v700, 0
      %vm702 = vcmp.lt.s32.totalorder %v700, 8
      %vm703 = vmand %vm701, %vm702
      %vm704 = vcmp.eq.s32.totalorder %v700, %v289
      %vm705 = vcmp.eq.s32.totalorder %v700, %v291
      %vm706 = vmor %vm704, %vm705
      %vm707 = vmand %vm703, %vm706
      %v708 = vsel %vm707, 1, 0
      %v709 = vcvt.s32.f32 %v708
      %v711 = vsel %vm310, %v709, 0
      %713 = vmatprep.subr.mxu0 0.0
      %714 = vmatpush1.msra.mxu0 %v711
      %715 = vmatprep.subr.mxu0 0.0
      %716 = vmatpush1.msra.mxu0 0.0
      %717 = vmatprep.subr.mxu0 0.0
      %718 = vmatpush1.msra.mxu0 0.0
      %719 = vmatprep.subr.mxu0 0.0
      %720 = vmatpush1.msra.mxu0 0.0
      %721 = vmatprep.subr.mxu0 0.0
      %722 = vmatpush1.msra.mxu0 0.0
      %723 = vmatprep.subr.mxu0 0.0
      %724 = vmatpush1.msra.mxu0 0.0
      %725 = vmatprep.subr.mxu0 0.0
      %726 = vmatpush1.msra.mxu0 0.0
      %727 = vmatprep.subr.mxu0 0.0
      %728 = vmatpush1.msra.mxu0 0.0
      %729 = vmatprep.subr.mxu0 0.0
      %730 = vmatpush1.msra.mxu0 0.0
      %731 = vmatprep.subr.mxu0 0.0
      %732 = vmatpush1.msra.mxu0 0.0
      %733 = vmatprep.subr.mxu0 0.0
      %734 = vmatpush1.msra.mxu0 0.0
      %735 = vmatprep.subr.mxu0 0.0
      %736 = vmatpush1.msra.mxu0 0.0
      %737 = vmatprep.subr.mxu0 0.0
      %738 = vmatpush1.msra.mxu0 0.0
      %739 = vmatprep.subr.mxu0 0.0
      %740 = vmatpush1.msra.mxu0 0.0
      %741 = vmatprep.subr.mxu0 0.0
      %742 = vmatpush1.msra.mxu0 0.0
      %743 = vmatprep.subr.mxu0 0.0
      %744 = vmatpush1.msra.mxu0 0.0
      %745 = vmatprep.subr.mxu0 0.0
      %746 = vmatpush1.msra.mxu0 0.0
      %747 = vmatprep.subr.mxu0 0.0
      %748 = vmatpush1.msra.mxu0 0.0
      %749 = vmatprep.subr.mxu0 0.0
      %750 = vmatpush1.msra.mxu0 0.0
      %751 = vmatprep.subr.mxu0 0.0
      %752 = vmatpush1.msra.mxu0 0.0
      %753 = vmatprep.subr.mxu0 0.0
      %754 = vmatpush1.msra.mxu0 0.0
      %755 = vmatprep.subr.mxu0 0.0
      %756 = vmatpush1.msra.mxu0 0.0
      %757 = vmatprep.subr.mxu0 0.0
      %758 = vmatpush1.msra.mxu0 0.0
      %759 = vmatprep.subr.mxu0 0.0
      %760 = vmatpush1.msra.mxu0 0.0
      %761 = vmatprep.subr.mxu0 0.0
      %762 = vmatpush1.msra.mxu0 0.0
      %763 = vmatprep.subr.mxu0 0.0
      %764 = vmatpush1.msra.mxu0 0.0
      %765 = vmatprep.subr.mxu0 0.0
      %766 = vmatpush1.msra.mxu0 0.0
      %767 = vmatprep.subr.mxu0 0.0
      %768 = vmatpush1.msra.mxu0 0.0
      %769 = vmatprep.subr.mxu0 0.0
      %770 = vmatpush1.msra.mxu0 0.0
      %771 = vmatprep.subr.mxu0 0.0
      %772 = vmatpush1.msra.mxu0 0.0
      %773 = vmatprep.subr.mxu0 0.0
      %774 = vmatpush1.msra.mxu0 0.0
      %775 = vmatprep.subr.mxu0 0.0
      %776 = vmatpush1.msra.mxu0 0.0
      %777 = vmatprep.mubr.f32.mxu0 0.0
      %778 = vmatmul.mubr.f32.gmra.mrb[0].mxu0 %v299
      %v779 = vpop.f32.mrb[0].mxu0
      %v780 = vadd.f32 0.0, %v779
      %v781 = vpop.f32.mrb[0].mxu0
      %782 = vmatprep.mubr.f32.mxu0 0.0
      %783 = vmatmul.mubr.f32.gmra.mrb[0].mxu0 %v302
      %v784 = vpop.f32.mrb[0].mxu0
      %v785 = vadd.f32 0.0, %v784
      %v786 = vpop.f32.mrb[0].mxu0
      %787 = vmatprep.mubr.f32.mxu0 0.0
      %788 = vmatmul.mubr.f32.gmra.mrb[0].mxu0 %v305
      %v789 = vpop.f32.mrb[0].mxu0
      %v790 = vadd.f32 0.0, %v789
      %v791 = vpop.f32.mrb[0].mxu0
      %792 = vmatprep.mubr.f32.mxu0 0.0
      %793 = vmatmul.mubr.f32.gmra.mrb[0].mxu0 %v308
      %v794 = vpop.f32.mrb[0].mxu0
      %v795 = vadd.f32 0.0, %v794
      %v796 = vpop.f32.mrb[0].mxu0
      %797 = vdwg.mxu0
      %s798 = scalar_lea.vmem %s1, 64
      %v799 = vld [vmem:[%s798] sm:$0xff]
      %v800 = vld [vmem:[%s798 + $0x8] sm:$0xff]
      %v801 = vld [vmem:[%s798 + $0x10] sm:$0xff]
      %v802 = vld [vmem:[%s798 + $0x18] sm:$0xff]
      %v804 = vsel %vm505, %v799, 0
      %v807 = vsel %vm505, %v800, 0
      %v810 = vsel %vm505, %v801, 0
      %v813 = vsel %vm505, %v802, 0
      %815 = vmatprep.subr.mxu0 0.0
      %816 = vmatpush1.msra.mxu0 %v780
      %817 = vmatprep.subr.mxu0 0.0
      %818 = vmatpush1.msra.mxu0 %v785
      %819 = vmatprep.subr.mxu0 0.0
      %820 = vmatpush1.msra.mxu0 %v790
      %821 = vmatprep.subr.mxu0 0.0
      %822 = vmatpush1.msra.mxu0 %v795
      %823 = vmatprep.subr.mxu0 0.0
      %824 = vmatpush1.msra.mxu0 0.0
      %825 = vmatprep.subr.mxu0 0.0
      %826 = vmatpush1.msra.mxu0 0.0
      %827 = vmatprep.subr.mxu0 0.0
      %828 = vmatpush1.msra.mxu0 0.0
      %829 = vmatprep.subr.mxu0 0.0
      %830 = vmatpush1.msra.mxu0 0.0
      %831 = vmatprep.subr.mxu0 0.0
      %832 = vmatpush1.msra.mxu0 0.0
      %833 = vmatprep.subr.mxu0 0.0
      %834 = vmatpush1.msra.mxu0 0.0
      %835 = vmatprep.subr.mxu0 0.0
      %836 = vmatpush1.msra.mxu0 0.0
      %837 = vmatprep.subr.mxu0 0.0
      %838 = vmatpush1.msra.mxu0 0.0
      %839 = vmatprep.subr.mxu0 0.0
      %840 = vmatpush1.msra.mxu0 0.0
      %841 = vmatprep.subr.mxu0 0.0
      %842 = vmatpush1.msra.mxu0 0.0
      %843 = vmatprep.subr.mxu0 0.0
      %844 = vmatpush1.msra.mxu0 0.0
      %845 = vmatprep.subr.mxu0 0.0
      %846 = vmatpush1.msra.mxu0 0.0
      %847 = vmatprep.subr.mxu0 0.0
      %848 = vmatpush1.msra.mxu0 0.0
      %849 = vmatprep.subr.mxu0 0.0
      %850 = vmatpush1.msra.mxu0 0.0
      %851 = vmatprep.subr.mxu0 0.0
      %852 = vmatpush1.msra.mxu0 0.0
      %853 = vmatprep.subr.mxu0 0.0
      %854 = vmatpush1.msra.mxu0 0.0
      %855 = vmatprep.subr.mxu0 0.0
      %856 = vmatpush1.msra.mxu0 0.0
      %857 = vmatprep.subr.mxu0 0.0
      %858 = vmatpush1.msra.mxu0 0.0
      %859 = vmatprep.subr.mxu0 0.0
      %860 = vmatpush1.msra.mxu0 0.0
      %861 = vmatprep.subr.mxu0 0.0
      %862 = vmatpush1.msra.mxu0 0.0
      %863 = vmatprep.subr.mxu0 0.0
      %864 = vmatpush1.msra.mxu0 0.0
      %865 = vmatprep.subr.mxu0 0.0
      %866 = vmatpush1.msra.mxu0 0.0
      %867 = vmatprep.subr.mxu0 0.0
      %868 = vmatpush1.msra.mxu0 0.0
      %869 = vmatprep.subr.mxu0 0.0
      %870 = vmatpush1.msra.mxu0 0.0
      %871 = vmatprep.subr.mxu0 0.0
      %872 = vmatpush1.msra.mxu0 0.0
      %873 = vmatprep.subr.mxu0 0.0
      %874 = vmatpush1.msra.mxu0 0.0
      %875 = vmatprep.subr.mxu0 0.0
      %876 = vmatpush1.msra.mxu0 0.0
      %877 = vmatprep.subr.mxu0 0.0
      %878 = vmatpush1.msra.mxu0 0.0
      %879 = vmatprep.mubr.f32.mxu0 0.0
      %880 = vmatmul.mubr.f32.gmra.mrb[0].mxu0 %v804
      %v881 = vpop.f32.mrb[0].mxu0
      %v882 = vadd.f32 0.0, %v881
      %v883 = vpop.f32.mrb[0].mxu0
      %884 = vmatprep.mubr.f32.mxu0 0.0
      %885 = vmatmul.mubr.f32.gmra.mrb[0].mxu0 %v807
      %v886 = vpop.f32.mrb[0].mxu0
      %v887 = vadd.f32 0.0, %v886
      %v888 = vpop.f32.mrb[0].mxu0
      %889 = vmatprep.mubr.f32.mxu0 0.0
      %890 = vmatmul.mubr.f32.gmra.mrb[0].mxu0 %v810
      %v891 = vpop.f32.mrb[0].mxu0
      %v892 = vadd.f32 0.0, %v891
      %v893 = vpop.f32.mrb[0].mxu0
      %894 = vmatprep.mubr.f32.mxu0 0.0
      %895 = vmatmul.mubr.f32.gmra.mrb[0].mxu0 %v813
      %v896 = vpop.f32.mrb[0].mxu0
      %v897 = vadd.f32 0.0, %v896
      %v898 = vpop.f32.mrb[0].mxu0
      %899 = vdwg.mxu0
      %v900 = vadd.f32 %v682, %v882
      %v901 = vadd.f32 %v687, %v887
      %v902 = vadd.f32 %v692, %v892
      %v903 = vadd.f32 %v697, %v897
      %v904 = vld [vmem:[%s4] sm:$0xff]
      %v905 = vld [vmem:[%s4 + $0x8] sm:$0xff]
      %v906 = vld [vmem:[%s4 + $0x10] sm:$0xff]
      %v907 = vld [vmem:[%s4 + $0x18] sm:$0xff]
      %909 = vset.pattern.permute.xlu0 0
      %910 = vperm.xlu0 %909, %v904
      %v911 = vpop.permute.xlu0 %910
      %914 = vset.pattern.permute.xlu0 0
      %915 = vperm.xlu0 %914, %v905
      %v916 = vpop.permute.xlu0 %915
      %919 = vset.pattern.permute.xlu0 0
      %920 = vperm.xlu0 %919, %v906
      %v921 = vpop.permute.xlu0 %920
      %924 = vset.pattern.permute.xlu0 0
      %925 = vperm.xlu0 %924, %v907
      %v926 = vpop.permute.xlu0 %925
      %v928 = vadd.f32 %v900, %v911
      %v929 = vadd.f32 %v901, %v916
      %v930 = vadd.f32 %v902, %v921
      %v931 = vadd.f32 %v903, %v926
      %vm932 = vcmp.ge.f32.partialorder %v928, 0.0
      %vm933 = vcmp.ge.f32.partialorder %v929, 0.0
      %vm934 = vcmp.ge.f32.partialorder %v930, 0.0
      %vm935 = vcmp.ge.f32.partialorder %v931, 0.0
      %v936 = vmul.f32 %v928, 0.2
      %v937 = vmul.f32 %v929, 0.2
      %v938 = vmul.f32 %v930, 0.2
      %v939 = vmul.f32 %v931, 0.2
      %v940 = vsel %vm932, %v928, %v936
      %v941 = vsel %vm933, %v929, %v937
      %v942 = vsel %vm934, %v930, %v938
      %v943 = vsel %vm935, %v931, %v939
      %vm944 = vcmp.lt.s32.totalorder %v285, 16
      %vm945 = vmand %vm286, %vm944
      %vm946 = vmand %vm945, %vm293
      %v947 = vsel %vm946, 1, 0
      %v948 = vcvt.s32.f32 %v947
      %vm949 = vcmask 64512
      %v951 = vsel %vm949, %v940, 0
      %v954 = vsel %vm949, %v941, 0
      %v957 = vsel %vm949, %v942, 0
      %v960 = vsel %vm949, %v943, 0
      %962 = vmatprep.subr.mxu0 0.0
      %963 = vmatpush1.msra.mxu0 %v948
      %964 = vmatprep.subr.mxu0 0.0
      %965 = vmatpush1.msra.mxu0 0.0
      %966 = vmatprep.subr.mxu0 0.0
      %967 = vmatpush1.msra.mxu0 0.0
      %968 = vmatprep.subr.mxu0 0.0
      %969 = vmatpush1.msra.mxu0 0.0
      %970 = vmatprep.subr.mxu0 0.0
      %971 = vmatpush1.msra.mxu0 0.0
      %972 = vmatprep.subr.mxu0 0.0
      %973 = vmatpush1.msra.mxu0 0.0
      %974 = vmatprep.subr.mxu0 0.0
      %975 = vmatpush1.msra.mxu0 0.0
      %976 = vmatprep.subr.mxu0 0.0
      %977 = vmatpush1.msra.mxu0 0.0
      %978 = vmatprep.subr.mxu0 0.0
      %979 = vmatpush1.msra.mxu0 0.0
      %980 = vmatprep.subr.mxu0 0.0
      %981 = vmatpush1.msra.mxu0 0.0
      %982 = vmatprep.subr.mxu0 0.0
      %983 = vmatpush1.msra.mxu0 0.0
      %984 = vmatprep.subr.mxu0 0.0
      %985 = vmatpush1.msra.mxu0 0.0
      %986 = vmatprep.subr.mxu0 0.0
      %987 = vmatpush1.msra.mxu0 0.0
      %988 = vmatprep.subr.mxu0 0.0
      %989 = vmatpush1.msra.mxu0 0.0
      %990 = vmatprep.subr.mxu0 0.0
      %991 = vmatpush1.msra.mxu0 0.0
      %992 = vmatprep.subr.mxu0 0.0
      %993 = vmatpush1.msra.mxu0 0.0
      %994 = vmatprep.subr.mxu0 0.0
      %995 = vmatpush1.msra.mxu0 0.0
      %996 = vmatprep.subr.mxu0 0.0
      %997 = vmatpush1.msra.mxu0 0.0
      %998 = vmatprep.subr.mxu0 0.0
      %999 = vmatpush1.msra.mxu0 0.0
      %1000 = vmatprep.subr.mxu0 0.0
      %1001 = vmatpush1.msra.mxu0 0.0
      %1002 = vmatprep.subr.mxu0 0.0
      %1003 = vmatpush1.msra.mxu0 0.0
      %1004 = vmatprep.subr.mxu0 0.0
      %1005 = vmatpush1.msra.mxu0 0.0
      %1006 = vmatprep.subr.mxu0 0.0
      %1007 = vmatpush1.msra.mxu0 0.0
      %1008 = vmatprep.subr.mxu0 0.0
      %1009 = vmatpush1.msra.mxu0 0.0
      %1010 = vmatprep.subr.mxu0 0.0
      %1011 = vmatpush1.msra.mxu0 0.0
      %1012 = vmatprep.subr.mxu0 0.0
      %1013 = vmatpush1.msra.mxu0 0.0
      %1014 = vmatprep.subr.mxu0 0.0
      %1015 = vmatpush1.msra.mxu0 0.0
      %1016 = vmatprep.subr.mxu0 0.0
      %1017 = vmatpush1.msra.mxu0 0.0
      %1018 = vmatprep.subr.mxu0 0.0
      %1019 = vmatpush1.msra.mxu0 0.0
      %1020 = vmatprep.subr.mxu0 0.0
      %1021 = vmatpush1.msra.mxu0 0.0
      %1022 = vmatprep.subr.mxu0 0.0
      %1023 = vmatpush1.msra.mxu0 0.0
      %1024 = vmatprep.subr.mxu0 0.0
      %1025 = vmatpush1.msra.mxu0 0.0
      %1026 = vmatprep.mubr.f32.mxu0 0.0
      %1027 = vmatmul.mubr.f32.gmra.mrb[0].mxu0 %v951
      %v1028 = vpop.f32.mrb[0].mxu0
      %v1029 = vadd.f32 0.0, %v1028
      %v1030 = vpop.f32.mrb[0].mxu0
      %1031 = vmatprep.mubr.f32.mxu0 0.0
      %1032 = vmatmul.mubr.f32.gmra.mrb[0].mxu0 %v954
      %v1033 = vpop.f32.mrb[0].mxu0
      %v1034 = vadd.f32 0.0, %v1033
      %v1035 = vpop.f32.mrb[0].mxu0
      %1036 = vmatprep.mubr.f32.mxu0 0.0
      %1037 = vmatmul.mubr.f32.gmra.mrb[0].mxu0 %v957
      %v1038 = vpop.f32.mrb[0].mxu0
      %v1039 = vadd.f32 0.0, %v1038
      %v1040 = vpop.f32.mrb[0].mxu0
      %1041 = vmatprep.mubr.f32.mxu0 0.0
      %1042 = vmatmul.mubr.f32.gmra.mrb[0].mxu0 %v960
      %v1043 = vpop.f32.mrb[0].mxu0
      %v1044 = vadd.f32 0.0, %v1043
      %v1045 = vpop.f32.mrb[0].mxu0
      %1046 = vdwg.mxu0
      %v1047 = vld [vmem:[%s2] sm:$0xff]
      %v1048 = vld [vmem:[%s2 + $0x8] sm:$0xff]
      %v1049 = vld [vmem:[%s2 + $0x10] sm:$0xff]
      %v1050 = vld [vmem:[%s2 + $0x18] sm:$0xff]
      %vm1051 = vcmp.lt.s32.totalorder %v284, 16
      %vm1052 = vmand %vm403, %vm1051
      %vm1053 = vmand %vm1052, %vm408
      %v1054 = vsel %vm1053, 1, 0
      %v1055 = vcvt.s32.f32 %v1054
      %1056 = vmatprep.subr.mxu0 0.0
      %1057 = vmatpush1.msra.mxu0 %v1055
      %1058 = vmatprep.subr.mxu0 0.0
      %1059 = vmatpush1.msra.mxu0 0.0
      %1060 = vmatprep.subr.mxu0 0.0
      %1061 = vmatpush1.msra.mxu0 0.0
      %1062 = vmatprep.subr.mxu0 0.0
      %1063 = vmatpush1.msra.mxu0 0.0
      %1064 = vmatprep.subr.mxu0 0.0
      %1065 = vmatpush1.msra.mxu0 0.0
      %1066 = vmatprep.subr.mxu0 0.0
      %1067 = vmatpush1.msra.mxu0 0.0
      %1068 = vmatprep.subr.mxu0 0.0
      %1069 = vmatpush1.msra.mxu0 0.0
      %1070 = vmatprep.subr.mxu0 0.0
      %1071 = vmatpush1.msra.mxu0 0.0
      %1072 = vmatprep.subr.mxu0 0.0
      %1073 = vmatpush1.msra.mxu0 0.0
      %1074 = vmatprep.subr.mxu0 0.0
      %1075 = vmatpush1.msra.mxu0 0.0
      %1076 = vmatprep.subr.mxu0 0.0
      %1077 = vmatpush1.msra.mxu0 0.0
      %1078 = vmatprep.subr.mxu0 0.0
      %1079 = vmatpush1.msra.mxu0 0.0
      %1080 = vmatprep.subr.mxu0 0.0
      %1081 = vmatpush1.msra.mxu0 0.0
      %1082 = vmatprep.subr.mxu0 0.0
      %1083 = vmatpush1.msra.mxu0 0.0
      %1084 = vmatprep.subr.mxu0 0.0
      %1085 = vmatpush1.msra.mxu0 0.0
      %1086 = vmatprep.subr.mxu0 0.0
      %1087 = vmatpush1.msra.mxu0 0.0
      %1088 = vmatprep.subr.mxu0 0.0
      %1089 = vmatpush1.msra.mxu0 0.0
      %1090 = vmatprep.subr.mxu0 0.0
      %1091 = vmatpush1.msra.mxu0 0.0
      %1092 = vmatprep.subr.mxu0 0.0
      %1093 = vmatpush1.msra.mxu0 0.0
      %1094 = vmatprep.subr.mxu0 0.0
      %1095 = vmatpush1.msra.mxu0 0.0
      %1096 = vmatprep.subr.mxu0 0.0
      %1097 = vmatpush1.msra.mxu0 0.0
      %1098 = vmatprep.subr.mxu0 0.0
      %1099 = vmatpush1.msra.mxu0 0.0
      %1100 = vmatprep.subr.mxu0 0.0
      %1101 = vmatpush1.msra.mxu0 0.0
      %1102 = vmatprep.subr.mxu0 0.0
      %1103 = vmatpush1.msra.mxu0 0.0
      %1104 = vmatprep.subr.mxu0 0.0
      %1105 = vmatpush1.msra.mxu0 0.0
      %1106 = vmatprep.subr.mxu0 0.0
      %1107 = vmatpush1.msra.mxu0 0.0
      %1108 = vmatprep.subr.mxu0 0.0
      %1109 = vmatpush1.msra.mxu0 0.0
      %1110 = vmatprep.subr.mxu0 0.0
      %1111 = vmatpush1.msra.mxu0 0.0
      %1112 = vmatprep.subr.mxu0 0.0
      %1113 = vmatpush1.msra.mxu0 0.0
      %1114 = vmatprep.subr.mxu0 0.0
      %1115 = vmatpush1.msra.mxu0 0.0
      %1116 = vmatprep.subr.mxu0 0.0
      %1117 = vmatpush1.msra.mxu0 0.0
      %1118 = vmatprep.subr.mxu0 0.0
      %1119 = vmatpush1.msra.mxu0 0.0
      %1120 = vmatprep.mubr.f32.mxu0 0.0
      %1121 = vmatmul.mubr.f32.gmra.mrb[0].mxu0 %v951
      %v1122 = vpop.f32.mrb[0].mxu0
      %v1123 = vadd.f32 0.0, %v1122
      %v1124 = vpop.f32.mrb[0].mxu0
      %1125 = vmatprep.mubr.f32.mxu0 0.0
      %1126 = vmatmul.mubr.f32.gmra.mrb[0].mxu0 %v954
      %v1127 = vpop.f32.mrb[0].mxu0
      %v1128 = vadd.f32 0.0, %v1127
      %v1129 = vpop.f32.mrb[0].mxu0
      %1130 = vmatprep.mubr.f32.mxu0 0.0
      %1131 = vmatmul.mubr.f32.gmra.mrb[0].mxu0 %v957
      %v1132 = vpop.f32.mrb[0].mxu0
      %v1133 = vadd.f32 0.0, %v1132
      %v1134 = vpop.f32.mrb[0].mxu0
      %1135 = vmatprep.mubr.f32.mxu0 0.0
      %1136 = vmatmul.mubr.f32.gmra.mrb[0].mxu0 %v960
      %v1137 = vpop.f32.mrb[0].mxu0
      %v1138 = vadd.f32 0.0, %v1137
      %v1139 = vpop.f32.mrb[0].mxu0
      %1140 = vdwg.mxu0
      %s1141 = scalar_lea.vmem %s2, 32
      %v1142 = vld [vmem:[%s1141] sm:$0xff]
      %v1143 = vld [vmem:[%s1141 + $0x8] sm:$0xff]
      %v1144 = vld [vmem:[%s1141 + $0x10] sm:$0xff]
      %v1145 = vld [vmem:[%s1141 + $0x18] sm:$0xff]
      %v1147 = vsel %vm505, %v1142, 0
      %v1150 = vsel %vm505, %v1143, 0
      %v1153 = vsel %vm505, %v1144, 0
      %v1156 = vsel %vm505, %v1145, 0
      %1158 = vmatprep.subr.mxu0 0.0
      %1159 = vmatpush1.msra.mxu0 %v1123
      %1160 = vmatprep.subr.mxu0 0.0
      %1161 = vmatpush1.msra.mxu0 %v1128
      %1162 = vmatprep.subr.mxu0 0.0
      %1163 = vmatpush1.msra.mxu0 %v1133
      %1164 = vmatprep.subr.mxu0 0.0
      %1165 = vmatpush1.msra.mxu0 %v1138
      %1166 = vmatprep.subr.mxu0 0.0
      %1167 = vmatpush1.msra.mxu0 0.0
      %1168 = vmatprep.subr.mxu0 0.0
      %1169 = vmatpush1.msra.mxu0 0.0
      %1170 = vmatprep.subr.mxu0 0.0
      %1171 = vmatpush1.msra.mxu0 0.0
      %1172 = vmatprep.subr.mxu0 0.0
      %1173 = vmatpush1.msra.mxu0 0.0
      %1174 = vmatprep.subr.mxu0 0.0
      %1175 = vmatpush1.msra.mxu0 0.0
      %1176 = vmatprep.subr.mxu0 0.0
      %1177 = vmatpush1.msra.mxu0 0.0
      %1178 = vmatprep.subr.mxu0 0.0
      %1179 = vmatpush1.msra.mxu0 0.0
      %1180 = vmatprep.subr.mxu0 0.0
      %1181 = vmatpush1.msra.mxu0 0.0
      %1182 = vmatprep.subr.mxu0 0.0
      %1183 = vmatpush1.msra.mxu0 0.0
      %1184 = vmatprep.subr.mxu0 0.0
      %1185 = vmatpush1.msra.mxu0 0.0
      %1186 = vmatprep.subr.mxu0 0.0
      %1187 = vmatpush1.msra.mxu0 0.0
      %1188 = vmatprep.subr.mxu0 0.0
      %1189 = vmatpush1.msra.mxu0 0.0
      %1190 = vmatprep.subr.mxu0 0.0
      %1191 = vmatpush1.msra.mxu0 0.0
      %1192 = vmatprep.subr.mxu0 0.0
      %1193 = vmatpush1.msra.mxu0 0.0
      %1194 = vmatprep.subr.mxu0 0.0
      %1195 = vmatpush1.msra.mxu0 0.0
      %1196 = vmatprep.subr.mxu0 0.0
      %1197 = vmatpush1.msra.mxu0 0.0
      %1198 = vmatprep.subr.mxu0 0.0
      %1199 = vmatpush1.msra.mxu0 0.0
      %1200 = vmatprep.subr.mxu0 0.0
      %1201 = vmatpush1.msra.mxu0 0.0
      %1202 = vmatprep.subr.mxu0 0.0
      %1203 = vmatpush1.msra.mxu0 0.0
      %1204 = vmatprep.subr.mxu0 0.0
      %1205 = vmatpush1.msra.mxu0 0.0
      %1206 = vmatprep.subr.mxu0 0.0
      %1207 = vmatpush1.msra.mxu0 0.0
      %1208 = vmatprep.subr.mxu0 0.0
      %1209 = vmatpush1.msra.mxu0 0.0
      %1210 = vmatprep.subr.mxu0 0.0
      %1211 = vmatpush1.msra.mxu0 0.0
      %1212 = vmatprep.subr.mxu0 0.0
      %1213 = vmatpush1.msra.mxu0 0.0
      %1214 = vmatprep.subr.mxu0 0.0
      %1215 = vmatpush1.msra.mxu0 0.0
      %1216 = vmatprep.subr.mxu0 0.0
      %1217 = vmatpush1.msra.mxu0 0.0
      %1218 = vmatprep.subr.mxu0 0.0
      %1219 = vmatpush1.msra.mxu0 0.0
      %1220 = vmatprep.subr.mxu0 0.0
      %1221 = vmatpush1.msra.mxu0 0.0
      %1222 = vmatprep.mubr.f32.mxu0 0.0
      %1223 = vmatmul.mubr.f32.gmra.mrb[0].mxu0 %v1147
      %v1224 = vpop.f32.mrb[0].mxu0
      %v1225 = vadd.f32 0.0, %v1224
      %v1226 = vpop.f32.mrb[0].mxu0
      %1227 = vmatprep.mubr.f32.mxu0 0.0
      %1228 = vmatmul.mubr.f32.gmra.mrb[0].mxu0 %v1150
      %v1229 = vpop.f32.mrb[0].mxu0
      %v1230 = vadd.f32 0.0, %v1229
      %v1231 = vpop.f32.mrb[0].mxu0
      %1232 = vmatprep.mubr.f32.mxu0 0.0
      %1233 = vmatmul.mubr.f32.gmra.mrb[0].mxu0 %v1153
      %v1234 = vpop.f32.mrb[0].mxu0
      %v1235 = vadd.f32 0.0, %v1234
      %v1236 = vpop.f32.mrb[0].mxu0
      %1237 = vmatprep.mubr.f32.mxu0 0.0
      %1238 = vmatmul.mubr.f32.gmra.mrb[0].mxu0 %v1156
      %v1239 = vpop.f32.mrb[0].mxu0
      %v1240 = vadd.f32 0.0, %v1239
      %v1241 = vpop.f32.mrb[0].mxu0
      %1242 = vdwg.mxu0
      %v1244 = vsel %vm505, %v1047, 0
      %v1247 = vsel %vm505, %v1048, 0
      %v1250 = vsel %vm505, %v1049, 0
      %v1253 = vsel %vm505, %v1050, 0
      %1255 = vmatprep.subr.mxu0 0.0
      %1256 = vmatpush1.msra.mxu0 %v1029
      %1257 = vmatprep.subr.mxu0 0.0
      %1258 = vmatpush1.msra.mxu0 %v1034
      %1259 = vmatprep.subr.mxu0 0.0
      %1260 = vmatpush1.msra.mxu0 %v1039
      %1261 = vmatprep.subr.mxu0 0.0
      %1262 = vmatpush1.msra.mxu0 %v1044
      %1263 = vmatprep.subr.mxu0 0.0
      %1264 = vmatpush1.msra.mxu0 0.0
      %1265 = vmatprep.subr.mxu0 0.0
      %1266 = vmatpush1.msra.mxu0 0.0
      %1267 = vmatprep.subr.mxu0 0.0
      %1268 = vmatpush1.msra.mxu0 0.0
      %1269 = vmatprep.subr.mxu0 0.0
      %1270 = vmatpush1.msra.mxu0 0.0
      %1271 = vmatprep.subr.mxu0 0.0
      %1272 = vmatpush1.msra.mxu0 0.0
      %1273 = vmatprep.subr.mxu0 0.0
      %1274 = vmatpush1.msra.mxu0 0.0
      %1275 = vmatprep.subr.mxu0 0.0
      %1276 = vmatpush1.msra.mxu0 0.0
      %1277 = vmatprep.subr.mxu0 0.0
      %1278 = vmatpush1.msra.mxu0 0.0
      %1279 = vmatprep.subr.mxu0 0.0
      %1280 = vmatpush1.msra.mxu0 0.0
      %1281 = vmatprep.subr.mxu0 0.0
      %1282 = vmatpush1.msra.mxu0 0.0
      %1283 = vmatprep.subr.mxu0 0.0
      %1284 = vmatpush1.msra.mxu0 0.0
      %1285 = vmatprep.subr.mxu0 0.0
      %1286 = vmatpush1.msra.mxu0 0.0
      %1287 = vmatprep.subr.mxu0 0.0
      %1288 = vmatpush1.msra.mxu0 0.0
      %1289 = vmatprep.subr.mxu0 0.0
      %1290 = vmatpush1.msra.mxu0 0.0
      %1291 = vmatprep.subr.mxu0 0.0
      %1292 = vmatpush1.msra.mxu0 0.0
      %1293 = vmatprep.subr.mxu0 0.0
      %1294 = vmatpush1.msra.mxu0 0.0
      %1295 = vmatprep.subr.mxu0 0.0
      %1296 = vmatpush1.msra.mxu0 0.0
      %1297 = vmatprep.subr.mxu0 0.0
      %1298 = vmatpush1.msra.mxu0 0.0
      %1299 = vmatprep.subr.mxu0 0.0
      %1300 = vmatpush1.msra.mxu0 0.0
      %1301 = vmatprep.subr.mxu0 0.0
      %1302 = vmatpush1.msra.mxu0 0.0
      %1303 = vmatprep.subr.mxu0 0.0
      %1304 = vmatpush1.msra.mxu0 0.0
      %1305 = vmatprep.subr.mxu0 0.0
      %1306 = vmatpush1.msra.mxu0 0.0
      %1307 = vmatprep.subr.mxu0 0.0
      %1308 = vmatpush1.msra.mxu0 0.0
      %1309 = vmatprep.subr.mxu0 0.0
      %1310 = vmatpush1.msra.mxu0 0.0
      %1311 = vmatprep.subr.mxu0 0.0
      %1312 = vmatpush1.msra.mxu0 0.0
      %1313 = vmatprep.subr.mxu0 0.0
      %1314 = vmatpush1.msra.mxu0 0.0
      %1315 = vmatprep.subr.mxu0 0.0
      %1316 = vmatpush1.msra.mxu0 0.0
      %1317 = vmatprep.subr.mxu0 0.0
      %1318 = vmatpush1.msra.mxu0 0.0
      %1319 = vmatprep.mubr.f32.mxu0 0.0
      %1320 = vmatmul.mubr.f32.gmra.mrb[0].mxu0 %v1244
      %v1321 = vpop.f32.mrb[0].mxu0
      %v1322 = vadd.f32 %v1225, %v1321
      %v1323 = vpop.f32.mrb[0].mxu0
      %1324 = vmatprep.mubr.f32.mxu0 0.0
      %1325 = vmatmul.mubr.f32.gmra.mrb[0].mxu0 %v1247
      %v1326 = vpop.f32.mrb[0].mxu0
      %v1327 = vadd.f32 %v1230, %v1326
      %v1328 = vpop.f32.mrb[0].mxu0
      %1329 = vmatprep.mubr.f32.mxu0 0.0
      %1330 = vmatmul.mubr.f32.gmra.mrb[0].mxu0 %v1250
      %v1331 = vpop.f32.mrb[0].mxu0
      %v1332 = vadd.f32 %v1235, %v1331
      %v1333 = vpop.f32.mrb[0].mxu0
      %1334 = vmatprep.mubr.f32.mxu0 0.0
      %1335 = vmatmul.mubr.f32.gmra.mrb[0].mxu0 %v1253
      %v1336 = vpop.f32.mrb[0].mxu0
      %v1337 = vadd.f32 %v1240, %v1336
      %v1338 = vpop.f32.mrb[0].mxu0
      %1339 = vdwg.mxu0
      %vm1340 = vcmp.lt.s32.totalorder %v700, 16
      %vm1341 = vmand %vm701, %vm1340
      %vm1342 = vmand %vm1341, %vm706
      %v1343 = vsel %vm1342, 1, 0
      %v1344 = vcvt.s32.f32 %v1343
      %1345 = vmatprep.subr.mxu0 0.0
      %1346 = vmatpush1.msra.mxu0 %v1344
      %1347 = vmatprep.subr.mxu0 0.0
      %1348 = vmatpush1.msra.mxu0 0.0
      %1349 = vmatprep.subr.mxu0 0.0
      %1350 = vmatpush1.msra.mxu0 0.0
      %1351 = vmatprep.subr.mxu0 0.0
      %1352 = vmatpush1.msra.mxu0 0.0
      %1353 = vmatprep.subr.mxu0 0.0
      %1354 = vmatpush1.msra.mxu0 0.0
      %1355 = vmatprep.subr.mxu0 0.0
      %1356 = vmatpush1.msra.mxu0 0.0
      %1357 = vmatprep.subr.mxu0 0.0
      %1358 = vmatpush1.msra.mxu0 0.0
      %1359 = vmatprep.subr.mxu0 0.0
      %1360 = vmatpush1.msra.mxu0 0.0
      %1361 = vmatprep.subr.mxu0 0.0
      %1362 = vmatpush1.msra.mxu0 0.0
      %1363 = vmatprep.subr.mxu0 0.0
      %1364 = vmatpush1.msra.mxu0 0.0
      %1365 = vmatprep.subr.mxu0 0.0
      %1366 = vmatpush1.msra.mxu0 0.0
      %1367 = vmatprep.subr.mxu0 0.0
      %1368 = vmatpush1.msra.mxu0 0.0
      %1369 = vmatprep.subr.mxu0 0.0
      %1370 = vmatpush1.msra.mxu0 0.0
      %1371 = vmatprep.subr.mxu0 0.0
      %1372 = vmatpush1.msra.mxu0 0.0
      %1373 = vmatprep.subr.mxu0 0.0
      %1374 = vmatpush1.msra.mxu0 0.0
      %1375 = vmatprep.subr.mxu0 0.0
      %1376 = vmatpush1.msra.mxu0 0.0
      %1377 = vmatprep.subr.mxu0 0.0
      %1378 = vmatpush1.msra.mxu0 0.0
      %1379 = vmatprep.subr.mxu0 0.0
      %1380 = vmatpush1.msra.mxu0 0.0
      %1381 = vmatprep.subr.mxu0 0.0
      %1382 = vmatpush1.msra.mxu0 0.0
      %1383 = vmatprep.subr.mxu0 0.0
      %1384 = vmatpush1.msra.mxu0 0.0
      %1385 = vmatprep.subr.mxu0 0.0
      %1386 = vmatpush1.msra.mxu0 0.0
      %1387 = vmatprep.subr.mxu0 0.0
      %1388 = vmatpush1.msra.mxu0 0.0
      %1389 = vmatprep.subr.mxu0 0.0
      %1390 = vmatpush1.msra.mxu0 0.0
      %1391 = vmatprep.subr.mxu0 0.0
      %1392 = vmatpush1.msra.mxu0 0.0
      %1393 = vmatprep.subr.mxu0 0.0
      %1394 = vmatpush1.msra.mxu0 0.0
      %1395 = vmatprep.subr.mxu0 0.0
      %1396 = vmatpush1.msra.mxu0 0.0
      %1397 = vmatprep.subr.mxu0 0.0
      %1398 = vmatpush1.msra.mxu0 0.0
      %1399 = vmatprep.subr.mxu0 0.0
      %1400 = vmatpush1.msra.mxu0 0.0
      %1401 = vmatprep.subr.mxu0 0.0
      %1402 = vmatpush1.msra.mxu0 0.0
      %1403 = vmatprep.subr.mxu0 0.0
      %1404 = vmatpush1.msra.mxu0 0.0
      %1405 = vmatprep.subr.mxu0 0.0
      %1406 = vmatpush1.msra.mxu0 0.0
      %1407 = vmatprep.subr.mxu0 0.0
      %1408 = vmatpush1.msra.mxu0 0.0
      %1409 = vmatprep.mubr.f32.mxu0 0.0
      %1410 = vmatmul.mubr.f32.gmra.mrb[0].mxu0 %v951
      %v1411 = vpop.f32.mrb[0].mxu0
      %v1412 = vadd.f32 0.0, %v1411
      %v1413 = vpop.f32.mrb[0].mxu0
      %1414 = vmatprep.mubr.f32.mxu0 0.0
      %1415 = vmatmul.mubr.f32.gmra.mrb[0].mxu0 %v954
      %v1416 = vpop.f32.mrb[0].mxu0
      %v1417 = vadd.f32 0.0, %v1416
      %v1418 = vpop.f32.mrb[0].mxu0
      %1419 = vmatprep.mubr.f32.mxu0 0.0
      %1420 = vmatmul.mubr.f32.gmra.mrb[0].mxu0 %v957
      %v1421 = vpop.f32.mrb[0].mxu0
      %v1422 = vadd.f32 0.0, %v1421
      %v1423 = vpop.f32.mrb[0].mxu0
      %1424 = vmatprep.mubr.f32.mxu0 0.0
      %1425 = vmatmul.mubr.f32.gmra.mrb[0].mxu0 %v960
      %v1426 = vpop.f32.mrb[0].mxu0
      %v1427 = vadd.f32 0.0, %v1426
      %v1428 = vpop.f32.mrb[0].mxu0
      %1429 = vdwg.mxu0
      %s1430 = scalar_lea.vmem %s2, 64
      %v1431 = vld [vmem:[%s1430] sm:$0xff]
      %v1432 = vld [vmem:[%s1430 + $0x8] sm:$0xff]
      %v1433 = vld [vmem:[%s1430 + $0x10] sm:$0xff]
      %v1434 = vld [vmem:[%s1430 + $0x18] sm:$0xff]
      %v1436 = vsel %vm505, %v1431, 0
      %v1439 = vsel %vm505, %v1432, 0
      %v1442 = vsel %vm505, %v1433, 0
      %v1445 = vsel %vm505, %v1434, 0
      %1447 = vmatprep.subr.mxu0 0.0
      %1448 = vmatpush1.msra.mxu0 %v1412
      %1449 = vmatprep.subr.mxu0 0.0
      %1450 = vmatpush1.msra.mxu0 %v1417
      %1451 = vmatprep.subr.mxu0 0.0
      %1452 = vmatpush1.msra.mxu0 %v1422
      %1453 = vmatprep.subr.mxu0 0.0
      %1454 = vmatpush1.msra.mxu0 %v1427
      %1455 = vmatprep.subr.mxu0 0.0
      %1456 = vmatpush1.msra.mxu0 0.0
      %1457 = vmatprep.subr.mxu0 0.0
      %1458 = vmatpush1.msra.mxu0 0.0
      %1459 = vmatprep.subr.mxu0 0.0
      %1460 = vmatpush1.msra.mxu0 0.0
      %1461 = vmatprep.subr.mxu0 0.0
      %1462 = vmatpush1.msra.mxu0 0.0
      %1463 = vmatprep.subr.mxu0 0.0
      %1464 = vmatpush1.msra.mxu0 0.0
      %1465 = vmatprep.subr.mxu0 0.0
      %1466 = vmatpush1.msra.mxu0 0.0
      %1467 = vmatprep.subr.mxu0 0.0
      %1468 = vmatpush1.msra.mxu0 0.0
      %1469 = vmatprep.subr.mxu0 0.0
      %1470 = vmatpush1.msra.mxu0 0.0
      %1471 = vmatprep.subr.mxu0 0.0
      %1472 = vmatpush1.msra.mxu0 0.0
      %1473 = vmatprep.subr.mxu0 0.0
      %1474 = vmatpush1.msra.mxu0 0.0
      %1475 = vmatprep.subr.mxu0 0.0
      %1476 = vmatpush1.msra.mxu0 0.0
      %1477 = vmatprep.subr.mxu0 0.0
      %1478 = vmatpush1.msra.mxu0 0.0
      %1479 = vmatprep.subr.mxu0 0.0
      %1480 = vmatpush1.msra.mxu0 0.0
      %1481 = vmatprep.subr.mxu0 0.0
      %1482 = vmatpush1.msra.mxu0 0.0
      %1483 = vmatprep.subr.mxu0 0.0
      %1484 = vmatpush1.msra.mxu0 0.0
      %1485 = vmatprep.subr.mxu0 0.0
      %1486 = vmatpush1.msra.mxu0 0.0
      %1487 = vmatprep.subr.mxu0 0.0
      %1488 = vmatpush1.msra.mxu0 0.0
      %1489 = vmatprep.subr.mxu0 0.0
      %1490 = vmatpush1.msra.mxu0 0.0
      %1491 = vmatprep.subr.mxu0 0.0
      %1492 = vmatpush1.msra.mxu0 0.0
      %1493 = vmatprep.subr.mxu0 0.0
      %1494 = vmatpush1.msra.mxu0 0.0
      %1495 = vmatprep.subr.mxu0 0.0
      %1496 = vmatpush1.msra.mxu0 0.0
      %1497 = vmatprep.subr.mxu0 0.0
      %1498 = vmatpush1.msra.mxu0 0.0
      %1499 = vmatprep.subr.mxu0 0.0
      %1500 = vmatpush1.msra.mxu0 0.0
      %1501 = vmatprep.subr.mxu0 0.0
      %1502 = vmatpush1.msra.mxu0 0.0
      %1503 = vmatprep.subr.mxu0 0.0
      %1504 = vmatpush1.msra.mxu0 0.0
      %1505 = vmatprep.subr.mxu0 0.0
      %1506 = vmatpush1.msra.mxu0 0.0
      %1507 = vmatprep.subr.mxu0 0.0
      %1508 = vmatpush1.msra.mxu0 0.0
      %1509 = vmatprep.subr.mxu0 0.0
      %1510 = vmatpush1.msra.mxu0 0.0
      %1511 = vmatprep.mubr.f32.mxu0 0.0
      %1512 = vmatmul.mubr.f32.gmra.mrb[0].mxu0 %v1436
      %v1513 = vpop.f32.mrb[0].mxu0
      %v1514 = vadd.f32 0.0, %v1513
      %v1515 = vpop.f32.mrb[0].mxu0
      %1516 = vmatprep.mubr.f32.mxu0 0.0
      %1517 = vmatmul.mubr.f32.gmra.mrb[0].mxu0 %v1439
      %v1518 = vpop.f32.mrb[0].mxu0
      %v1519 = vadd.f32 0.0, %v1518
      %v1520 = vpop.f32.mrb[0].mxu0
      %1521 = vmatprep.mubr.f32.mxu0 0.0
      %1522 = vmatmul.mubr.f32.gmra.mrb[0].mxu0 %v1442
      %v1523 = vpop.f32.mrb[0].mxu0
      %v1524 = vadd.f32 0.0, %v1523
      %v1525 = vpop.f32.mrb[0].mxu0
      %1526 = vmatprep.mubr.f32.mxu0 0.0
      %1527 = vmatmul.mubr.f32.gmra.mrb[0].mxu0 %v1445
      %v1528 = vpop.f32.mrb[0].mxu0
      %v1529 = vadd.f32 0.0, %v1528
      %v1530 = vpop.f32.mrb[0].mxu0
      %1531 = vdwg.mxu0
      %v1532 = vadd.f32 %v1322, %v1514
      %v1533 = vadd.f32 %v1327, %v1519
      %v1534 = vadd.f32 %v1332, %v1524
      %v1535 = vadd.f32 %v1337, %v1529
      %v1536 = vld [vmem:[%s5] sm:$0xff]
      %v1537 = vld [vmem:[%s5 + $0x8] sm:$0xff]
      %v1538 = vld [vmem:[%s5 + $0x10] sm:$0xff]
      %v1539 = vld [vmem:[%s5 + $0x18] sm:$0xff]
      %1541 = vset.pattern.permute.xlu0 0
      %1542 = vperm.xlu0 %1541, %v1536
      %v1543 = vpop.permute.xlu0 %1542
      %1546 = vset.pattern.permute.xlu0 0
      %1547 = vperm.xlu0 %1546, %v1537
      %v1548 = vpop.permute.xlu0 %1547
      %1551 = vset.pattern.permute.xlu0 0
      %1552 = vperm.xlu0 %1551, %v1538
      %v1553 = vpop.permute.xlu0 %1552
      %1556 = vset.pattern.permute.xlu0 0
      %1557 = vperm.xlu0 %1556, %v1539
      %v1558 = vpop.permute.xlu0 %1557
      %v1560 = vadd.f32 %v1532, %v1543
      %v1561 = vadd.f32 %v1533, %v1548
      %v1562 = vadd.f32 %v1534, %v1553
      %v1563 = vadd.f32 %v1535, %v1558
      %vm1564 = vcmp.ge.f32.partialorder %v1560, 0.0
      %vm1565 = vcmp.ge.f32.partialorder %v1561, 0.0
      %vm1566 = vcmp.ge.f32.partialorder %v1562, 0.0
      %vm1567 = vcmp.ge.f32.partialorder %v1563, 0.0
      %v1568 = vmul.f32 %v1560, 0.2
      %v1569 = vmul.f32 %v1561, 0.2
      %v1570 = vmul.f32 %v1562, 0.2
      %v1571 = vmul.f32 %v1563, 0.2
      %v1572 = vsel %vm1564, %v1560, %v1568
      %v1573 = vsel %vm1565, %v1561, %v1569
      %v1574 = vsel %vm1566, %v1562, %v1570
      %v1575 = vsel %vm1567, %v1563, %v1571
      %v1576 = vadd.s32 %v282, 8
      %vm1577 = vcmp.lt.s32.totalorder %v285, 32
      %vm1578 = vmand %vm286, %vm1577
      %v1579 = vmul.u32 %v1576, 2
      %vm1580 = vcmp.eq.s32.totalorder %v285, %v1579
      %v1581 = vadd.s32 %v1579, 1
      %vm1582 = vcmp.eq.s32.totalorder %v285, %v1581
      %vm1583 = vmor %vm1580, %vm1582
      %vm1584 = vmand %vm1578, %vm293
      %vm1585 = vmand %vm1578, %vm1583
      %v1586 = vsel %vm1584, 1, 0
      %v1587 = vsel %vm1585, 1, 0
      %v1588 = vcvt.s32.f32 %v1586
      %v1589 = vcvt.s32.f32 %v1587
      %vm1590 = vcmask 130048
      %v1592 = vsel %vm1590, %v1572, 0
      %v1595 = vsel %vm1590, %v1573, 0
      %v1598 = vsel %vm1590, %v1574, 0
      %v1601 = vsel %vm1590, %v1575, 0
      %1603 = vmatprep.subr.mxu0 0.0
      %1604 = vmatpush1.msra.mxu0 %v1588
      %1605 = vmatprep.subr.mxu0 0.0
      %1606 = vmatpush1.msra.mxu0 %v1589
      %1607 = vmatprep.subr.mxu0 0.0
      %1608 = vmatpush1.msra.mxu0 0.0
      %1609 = vmatprep.subr.mxu0 0.0
      %1610 = vmatpush1.msra.mxu0 0.0
      %1611 = vmatprep.subr.mxu0 0.0
      %1612 = vmatpush1.msra.mxu0 0.0
      %1613 = vmatprep.subr.mxu0 0.0
      %1614 = vmatpush1.msra.mxu0 0.0
      %1615 = vmatprep.subr.mxu0 0.0
      %1616 = vmatpush1.msra.mxu0 0.0
      %1617 = vmatprep.subr.mxu0 0.0
      %1618 = vmatpush1.msra.mxu0 0.0
      %1619 = vmatprep.subr.mxu0 0.0
      %1620 = vmatpush1.msra.mxu0 0.0
      %1621 = vmatprep.subr.mxu0 0.0
      %1622 = vmatpush1.msra.mxu0 0.0
      %1623 = vmatprep.subr.mxu0 0.0
      %1624 = vmatpush1.msra.mxu0 0.0
      %1625 = vmatprep.subr.mxu0 0.0
      %1626 = vmatpush1.msra.mxu0 0.0
      %1627 = vmatprep.subr.mxu0 0.0
      %1628 = vmatpush1.msra.mxu0 0.0
      %1629 = vmatprep.subr.mxu0 0.0
      %1630 = vmatpush1.msra.mxu0 0.0
      %1631 = vmatprep.subr.mxu0 0.0
      %1632 = vmatpush1.msra.mxu0 0.0
      %1633 = vmatprep.subr.mxu0 0.0
      %1634 = vmatpush1.msra.mxu0 0.0
      %1635 = vmatprep.subr.mxu0 0.0
      %1636 = vmatpush1.msra.mxu0 0.0
      %1637 = vmatprep.subr.mxu0 0.0
      %1638 = vmatpush1.msra.mxu0 0.0
      %1639 = vmatprep.subr.mxu0 0.0
      %1640 = vmatpush1.msra.mxu0 0.0
      %1641 = vmatprep.subr.mxu0 0.0
      %1642 = vmatpush1.msra.mxu0 0.0
      %1643 = vmatprep.subr.mxu0 0.0
      %1644 = vmatpush1.msra.mxu0 0.0
      %1645 = vmatprep.subr.mxu0 0.0
      %1646 = vmatpush1.msra.mxu0 0.0
      %1647 = vmatprep.subr.mxu0 0.0
      %1648 = vmatpush1.msra.mxu0 0.0
      %1649 = vmatprep.subr.mxu0 0.0
      %1650 = vmatpush1.msra.mxu0 0.0
      %1651 = vmatprep.subr.mxu0 0.0
      %1652 = vmatpush1.msra.mxu0 0.0
      %1653 = vmatprep.subr.mxu0 0.0
      %1654 = vmatpush1.msra.mxu0 0.0
      %1655 = vmatprep.subr.mxu0 0.0
      %1656 = vmatpush1.msra.mxu0 0.0
      %1657 = vmatprep.subr.mxu0 0.0
      %1658 = vmatpush1.msra.mxu0 0.0
      %1659 = vmatprep.subr.mxu0 0.0
      %1660 = vmatpush1.msra.mxu0 0.0
      %1661 = vmatprep.subr.mxu0 0.0
      %1662 = vmatpush1.msra.mxu0 0.0
      %1663 = vmatprep.subr.mxu0 0.0
      %1664 = vmatpush1.msra.mxu0 0.0
      %1665 = vmatprep.subr.mxu0 0.0
      %1666 = vmatpush1.msra.mxu0 0.0
      %1667 = vmatprep.mubr.f32.mxu0 0.0
      %1668 = vmatmul.mubr.f32.gmra.mrb[0].mxu0 %v1592
      %v1669 = vpop.f32.mrb[0].mxu0
      %v1670 = vadd.f32 0.0, %v1669
      %v1671 = vpop.f32.mrb[0].mxu0
      %1672 = vmatprep.mubr.f32.mxu0 0.0
      %1673 = vmatmul.mubr.f32.gmra.mrb[0].mxu0 %v1595
      %v1674 = vpop.f32.mrb[0].mxu0
      %v1675 = vadd.f32 0.0, %v1674
      %v1676 = vpop.f32.mrb[0].mxu0
      %1677 = vmatprep.mubr.f32.mxu0 0.0
      %1678 = vmatmul.mubr.f32.gmra.mrb[0].mxu0 %v1598
      %v1679 = vpop.f32.mrb[0].mxu0
      %v1680 = vadd.f32 0.0, %v1679
      %v1681 = vpop.f32.mrb[0].mxu0
      %1682 = vmatprep.mubr.f32.mxu0 0.0
      %1683 = vmatmul.mubr.f32.gmra.mrb[0].mxu0 %v1601
      %v1684 = vpop.f32.mrb[0].mxu0
      %v1685 = vadd.f32 0.0, %v1684
      %v1686 = vpop.f32.mrb[0].mxu0
      %1687 = vdwg.mxu0
      %v1688 = vld [vmem:[%s3] sm:$0x1]
      %vm1689 = vcmp.lt.s32.totalorder %v284, 32
      %vm1690 = vmand %vm403, %vm1689
      %vm1691 = vcmp.eq.s32.totalorder %v284, %v1579
      %vm1692 = vcmp.eq.s32.totalorder %v284, %v1581
      %vm1693 = vmor %vm1691, %vm1692
      %vm1694 = vmand %vm1690, %vm408
      %vm1695 = vmand %vm1690, %vm1693
      %v1696 = vsel %vm1694, 1, 0
      %v1697 = vsel %vm1695, 1, 0
      %v1698 = vcvt.s32.f32 %v1696
      %v1699 = vcvt.s32.f32 %v1697
      %1700 = vmatprep.subr.mxu0 0.0
      %1701 = vmatpush1.msra.mxu0 %v1698
      %1702 = vmatprep.subr.mxu0 0.0
      %1703 = vmatpush1.msra.mxu0 %v1699
      %1704 = vmatprep.subr.mxu0 0.0
      %1705 = vmatpush1.msra.mxu0 0.0
      %1706 = vmatprep.subr.mxu0 0.0
      %1707 = vmatpush1.msra.mxu0 0.0
      %1708 = vmatprep.subr.mxu0 0.0
      %1709 = vmatpush1.msra.mxu0 0.0
      %1710 = vmatprep.subr.mxu0 0.0
      %1711 = vmatpush1.msra.mxu0 0.0
      %1712 = vmatprep.subr.mxu0 0.0
      %1713 = vmatpush1.msra.mxu0 0.0
      %1714 = vmatprep.subr.mxu0 0.0
      %1715 = vmatpush1.msra.mxu0 0.0
      %1716 = vmatprep.subr.mxu0 0.0
      %1717 = vmatpush1.msra.mxu0 0.0
      %1718 = vmatprep.subr.mxu0 0.0
      %1719 = vmatpush1.msra.mxu0 0.0
      %1720 = vmatprep.subr.mxu0 0.0
      %1721 = vmatpush1.msra.mxu0 0.0
      %1722 = vmatprep.subr.mxu0 0.0
      %1723 = vmatpush1.msra.mxu0 0.0
      %1724 = vmatprep.subr.mxu0 0.0
      %1725 = vmatpush1.msra.mxu0 0.0
      %1726 = vmatprep.subr.mxu0 0.0
      %1727 = vmatpush1.msra.mxu0 0.0
      %1728 = vmatprep.subr.mxu0 0.0
      %1729 = vmatpush1.msra.mxu0 0.0
      %1730 = vmatprep.subr.mxu0 0.0
      %1731 = vmatpush1.msra.mxu0 0.0
      %1732 = vmatprep.subr.mxu0 0.0
      %1733 = vmatpush1.msra.mxu0 0.0
      %1734 = vmatprep.subr.mxu0 0.0
      %1735 = vmatpush1.msra.mxu0 0.0
      %1736 = vmatprep.subr.mxu0 0.0
      %1737 = vmatpush1.msra.mxu0 0.0
      %1738 = vmatprep.subr.mxu0 0.0
      %1739 = vmatpush1.msra.mxu0 0.0
      %1740 = vmatprep.subr.mxu0 0.0
      %1741 = vmatpush1.msra.mxu0 0.0
      %1742 = vmatprep.subr.mxu0 0.0
      %1743 = vmatpush1.msra.mxu0 0.0
      %1744 = vmatprep.subr.mxu0 0.0
      %1745 = vmatpush1.msra.mxu0 0.0
      %1746 = vmatprep.subr.mxu0 0.0
      %1747 = vmatpush1.msra.mxu0 0.0
      %1748 = vmatprep.subr.mxu0 0.0
      %1749 = vmatpush1.msra.mxu0 0.0
      %1750 = vmatprep.subr.mxu0 0.0
      %1751 = vmatpush1.msra.mxu0 0.0
      %1752 = vmatprep.subr.mxu0 0.0
      %1753 = vmatpush1.msra.mxu0 0.0
      %1754 = vmatprep.subr.mxu0 0.0
      %1755 = vmatpush1.msra.mxu0 0.0
      %1756 = vmatprep.subr.mxu0 0.0
      %1757 = vmatpush1.msra.mxu0 0.0
      %1758 = vmatprep.subr.mxu0 0.0
      %1759 = vmatpush1.msra.mxu0 0.0
      %1760 = vmatprep.subr.mxu0 0.0
      %1761 = vmatpush1.msra.mxu0 0.0
      %1762 = vmatprep.subr.mxu0 0.0
      %1763 = vmatpush1.msra.mxu0 0.0
      %1764 = vmatprep.mubr.f32.mxu0 0.0
      %1765 = vmatmul.mubr.f32.gmra.mrb[0].mxu0 %v1592
      %v1766 = vpop.f32.mrb[0].mxu0
      %v1767 = vadd.f32 0.0, %v1766
      %v1768 = vpop.f32.mrb[0].mxu0
      %1769 = vmatprep.mubr.f32.mxu0 0.0
      %1770 = vmatmul.mubr.f32.gmra.mrb[0].mxu0 %v1595
      %v1771 = vpop.f32.mrb[0].mxu0
      %v1772 = vadd.f32 0.0, %v1771
      %v1773 = vpop.f32.mrb[0].mxu0
      %1774 = vmatprep.mubr.f32.mxu0 0.0
      %1775 = vmatmul.mubr.f32.gmra.mrb[0].mxu0 %v1598
      %v1776 = vpop.f32.mrb[0].mxu0
      %v1777 = vadd.f32 0.0, %v1776
      %v1778 = vpop.f32.mrb[0].mxu0
      %1779 = vmatprep.mubr.f32.mxu0 0.0
      %1780 = vmatmul.mubr.f32.gmra.mrb[0].mxu0 %v1601
      %v1781 = vpop.f32.mrb[0].mxu0
      %v1782 = vadd.f32 0.0, %v1781
      %v1783 = vpop.f32.mrb[0].mxu0
      %1784 = vdwg.mxu0
      %s1785 = scalar_lea.vmem %s3, 1
      %v1786 = vld [vmem:[%s1785] sm:$0x1]
      %v1788 = vsel %vm505, %v1786, 0
      %1790 = vmatprep.subr.mxu0 0.0
      %1791 = vmatpush1.msra.mxu0 %v1767
      %1792 = vmatprep.subr.mxu0 0.0
      %1793 = vmatpush1.msra.mxu0 %v1772
      %1794 = vmatprep.subr.mxu0 0.0
      %1795 = vmatpush1.msra.mxu0 %v1777
      %1796 = vmatprep.subr.mxu0 0.0
      %1797 = vmatpush1.msra.mxu0 %v1782
      %1798 = vmatprep.subr.mxu0 0.0
      %1799 = vmatpush1.msra.mxu0 0.0
      %1800 = vmatprep.subr.mxu0 0.0
      %1801 = vmatpush1.msra.mxu0 0.0
      %1802 = vmatprep.subr.mxu0 0.0
      %1803 = vmatpush1.msra.mxu0 0.0
      %1804 = vmatprep.subr.mxu0 0.0
      %1805 = vmatpush1.msra.mxu0 0.0
      %1806 = vmatprep.subr.mxu0 0.0
      %1807 = vmatpush1.msra.mxu0 0.0
      %1808 = vmatprep.subr.mxu0 0.0
      %1809 = vmatpush1.msra.mxu0 0.0
      %1810 = vmatprep.subr.mxu0 0.0
      %1811 = vmatpush1.msra.mxu0 0.0
      %1812 = vmatprep.subr.mxu0 0.0
      %1813 = vmatpush1.msra.mxu0 0.0
      %1814 = vmatprep.subr.mxu0 0.0
      %1815 = vmatpush1.msra.mxu0 0.0
      %1816 = vmatprep.subr.mxu0 0.0
      %1817 = vmatpush1.msra.mxu0 0.0
      %1818 = vmatprep.subr.mxu0 0.0
      %1819 = vmatpush1.msra.mxu0 0.0
      %1820 = vmatprep.subr.mxu0 0.0
      %1821 = vmatpush1.msra.mxu0 0.0
      %1822 = vmatprep.subr.mxu0 0.0
      %1823 = vmatpush1.msra.mxu0 0.0
      %1824 = vmatprep.subr.mxu0 0.0
      %1825 = vmatpush1.msra.mxu0 0.0
      %1826 = vmatprep.subr.mxu0 0.0
      %1827 = vmatpush1.msra.mxu0 0.0
      %1828 = vmatprep.subr.mxu0 0.0
      %1829 = vmatpush1.msra.mxu0 0.0
      %1830 = vmatprep.subr.mxu0 0.0
      %1831 = vmatpush1.msra.mxu0 0.0
      %1832 = vmatprep.subr.mxu0 0.0
      %1833 = vmatpush1.msra.mxu0 0.0
      %1834 = vmatprep.subr.mxu0 0.0
      %1835 = vmatpush1.msra.mxu0 0.0
      %1836 = vmatprep.subr.mxu0 0.0
      %1837 = vmatpush1.msra.mxu0 0.0
      %1838 = vmatprep.subr.mxu0 0.0
      %1839 = vmatpush1.msra.mxu0 0.0
      %1840 = vmatprep.subr.mxu0 0.0
      %1841 = vmatpush1.msra.mxu0 0.0
      %1842 = vmatprep.subr.mxu0 0.0
      %1843 = vmatpush1.msra.mxu0 0.0
      %1844 = vmatprep.subr.mxu0 0.0
      %1845 = vmatpush1.msra.mxu0 0.0
      %1846 = vmatprep.subr.mxu0 0.0
      %1847 = vmatpush1.msra.mxu0 0.0
      %1848 = vmatprep.subr.mxu0 0.0
      %1849 = vmatpush1.msra.mxu0 0.0
      %1850 = vmatprep.subr.mxu0 0.0
      %1851 = vmatpush1.msra.mxu0 0.0
      %1852 = vmatprep.subr.mxu0 0.0
      %1853 = vmatpush1.msra.mxu0 0.0
      %1854 = vmatprep.mubr.f32.mxu0 0.0
      %1855 = vmatmul.mubr.f32.gmra.mrb[0].mxu0 %v1788
      %v1856 = vpop.f32.mrb[0].mxu0
      %v1857 = vadd.f32 0.0, %v1856
      %v1858 = vpop.f32.mrb[0].mxu0
      %1859 = vdwg.mxu0
      %v1861 = vsel %vm505, %v1688, 0
      %1863 = vmatprep.subr.mxu0 0.0
      %1864 = vmatpush1.msra.mxu0 %v1670
      %1865 = vmatprep.subr.mxu0 0.0
      %1866 = vmatpush1.msra.mxu0 %v1675
      %1867 = vmatprep.subr.mxu0 0.0
      %1868 = vmatpush1.msra.mxu0 %v1680
      %1869 = vmatprep.subr.mxu0 0.0
      %1870 = vmatpush1.msra.mxu0 %v1685
      %1871 = vmatprep.subr.mxu0 0.0
      %1872 = vmatpush1.msra.mxu0 0.0
      %1873 = vmatprep.subr.mxu0 0.0
      %1874 = vmatpush1.msra.mxu0 0.0
      %1875 = vmatprep.subr.mxu0 0.0
      %1876 = vmatpush1.msra.mxu0 0.0
      %1877 = vmatprep.subr.mxu0 0.0
      %1878 = vmatpush1.msra.mxu0 0.0
      %1879 = vmatprep.subr.mxu0 0.0
      %1880 = vmatpush1.msra.mxu0 0.0
      %1881 = vmatprep.subr.mxu0 0.0
      %1882 = vmatpush1.msra.mxu0 0.0
      %1883 = vmatprep.subr.mxu0 0.0
      %1884 = vmatpush1.msra.mxu0 0.0
      %1885 = vmatprep.subr.mxu0 0.0
      %1886 = vmatpush1.msra.mxu0 0.0
      %1887 = vmatprep.subr.mxu0 0.0
      %1888 = vmatpush1.msra.mxu0 0.0
      %1889 = vmatprep.subr.mxu0 0.0
      %1890 = vmatpush1.msra.mxu0 0.0
      %1891 = vmatprep.subr.mxu0 0.0
      %1892 = vmatpush1.msra.mxu0 0.0
      %1893 = vmatprep.subr.mxu0 0.0
      %1894 = vmatpush1.msra.mxu0 0.0
      %1895 = vmatprep.subr.mxu0 0.0
      %1896 = vmatpush1.msra.mxu0 0.0
      %1897 = vmatprep.subr.mxu0 0.0
      %1898 = vmatpush1.msra.mxu0 0.0
      %1899 = vmatprep.subr.mxu0 0.0
      %1900 = vmatpush1.msra.mxu0 0.0
      %1901 = vmatprep.subr.mxu0 0.0
      %1902 = vmatpush1.msra.mxu0 0.0
      %1903 = vmatprep.subr.mxu0 0.0
      %1904 = vmatpush1.msra.mxu0 0.0
      %1905 = vmatprep.subr.mxu0 0.0
      %1906 = vmatpush1.msra.mxu0 0.0
      %1907 = vmatprep.subr.mxu0 0.0
      %1908 = vmatpush1.msra.mxu0 0.0
      %1909 = vmatprep.subr.mxu0 0.0
      %1910 = vmatpush1.msra.mxu0 0.0
      %1911 = vmatprep.subr.mxu0 0.0
      %1912 = vmatpush1.msra.mxu0 0.0
      %1913 = vmatprep.subr.mxu0 0.0
      %1914 = vmatpush1.msra.mxu0 0.0
      %1915 = vmatprep.subr.mxu0 0.0
      %1916 = vmatpush1.msra.mxu0 0.0
      %1917 = vmatprep.subr.mxu0 0.0
      %1918 = vmatpush1.msra.mxu0 0.0
      %1919 = vmatprep.subr.mxu0 0.0
      %1920 = vmatpush1.msra.mxu0 0.0
      %1921 = vmatprep.subr.mxu0 0.0
      %1922 = vmatpush1.msra.mxu0 0.0
      %1923 = vmatprep.subr.mxu0 0.0
      %1924 = vmatpush1.msra.mxu0 0.0
      %1925 = vmatprep.subr.mxu0 0.0
      %1926 = vmatpush1.msra.mxu0 0.0
      %1927 = vmatprep.mubr.f32.mxu0 0.0
      %1928 = vmatmul.mubr.f32.gmra.mrb[0].mxu0 %v1861
      %v1929 = vpop.f32.mrb[0].mxu0
      %v1930 = vadd.f32 %v1857, %v1929
      %v1931 = vpop.f32.mrb[0].mxu0
      %1932 = vdwg.mxu0
      %vm1933 = vcmp.lt.s32.totalorder %v700, 32
      %vm1934 = vmand %vm701, %vm1933
      %vm1935 = vcmp.eq.s32.totalorder %v700, %v1579
      %vm1936 = vcmp.eq.s32.totalorder %v700, %v1581
      %vm1937 = vmor %vm1935, %vm1936
      %vm1938 = vmand %vm1934, %vm706
      %vm1939 = vmand %vm1934, %vm1937
      %v1940 = vsel %vm1938, 1, 0
      %v1941 = vsel %vm1939, 1, 0
      %v1942 = vcvt.s32.f32 %v1940
      %v1943 = vcvt.s32.f32 %v1941
      %1944 = vmatprep.subr.mxu0 0.0
      %1945 = vmatpush1.msra.mxu0 %v1942
      %1946 = vmatprep.subr.mxu0 0.0
      %1947 = vmatpush1.msra.mxu0 %v1943
      %1948 = vmatprep.subr.mxu0 0.0
      %1949 = vmatpush1.msra.mxu0 0.0
      %1950 = vmatprep.subr.mxu0 0.0
      %1951 = vmatpush1.msra.mxu0 0.0
      %1952 = vmatprep.subr.mxu0 0.0
      %1953 = vmatpush1.msra.mxu0 0.0
      %1954 = vmatprep.subr.mxu0 0.0
      %1955 = vmatpush1.msra.mxu0 0.0
      %1956 = vmatprep.subr.mxu0 0.0
      %1957 = vmatpush1.msra.mxu0 0.0
      %1958 = vmatprep.subr.mxu0 0.0
      %1959 = vmatpush1.msra.mxu0 0.0
      %1960 = vmatprep.subr.mxu0 0.0
      %1961 = vmatpush1.msra.mxu0 0.0
      %1962 = vmatprep.subr.mxu0 0.0
      %1963 = vmatpush1.msra.mxu0 0.0
      %1964 = vmatprep.subr.mxu0 0.0
      %1965 = vmatpush1.msra.mxu0 0.0
      %1966 = vmatprep.subr.mxu0 0.0
      %1967 = vmatpush1.msra.mxu0 0.0
      %1968 = vmatprep.subr.mxu0 0.0
      %1969 = vmatpush1.msra.mxu0 0.0
      %1970 = vmatprep.subr.mxu0 0.0
      %1971 = vmatpush1.msra.mxu0 0.0
      %1972 = vmatprep.subr.mxu0 0.0
      %1973 = vmatpush1.msra.mxu0 0.0
      %1974 = vmatprep.subr.mxu0 0.0
      %1975 = vmatpush1.msra.mxu0 0.0
      %1976 = vmatprep.subr.mxu0 0.0
      %1977 = vmatpush1.msra.mxu0 0.0
      %1978 = vmatprep.subr.mxu0 0.0
      %1979 = vmatpush1.msra.mxu0 0.0
      %1980 = vmatprep.subr.mxu0 0.0
      %1981 = vmatpush1.msra.mxu0 0.0
      %1982 = vmatprep.subr.mxu0 0.0
      %1983 = vmatpush1.msra.mxu0 0.0
      %1984 = vmatprep.subr.mxu0 0.0
      %1985 = vmatpush1.msra.mxu0 0.0
      %1986 = vmatprep.subr.mxu0 0.0
      %1987 = vmatpush1.msra.mxu0 0.0
      %1988 = vmatprep.subr.mxu0 0.0
      %1989 = vmatpush1.msra.mxu0 0.0
      %1990 = vmatprep.subr.mxu0 0.0
      %1991 = vmatpush1.msra.mxu0 0.0
      %1992 = vmatprep.subr.mxu0 0.0
      %1993 = vmatpush1.msra.mxu0 0.0
      %1994 = vmatprep.subr.mxu0 0.0
      %1995 = vmatpush1.msra.mxu0 0.0
      %1996 = vmatprep.subr.mxu0 0.0
      %1997 = vmatpush1.msra.mxu0 0.0
      %1998 = vmatprep.subr.mxu0 0.0
      %1999 = vmatpush1.msra.mxu0 0.0
      %2000 = vmatprep.subr.mxu0 0.0
      %2001 = vmatpush1.msra.mxu0 0.0
      %2002 = vmatprep.subr.mxu0 0.0
      %2003 = vmatpush1.msra.mxu0 0.0
      %2004 = vmatprep.subr.mxu0 0.0
      %2005 = vmatpush1.msra.mxu0 0.0
      %2006 = vmatprep.subr.mxu0 0.0
      %2007 = vmatpush1.msra.mxu0 0.0
      %2008 = vmatprep.mubr.f32.mxu0 0.0
      %2009 = vmatmul.mubr.f32.gmra.mrb[0].mxu0 %v1592
      %v2010 = vpop.f32.mrb[0].mxu0
      %v2011 = vadd.f32 0.0, %v2010
      %v2012 = vpop.f32.mrb[0].mxu0
      %2013 = vmatprep.mubr.f32.mxu0 0.0
      %2014 = vmatmul.mubr.f32.gmra.mrb[0].mxu0 %v1595
      %v2015 = vpop.f32.mrb[0].mxu0
      %v2016 = vadd.f32 0.0, %v2015
      %v2017 = vpop.f32.mrb[0].mxu0
      %2018 = vmatprep.mubr.f32.mxu0 0.0
      %2019 = vmatmul.mubr.f32.gmra.mrb[0].mxu0 %v1598
      %v2020 = vpop.f32.mrb[0].mxu0
      %v2021 = vadd.f32 0.0, %v2020
      %v2022 = vpop.f32.mrb[0].mxu0
      %2023 = vmatprep.mubr.f32.mxu0 0.0
      %2024 = vmatmul.mubr.f32.gmra.mrb[0].mxu0 %v1601
      %v2025 = vpop.f32.mrb[0].mxu0
      %v2026 = vadd.f32 0.0, %v2025
      %v2027 = vpop.f32.mrb[0].mxu0
      %2028 = vdwg.mxu0
      %s2029 = scalar_lea.vmem %s3, 2
      %v2030 = vld [vmem:[%s2029] sm:$0x1]
      %v2032 = vsel %vm505, %v2030, 0
      %2034 = vmatprep.subr.mxu0 0.0
      %2035 = vmatpush1.msra.mxu0 %v2011
      %2036 = vmatprep.subr.mxu0 0.0
      %2037 = vmatpush1.msra.mxu0 %v2016
      %2038 = vmatprep.subr.mxu0 0.0
      %2039 = vmatpush1.msra.mxu0 %v2021
      %2040 = vmatprep.subr.mxu0 0.0
      %2041 = vmatpush1.msra.mxu0 %v2026
      %2042 = vmatprep.subr.mxu0 0.0
      %2043 = vmatpush1.msra.mxu0 0.0
      %2044 = vmatprep.subr.mxu0 0.0
      %2045 = vmatpush1.msra.mxu0 0.0
      %2046 = vmatprep.subr.mxu0 0.0
      %2047 = vmatpush1.msra.mxu0 0.0
      %2048 = vmatprep.subr.mxu0 0.0
      %2049 = vmatpush1.msra.mxu0 0.0
      %2050 = vmatprep.subr.mxu0 0.0
      %2051 = vmatpush1.msra.mxu0 0.0
      %2052 = vmatprep.subr.mxu0 0.0
      %2053 = vmatpush1.msra.mxu0 0.0
      %2054 = vmatprep.subr.mxu0 0.0
      %2055 = vmatpush1.msra.mxu0 0.0
      %2056 = vmatprep.subr.mxu0 0.0
      %2057 = vmatpush1.msra.mxu0 0.0
      %2058 = vmatprep.subr.mxu0 0.0
      %2059 = vmatpush1.msra.mxu0 0.0
      %2060 = vmatprep.subr.mxu0 0.0
      %2061 = vmatpush1.msra.mxu0 0.0
      %2062 = vmatprep.subr.mxu0 0.0
      %2063 = vmatpush1.msra.mxu0 0.0
      %2064 = vmatprep.subr.mxu0 0.0
      %2065 = vmatpush1.msra.mxu0 0.0
      %2066 = vmatprep.subr.mxu0 0.0
      %2067 = vmatpush1.msra.mxu0 0.0
      %2068 = vmatprep.subr.mxu0 0.0
      %2069 = vmatpush1.msra.mxu0 0.0
      %2070 = vmatprep.subr.mxu0 0.0
      %2071 = vmatpush1.msra.mxu0 0.0
      %2072 = vmatprep.subr.mxu0 0.0
      %2073 = vmatpush1.msra.mxu0 0.0
      %2074 = vmatprep.subr.mxu0 0.0
      %2075 = vmatpush1.msra.mxu0 0.0
      %2076 = vmatprep.subr.mxu0 0.0
      %2077 = vmatpush1.msra.mxu0 0.0
      %2078 = vmatprep.subr.mxu0 0.0
      %2079 = vmatpush1.msra.mxu0 0.0
      %2080 = vmatprep.subr.mxu0 0.0
      %2081 = vmatpush1.msra.mxu0 0.0
      %2082 = vmatprep.subr.mxu0 0.0
      %2083 = vmatpush1.msra.mxu0 0.0
      %2084 = vmatprep.subr.mxu0 0.0
      %2085 = vmatpush1.msra.mxu0 0.0
      %2086 = vmatprep.subr.mxu0 0.0
      %2087 = vmatpush1.msra.mxu0 0.0
      %2088 = vmatprep.subr.mxu0 0.0
      %2089 = vmatpush1.msra.mxu0 0.0
      %2090 = vmatprep.subr.mxu0 0.0
      %2091 = vmatpush1.msra.mxu0 0.0
      %2092 = vmatprep.subr.mxu0 0.0
      %2093 = vmatpush1.msra.mxu0 0.0
      %2094 = vmatprep.subr.mxu0 0.0
      %2095 = vmatpush1.msra.mxu0 0.0
      %2096 = vmatprep.subr.mxu0 0.0
      %2097 = vmatpush1.msra.mxu0 0.0
      %2098 = vmatprep.mubr.f32.mxu0 0.0
      %2099 = vmatmul.mubr.f32.gmra.mrb[0].mxu0 %v2032
      %v2100 = vpop.f32.mrb[0].mxu0
      %v2101 = vadd.f32 0.0, %v2100
      %v2102 = vpop.f32.mrb[0].mxu0
      %2103 = vdwg.mxu0
      %v2104 = vadd.f32 %v1930, %v2101
      %v2105 = vld [vmem:[#allocation2] sm:$0x1]
      %2107 = vset.pattern.permute.xlu0 0
      %2108 = vperm.xlu0 %2107, %v2105
      %v2109 = vpop.permute.xlu0 %2108
      %v2111 = vlaneseq
      %v2112 = vshrl.u32 %v2111, 7
      %v2113 = vsub.s32 0, %v2112
      %v2114 = vrot.slane %v2109, %v2113
      %v2115 = vadd.f32 %v2104, %v2114
      %v2116 = vmul.f32 %v2115, %v2115
      %vm2117 = vcmask 253952
      %2118 = vst.msk [vmem:[%s276] sm:$0x1] %vm2117, %v2116
      %p2119 = scmp.lt.s32.totalorder %s20, 1
      %s2120 = scalar_select %p2119, %s20, 1
      %s2121 = scalar_lea.vmem %s7, %s2120
      // Predicated region
      $region49: #{segment_generator_forward.9} parent=47 // pred_check
        %p2122 = pneg %p190
      $region50: #{segment_generator_forward.9} parent=47 // pred_check_branch
        %2124 = sbr.rel (%p2122) target = $region52
      $region51: #{segment_generator_forward.9} parent=47 // pred_region
        _
      $region52: #{segment_generator_forward.9} parent=47 // pred_fallthru
        _
    $region48: #{segment_generator_forward.9} parent=5 // pred_fallthru
      _
    %p2125 = scmp.le.s32.totalorder 2, %s15
    // Predicated region
    $region53: #{segment_generator_forward.9} parent=5 // pred_check
      %p2126 = pneg %p2125
    $region54: #{segment_generator_forward.9} parent=5 // pred_check_branch
      %2128 = sbr.rel (%p2126) target = $region56
    $region55: #{segment_generator_forward.9} parent=5 // pred_region
      %s2129 = ssub.s32 %s15, 2
      // Predicated region
      $region57: #{segment_generator_forward.9} parent=55 // pred_check
        %p2130 = pneg %p196
      $region58: #{segment_generator_forward.9} parent=55 // pred_check_branch
        %2132 = sbr.rel (%p2130) target = $region60
      $region59: #{segment_generator_forward.9} parent=55 // pred_region
        %p2133 = scmp.lt.s32.totalorder %s21, 1
        %s2134 = scalar_select %p2133, %s21, 1
        %s2135 = scalar_lea.vmem %s7, %s2134
      $region60: #{segment_generator_forward.9} parent=55 // pred_fallthru
        _
    $region56: #{segment_generator_forward.9} parent=5 // pred_fallthru
      _
  $region6: #{segment_generator_forward.9} parent=0 // loop_footer
    %s19 = sadd.s32 1, %s15
  $region7: #{segment_generator_forward.9} parent=0 // loop_footer_branch
    %14 = sbr.rel target = $region3
  $region8: #{segment_generator_forward.9} parent=0 // loop_exit
    _

// kernel: segment_generator_forward.10
$region0: #{segment_generator_forward.10}
  #allocation0 [shape = 'u32[]', space=smem, size = 0x4, offset = 0x4, fixed_abs, tag = 'smem constant byte address 0x4 - core index']
  #allocation1 [shape = 'u32[144,128]{1,0:T(1,128)}', space=vmem, size = 0x12000, scoped, tag = 'internal scratch']
  %s0 = inlined_call_operand.vmem [shape: f32[2,2,18], index: 0, kind: input, shape index: {}]
  %s1 = inlined_call_operand.vmem [shape: f32[18,2048], index: 1, kind: input, shape index: {}]
  %s2 = inlined_call_operand.vmem [shape: f32[1,4096], index: 2, kind: input, shape index: {}]
  %s3 = inlined_call_operand.vmem [shape: f32[2,4096], index: 3, kind: output, shape index: {}]
  %s4 = sld [smem:[#allocation0]]
  $region45: #{segment_generator_forward.10} parent=0
    _
  %s6 = ssub.s32 1, %s4
  %s7 = scalar_select 0, %s6, %s4
  loop: start=0, step=1, limit=4
  $region2: #{segment_generator_forward.10} parent=0 // loop_pre_header
    _
  $region3: #{segment_generator_forward.10} parent=0 // loop_header
    %s9 = sphi 0, %s13
    %p10 = scmp.ge.s32.totalorder %s9, 4
    %s19 = sphi 0, %s21
    %s22 = sphi 0, %s19
    %s23 = sphi 0, %s22
    %s39 = sphi 0, %s23
    %s43 = sphi 0, %s43
    %s45 = sphi 0, %s43
    %s46 = sphi 0, %s45
    %s60 = sphi 0, %s46
    %s66 = sphi 0, %s68
    %s69 = sphi 0, %s66
    %s70 = sphi 0, %s69
    %s86 = sphi 0, %s70
    %s92 = sphi 0, %s94
    %s95 = sphi 0, %s92
    %s96 = sphi 0, %s95
    %s112 = sphi 0, %s96
  $region4: #{segment_generator_forward.10} parent=0 // loop_header_branch
    %12 = sbr.rel (%p10) target = $region8
  $region5: #{segment_generator_forward.10} parent=0 // loop_body
    %s14 = ssub.s32 %s9, 1
    %s15 = ssub.s32 %s9, 2
    %s16 = sadd.s32 %s9, 1
    %s17 = ssub.s32 %s9, %s16
    %p18 = scmp.eq.s32.totalorder %s17, 0
    %s20 = sadd.s32 %s19, 1
    %s21 = scalar_select %p18, %s19, %s20
    %p24 = pneg %p18
    %p25 = scmp.eq.s32.totalorder %s9, 1
    %p26 = por %p24, %p25
    %p27 = scmp.ne.s32.totalorder %s19, %s22
    %p28 = scmp.eq.s32.totalorder %s9, 0
    %p29 = por %p27, %p28
    %p30 = scmp.ne.s32.totalorder %s19, %s22
    %p31 = scmp.eq.s32.totalorder %s14, 1
    %p32 = por %p30, %p31
    %p33 = scmp.ne.s32.totalorder %s22, %s23
    %p34 = scmp.eq.s32.totalorder %s14, 0
    %p35 = por %p33, %p34
    %p36 = scmp.ne.s32.totalorder %s22, %s23
    %p37 = scmp.eq.s32.totalorder %s15, 1
    %p38 = por %p36, %p37
    %p40 = scmp.ne.s32.totalorder %s23, %s39
    %p41 = scmp.eq.s32.totalorder %s15, 0
    %p42 = por %p40, %p41
    %s44 = sadd.s32 %s43, 1
    %p47 = scmp.eq.s32.totalorder %s9, 1
    %p48 = scmp.ne.s32.totalorder %s43, %s45
    %p49 = scmp.eq.s32.totalorder %s9, 0
    %p50 = por %p48, %p49
    %p51 = scmp.ne.s32.totalorder %s43, %s45
    %p52 = scmp.eq.s32.totalorder %s14, 1
    %p53 = por %p51, %p52
    %p54 = scmp.ne.s32.totalorder %s45, %s46
    %p55 = scmp.eq.s32.totalorder %s14, 0
    %p56 = por %p54, %p55
    %p57 = scmp.ne.s32.totalorder %s45, %s46
    %p58 = scmp.eq.s32.totalorder %s15, 1
    %p59 = por %p57, %p58
    %p61 = scmp.ne.s32.totalorder %s46, %s60
    %p62 = scmp.eq.s32.totalorder %s15, 0
    %p63 = por %p61, %p62
    %s64 = ssub.s32 %s9, %s16
    %p65 = scmp.eq.s32.totalorder %s64, 0
    %s67 = sadd.s32 %s66, 1
    %s68 = scalar_select %p65, %s66, %s67
    %p71 = pneg %p65
    %p72 = scmp.eq.s32.totalorder %s9, 1
    %p73 = por %p71, %p72
    %p74 = scmp.ne.s32.totalorder %s66, %s69
    %p75 = scmp.eq.s32.totalorder %s9, 0
    %p76 = por %p74, %p75
    %p77 = scmp.ne.s32.totalorder %s66, %s69
    %p78 = scmp.eq.s32.totalorder %s14, 1
    %p79 = por %p77, %p78
    %p80 = scmp.ne.s32.totalorder %s69, %s70
    %p81 = scmp.eq.s32.totalorder %s14, 0
    %p82 = por %p80, %p81
    %p83 = scmp.ne.s32.totalorder %s69, %s70
    %p84 = scmp.eq.s32.totalorder %s15, 1
    %p85 = por %p83, %p84
    %p87 = scmp.ne.s32.totalorder %s70, %s86
    %p88 = scmp.eq.s32.totalorder %s15, 0
    %p89 = por %p87, %p88
    %s90 = ssub.s32 %s9, %s16
    %p91 = scmp.eq.s32.totalorder %s90, 0
    %s93 = sadd.s32 %s92, 1
    %s94 = scalar_select %p91, %s92, %s93
    %p97 = pneg %p91
    %p98 = scmp.eq.s32.totalorder %s9, 1
    %p99 = por %p97, %p98
    %p100 = scmp.ne.s32.totalorder %s92, %s95
    %p101 = scmp.eq.s32.totalorder %s9, 0
    %p102 = por %p100, %p101
    %p103 = scmp.ne.s32.totalorder %s92, %s95
    %p104 = scmp.eq.s32.totalorder %s14, 1
    %p105 = por %p103, %p104
    %p106 = scmp.ne.s32.totalorder %s95, %s96
    %p107 = scmp.eq.s32.totalorder %s14, 0
    %p108 = por %p106, %p107
    %p109 = scmp.ne.s32.totalorder %s95, %s96
    %p110 = scmp.eq.s32.totalorder %s15, 1
    %p111 = por %p109, %p110
    %p113 = scmp.ne.s32.totalorder %s96, %s112
    %p114 = scmp.eq.s32.totalorder %s15, 0
    %p115 = por %p113, %p114
    %p116 = scmp.le.s32.totalorder 1, %s9
    %p117 = scmp.lt.s32.totalorder %s9, 3
    %p118 = pnand %p116, %p117
    %p119 = pneg %p118
    // Predicated region
    $region9: #{segment_generator_forward.10} parent=5 // pred_check
      _
    $region10: #{segment_generator_forward.10} parent=5 // pred_check_branch
      %121 = sbr.rel (%p118) target = $region12
    $region11: #{segment_generator_forward.10} parent=5 // pred_region
      %s122 = ssub.s32 %s9, 1
      // Predicated region
      $region13: #{segment_generator_forward.10} parent=11 // pred_check
        %p123 = pneg %p56
      $region14: #{segment_generator_forward.10} parent=11 // pred_check_branch
        %125 = sbr.rel (%p123) target = $region16
      $region15: #{segment_generator_forward.10} parent=11 // pred_region
        _
      $region16: #{segment_generator_forward.10} parent=11 // pred_fallthru
        _
    $region12: #{segment_generator_forward.10} parent=5 // pred_fallthru
      _
    %p126 = scmp.lt.s32.totalorder %s9, 2
    // Predicated region
    $region17: #{segment_generator_forward.10} parent=5 // pred_check
      %p127 = pneg %p126
    $region18: #{segment_generator_forward.10} parent=5 // pred_check_branch
      %129 = sbr.rel (%p127) target = $region20
    $region19: #{segment_generator_forward.10} parent=5 // pred_region
      // Predicated region
      $region21: #{segment_generator_forward.10} parent=19 // pred_check
        %p130 = pneg %p29
      $region22: #{segment_generator_forward.10} parent=19 // pred_check_branch
        %132 = sbr.rel (%p130) target = $region24
      $region23: #{segment_generator_forward.10} parent=19 // pred_region
        %p133 = scmp.lt.s32.totalorder %s9, 1
        %s134 = scalar_select %p133, %s9, 1
        %s135 = smul.addr %s134, 2
        %s136 = scalar_lea.vmem %s0, %s135
      $region24: #{segment_generator_forward.10} parent=19 // pred_fallthru
        _
      // Predicated region
      $region25: #{segment_generator_forward.10} parent=19 // pred_check
        %p137 = pneg %p76
      $region26: #{segment_generator_forward.10} parent=19 // pred_check_branch
        %139 = sbr.rel (%p137) target = $region28
      $region27: #{segment_generator_forward.10} parent=19 // pred_region
        %s140 = smul.u32 16, %s9
        %p141 = scmp.lt.s32.totalorder %s140, 31
        %s142 = scalar_select %p141, %s140, 31
        %s143 = scalar_lea.vmem %s2, %s142
        %s144 = smul.u32 16, %s9
      $region28: #{segment_generator_forward.10} parent=19 // pred_fallthru
        _
    $region20: #{segment_generator_forward.10} parent=5 // pred_fallthru
      _
    %p145 = scmp.le.s32.totalorder 1, %s9
    %p146 = scmp.lt.s32.totalorder %s9, 3
    %p147 = pnand %p145, %p146
    %p148 = pneg %p147
    // Predicated region
    $region29: #{segment_generator_forward.10} parent=5 // pred_check
      _
    $region30: #{segment_generator_forward.10} parent=5 // pred_check_branch
      %150 = sbr.rel (%p147) target = $region32
    $region31: #{segment_generator_forward.10} parent=5 // pred_region
      %s151 = ssub.s32 %s9, 1
      %p152 = scmp.lt.s32.totalorder %s14, 1
      %s153 = scalar_select %p152, %s14, 1
      %s154 = smul.addr %s153, 2
      %s155 = scalar_lea.vmem %s0, %s154
      %p156 = pneg %p35
      %p157 = pneg %p32
      %p158 = pneg %p56
      %p159 = pneg %p53
      %s160 = smul.u32 16, %s14
      %p161 = scmp.lt.s32.totalorder %s160, 31
      %s162 = scalar_select %p161, %s160, 31
      %s163 = scalar_lea.vmem %s2, %s162
      %p164 = pneg %p82
      %p165 = pneg %p79
      %p166 = pneg %p108
      %p167 = pneg %p105
      %s168 = smul.u32 16, %s14
      %p169 = scmp.lt.s32.totalorder %s168, 31
      %s170 = scalar_select %p169, %s168, 31
      %s171 = smul.addr %s170, 2
      %s172 = scalar_lea.vmem %s3, %s171
      %p173 = scmp.lt.s32.totalorder %s14, 1
      %s174 = scalar_select %p173, %s14, 1
      %s175 = smul.addr %s174, 2
      %s176 = scalar_lea.vmem %s0, %s175
      %s177 = smul.u32 16, %s14
      %p178 = scmp.lt.s32.totalorder %s177, 31
      %s179 = scalar_select %p178, %s177, 31
      %s180 = scalar_lea.vmem %s2, %s179
      %s181 = smul.u32 16, %s14
      %s182 = smul.u32 16, %s14
      %p183 = scmp.lt.s32.totalorder %s182, 31
      %s184 = scalar_select %p183, %s182, 31
      %s185 = smul.addr %s184, 2
      %s186 = scalar_lea.vmem %s3, %s185
      %s187 = smul.u32 16, %s14
      %v188 = vld [vmem:[%s176] sm:$0x3]
      %v189 = vld [vmem:[%s1] sm:$0xff]
      %v190 = vld [vmem:[%s1 + $0x8] sm:$0xff]
      %v191 = vld [vmem:[%s1 + $0x10] sm:$0xff]
      %v192 = vld [vmem:[%s1 + $0x18] sm:$0xff]
      %v193 = vld [vmem:[%s1 + $0x20] sm:$0xff]
      %v194 = vld [vmem:[%s1 + $0x28] sm:$0xff]
      %v195 = vld [vmem:[%s1 + $0x30] sm:$0xff]
      %v196 = vld [vmem:[%s1 + $0x38] sm:$0xff]
      %v197 = vld [vmem:[%s1 + $0x40] sm:$0xff]
      %v198 = vld [vmem:[%s1 + $0x48] sm:$0xff]
      %v199 = vld [vmem:[%s1 + $0x50] sm:$0xff]
      %v200 = vld [vmem:[%s1 + $0x58] sm:$0xff]
      %v201 = vld [vmem:[%s1 + $0x60] sm:$0xff]
      %v202 = vld [vmem:[%s1 + $0x68] sm:$0xff]
      %v203 = vld [vmem:[%s1 + $0x70] sm:$0xff]
      %v204 = vld [vmem:[%s1 + $0x78] sm:$0xff]
      %v205 = vld [vmem:[%s1 + $0x80] sm:$0xff]
      %v206 = vld [vmem:[%s1 + $0x88] sm:$0xff]
      %v207 = vld [vmem:[%s1 + $0x90] sm:$0xff]
      %v208 = vld [vmem:[%s1 + $0x98] sm:$0xff]
      %v209 = vld [vmem:[%s1 + $0xa0] sm:$0xff]
      %v210 = vld [vmem:[%s1 + $0xa8] sm:$0xff]
      %v211 = vld [vmem:[%s1 + $0xb0] sm:$0xff]
      %v212 = vld [vmem:[%s1 + $0xb8] sm:$0xff]
      %v213 = vld [vmem:[%s1 + $0xc0] sm:$0xff]
      %v214 = vld [vmem:[%s1 + $0xc8] sm:$0xff]
      %v215 = vld [vmem:[%s1 + $0xd0] sm:$0xff]
      %v216 = vld [vmem:[%s1 + $0xd8] sm:$0xff]
      %v217 = vld [vmem:[%s1 + $0xe0] sm:$0xff]
      %v218 = vld [vmem:[%s1 + $0xe8] sm:$0xff]
      %v219 = vld [vmem:[%s1 + $0xf0] sm:$0xff]
      %v220 = vld [vmem:[%s1 + $0xf8] sm:$0xff]
      %v221 = vld [vmem:[%s1 + $0x100] sm:$0x3]
      %v222 = vld [vmem:[%s1 + $0x108] sm:$0x3]
      %v223 = vld [vmem:[%s1 + $0x110] sm:$0x3]
      %v224 = vld [vmem:[%s1 + $0x118] sm:$0x3]
      %v225 = vld [vmem:[%s1 + $0x120] sm:$0x3]
      %v226 = vld [vmem:[%s1 + $0x128] sm:$0x3]
      %v227 = vld [vmem:[%s1 + $0x130] sm:$0x3]
      %v228 = vld [vmem:[%s1 + $0x138] sm:$0x3]
      %v229 = vld [vmem:[%s1 + $0x140] sm:$0x3]
      %v230 = vld [vmem:[%s1 + $0x148] sm:$0x3]
      %v231 = vld [vmem:[%s1 + $0x150] sm:$0x3]
      %v232 = vld [vmem:[%s1 + $0x158] sm:$0x3]
      %v233 = vld [vmem:[%s1 + $0x160] sm:$0x3]
      %v234 = vld [vmem:[%s1 + $0x168] sm:$0x3]
      %v235 = vld [vmem:[%s1 + $0x170] sm:$0x3]
      %v236 = vld [vmem:[%s1 + $0x178] sm:$0x3]
      %vm237 = vcmask 146432
      %v239 = vsel %vm237, %v188, 0
      %vm241 = vcmask 1041408
      %v243 = vsel %vm241, %v221, 0
      %v246 = vsel %vm241, %v222, 0
      %v249 = vsel %vm241, %v223, 0
      %v252 = vsel %vm241, %v224, 0
      %v255 = vsel %vm241, %v225, 0
      %v258 = vsel %vm241, %v226, 0
      %v261 = vsel %vm241, %v227, 0
      %v264 = vsel %vm241, %v228, 0
      %v267 = vsel %vm241, %v229, 0
      %v270 = vsel %vm241, %v230, 0
      %v273 = vsel %vm241, %v231, 0
      %v276 = vsel %vm241, %v232, 0
      %v279 = vsel %vm241, %v233, 0
      %v282 = vsel %vm241, %v234, 0
      %v285 = vsel %vm241, %v235, 0
      %v288 = vsel %vm241, %v236, 0
      %290 = vmatprep.subr.mxu0 %v190
      %291 = vmatpush1.msra.mxu0 %v189
      %292 = vmatprep.subr.mxu0 %v206
      %293 = vmatpush1.msra.mxu0 %v205
      %294 = vmatprep.subr.mxu0 %v246
      %295 = vmatpush1.msra.mxu0 %v243
      %296 = vmatprep.subr.mxu0 0.0
      %297 = vmatpush1.msra.mxu0 0.0
      %298 = vmatprep.subr.mxu0 0.0
      %299 = vmatpush1.msra.mxu0 0.0
      %300 = vmatprep.subr.mxu0 0.0
      %301 = vmatpush1.msra.mxu0 0.0
      %302 = vmatprep.subr.mxu0 0.0
      %303 = vmatpush1.msra.mxu0 0.0
      %304 = vmatprep.subr.mxu0 0.0
      %305 = vmatpush1.msra.mxu0 0.0
      %306 = vmatprep.subr.mxu0 0.0
      %307 = vmatpush1.msra.mxu0 0.0
      %308 = vmatprep.subr.mxu0 0.0
      %309 = vmatpush1.msra.mxu0 0.0
      %310 = vmatprep.subr.mxu0 0.0
      %311 = vmatpush1.msra.mxu0 0.0
      %312 = vmatprep.subr.mxu0 0.0
      %313 = vmatpush1.msra.mxu0 0.0
      %314 = vmatprep.subr.mxu0 0.0
      %315 = vmatpush1.msra.mxu0 0.0
      %316 = vmatprep.subr.mxu0 0.0
      %317 = vmatpush1.msra.mxu0 0.0
      %318 = vmatprep.subr.mxu0 0.0
      %319 = vmatpush1.msra.mxu0 0.0
      %320 = vmatprep.subr.mxu0 0.0
      %321 = vmatpush1.msra.mxu0 0.0
      %322 = vmatprep.subr.mxu0 0.0
      %323 = vmatpush1.msra.mxu0 0.0
      %324 = vmatprep.subr.mxu0 0.0
      %325 = vmatpush1.msra.mxu0 0.0
      %326 = vmatprep.subr.mxu0 0.0
      %327 = vmatpush1.msra.mxu0 0.0
      %328 = vmatprep.subr.mxu0 0.0
      %329 = vmatpush1.msra.mxu0 0.0
      %330 = vmatprep.subr.mxu0 0.0
      %331 = vmatpush1.msra.mxu0 0.0
      %332 = vmatprep.subr.mxu0 0.0
      %333 = vmatpush1.msra.mxu0 0.0
      %334 = vmatprep.subr.mxu0 0.0
      %335 = vmatpush1.msra.mxu0 0.0
      %336 = vmatprep.subr.mxu0 0.0
      %337 = vmatpush1.msra.mxu0 0.0
      %338 = vmatprep.subr.mxu0 0.0
      %339 = vmatpush1.msra.mxu0 0.0
      %340 = vmatprep.subr.mxu0 0.0
      %341 = vmatpush1.msra.mxu0 0.0
      %342 = vmatprep.subr.mxu0 0.0
      %343 = vmatpush1.msra.mxu0 0.0
      %344 = vmatprep.subr.mxu0 0.0
      %345 = vmatpush1.msra.mxu0 0.0
      %346 = vmatprep.subr.mxu0 0.0
      %347 = vmatpush1.msra.mxu0 0.0
      %348 = vmatprep.subr.mxu0 0.0
      %349 = vmatpush1.msra.mxu0 0.0
      %350 = vmatprep.subr.mxu0 0.0
      %351 = vmatpush1.msra.mxu0 0.0
      %352 = vmatprep.subr.mxu0 0.0
      %353 = vmatpush1.msra.mxu0 0.0
      %354 = vmatprep.mubr.f32.mxu0 0.0
      %355 = vmatmul.mubr.f32.gmra.mrb[0].mxu0 %v239
      %v356 = vpop.f32.mrb[0].mxu0
      %v357 = vadd.f32 0.0, %v356
      %v358 = vpop.f32.mrb[0].mxu0
      %v359 = vadd.f32 0.0, %v358
      %360 = vdwg.mxu0
      %361 = vmatprep.subr.mxu0 %v192
      %362 = vmatpush1.msra.mxu0 %v191
      %363 = vmatprep.subr.mxu0 %v208
      %364 = vmatpush1.msra.mxu0 %v207
      %365 = vmatprep.subr.mxu0 %v252
      %366 = vmatpush1.msra.mxu0 %v249
      %367 = vmatprep.subr.mxu0 0.0
      %368 = vmatpush1.msra.mxu0 0.0
      %369 = vmatprep.subr.mxu0 0.0
      %370 = vmatpush1.msra.mxu0 0.0
      %371 = vmatprep.subr.mxu0 0.0
      %372 = vmatpush1.msra.mxu0 0.0
      %373 = vmatprep.subr.mxu0 0.0
      %374 = vmatpush1.msra.mxu0 0.0
      %375 = vmatprep.subr.mxu0 0.0
      %376 = vmatpush1.msra.mxu0 0.0
      %377 = vmatprep.subr.mxu0 0.0
      %378 = vmatpush1.msra.mxu0 0.0
      %379 = vmatprep.subr.mxu0 0.0
      %380 = vmatpush1.msra.mxu0 0.0
      %381 = vmatprep.subr.mxu0 0.0
      %382 = vmatpush1.msra.mxu0 0.0
      %383 = vmatprep.subr.mxu0 0.0
      %384 = vmatpush1.msra.mxu0 0.0
      %385 = vmatprep.subr.mxu0 0.0
      %386 = vmatpush1.msra.mxu0 0.0
      %387 = vmatprep.subr.mxu0 0.0
      %388 = vmatpush1.msra.mxu0 0.0
      %389 = vmatprep.subr.mxu0 0.0
      %390 = vmatpush1.msra.mxu0 0.0
      %391 = vmatprep.subr.mxu0 0.0
      %392 = vmatpush1.msra.mxu0 0.0
      %393 = vmatprep.subr.mxu0 0.0
      %394 = vmatpush1.msra.mxu0 0.0
      %395 = vmatprep.subr.mxu0 0.0
      %396 = vmatpush1.msra.mxu0 0.0
      %397 = vmatprep.subr.mxu0 0.0
      %398 = vmatpush1.msra.mxu0 0.0
      %399 = vmatprep.subr.mxu0 0.0
      %400 = vmatpush1.msra.mxu0 0.0
      %401 = vmatprep.subr.mxu0 0.0
      %402 = vmatpush1.msra.mxu0 0.0
      %403 = vmatprep.subr.mxu0 0.0
      %404 = vmatpush1.msra.mxu0 0.0
      %405 = vmatprep.subr.mxu0 0.0
      %406 = vmatpush1.msra.mxu0 0.0
      %407 = vmatprep.subr.mxu0 0.0
      %408 = vmatpush1.msra.mxu0 0.0
      %409 = vmatprep.subr.mxu0 0.0
      %410 = vmatpush1.msra.mxu0 0.0
      %411 = vmatprep.subr.mxu0 0.0
      %412 = vmatpush1.msra.mxu0 0.0
      %413 = vmatprep.subr.mxu0 0.0
      %414 = vmatpush1.msra.mxu0 0.0
      %415 = vmatprep.subr.mxu0 0.0
      %416 = vmatpush1.msra.mxu0 0.0
      %417 = vmatprep.subr.mxu0 0.0
      %418 = vmatpush1.msra.mxu0 0.0
      %419 = vmatprep.subr.mxu0 0.0
      %420 = vmatpush1.msra.mxu0 0.0
      %421 = vmatprep.subr.mxu0 0.0
      %422 = vmatpush1.msra.mxu0 0.0
      %423 = vmatprep.subr.mxu0 0.0
      %424 = vmatpush1.msra.mxu0 0.0
      %425 = vmatprep.mubr.f32.mxu0 0.0
      %426 = vmatmul.mubr.f32.gmra.mrb[0].mxu0 %v239
      %v427 = vpop.f32.mrb[0].mxu0
      %v428 = vadd.f32 0.0, %v427
      %v429 = vpop.f32.mrb[0].mxu0
      %v430 = vadd.f32 0.0, %v429
      %431 = vdwg.mxu0
      %432 = vmatprep.subr.mxu0 %v194
      %433 = vmatpush1.msra.mxu0 %v193
      %434 = vmatprep.subr.mxu0 %v210
      %435 = vmatpush1.msra.mxu0 %v209
      %436 = vmatprep.subr.mxu0 %v258
      %437 = vmatpush1.msra.mxu0 %v255
      %438 = vmatprep.subr.mxu0 0.0
      %439 = vmatpush1.msra.mxu0 0.0
      %440 = vmatprep.subr.mxu0 0.0
      %441 = vmatpush1.msra.mxu0 0.0
      %442 = vmatprep.subr.mxu0 0.0
      %443 = vmatpush1.msra.mxu0 0.0
      %444 = vmatprep.subr.mxu0 0.0
      %445 = vmatpush1.msra.mxu0 0.0
      %446 = vmatprep.subr.mxu0 0.0
      %447 = vmatpush1.msra.mxu0 0.0
      %448 = vmatprep.subr.mxu0 0.0
      %449 = vmatpush1.msra.mxu0 0.0
      %450 = vmatprep.subr.mxu0 0.0
      %451 = vmatpush1.msra.mxu0 0.0
      %452 = vmatprep.subr.mxu0 0.0
      %453 = vmatpush1.msra.mxu0 0.0
      %454 = vmatprep.subr.mxu0 0.0
      %455 = vmatpush1.msra.mxu0 0.0
      %456 = vmatprep.subr.mxu0 0.0
      %457 = vmatpush1.msra.mxu0 0.0
      %458 = vmatprep.subr.mxu0 0.0
      %459 = vmatpush1.msra.mxu0 0.0
      %460 = vmatprep.subr.mxu0 0.0
      %461 = vmatpush1.msra.mxu0 0.0
      %462 = vmatprep.subr.mxu0 0.0
      %463 = vmatpush1.msra.mxu0 0.0
      %464 = vmatprep.subr.mxu0 0.0
      %465 = vmatpush1.msra.mxu0 0.0
      %466 = vmatprep.subr.mxu0 0.0
      %467 = vmatpush1.msra.mxu0 0.0
      %468 = vmatprep.subr.mxu0 0.0
      %469 = vmatpush1.msra.mxu0 0.0
      %470 = vmatprep.subr.mxu0 0.0
      %471 = vmatpush1.msra.mxu0 0.0
      %472 = vmatprep.subr.mxu0 0.0
      %473 = vmatpush1.msra.mxu0 0.0
      %474 = vmatprep.subr.mxu0 0.0
      %475 = vmatpush1.msra.mxu0 0.0
      %476 = vmatprep.subr.mxu0 0.0
      %477 = vmatpush1.msra.mxu0 0.0
      %478 = vmatprep.subr.mxu0 0.0
      %479 = vmatpush1.msra.mxu0 0.0
      %480 = vmatprep.subr.mxu0 0.0
      %481 = vmatpush1.msra.mxu0 0.0
      %482 = vmatprep.subr.mxu0 0.0
      %483 = vmatpush1.msra.mxu0 0.0
      %484 = vmatprep.subr.mxu0 0.0
      %485 = vmatpush1.msra.mxu0 0.0
      %486 = vmatprep.subr.mxu0 0.0
      %487 = vmatpush1.msra.mxu0 0.0
      %488 = vmatprep.subr.mxu0 0.0
      %489 = vmatpush1.msra.mxu0 0.0
      %490 = vmatprep.subr.mxu0 0.0
      %491 = vmatpush1.msra.mxu0 0.0
      %492 = vmatprep.subr.mxu0 0.0
      %493 = vmatpush1.msra.mxu0 0.0
      %494 = vmatprep.subr.mxu0 0.0
      %495 = vmatpush1.msra.mxu0 0.0
      %496 = vmatprep.mubr.f32.mxu0 0.0
      %497 = vmatmul.mubr.f32.gmra.mrb[0].mxu0 %v239
      %v498 = vpop.f32.mrb[0].mxu0
      %v499 = vadd.f32 0.0, %v498
      %v500 = vpop.f32.mrb[0].mxu0
      %v501 = vadd.f32 0.0, %v500
      %502 = vdwg.mxu0
      %503 = vmatprep.subr.mxu0 %v196
      %504 = vmatpush1.msra.mxu0 %v195
      %505 = vmatprep.subr.mxu0 %v212
      %506 = vmatpush1.msra.mxu0 %v211
      %507 = vmatprep.subr.mxu0 %v264
      %508 = vmatpush1.msra.mxu0 %v261
      %509 = vmatprep.subr.mxu0 0.0
      %510 = vmatpush1.msra.mxu0 0.0
      %511 = vmatprep.subr.mxu0 0.0
      %512 = vmatpush1.msra.mxu0 0.0
      %513 = vmatprep.subr.mxu0 0.0
      %514 = vmatpush1.msra.mxu0 0.0
      %515 = vmatprep.subr.mxu0 0.0
      %516 = vmatpush1.msra.mxu0 0.0
      %517 = vmatprep.subr.mxu0 0.0
      %518 = vmatpush1.msra.mxu0 0.0
      %519 = vmatprep.subr.mxu0 0.0
      %520 = vmatpush1.msra.mxu0 0.0
      %521 = vmatprep.subr.mxu0 0.0
      %522 = vmatpush1.msra.mxu0 0.0
      %523 = vmatprep.subr.mxu0 0.0
      %524 = vmatpush1.msra.mxu0 0.0
      %525 = vmatprep.subr.mxu0 0.0
      %526 = vmatpush1.msra.mxu0 0.0
      %527 = vmatprep.subr.mxu0 0.0
      %528 = vmatpush1.msra.mxu0 0.0
      %529 = vmatprep.subr.mxu0 0.0
      %530 = vmatpush1.msra.mxu0 0.0
      %531 = vmatprep.subr.mxu0 0.0
      %532 = vmatpush1.msra.mxu0 0.0
      %533 = vmatprep.subr.mxu0 0.0
      %534 = vmatpush1.msra.mxu0 0.0
      %535 = vmatprep.subr.mxu0 0.0
      %536 = vmatpush1.msra.mxu0 0.0
      %537 = vmatprep.subr.mxu0 0.0
      %538 = vmatpush1.msra.mxu0 0.0
      %539 = vmatprep.subr.mxu0 0.0
      %540 = vmatpush1.msra.mxu0 0.0
      %541 = vmatprep.subr.mxu0 0.0
      %542 = vmatpush1.msra.mxu0 0.0
      %543 = vmatprep.subr.mxu0 0.0
      %544 = vmatpush1.msra.mxu0 0.0
      %545 = vmatprep.subr.mxu0 0.0
      %546 = vmatpush1.msra.mxu0 0.0
      %547 = vmatprep.subr.mxu0 0.0
      %548 = vmatpush1.msra.mxu0 0.0
      %549 = vmatprep.subr.mxu0 0.0
      %550 = vmatpush1.msra.mxu0 0.0
      %551 = vmatprep.subr.mxu0 0.0
      %552 = vmatpush1.msra.mxu0 0.0
      %553 = vmatprep.subr.mxu0 0.0
      %554 = vmatpush1.msra.mxu0 0.0
      %555 = vmatprep.subr.mxu0 0.0
      %556 = vmatpush1.msra.mxu0 0.0
      %557 = vmatprep.subr.mxu0 0.0
      %558 = vmatpush1.msra.mxu0 0.0
      %559 = vmatprep.subr.mxu0 0.0
      %560 = vmatpush1.msra.mxu0 0.0
      %561 = vmatprep.subr.mxu0 0.0
      %562 = vmatpush1.msra.mxu0 0.0
      %563 = vmatprep.subr.mxu0 0.0
      %564 = vmatpush1.msra.mxu0 0.0
      %565 = vmatprep.subr.mxu0 0.0
      %566 = vmatpush1.msra.mxu0 0.0
      %567 = vmatprep.mubr.f32.mxu0 0.0
      %568 = vmatmul.mubr.f32.gmra.mrb[0].mxu0 %v239
      %v569 = vpop.f32.mrb[0].mxu0
      %v570 = vadd.f32 0.0, %v569
      %v571 = vpop.f32.mrb[0].mxu0
      %v572 = vadd.f32 0.0, %v571
      %573 = vdwg.mxu0
      %574 = vmatprep.subr.mxu0 %v198
      %575 = vmatpush1.msra.mxu0 %v197
      %576 = vmatprep.subr.mxu0 %v214
      %577 = vmatpush1.msra.mxu0 %v213
      %578 = vmatprep.subr.mxu0 %v270
      %579 = vmatpush1.msra.mxu0 %v267
      %580 = vmatprep.subr.mxu0 0.0
      %581 = vmatpush1.msra.mxu0 0.0
      %582 = vmatprep.subr.mxu0 0.0
      %583 = vmatpush1.msra.mxu0 0.0
      %584 = vmatprep.subr.mxu0 0.0
      %585 = vmatpush1.msra.mxu0 0.0
      %586 = vmatprep.subr.mxu0 0.0
      %587 = vmatpush1.msra.mxu0 0.0
      %588 = vmatprep.subr.mxu0 0.0
      %589 = vmatpush1.msra.mxu0 0.0
      %590 = vmatprep.subr.mxu0 0.0
      %591 = vmatpush1.msra.mxu0 0.0
      %592 = vmatprep.subr.mxu0 0.0
      %593 = vmatpush1.msra.mxu0 0.0
      %594 = vmatprep.subr.mxu0 0.0
      %595 = vmatpush1.msra.mxu0 0.0
      %596 = vmatprep.subr.mxu0 0.0
      %597 = vmatpush1.msra.mxu0 0.0
      %598 = vmatprep.subr.mxu0 0.0
      %599 = vmatpush1.msra.mxu0 0.0
      %600 = vmatprep.subr.mxu0 0.0
      %601 = vmatpush1.msra.mxu0 0.0
      %602 = vmatprep.subr.mxu0 0.0
      %603 = vmatpush1.msra.mxu0 0.0
      %604 = vmatprep.subr.mxu0 0.0
      %605 = vmatpush1.msra.mxu0 0.0
      %606 = vmatprep.subr.mxu0 0.0
      %607 = vmatpush1.msra.mxu0 0.0
      %608 = vmatprep.subr.mxu0 0.0
      %609 = vmatpush1.msra.mxu0 0.0
      %610 = vmatprep.subr.mxu0 0.0
      %611 = vmatpush1.msra.mxu0 0.0
      %612 = vmatprep.subr.mxu0 0.0
      %613 = vmatpush1.msra.mxu0 0.0
      %614 = vmatprep.subr.mxu0 0.0
      %615 = vmatpush1.msra.mxu0 0.0
      %616 = vmatprep.subr.mxu0 0.0
      %617 = vmatpush1.msra.mxu0 0.0
      %618 = vmatprep.subr.mxu0 0.0
      %619 = vmatpush1.msra.mxu0 0.0
      %620 = vmatprep.subr.mxu0 0.0
      %621 = vmatpush1.msra.mxu0 0.0
      %622 = vmatprep.subr.mxu0 0.0
      %623 = vmatpush1.msra.mxu0 0.0
      %624 = vmatprep.subr.mxu0 0.0
      %625 = vmatpush1.msra.mxu0 0.0
      %626 = vmatprep.subr.mxu0 0.0
      %627 = vmatpush1.msra.mxu0 0.0
      %628 = vmatprep.subr.mxu0 0.0
      %629 = vmatpush1.msra.mxu0 0.0
      %630 = vmatprep.subr.mxu0 0.0
      %631 = vmatpush1.msra.mxu0 0.0
      %632 = vmatprep.subr.mxu0 0.0
      %633 = vmatpush1.msra.mxu0 0.0
      %634 = vmatprep.subr.mxu0 0.0
      %635 = vmatpush1.msra.mxu0 0.0
      %636 = vmatprep.subr.mxu0 0.0
      %637 = vmatpush1.msra.mxu0 0.0
      %638 = vmatprep.mubr.f32.mxu0 0.0
      %639 = vmatmul.mubr.f32.gmra.mrb[0].mxu0 %v239
      %v640 = vpop.f32.mrb[0].mxu0
      %v641 = vadd.f32 0.0, %v640
      %v642 = vpop.f32.mrb[0].mxu0
      %v643 = vadd.f32 0.0, %v642
      %644 = vdwg.mxu0
      %645 = vmatprep.subr.mxu0 %v200
      %646 = vmatpush1.msra.mxu0 %v199
      %647 = vmatprep.subr.mxu0 %v216
      %648 = vmatpush1.msra.mxu0 %v215
      %649 = vmatprep.subr.mxu0 %v276
      %650 = vmatpush1.msra.mxu0 %v273
      %651 = vmatprep.subr.mxu0 0.0
      %652 = vmatpush1.msra.mxu0 0.0
      %653 = vmatprep.subr.mxu0 0.0
      %654 = vmatpush1.msra.mxu0 0.0
      %655 = vmatprep.subr.mxu0 0.0
      %656 = vmatpush1.msra.mxu0 0.0
      %657 = vmatprep.subr.mxu0 0.0
      %658 = vmatpush1.msra.mxu0 0.0
      %659 = vmatprep.subr.mxu0 0.0
      %660 = vmatpush1.msra.mxu0 0.0
      %661 = vmatprep.subr.mxu0 0.0
      %662 = vmatpush1.msra.mxu0 0.0
      %663 = vmatprep.subr.mxu0 0.0
      %664 = vmatpush1.msra.mxu0 0.0
      %665 = vmatprep.subr.mxu0 0.0
      %666 = vmatpush1.msra.mxu0 0.0
      %667 = vmatprep.subr.mxu0 0.0
      %668 = vmatpush1.msra.mxu0 0.0
      %669 = vmatprep.subr.mxu0 0.0
      %670 = vmatpush1.msra.mxu0 0.0
      %671 = vmatprep.subr.mxu0 0.0
      %672 = vmatpush1.msra.mxu0 0.0
      %673 = vmatprep.subr.mxu0 0.0
      %674 = vmatpush1.msra.mxu0 0.0
      %675 = vmatprep.subr.mxu0 0.0
      %676 = vmatpush1.msra.mxu0 0.0
      %677 = vmatprep.subr.mxu0 0.0
      %678 = vmatpush1.msra.mxu0 0.0
      %679 = vmatprep.subr.mxu0 0.0
      %680 = vmatpush1.msra.mxu0 0.0
      %681 = vmatprep.subr.mxu0 0.0
      %682 = vmatpush1.msra.mxu0 0.0
      %683 = vmatprep.subr.mxu0 0.0
      %684 = vmatpush1.msra.mxu0 0.0
      %685 = vmatprep.subr.mxu0 0.0
      %686 = vmatpush1.msra.mxu0 0.0
      %687 = vmatprep.subr.mxu0 0.0
      %688 = vmatpush1.msra.mxu0 0.0
      %689 = vmatprep.subr.mxu0 0.0
      %690 = vmatpush1.msra.mxu0 0.0
      %691 = vmatprep.subr.mxu0 0.0
      %692 = vmatpush1.msra.mxu0 0.0
      %693 = vmatprep.subr.mxu0 0.0
      %694 = vmatpush1.msra.mxu0 0.0
      %695 = vmatprep.subr.mxu0 0.0
      %696 = vmatpush1.msra.mxu0 0.0
      %697 = vmatprep.subr.mxu0 0.0
      %698 = vmatpush1.msra.mxu0 0.0
      %699 = vmatprep.subr.mxu0 0.0
      %700 = vmatpush1.msra.mxu0 0.0
      %701 = vmatprep.subr.mxu0 0.0
      %702 = vmatpush1.msra.mxu0 0.0
      %703 = vmatprep.subr.mxu0 0.0
      %704 = vmatpush1.msra.mxu0 0.0
      %705 = vmatprep.subr.mxu0 0.0
      %706 = vmatpush1.msra.mxu0 0.0
      %707 = vmatprep.subr.mxu0 0.0
      %708 = vmatpush1.msra.mxu0 0.0
      %709 = vmatprep.mubr.f32.mxu0 0.0
      %710 = vmatmul.mubr.f32.gmra.mrb[0].mxu0 %v239
      %v711 = vpop.f32.mrb[0].mxu0
      %v712 = vadd.f32 0.0, %v711
      %v713 = vpop.f32.mrb[0].mxu0
      %v714 = vadd.f32 0.0, %v713
      %715 = vdwg.mxu0
      %716 = vmatprep.subr.mxu0 %v202
      %717 = vmatpush1.msra.mxu0 %v201
      %718 = vmatprep.subr.mxu0 %v218
      %719 = vmatpush1.msra.mxu0 %v217
      %720 = vmatprep.subr.mxu0 %v282
      %721 = vmatpush1.msra.mxu0 %v279
      %722 = vmatprep.subr.mxu0 0.0
      %723 = vmatpush1.msra.mxu0 0.0
      %724 = vmatprep.subr.mxu0 0.0
      %725 = vmatpush1.msra.mxu0 0.0
      %726 = vmatprep.subr.mxu0 0.0
      %727 = vmatpush1.msra.mxu0 0.0
      %728 = vmatprep.subr.mxu0 0.0
      %729 = vmatpush1.msra.mxu0 0.0
      %730 = vmatprep.subr.mxu0 0.0
      %731 = vmatpush1.msra.mxu0 0.0
      %732 = vmatprep.subr.mxu0 0.0
      %733 = vmatpush1.msra.mxu0 0.0
      %734 = vmatprep.subr.mxu0 0.0
      %735 = vmatpush1.msra.mxu0 0.0
      %736 = vmatprep.subr.mxu0 0.0
      %737 = vmatpush1.msra.mxu0 0.0
      %738 = vmatprep.subr.mxu0 0.0
      %739 = vmatpush1.msra.mxu0 0.0
      %740 = vmatprep.subr.mxu0 0.0
      %741 = vmatpush1.msra.mxu0 0.0
      %742 = vmatprep.subr.mxu0 0.0
      %743 = vmatpush1.msra.mxu0 0.0
      %744 = vmatprep.subr.mxu0 0.0
      %745 = vmatpush1.msra.mxu0 0.0
      %746 = vmatprep.subr.mxu0 0.0
      %747 = vmatpush1.msra.mxu0 0.0
      %748 = vmatprep.subr.mxu0 0.0
      %749 = vmatpush1.msra.mxu0 0.0
      %750 = vmatprep.subr.mxu0 0.0
      %751 = vmatpush1.msra.mxu0 0.0
      %752 = vmatprep.subr.mxu0 0.0
      %753 = vmatpush1.msra.mxu0 0.0
      %754 = vmatprep.subr.mxu0 0.0
      %755 = vmatpush1.msra.mxu0 0.0
      %756 = vmatprep.subr.mxu0 0.0
      %757 = vmatpush1.msra.mxu0 0.0
      %758 = vmatprep.subr.mxu0 0.0
      %759 = vmatpush1.msra.mxu0 0.0
      %760 = vmatprep.subr.mxu0 0.0
      %761 = vmatpush1.msra.mxu0 0.0
      %762 = vmatprep.subr.mxu0 0.0
      %763 = vmatpush1.msra.mxu0 0.0
      %764 = vmatprep.subr.mxu0 0.0
      %765 = vmatpush1.msra.mxu0 0.0
      %766 = vmatprep.subr.mxu0 0.0
      %767 = vmatpush1.msra.mxu0 0.0
      %768 = vmatprep.subr.mxu0 0.0
      %769 = vmatpush1.msra.mxu0 0.0
      %770 = vmatprep.subr.mxu0 0.0
      %771 = vmatpush1.msra.mxu0 0.0
      %772 = vmatprep.subr.mxu0 0.0
      %773 = vmatpush1.msra.mxu0 0.0
      %774 = vmatprep.subr.mxu0 0.0
      %775 = vmatpush1.msra.mxu0 0.0
      %776 = vmatprep.subr.mxu0 0.0
      %777 = vmatpush1.msra.mxu0 0.0
      %778 = vmatprep.subr.mxu0 0.0
      %779 = vmatpush1.msra.mxu0 0.0
      %780 = vmatprep.mubr.f32.mxu0 0.0
      %781 = vmatmul.mubr.f32.gmra.mrb[0].mxu0 %v239
      %v782 = vpop.f32.mrb[0].mxu0
      %v783 = vadd.f32 0.0, %v782
      %v784 = vpop.f32.mrb[0].mxu0
      %v785 = vadd.f32 0.0, %v784
      %786 = vdwg.mxu0
      %787 = vmatprep.subr.mxu0 %v204
      %788 = vmatpush1.msra.mxu0 %v203
      %789 = vmatprep.subr.mxu0 %v220
      %790 = vmatpush1.msra.mxu0 %v219
      %791 = vmatprep.subr.mxu0 %v288
      %792 = vmatpush1.msra.mxu0 %v285
      %793 = vmatprep.subr.mxu0 0.0
      %794 = vmatpush1.msra.mxu0 0.0
      %795 = vmatprep.subr.mxu0 0.0
      %796 = vmatpush1.msra.mxu0 0.0
      %797 = vmatprep.subr.mxu0 0.0
      %798 = vmatpush1.msra.mxu0 0.0
      %799 = vmatprep.subr.mxu0 0.0
      %800 = vmatpush1.msra.mxu0 0.0
      %801 = vmatprep.subr.mxu0 0.0
      %802 = vmatpush1.msra.mxu0 0.0
      %803 = vmatprep.subr.mxu0 0.0
      %804 = vmatpush1.msra.mxu0 0.0
      %805 = vmatprep.subr.mxu0 0.0
      %806 = vmatpush1.msra.mxu0 0.0
      %807 = vmatprep.subr.mxu0 0.0
      %808 = vmatpush1.msra.mxu0 0.0
      %809 = vmatprep.subr.mxu0 0.0
      %810 = vmatpush1.msra.mxu0 0.0
      %811 = vmatprep.subr.mxu0 0.0
      %812 = vmatpush1.msra.mxu0 0.0
      %813 = vmatprep.subr.mxu0 0.0
      %814 = vmatpush1.msra.mxu0 0.0
      %815 = vmatprep.subr.mxu0 0.0
      %816 = vmatpush1.msra.mxu0 0.0
      %817 = vmatprep.subr.mxu0 0.0
      %818 = vmatpush1.msra.mxu0 0.0
      %819 = vmatprep.subr.mxu0 0.0
      %820 = vmatpush1.msra.mxu0 0.0
      %821 = vmatprep.subr.mxu0 0.0
      %822 = vmatpush1.msra.mxu0 0.0
      %823 = vmatprep.subr.mxu0 0.0
      %824 = vmatpush1.msra.mxu0 0.0
      %825 = vmatprep.subr.mxu0 0.0
      %826 = vmatpush1.msra.mxu0 0.0
      %827 = vmatprep.subr.mxu0 0.0
      %828 = vmatpush1.msra.mxu0 0.0
      %829 = vmatprep.subr.mxu0 0.0
      %830 = vmatpush1.msra.mxu0 0.0
      %831 = vmatprep.subr.mxu0 0.0
      %832 = vmatpush1.msra.mxu0 0.0
      %833 = vmatprep.subr.mxu0 0.0
      %834 = vmatpush1.msra.mxu0 0.0
      %835 = vmatprep.subr.mxu0 0.0
      %836 = vmatpush1.msra.mxu0 0.0
      %837 = vmatprep.subr.mxu0 0.0
      %838 = vmatpush1.msra.mxu0 0.0
      %839 = vmatprep.subr.mxu0 0.0
      %840 = vmatpush1.msra.mxu0 0.0
      %841 = vmatprep.subr.mxu0 0.0
      %842 = vmatpush1.msra.mxu0 0.0
      %843 = vmatprep.subr.mxu0 0.0
      %844 = vmatpush1.msra.mxu0 0.0
      %845 = vmatprep.subr.mxu0 0.0
      %846 = vmatpush1.msra.mxu0 0.0
      %847 = vmatprep.subr.mxu0 0.0
      %848 = vmatpush1.msra.mxu0 0.0
      %849 = vmatprep.subr.mxu0 0.0
      %850 = vmatpush1.msra.mxu0 0.0
      %851 = vmatprep.mubr.f32.mxu0 0.0
      %852 = vmatmul.mubr.f32.gmra.mrb[0].mxu0 %v239
      %v853 = vpop.f32.mrb[0].mxu0
      %v854 = vadd.f32 0.0, %v853
      %v855 = vpop.f32.mrb[0].mxu0
      %v856 = vadd.f32 0.0, %v855
      %857 = vdwg.mxu0
      %v858 = vld [vmem:[%s180] sm:$0xff]
      %v859 = vld [vmem:[%s180 + $0x8] sm:$0xff]
      %v862 = vlaneseq
      %v863 = vshrl.u32 %v862, 7
      %v864 = vsub.s32 0, %v863
      %v865 = vrot.slane %v858, %v864
      %v866 = vlaneseq
      %v867 = vshrl.u32 %v866, 7
      %v868 = vsub.s32 1, %v867
      %v869 = vrot.slane %v858, %v868
      %v870 = vlaneseq
      %v871 = vshrl.u32 %v870, 7
      %v872 = vsub.s32 2, %v871
      %v873 = vrot.slane %v858, %v872
      %v874 = vlaneseq
      %v875 = vshrl.u32 %v874, 7
      %v876 = vsub.s32 3, %v875
      %v877 = vrot.slane %v858, %v876
      %v878 = vlaneseq
      %v879 = vshrl.u32 %v878, 7
      %v880 = vsub.s32 4, %v879
      %v881 = vrot.slane %v858, %v880
      %v882 = vlaneseq
      %v883 = vshrl.u32 %v882, 7
      %v884 = vsub.s32 5, %v883
      %v885 = vrot.slane %v858, %v884
      %v886 = vlaneseq
      %v887 = vshrl.u32 %v886, 7
      %v888 = vsub.s32 6, %v887
      %v889 = vrot.slane %v858, %v888
      %v890 = vlaneseq
      %v891 = vshrl.u32 %v890, 7
      %v892 = vsub.s32 7, %v891
      %v893 = vrot.slane %v858, %v892
      %v894 = vlaneseq
      %v895 = vshrl.u32 %v894, 7
      %v896 = vsub.s32 0, %v895
      %v897 = vrot.slane %v859, %v896
      %v898 = vlaneseq
      %v899 = vshrl.u32 %v898, 7
      %v900 = vsub.s32 1, %v899
      %v901 = vrot.slane %v859, %v900
      %v902 = vlaneseq
      %v903 = vshrl.u32 %v902, 7
      %v904 = vsub.s32 2, %v903
      %v905 = vrot.slane %v859, %v904
      %v906 = vlaneseq
      %v907 = vshrl.u32 %v906, 7
      %v908 = vsub.s32 3, %v907
      %v909 = vrot.slane %v859, %v908
      %v910 = vlaneseq
      %v911 = vshrl.u32 %v910, 7
      %v912 = vsub.s32 4, %v911
      %v913 = vrot.slane %v859, %v912
      %v914 = vlaneseq
      %v915 = vshrl.u32 %v914, 7
      %v916 = vsub.s32 5, %v915
      %v917 = vrot.slane %v859, %v916
      %v918 = vlaneseq
      %v919 = vshrl.u32 %v918, 7
      %v920 = vsub.s32 6, %v919
      %v921 = vrot.slane %v859, %v920
      %v922 = vlaneseq
      %v923 = vshrl.u32 %v922, 7
      %v924 = vsub.s32 7, %v923
      %v925 = vrot.slane %v859, %v924
      %v942 = vmul.f32 %v357, %v865
      %v943 = vmul.f32 %v359, %v869
      %v944 = vmul.f32 %v428, %v873
      %v945 = vmul.f32 %v430, %v877
      %v946 = vmul.f32 %v499, %v881
      %v947 = vmul.f32 %v501, %v885
      %v948 = vmul.f32 %v570, %v889
      %v949 = vmul.f32 %v572, %v893
      %v950 = vmul.f32 %v641, %v897
      %v951 = vmul.f32 %v643, %v901
      %v952 = vmul.f32 %v712, %v905
      %v953 = vmul.f32 %v714, %v909
      %v954 = vmul.f32 %v783, %v913
      %v955 = vmul.f32 %v785, %v917
      %v956 = vmul.f32 %v854, %v921
      %v957 = vmul.f32 %v856, %v925
      %v974 = vcombine.low %v942, %v943
      %v975 = vcombine.low %v944, %v945
      %v977 = vunpack.c.l.s4 1983009808
      %v978 = vunpack.c.0.s8 %v977
      %v979 = vlaneseq
      %v980 = vshrl.u32 %v979, 7
      %v981 = vsub.s32 %v978, %v980
      %v982 = vrot.slane %v974, %v981
      %v984 = vunpack.c.l.s4 1983009808
      %v985 = vunpack.c.0.s8 %v984
      %v986 = vlaneseq
      %v987 = vshrl.u32 %v986, 7
      %v988 = vsub.s32 %v985, %v987
      %v989 = vrot.slane %v975, %v988
      %v990 = vcombine.low %v982, %v989
      %v991 = vcombine.low %v946, %v947
      %v992 = vcombine.low %v948, %v949
      %v994 = vunpack.c.l.s4 1983009808
      %v995 = vunpack.c.0.s8 %v994
      %v996 = vlaneseq
      %v997 = vshrl.u32 %v996, 7
      %v998 = vsub.s32 %v995, %v997
      %v999 = vrot.slane %v991, %v998
      %v1001 = vunpack.c.l.s4 1983009808
      %v1002 = vunpack.c.0.s8 %v1001
      %v1003 = vlaneseq
      %v1004 = vshrl.u32 %v1003, 7
      %v1005 = vsub.s32 %v1002, %v1004
      %v1006 = vrot.slane %v992, %v1005
      %v1007 = vcombine.low %v999, %v1006
      %v1008 = vcombine.low %v950, %v951
      %v1009 = vcombine.low %v952, %v953
      %v1011 = vunpack.c.l.s4 1983009808
      %v1012 = vunpack.c.0.s8 %v1011
      %v1013 = vlaneseq
      %v1014 = vshrl.u32 %v1013, 7
      %v1015 = vsub.s32 %v1012, %v1014
      %v1016 = vrot.slane %v1008, %v1015
      %v1018 = vunpack.c.l.s4 1983009808
      %v1019 = vunpack.c.0.s8 %v1018
      %v1020 = vlaneseq
      %v1021 = vshrl.u32 %v1020, 7
      %v1022 = vsub.s32 %v1019, %v1021
      %v1023 = vrot.slane %v1009, %v1022
      %v1024 = vcombine.low %v1016, %v1023
      %v1025 = vcombine.low %v954, %v955
      %v1026 = vcombine.low %v956, %v957
      %v1028 = vunpack.c.l.s4 1983009808
      %v1029 = vunpack.c.0.s8 %v1028
      %v1030 = vlaneseq
      %v1031 = vshrl.u32 %v1030, 7
      %v1032 = vsub.s32 %v1029, %v1031
      %v1033 = vrot.slane %v1025, %v1032
      %v1035 = vunpack.c.l.s4 1983009808
      %v1036 = vunpack.c.0.s8 %v1035
      %v1037 = vlaneseq
      %v1038 = vshrl.u32 %v1037, 7
      %v1039 = vsub.s32 %v1036, %v1038
      %v1040 = vrot.slane %v1026, %v1039
      %v1041 = vcombine.low %v1033, %v1040
      %1046 = vst [vmem:[%s186] sm:$0xff] %v990
      %1047 = vst [vmem:[%s186 + $0x8] sm:$0xff] %v1007
      %1048 = vst [vmem:[%s186 + $0x10] sm:$0xff] %v1024
      %1049 = vst [vmem:[%s186 + $0x18] sm:$0xff] %v1041
      %s1050 = smul.u32 16, %s14
      %p1051 = scmp.lt.s32.totalorder %s1050, 31
      %s1052 = scalar_select %p1051, %s1050, 31
      %s1053 = smul.addr %s1052, 2
      %s1054 = scalar_lea.vmem %s3, %s1053
      // Predicated region
      $region33: #{segment_generator_forward.10} parent=31 // pred_check
        %p1055 = pneg %p105
      $region34: #{segment_generator_forward.10} parent=31 // pred_check_branch
        %1057 = sbr.rel (%p1055) target = $region36
      $region35: #{segment_generator_forward.10} parent=31 // pred_region
        %s1058 = smul.u32 16, %s14
      $region36: #{segment_generator_forward.10} parent=31 // pred_fallthru
        _
    $region32: #{segment_generator_forward.10} parent=5 // pred_fallthru
      _
    %p1059 = scmp.le.s32.totalorder 2, %s9
    // Predicated region
    $region37: #{segment_generator_forward.10} parent=5 // pred_check
      %p1060 = pneg %p1059
    $region38: #{segment_generator_forward.10} parent=5 // pred_check_branch
      %1062 = sbr.rel (%p1060) target = $region40
    $region39: #{segment_generator_forward.10} parent=5 // pred_region
      %s1063 = ssub.s32 %s9, 2
      // Predicated region
      $region41: #{segment_generator_forward.10} parent=39 // pred_check
        %p1064 = pneg %p111
      $region42: #{segment_generator_forward.10} parent=39 // pred_check_branch
        %1066 = sbr.rel (%p1064) target = $region44
      $region43: #{segment_generator_forward.10} parent=39 // pred_region
        %s1067 = smul.u32 16, %s15
        %p1068 = scmp.lt.s32.totalorder %s1067, 31
        %s1069 = scalar_select %p1068, %s1067, 31
        %s1070 = smul.addr %s1069, 2
        %s1071 = scalar_lea.vmem %s3, %s1070
      $region44: #{segment_generator_forward.10} parent=39 // pred_fallthru
        _
    $region40: #{segment_generator_forward.10} parent=5 // pred_fallthru
      _
  $region6: #{segment_generator_forward.10} parent=0 // loop_footer
    %s13 = sadd.s32 1, %s9
  $region7: #{segment_generator_forward.10} parent=0 // loop_footer_branch
    %8 = sbr.rel target = $region3
  $region8: #{segment_generator_forward.10} parent=0 // loop_exit
    _

// kernel: segment_generator_forward.11
$region0: #{segment_generator_forward.11}
  #allocation0 [shape = 'u32[]', space=smem, size = 0x4, offset = 0x4, fixed_abs, tag = 'smem constant byte address 0x4 - core index']
  #allocation1 [shape = 'u32[144,128]{1,0:T(1,128)}', space=vmem, size = 0x12000, scoped, tag = 'internal scratch']
  %s0 = inlined_call_operand.vmem [shape: f32[2,32], index: 0, kind: input, shape index: {}]
  %s1 = inlined_call_operand.vmem [shape: f32[32,256], index: 1, kind: input, shape index: {}]
  %s2 = inlined_call_operand.vmem [shape: f32[1,256], index: 2, kind: input, shape index: {}]
  %s3 = inlined_call_operand.vmem [shape: f32[2,256], index: 3, kind: output, shape index: {}]
  %s4 = sld [smem:[#allocation0]]
  $region22: #{segment_generator_forward.11} parent=0
    _
  %s6 = ssub.s32 1, %s4
  %s7 = scalar_select 0, %s6, %s4
  // Predicated region
  $region2: #{segment_generator_forward.11} parent=0 // pred_check
    _
  $region3: #{segment_generator_forward.11} parent=0 // pred_check_branch
    %9 = sbr.rel (0) target = $region5
  $region4: #{segment_generator_forward.11} parent=0 // pred_region
    _
  $region5: #{segment_generator_forward.11} parent=0 // pred_fallthru
    _
  // Predicated region
  $region6: #{segment_generator_forward.11} parent=0 // pred_check
    _
  $region7: #{segment_generator_forward.11} parent=0 // pred_check_branch
    %11 = sbr.rel (0) target = $region9
  $region8: #{segment_generator_forward.11} parent=0 // pred_region
    _
  $region9: #{segment_generator_forward.11} parent=0 // pred_fallthru
    _
  // Predicated region
  $region10: #{segment_generator_forward.11} parent=0 // pred_check
    _
  $region11: #{segment_generator_forward.11} parent=0 // pred_check_branch
    %13 = sbr.rel (0) target = $region13
  $region12: #{segment_generator_forward.11} parent=0 // pred_region
    _
  $region13: #{segment_generator_forward.11} parent=0 // pred_fallthru
    _
  %v14 = vld [vmem:[%s0] sm:$0x3]
  %v15 = vld [vmem:[%s1] sm:$0xff]
  %v16 = vld [vmem:[%s1 + $0x8] sm:$0xff]
  %v17 = vld [vmem:[%s1 + $0x10] sm:$0xff]
  %v18 = vld [vmem:[%s1 + $0x18] sm:$0xff]
  %v19 = vld [vmem:[%s1 + $0x20] sm:$0xff]
  %v20 = vld [vmem:[%s1 + $0x28] sm:$0xff]
  %v21 = vld [vmem:[%s1 + $0x30] sm:$0xff]
  %v22 = vld [vmem:[%s1 + $0x38] sm:$0xff]
  %v23 = vld [vmem:[%s2] sm:$0x3]
  %v25 = vlaneseq
  %v26 = vshrl.u32 %v25, 7
  %v27 = vsub.s32 0, %v26
  %v28 = vrot.slane %v23, %v27
  %v29 = vlaneseq
  %v30 = vshrl.u32 %v29, 7
  %v31 = vsub.s32 1, %v30
  %v32 = vrot.slane %v23, %v31
  %vm35 = vcmask 261120
  %v37 = vsel %vm35, %v14, 0
  %39 = vmatprep.subr.mxu0 %v16
  %40 = vmatpush1.msra.mxu0 %v15
  %41 = vmatprep.subr.mxu0 %v18
  %42 = vmatpush1.msra.mxu0 %v17
  %43 = vmatprep.subr.mxu0 %v20
  %44 = vmatpush1.msra.mxu0 %v19
  %45 = vmatprep.subr.mxu0 %v22
  %46 = vmatpush1.msra.mxu0 %v21
  %47 = vmatprep.subr.mxu0 0.0
  %48 = vmatpush1.msra.mxu0 0.0
  %49 = vmatprep.subr.mxu0 0.0
  %50 = vmatpush1.msra.mxu0 0.0
  %51 = vmatprep.subr.mxu0 0.0
  %52 = vmatpush1.msra.mxu0 0.0
  %53 = vmatprep.subr.mxu0 0.0
  %54 = vmatpush1.msra.mxu0 0.0
  %55 = vmatprep.subr.mxu0 0.0
  %56 = vmatpush1.msra.mxu0 0.0
  %57 = vmatprep.subr.mxu0 0.0
  %58 = vmatpush1.msra.mxu0 0.0
  %59 = vmatprep.subr.mxu0 0.0
  %60 = vmatpush1.msra.mxu0 0.0
  %61 = vmatprep.subr.mxu0 0.0
  %62 = vmatpush1.msra.mxu0 0.0
  %63 = vmatprep.subr.mxu0 0.0
  %64 = vmatpush1.msra.mxu0 0.0
  %65 = vmatprep.subr.mxu0 0.0
  %66 = vmatpush1.msra.mxu0 0.0
  %67 = vmatprep.subr.mxu0 0.0
  %68 = vmatpush1.msra.mxu0 0.0
  %69 = vmatprep.subr.mxu0 0.0
  %70 = vmatpush1.msra.mxu0 0.0
  %71 = vmatprep.subr.mxu0 0.0
  %72 = vmatpush1.msra.mxu0 0.0
  %73 = vmatprep.subr.mxu0 0.0
  %74 = vmatpush1.msra.mxu0 0.0
  %75 = vmatprep.subr.mxu0 0.0
  %76 = vmatpush1.msra.mxu0 0.0
  %77 = vmatprep.subr.mxu0 0.0
  %78 = vmatpush1.msra.mxu0 0.0
  %79 = vmatprep.subr.mxu0 0.0
  %80 = vmatpush1.msra.mxu0 0.0
  %81 = vmatprep.subr.mxu0 0.0
  %82 = vmatpush1.msra.mxu0 0.0
  %83 = vmatprep.subr.mxu0 0.0
  %84 = vmatpush1.msra.mxu0 0.0
  %85 = vmatprep.subr.mxu0 0.0
  %86 = vmatpush1.msra.mxu0 0.0
  %87 = vmatprep.subr.mxu0 0.0
  %88 = vmatpush1.msra.mxu0 0.0
  %89 = vmatprep.subr.mxu0 0.0
  %90 = vmatpush1.msra.mxu0 0.0
  %91 = vmatprep.subr.mxu0 0.0
  %92 = vmatpush1.msra.mxu0 0.0
  %93 = vmatprep.subr.mxu0 0.0
  %94 = vmatpush1.msra.mxu0 0.0
  %95 = vmatprep.subr.mxu0 0.0
  %96 = vmatpush1.msra.mxu0 0.0
  %97 = vmatprep.subr.mxu0 0.0
  %98 = vmatpush1.msra.mxu0 0.0
  %99 = vmatprep.subr.mxu0 0.0
  %100 = vmatpush1.msra.mxu0 0.0
  %101 = vmatprep.subr.mxu0 0.0
  %102 = vmatpush1.msra.mxu0 0.0
  %103 = vmatprep.mubr.f32.mxu0 0.0
  %104 = vmatmul.mubr.f32.gmra.mrb[0].mxu0 %v37
  %v105 = vpop.f32.mrb[0].mxu0
  %v106 = vadd.f32 %v28, %v105
  %v107 = vpop.f32.mrb[0].mxu0
  %v108 = vadd.f32 %v32, %v107
  %109 = vdwg.mxu0
  %v112 = vcombine.low %v106, %v108
  %v114 = vunpack.c.l.s4 1983009808
  %v115 = vunpack.c.0.s8 %v114
  %v116 = vlaneseq
  %v117 = vshrl.u32 %v116, 7
  %v118 = vsub.s32 %v115, %v117
  %v119 = vrot.slane %v112, %v118
  %121 = vst [vmem:[%s3] sm:$0xf] %v119
  // Predicated region
  $region14: #{segment_generator_forward.11} parent=0 // pred_check
    _
  $region15: #{segment_generator_forward.11} parent=0 // pred_check_branch
    %123 = sbr.rel (0) target = $region17
  $region16: #{segment_generator_forward.11} parent=0 // pred_region
    _
  $region17: #{segment_generator_forward.11} parent=0 // pred_fallthru
    _
  // Predicated region
  $region18: #{segment_generator_forward.11} parent=0 // pred_check
    _
  $region19: #{segment_generator_forward.11} parent=0 // pred_check_branch
    %125 = sbr.rel (0) target = $region21
  $region20: #{segment_generator_forward.11} parent=0 // pred_region
    _
  $region21: #{segment_generator_forward.11} parent=0 // pred_fallthru
    _

// kernel: segment_generator_forward.12
$region0: #{segment_generator_forward.12}
  #allocation0 [shape = 'u32[]', space=smem, size = 0x4, offset = 0x4, fixed_abs, tag = 'smem constant byte address 0x4 - core index']
  #allocation1 [shape = 'u32[144,128]{1,0:T(1,128)}', space=vmem, size = 0x12000, scoped, tag = 'internal scratch']
  %s0 = inlined_call_operand.vmem [shape: f32[2,32,8], index: 0, kind: input, shape index: {}]
  %s1 = inlined_call_operand.vmem [shape: f32[3,32,32], index: 1, kind: input, shape index: {}]
  %s2 = inlined_call_operand.vmem [shape: f32[3,8,32], index: 2, kind: input, shape index: {}]
  %s3 = inlined_call_operand.vmem [shape: f32[32,1], index: 3, kind: input, shape index: {}]
  %s4 = inlined_call_operand.vmem [shape: f32[8,1], index: 4, kind: input, shape index: {}]
  %s5 = inlined_call_operand.vmem [shape: f32[2,8,32], index: 5, kind: output, shape index: {}]
  %s6 = sld [smem:[#allocation0]]
  $region53: #{segment_generator_forward.12} parent=0
    _
  %s8 = ssub.s32 1, %s6
  %s9 = scalar_select 0, %s8, %s6
  loop: start=0, step=1, limit=4
  $region2: #{segment_generator_forward.12} parent=0 // loop_pre_header
    _
  $region3: #{segment_generator_forward.12} parent=0 // loop_header
    %s11 = sphi 0, %s15
    %p12 = scmp.ge.s32.totalorder %s11, 4
    %s21 = sphi 0, %s23
    %s24 = sphi 0, %s21
    %s25 = sphi 0, %s24
    %s41 = sphi 0, %s25
    %s45 = sphi 0, %s45
    %s47 = sphi 0, %s45
    %s48 = sphi 0, %s47
    %s62 = sphi 0, %s48
    %s66 = sphi 0, %s66
    %s68 = sphi 0, %s66
    %s69 = sphi 0, %s68
    %s83 = sphi 0, %s69
    %s87 = sphi 0, %s87
    %s89 = sphi 0, %s87
    %s90 = sphi 0, %s89
    %s104 = sphi 0, %s90
    %s108 = sphi 0, %s108
    %s110 = sphi 0, %s108
    %s111 = sphi 0, %s110
    %s125 = sphi 0, %s111
    %s131 = sphi 0, %s133
    %s134 = sphi 0, %s131
    %s135 = sphi 0, %s134
    %s151 = sphi 0, %s135
  $region4: #{segment_generator_forward.12} parent=0 // loop_header_branch
    %14 = sbr.rel (%p12) target = $region8
  $region5: #{segment_generator_forward.12} parent=0 // loop_body
    %s16 = ssub.s32 %s11, 1
    %s17 = ssub.s32 %s11, 2
    %s18 = sadd.s32 %s11, 1
    %s19 = ssub.s32 %s11, %s18
    %p20 = scmp.eq.s32.totalorder %s19, 0
    %s22 = sadd.s32 %s21, 1
    %s23 = scalar_select %p20, %s21, %s22
    %p26 = pneg %p20
    %p27 = scmp.eq.s32.totalorder %s11, 1
    %p28 = por %p26, %p27
    %p29 = scmp.ne.s32.totalorder %s21, %s24
    %p30 = scmp.eq.s32.totalorder %s11, 0
    %p31 = por %p29, %p30
    %p32 = scmp.ne.s32.totalorder %s21, %s24
    %p33 = scmp.eq.s32.totalorder %s16, 1
    %p34 = por %p32, %p33
    %p35 = scmp.ne.s32.totalorder %s24, %s25
    %p36 = scmp.eq.s32.totalorder %s16, 0
    %p37 = por %p35, %p36
    %p38 = scmp.ne.s32.totalorder %s24, %s25
    %p39 = scmp.eq.s32.totalorder %s17, 1
    %p40 = por %p38, %p39
    %p42 = scmp.ne.s32.totalorder %s25, %s41
    %p43 = scmp.eq.s32.totalorder %s17, 0
    %p44 = por %p42, %p43
    %s46 = sadd.s32 %s45, 1
    %p49 = scmp.eq.s32.totalorder %s11, 1
    %p50 = scmp.ne.s32.totalorder %s45, %s47
    %p51 = scmp.eq.s32.totalorder %s11, 0
    %p52 = por %p50, %p51
    %p53 = scmp.ne.s32.totalorder %s45, %s47
    %p54 = scmp.eq.s32.totalorder %s16, 1
    %p55 = por %p53, %p54
    %p56 = scmp.ne.s32.totalorder %s47, %s48
    %p57 = scmp.eq.s32.totalorder %s16, 0
    %p58 = por %p56, %p57
    %p59 = scmp.ne.s32.totalorder %s47, %s48
    %p60 = scmp.eq.s32.totalorder %s17, 1
    %p61 = por %p59, %p60
    %p63 = scmp.ne.s32.totalorder %s48, %s62
    %p64 = scmp.eq.s32.totalorder %s17, 0
    %p65 = por %p63, %p64
    %s67 = sadd.s32 %s66, 1
    %p70 = scmp.eq.s32.totalorder %s11, 1
    %p71 = scmp.ne.s32.totalorder %s66, %s68
    %p72 = scmp.eq.s32.totalorder %s11, 0
    %p73 = por %p71, %p72
    %p74 = scmp.ne.s32.totalorder %s66, %s68
    %p75 = scmp.eq.s32.totalorder %s16, 1
    %p76 = por %p74, %p75
    %p77 = scmp.ne.s32.totalorder %s68, %s69
    %p78 = scmp.eq.s32.totalorder %s16, 0
    %p79 = por %p77, %p78
    %p80 = scmp.ne.s32.totalorder %s68, %s69
    %p81 = scmp.eq.s32.totalorder %s17, 1
    %p82 = por %p80, %p81
    %p84 = scmp.ne.s32.totalorder %s69, %s83
    %p85 = scmp.eq.s32.totalorder %s17, 0
    %p86 = por %p84, %p85
    %s88 = sadd.s32 %s87, 1
    %p91 = scmp.eq.s32.totalorder %s11, 1
    %p92 = scmp.ne.s32.totalorder %s87, %s89
    %p93 = scmp.eq.s32.totalorder %s11, 0
    %p94 = por %p92, %p93
    %p95 = scmp.ne.s32.totalorder %s87, %s89
    %p96 = scmp.eq.s32.totalorder %s16, 1
    %p97 = por %p95, %p96
    %p98 = scmp.ne.s32.totalorder %s89, %s90
    %p99 = scmp.eq.s32.totalorder %s16, 0
    %p100 = por %p98, %p99
    %p101 = scmp.ne.s32.totalorder %s89, %s90
    %p102 = scmp.eq.s32.totalorder %s17, 1
    %p103 = por %p101, %p102
    %p105 = scmp.ne.s32.totalorder %s90, %s104
    %p106 = scmp.eq.s32.totalorder %s17, 0
    %p107 = por %p105, %p106
    %s109 = sadd.s32 %s108, 1
    %p112 = scmp.eq.s32.totalorder %s11, 1
    %p113 = scmp.ne.s32.totalorder %s108, %s110
    %p114 = scmp.eq.s32.totalorder %s11, 0
    %p115 = por %p113, %p114
    %p116 = scmp.ne.s32.totalorder %s108, %s110
    %p117 = scmp.eq.s32.totalorder %s16, 1
    %p118 = por %p116, %p117
    %p119 = scmp.ne.s32.totalorder %s110, %s111
    %p120 = scmp.eq.s32.totalorder %s16, 0
    %p121 = por %p119, %p120
    %p122 = scmp.ne.s32.totalorder %s110, %s111
    %p123 = scmp.eq.s32.totalorder %s17, 1
    %p124 = por %p122, %p123
    %p126 = scmp.ne.s32.totalorder %s111, %s125
    %p127 = scmp.eq.s32.totalorder %s17, 0
    %p128 = por %p126, %p127
    %s129 = ssub.s32 %s11, %s18
    %p130 = scmp.eq.s32.totalorder %s129, 0
    %s132 = sadd.s32 %s131, 1
    %s133 = scalar_select %p130, %s131, %s132
    %p136 = pneg %p130
    %p137 = scmp.eq.s32.totalorder %s11, 1
    %p138 = por %p136, %p137
    %p139 = scmp.ne.s32.totalorder %s131, %s134
    %p140 = scmp.eq.s32.totalorder %s11, 0
    %p141 = por %p139, %p140
    %p142 = scmp.ne.s32.totalorder %s131, %s134
    %p143 = scmp.eq.s32.totalorder %s16, 1
    %p144 = por %p142, %p143
    %p145 = scmp.ne.s32.totalorder %s134, %s135
    %p146 = scmp.eq.s32.totalorder %s16, 0
    %p147 = por %p145, %p146
    %p148 = scmp.ne.s32.totalorder %s134, %s135
    %p149 = scmp.eq.s32.totalorder %s17, 1
    %p150 = por %p148, %p149
    %p152 = scmp.ne.s32.totalorder %s135, %s151
    %p153 = scmp.eq.s32.totalorder %s17, 0
    %p154 = por %p152, %p153
    %p155 = scmp.le.s32.totalorder 1, %s11
    %p156 = scmp.lt.s32.totalorder %s11, 3
    %p157 = pnand %p155, %p156
    %p158 = pneg %p157
    // Predicated region
    $region9: #{segment_generator_forward.12} parent=5 // pred_check
      _
    $region10: #{segment_generator_forward.12} parent=5 // pred_check_branch
      %160 = sbr.rel (%p157) target = $region12
    $region11: #{segment_generator_forward.12} parent=5 // pred_region
      %s161 = ssub.s32 %s11, 1
      // Predicated region
      $region13: #{segment_generator_forward.12} parent=11 // pred_check
        %p162 = pneg %p58
      $region14: #{segment_generator_forward.12} parent=11 // pred_check_branch
        %164 = sbr.rel (%p162) target = $region16
      $region15: #{segment_generator_forward.12} parent=11 // pred_region
        _
      $region16: #{segment_generator_forward.12} parent=11 // pred_fallthru
        _
      // Predicated region
      $region17: #{segment_generator_forward.12} parent=11 // pred_check
        %p165 = pneg %p79
      $region18: #{segment_generator_forward.12} parent=11 // pred_check_branch
        %167 = sbr.rel (%p165) target = $region20
      $region19: #{segment_generator_forward.12} parent=11 // pred_region
        _
      $region20: #{segment_generator_forward.12} parent=11 // pred_fallthru
        _
      // Predicated region
      $region21: #{segment_generator_forward.12} parent=11 // pred_check
        %p168 = pneg %p100
      $region22: #{segment_generator_forward.12} parent=11 // pred_check_branch
        %170 = sbr.rel (%p168) target = $region24
      $region23: #{segment_generator_forward.12} parent=11 // pred_region
        _
      $region24: #{segment_generator_forward.12} parent=11 // pred_fallthru
        _
      // Predicated region
      $region25: #{segment_generator_forward.12} parent=11 // pred_check
        %p171 = pneg %p121
      $region26: #{segment_generator_forward.12} parent=11 // pred_check_branch
        %173 = sbr.rel (%p171) target = $region28
      $region27: #{segment_generator_forward.12} parent=11 // pred_region
        _
      $region28: #{segment_generator_forward.12} parent=11 // pred_fallthru
        _
    $region12: #{segment_generator_forward.12} parent=5 // pred_fallthru
      _
    %p174 = scmp.lt.s32.totalorder %s11, 2
    // Predicated region
    $region29: #{segment_generator_forward.12} parent=5 // pred_check
      %p175 = pneg %p174
    $region30: #{segment_generator_forward.12} parent=5 // pred_check_branch
      %177 = sbr.rel (%p175) target = $region32
    $region31: #{segment_generator_forward.12} parent=5 // pred_region
      // Predicated region
      $region33: #{segment_generator_forward.12} parent=31 // pred_check
        %p178 = pneg %p31
      $region34: #{segment_generator_forward.12} parent=31 // pred_check_branch
        %180 = sbr.rel (%p178) target = $region36
      $region35: #{segment_generator_forward.12} parent=31 // pred_region
        %p181 = scmp.lt.s32.totalorder %s11, 1
        %s182 = scalar_select %p181, %s11, 1
        %s183 = smul.addr %s182, 4
        %s184 = smul.addr %s183, 8
        %s185 = scalar_lea.vmem %s0, %s184
      $region36: #{segment_generator_forward.12} parent=31 // pred_fallthru
        _
    $region32: #{segment_generator_forward.12} parent=5 // pred_fallthru
      _
    %p186 = scmp.le.s32.totalorder 1, %s11
    %p187 = scmp.lt.s32.totalorder %s11, 3
    %p188 = pnand %p186, %p187
    %p189 = pneg %p188
    // Predicated region
    $region37: #{segment_generator_forward.12} parent=5 // pred_check
      _
    $region38: #{segment_generator_forward.12} parent=5 // pred_check_branch
      %191 = sbr.rel (%p188) target = $region40
    $region39: #{segment_generator_forward.12} parent=5 // pred_region
      %s192 = ssub.s32 %s11, 1
      %p193 = scmp.lt.s32.totalorder %s16, 1
      %s194 = scalar_select %p193, %s16, 1
      %s195 = smul.addr %s194, 4
      %s196 = smul.addr %s195, 8
      %s197 = scalar_lea.vmem %s0, %s196
      %p198 = pneg %p37
      %p199 = pneg %p34
      %p200 = pneg %p58
      %p201 = pneg %p55
      %p202 = pneg %p79
      %p203 = pneg %p76
      %p204 = pneg %p100
      %p205 = pneg %p97
      %p206 = pneg %p121
      %p207 = pneg %p118
      %p208 = pneg %p147
      %p209 = pneg %p144
      %p210 = scmp.lt.s32.totalorder %s16, 1
      %s211 = scalar_select %p210, %s16, 1
      %s212 = smul.addr %s211, 8
      %s213 = scalar_lea.vmem %s5, %s212
      %p214 = scmp.lt.s32.totalorder %s16, 1
      %s215 = scalar_select %p214, %s16, 1
      %s216 = smul.addr %s215, 4
      %s217 = smul.addr %s216, 8
      %s218 = scalar_lea.vmem %s0, %s217
      %p219 = scmp.lt.s32.totalorder %s16, 1
      %s220 = scalar_select %p219, %s16, 1
      %s221 = smul.addr %s220, 8
      %s222 = scalar_lea.vmem %s5, %s221
      %v223 = vld [vmem:[%s218] sm:$0xff]
      %v224 = vld [vmem:[%s218 + $0x8] sm:$0xff]
      %v225 = vld [vmem:[%s218 + $0x10] sm:$0xff]
      %v226 = vld [vmem:[%s218 + $0x18] sm:$0xff]
      %v227 = vlaneseq
      %v228 = vshrl.u32 %v227, 7
      %v229 = vlaneseq
      %v230 = vand.u32 %v229, 127
      %v231 = vadd.s32 %v230, 4294967295
      %vm232 = vcmp.ge.s32.totalorder %v231, 0
      %vm233 = vcmp.lt.s32.totalorder %v231, 16
      %vm234 = vmand %vm232, %vm233
      %v235 = vmul.u32 %v228, 2
      %vm236 = vcmp.eq.s32.totalorder %v231, %v235
      %v237 = vadd.s32 %v235, 1
      %vm238 = vcmp.eq.s32.totalorder %v231, %v237
      %vm239 = vmor %vm236, %vm238
      %vm240 = vmand %vm234, %vm239
      %v241 = vsel %vm240, 1, 0
      %v242 = vcvt.s32.f32 %v241
      %vm243 = vcmask 64512
      %v245 = vsel %vm243, %v223, 0
      %v248 = vsel %vm243, %v224, 0
      %v251 = vsel %vm243, %v225, 0
      %v254 = vsel %vm243, %v226, 0
      %256 = vmatprep.subr.mxu0 0.0
      %257 = vmatpush1.msra.mxu0 %v242
      %258 = vmatprep.subr.mxu0 0.0
      %259 = vmatpush1.msra.mxu0 0.0
      %260 = vmatprep.subr.mxu0 0.0
      %261 = vmatpush1.msra.mxu0 0.0
      %262 = vmatprep.subr.mxu0 0.0
      %263 = vmatpush1.msra.mxu0 0.0
      %264 = vmatprep.subr.mxu0 0.0
      %265 = vmatpush1.msra.mxu0 0.0
      %266 = vmatprep.subr.mxu0 0.0
      %267 = vmatpush1.msra.mxu0 0.0
      %268 = vmatprep.subr.mxu0 0.0
      %269 = vmatpush1.msra.mxu0 0.0
      %270 = vmatprep.subr.mxu0 0.0
      %271 = vmatpush1.msra.mxu0 0.0
      %272 = vmatprep.subr.mxu0 0.0
      %273 = vmatpush1.msra.mxu0 0.0
      %274 = vmatprep.subr.mxu0 0.0
      %275 = vmatpush1.msra.mxu0 0.0
      %276 = vmatprep.subr.mxu0 0.0
      %277 = vmatpush1.msra.mxu0 0.0
      %278 = vmatprep.subr.mxu0 0.0
      %279 = vmatpush1.msra.mxu0 0.0
      %280 = vmatprep.subr.mxu0 0.0
      %281 = vmatpush1.msra.mxu0 0.0
      %282 = vmatprep.subr.mxu0 0.0
      %283 = vmatpush1.msra.mxu0 0.0
      %284 = vmatprep.subr.mxu0 0.0
      %285 = vmatpush1.msra.mxu0 0.0
      %286 = vmatprep.subr.mxu0 0.0
      %287 = vmatpush1.msra.mxu0 0.0
      %288 = vmatprep.subr.mxu0 0.0
      %289 = vmatpush1.msra.mxu0 0.0
      %290 = vmatprep.subr.mxu0 0.0
      %291 = vmatpush1.msra.mxu0 0.0
      %292 = vmatprep.subr.mxu0 0.0
      %293 = vmatpush1.msra.mxu0 0.0
      %294 = vmatprep.subr.mxu0 0.0
      %295 = vmatpush1.msra.mxu0 0.0
      %296 = vmatprep.subr.mxu0 0.0
      %297 = vmatpush1.msra.mxu0 0.0
      %298 = vmatprep.subr.mxu0 0.0
      %299 = vmatpush1.msra.mxu0 0.0
      %300 = vmatprep.subr.mxu0 0.0
      %301 = vmatpush1.msra.mxu0 0.0
      %302 = vmatprep.subr.mxu0 0.0
      %303 = vmatpush1.msra.mxu0 0.0
      %304 = vmatprep.subr.mxu0 0.0
      %305 = vmatpush1.msra.mxu0 0.0
      %306 = vmatprep.subr.mxu0 0.0
      %307 = vmatpush1.msra.mxu0 0.0
      %308 = vmatprep.subr.mxu0 0.0
      %309 = vmatpush1.msra.mxu0 0.0
      %310 = vmatprep.subr.mxu0 0.0
      %311 = vmatpush1.msra.mxu0 0.0
      %312 = vmatprep.subr.mxu0 0.0
      %313 = vmatpush1.msra.mxu0 0.0
      %314 = vmatprep.subr.mxu0 0.0
      %315 = vmatpush1.msra.mxu0 0.0
      %316 = vmatprep.subr.mxu0 0.0
      %317 = vmatpush1.msra.mxu0 0.0
      %318 = vmatprep.subr.mxu0 0.0
      %319 = vmatpush1.msra.mxu0 0.0
      %320 = vmatprep.mubr.f32.mxu0 0.0
      %321 = vmatmul.mubr.f32.gmra.mrb[0].mxu0 %v245
      %v322 = vpop.f32.mrb[0].mxu0
      %v323 = vadd.f32 0.0, %v322
      %v324 = vpop.f32.mrb[0].mxu0
      %325 = vmatprep.mubr.f32.mxu0 0.0
      %326 = vmatmul.mubr.f32.gmra.mrb[0].mxu0 %v248
      %v327 = vpop.f32.mrb[0].mxu0
      %v328 = vadd.f32 0.0, %v327
      %v329 = vpop.f32.mrb[0].mxu0
      %330 = vmatprep.mubr.f32.mxu0 0.0
      %331 = vmatmul.mubr.f32.gmra.mrb[0].mxu0 %v251
      %v332 = vpop.f32.mrb[0].mxu0
      %v333 = vadd.f32 0.0, %v332
      %v334 = vpop.f32.mrb[0].mxu0
      %335 = vmatprep.mubr.f32.mxu0 0.0
      %336 = vmatmul.mubr.f32.gmra.mrb[0].mxu0 %v254
      %v337 = vpop.f32.mrb[0].mxu0
      %v338 = vadd.f32 0.0, %v337
      %v339 = vpop.f32.mrb[0].mxu0
      %340 = vdwg.mxu0
      %v341 = vld [vmem:[%s1] sm:$0xff]
      %v342 = vld [vmem:[%s1 + $0x8] sm:$0xff]
      %v343 = vld [vmem:[%s1 + $0x10] sm:$0xff]
      %v344 = vld [vmem:[%s1 + $0x18] sm:$0xff]
      %vm345 = vcmp.ge.s32.totalorder %v230, 0
      %vm346 = vcmp.lt.s32.totalorder %v230, 16
      %vm347 = vmand %vm345, %vm346
      %vm348 = vcmp.eq.s32.totalorder %v230, %v235
      %vm349 = vcmp.eq.s32.totalorder %v230, %v237
      %vm350 = vmor %vm348, %vm349
      %vm351 = vmand %vm347, %vm350
      %v352 = vsel %vm351, 1, 0
      %v353 = vcvt.s32.f32 %v352
      %354 = vmatprep.subr.mxu0 0.0
      %355 = vmatpush1.msra.mxu0 %v353
      %356 = vmatprep.subr.mxu0 0.0
      %357 = vmatpush1.msra.mxu0 0.0
      %358 = vmatprep.subr.mxu0 0.0
      %359 = vmatpush1.msra.mxu0 0.0
      %360 = vmatprep.subr.mxu0 0.0
      %361 = vmatpush1.msra.mxu0 0.0
      %362 = vmatprep.subr.mxu0 0.0
      %363 = vmatpush1.msra.mxu0 0.0
      %364 = vmatprep.subr.mxu0 0.0
      %365 = vmatpush1.msra.mxu0 0.0
      %366 = vmatprep.subr.mxu0 0.0
      %367 = vmatpush1.msra.mxu0 0.0
      %368 = vmatprep.subr.mxu0 0.0
      %369 = vmatpush1.msra.mxu0 0.0
      %370 = vmatprep.subr.mxu0 0.0
      %371 = vmatpush1.msra.mxu0 0.0
      %372 = vmatprep.subr.mxu0 0.0
      %373 = vmatpush1.msra.mxu0 0.0
      %374 = vmatprep.subr.mxu0 0.0
      %375 = vmatpush1.msra.mxu0 0.0
      %376 = vmatprep.subr.mxu0 0.0
      %377 = vmatpush1.msra.mxu0 0.0
      %378 = vmatprep.subr.mxu0 0.0
      %379 = vmatpush1.msra.mxu0 0.0
      %380 = vmatprep.subr.mxu0 0.0
      %381 = vmatpush1.msra.mxu0 0.0
      %382 = vmatprep.subr.mxu0 0.0
      %383 = vmatpush1.msra.mxu0 0.0
      %384 = vmatprep.subr.mxu0 0.0
      %385 = vmatpush1.msra.mxu0 0.0
      %386 = vmatprep.subr.mxu0 0.0
      %387 = vmatpush1.msra.mxu0 0.0
      %388 = vmatprep.subr.mxu0 0.0
      %389 = vmatpush1.msra.mxu0 0.0
      %390 = vmatprep.subr.mxu0 0.0
      %391 = vmatpush1.msra.mxu0 0.0
      %392 = vmatprep.subr.mxu0 0.0
      %393 = vmatpush1.msra.mxu0 0.0
      %394 = vmatprep.subr.mxu0 0.0
      %395 = vmatpush1.msra.mxu0 0.0
      %396 = vmatprep.subr.mxu0 0.0
      %397 = vmatpush1.msra.mxu0 0.0
      %398 = vmatprep.subr.mxu0 0.0
      %399 = vmatpush1.msra.mxu0 0.0
      %400 = vmatprep.subr.mxu0 0.0
      %401 = vmatpush1.msra.mxu0 0.0
      %402 = vmatprep.subr.mxu0 0.0
      %403 = vmatpush1.msra.mxu0 0.0
      %404 = vmatprep.subr.mxu0 0.0
      %405 = vmatpush1.msra.mxu0 0.0
      %406 = vmatprep.subr.mxu0 0.0
      %407 = vmatpush1.msra.mxu0 0.0
      %408 = vmatprep.subr.mxu0 0.0
      %409 = vmatpush1.msra.mxu0 0.0
      %410 = vmatprep.subr.mxu0 0.0
      %411 = vmatpush1.msra.mxu0 0.0
      %412 = vmatprep.subr.mxu0 0.0
      %413 = vmatpush1.msra.mxu0 0.0
      %414 = vmatprep.subr.mxu0 0.0
      %415 = vmatpush1.msra.mxu0 0.0
      %416 = vmatprep.subr.mxu0 0.0
      %417 = vmatpush1.msra.mxu0 0.0
      %418 = vmatprep.mubr.f32.mxu0 0.0
      %419 = vmatmul.mubr.f32.gmra.mrb[0].mxu0 %v245
      %v420 = vpop.f32.mrb[0].mxu0
      %v421 = vadd.f32 0.0, %v420
      %v422 = vpop.f32.mrb[0].mxu0
      %423 = vmatprep.mubr.f32.mxu0 0.0
      %424 = vmatmul.mubr.f32.gmra.mrb[0].mxu0 %v248
      %v425 = vpop.f32.mrb[0].mxu0
      %v426 = vadd.f32 0.0, %v425
      %v427 = vpop.f32.mrb[0].mxu0
      %428 = vmatprep.mubr.f32.mxu0 0.0
      %429 = vmatmul.mubr.f32.gmra.mrb[0].mxu0 %v251
      %v430 = vpop.f32.mrb[0].mxu0
      %v431 = vadd.f32 0.0, %v430
      %v432 = vpop.f32.mrb[0].mxu0
      %433 = vmatprep.mubr.f32.mxu0 0.0
      %434 = vmatmul.mubr.f32.gmra.mrb[0].mxu0 %v254
      %v435 = vpop.f32.mrb[0].mxu0
      %v436 = vadd.f32 0.0, %v435
      %v437 = vpop.f32.mrb[0].mxu0
      %438 = vdwg.mxu0
      %s439 = scalar_lea.vmem %s1, 32
      %v440 = vld [vmem:[%s439] sm:$0xff]
      %v441 = vld [vmem:[%s439 + $0x8] sm:$0xff]
      %v442 = vld [vmem:[%s439 + $0x10] sm:$0xff]
      %v443 = vld [vmem:[%s439 + $0x18] sm:$0xff]
      %vm444 = vcmask 261120
      %v446 = vsel %vm444, %v440, 0
      %v449 = vsel %vm444, %v441, 0
      %v452 = vsel %vm444, %v442, 0
      %v455 = vsel %vm444, %v443, 0
      %457 = vmatprep.subr.mxu0 0.0
      %458 = vmatpush1.msra.mxu0 %v421
      %459 = vmatprep.subr.mxu0 0.0
      %460 = vmatpush1.msra.mxu0 %v426
      %461 = vmatprep.subr.mxu0 0.0
      %462 = vmatpush1.msra.mxu0 %v431
      %463 = vmatprep.subr.mxu0 0.0
      %464 = vmatpush1.msra.mxu0 %v436
      %465 = vmatprep.subr.mxu0 0.0
      %466 = vmatpush1.msra.mxu0 0.0
      %467 = vmatprep.subr.mxu0 0.0
      %468 = vmatpush1.msra.mxu0 0.0
      %469 = vmatprep.subr.mxu0 0.0
      %470 = vmatpush1.msra.mxu0 0.0
      %471 = vmatprep.subr.mxu0 0.0
      %472 = vmatpush1.msra.mxu0 0.0
      %473 = vmatprep.subr.mxu0 0.0
      %474 = vmatpush1.msra.mxu0 0.0
      %475 = vmatprep.subr.mxu0 0.0
      %476 = vmatpush1.msra.mxu0 0.0
      %477 = vmatprep.subr.mxu0 0.0
      %478 = vmatpush1.msra.mxu0 0.0
      %479 = vmatprep.subr.mxu0 0.0
      %480 = vmatpush1.msra.mxu0 0.0
      %481 = vmatprep.subr.mxu0 0.0
      %482 = vmatpush1.msra.mxu0 0.0
      %483 = vmatprep.subr.mxu0 0.0
      %484 = vmatpush1.msra.mxu0 0.0
      %485 = vmatprep.subr.mxu0 0.0
      %486 = vmatpush1.msra.mxu0 0.0
      %487 = vmatprep.subr.mxu0 0.0
      %488 = vmatpush1.msra.mxu0 0.0
      %489 = vmatprep.subr.mxu0 0.0
      %490 = vmatpush1.msra.mxu0 0.0
      %491 = vmatprep.subr.mxu0 0.0
      %492 = vmatpush1.msra.mxu0 0.0
      %493 = vmatprep.subr.mxu0 0.0
      %494 = vmatpush1.msra.mxu0 0.0
      %495 = vmatprep.subr.mxu0 0.0
      %496 = vmatpush1.msra.mxu0 0.0
      %497 = vmatprep.subr.mxu0 0.0
      %498 = vmatpush1.msra.mxu0 0.0
      %499 = vmatprep.subr.mxu0 0.0
      %500 = vmatpush1.msra.mxu0 0.0
      %501 = vmatprep.subr.mxu0 0.0
      %502 = vmatpush1.msra.mxu0 0.0
      %503 = vmatprep.subr.mxu0 0.0
      %504 = vmatpush1.msra.mxu0 0.0
      %505 = vmatprep.subr.mxu0 0.0
      %506 = vmatpush1.msra.mxu0 0.0
      %507 = vmatprep.subr.mxu0 0.0
      %508 = vmatpush1.msra.mxu0 0.0
      %509 = vmatprep.subr.mxu0 0.0
      %510 = vmatpush1.msra.mxu0 0.0
      %511 = vmatprep.subr.mxu0 0.0
      %512 = vmatpush1.msra.mxu0 0.0
      %513 = vmatprep.subr.mxu0 0.0
      %514 = vmatpush1.msra.mxu0 0.0
      %515 = vmatprep.subr.mxu0 0.0
      %516 = vmatpush1.msra.mxu0 0.0
      %517 = vmatprep.subr.mxu0 0.0
      %518 = vmatpush1.msra.mxu0 0.0
      %519 = vmatprep.subr.mxu0 0.0
      %520 = vmatpush1.msra.mxu0 0.0
      %521 = vmatprep.mubr.f32.mxu0 0.0
      %522 = vmatmul.mubr.f32.gmra.mrb[0].mxu0 %v446
      %v523 = vpop.f32.mrb[0].mxu0
      %v524 = vadd.f32 0.0, %v523
      %v525 = vpop.f32.mrb[0].mxu0
      %526 = vmatprep.mubr.f32.mxu0 0.0
      %527 = vmatmul.mubr.f32.gmra.mrb[0].mxu0 %v449
      %v528 = vpop.f32.mrb[0].mxu0
      %v529 = vadd.f32 0.0, %v528
      %v530 = vpop.f32.mrb[0].mxu0
      %531 = vmatprep.mubr.f32.mxu0 0.0
      %532 = vmatmul.mubr.f32.gmra.mrb[0].mxu0 %v452
      %v533 = vpop.f32.mrb[0].mxu0
      %v534 = vadd.f32 0.0, %v533
      %v535 = vpop.f32.mrb[0].mxu0
      %536 = vmatprep.mubr.f32.mxu0 0.0
      %537 = vmatmul.mubr.f32.gmra.mrb[0].mxu0 %v455
      %v538 = vpop.f32.mrb[0].mxu0
      %v539 = vadd.f32 0.0, %v538
      %v540 = vpop.f32.mrb[0].mxu0
      %541 = vdwg.mxu0
      %v543 = vsel %vm444, %v341, 0
      %v546 = vsel %vm444, %v342, 0
      %v549 = vsel %vm444, %v343, 0
      %v552 = vsel %vm444, %v344, 0
      %554 = vmatprep.subr.mxu0 0.0
      %555 = vmatpush1.msra.mxu0 %v323
      %556 = vmatprep.subr.mxu0 0.0
      %557 = vmatpush1.msra.mxu0 %v328
      %558 = vmatprep.subr.mxu0 0.0
      %559 = vmatpush1.msra.mxu0 %v333
      %560 = vmatprep.subr.mxu0 0.0
      %561 = vmatpush1.msra.mxu0 %v338
      %562 = vmatprep.subr.mxu0 0.0
      %563 = vmatpush1.msra.mxu0 0.0
      %564 = vmatprep.subr.mxu0 0.0
      %565 = vmatpush1.msra.mxu0 0.0
      %566 = vmatprep.subr.mxu0 0.0
      %567 = vmatpush1.msra.mxu0 0.0
      %568 = vmatprep.subr.mxu0 0.0
      %569 = vmatpush1.msra.mxu0 0.0
      %570 = vmatprep.subr.mxu0 0.0
      %571 = vmatpush1.msra.mxu0 0.0
      %572 = vmatprep.subr.mxu0 0.0
      %573 = vmatpush1.msra.mxu0 0.0
      %574 = vmatprep.subr.mxu0 0.0
      %575 = vmatpush1.msra.mxu0 0.0
      %576 = vmatprep.subr.mxu0 0.0
      %577 = vmatpush1.msra.mxu0 0.0
      %578 = vmatprep.subr.mxu0 0.0
      %579 = vmatpush1.msra.mxu0 0.0
      %580 = vmatprep.subr.mxu0 0.0
      %581 = vmatpush1.msra.mxu0 0.0
      %582 = vmatprep.subr.mxu0 0.0
      %583 = vmatpush1.msra.mxu0 0.0
      %584 = vmatprep.subr.mxu0 0.0
      %585 = vmatpush1.msra.mxu0 0.0
      %586 = vmatprep.subr.mxu0 0.0
      %587 = vmatpush1.msra.mxu0 0.0
      %588 = vmatprep.subr.mxu0 0.0
      %589 = vmatpush1.msra.mxu0 0.0
      %590 = vmatprep.subr.mxu0 0.0
      %591 = vmatpush1.msra.mxu0 0.0
      %592 = vmatprep.subr.mxu0 0.0
      %593 = vmatpush1.msra.mxu0 0.0
      %594 = vmatprep.subr.mxu0 0.0
      %595 = vmatpush1.msra.mxu0 0.0
      %596 = vmatprep.subr.mxu0 0.0
      %597 = vmatpush1.msra.mxu0 0.0
      %598 = vmatprep.subr.mxu0 0.0
      %599 = vmatpush1.msra.mxu0 0.0
      %600 = vmatprep.subr.mxu0 0.0
      %601 = vmatpush1.msra.mxu0 0.0
      %602 = vmatprep.subr.mxu0 0.0
      %603 = vmatpush1.msra.mxu0 0.0
      %604 = vmatprep.subr.mxu0 0.0
      %605 = vmatpush1.msra.mxu0 0.0
      %606 = vmatprep.subr.mxu0 0.0
      %607 = vmatpush1.msra.mxu0 0.0
      %608 = vmatprep.subr.mxu0 0.0
      %609 = vmatpush1.msra.mxu0 0.0
      %610 = vmatprep.subr.mxu0 0.0
      %611 = vmatpush1.msra.mxu0 0.0
      %612 = vmatprep.subr.mxu0 0.0
      %613 = vmatpush1.msra.mxu0 0.0
      %614 = vmatprep.subr.mxu0 0.0
      %615 = vmatpush1.msra.mxu0 0.0
      %616 = vmatprep.subr.mxu0 0.0
      %617 = vmatpush1.msra.mxu0 0.0
      %618 = vmatprep.mubr.f32.mxu0 0.0
      %619 = vmatmul.mubr.f32.gmra.mrb[0].mxu0 %v543
      %v620 = vpop.f32.mrb[0].mxu0
      %v621 = vadd.f32 %v524, %v620
      %v622 = vpop.f32.mrb[0].mxu0
      %623 = vmatprep.mubr.f32.mxu0 0.0
      %624 = vmatmul.mubr.f32.gmra.mrb[0].mxu0 %v546
      %v625 = vpop.f32.mrb[0].mxu0
      %v626 = vadd.f32 %v529, %v625
      %v627 = vpop.f32.mrb[0].mxu0
      %628 = vmatprep.mubr.f32.mxu0 0.0
      %629 = vmatmul.mubr.f32.gmra.mrb[0].mxu0 %v549
      %v630 = vpop.f32.mrb[0].mxu0
      %v631 = vadd.f32 %v534, %v630
      %v632 = vpop.f32.mrb[0].mxu0
      %633 = vmatprep.mubr.f32.mxu0 0.0
      %634 = vmatmul.mubr.f32.gmra.mrb[0].mxu0 %v552
      %v635 = vpop.f32.mrb[0].mxu0
      %v636 = vadd.f32 %v539, %v635
      %v637 = vpop.f32.mrb[0].mxu0
      %638 = vdwg.mxu0
      %v639 = vadd.s32 %v230, 1
      %vm640 = vcmp.ge.s32.totalorder %v639, 0
      %vm641 = vcmp.lt.s32.totalorder %v639, 16
      %vm642 = vmand %vm640, %vm641
      %vm643 = vcmp.eq.s32.totalorder %v639, %v235
      %vm644 = vcmp.eq.s32.totalorder %v639, %v237
      %vm645 = vmor %vm643, %vm644
      %vm646 = vmand %vm642, %vm645
      %v647 = vsel %vm646, 1, 0
      %v648 = vcvt.s32.f32 %v647
      %649 = vmatprep.subr.mxu0 0.0
      %650 = vmatpush1.msra.mxu0 %v648
      %651 = vmatprep.subr.mxu0 0.0
      %652 = vmatpush1.msra.mxu0 0.0
      %653 = vmatprep.subr.mxu0 0.0
      %654 = vmatpush1.msra.mxu0 0.0
      %655 = vmatprep.subr.mxu0 0.0
      %656 = vmatpush1.msra.mxu0 0.0
      %657 = vmatprep.subr.mxu0 0.0
      %658 = vmatpush1.msra.mxu0 0.0
      %659 = vmatprep.subr.mxu0 0.0
      %660 = vmatpush1.msra.mxu0 0.0
      %661 = vmatprep.subr.mxu0 0.0
      %662 = vmatpush1.msra.mxu0 0.0
      %663 = vmatprep.subr.mxu0 0.0
      %664 = vmatpush1.msra.mxu0 0.0
      %665 = vmatprep.subr.mxu0 0.0
      %666 = vmatpush1.msra.mxu0 0.0
      %667 = vmatprep.subr.mxu0 0.0
      %668 = vmatpush1.msra.mxu0 0.0
      %669 = vmatprep.subr.mxu0 0.0
      %670 = vmatpush1.msra.mxu0 0.0
      %671 = vmatprep.subr.mxu0 0.0
      %672 = vmatpush1.msra.mxu0 0.0
      %673 = vmatprep.subr.mxu0 0.0
      %674 = vmatpush1.msra.mxu0 0.0
      %675 = vmatprep.subr.mxu0 0.0
      %676 = vmatpush1.msra.mxu0 0.0
      %677 = vmatprep.subr.mxu0 0.0
      %678 = vmatpush1.msra.mxu0 0.0
      %679 = vmatprep.subr.mxu0 0.0
      %680 = vmatpush1.msra.mxu0 0.0
      %681 = vmatprep.subr.mxu0 0.0
      %682 = vmatpush1.msra.mxu0 0.0
      %683 = vmatprep.subr.mxu0 0.0
      %684 = vmatpush1.msra.mxu0 0.0
      %685 = vmatprep.subr.mxu0 0.0
      %686 = vmatpush1.msra.mxu0 0.0
      %687 = vmatprep.subr.mxu0 0.0
      %688 = vmatpush1.msra.mxu0 0.0
      %689 = vmatprep.subr.mxu0 0.0
      %690 = vmatpush1.msra.mxu0 0.0
      %691 = vmatprep.subr.mxu0 0.0
      %692 = vmatpush1.msra.mxu0 0.0
      %693 = vmatprep.subr.mxu0 0.0
      %694 = vmatpush1.msra.mxu0 0.0
      %695 = vmatprep.subr.mxu0 0.0
      %696 = vmatpush1.msra.mxu0 0.0
      %697 = vmatprep.subr.mxu0 0.0
      %698 = vmatpush1.msra.mxu0 0.0
      %699 = vmatprep.subr.mxu0 0.0
      %700 = vmatpush1.msra.mxu0 0.0
      %701 = vmatprep.subr.mxu0 0.0
      %702 = vmatpush1.msra.mxu0 0.0
      %703 = vmatprep.subr.mxu0 0.0
      %704 = vmatpush1.msra.mxu0 0.0
      %705 = vmatprep.subr.mxu0 0.0
      %706 = vmatpush1.msra.mxu0 0.0
      %707 = vmatprep.subr.mxu0 0.0
      %708 = vmatpush1.msra.mxu0 0.0
      %709 = vmatprep.subr.mxu0 0.0
      %710 = vmatpush1.msra.mxu0 0.0
      %711 = vmatprep.subr.mxu0 0.0
      %712 = vmatpush1.msra.mxu0 0.0
      %713 = vmatprep.mubr.f32.mxu0 0.0
      %714 = vmatmul.mubr.f32.gmra.mrb[0].mxu0 %v245
      %v715 = vpop.f32.mrb[0].mxu0
      %v716 = vadd.f32 0.0, %v715
      %v717 = vpop.f32.mrb[0].mxu0
      %718 = vmatprep.mubr.f32.mxu0 0.0
      %719 = vmatmul.mubr.f32.gmra.mrb[0].mxu0 %v248
      %v720 = vpop.f32.mrb[0].mxu0
      %v721 = vadd.f32 0.0, %v720
      %v722 = vpop.f32.mrb[0].mxu0
      %723 = vmatprep.mubr.f32.mxu0 0.0
      %724 = vmatmul.mubr.f32.gmra.mrb[0].mxu0 %v251
      %v725 = vpop.f32.mrb[0].mxu0
      %v726 = vadd.f32 0.0, %v725
      %v727 = vpop.f32.mrb[0].mxu0
      %728 = vmatprep.mubr.f32.mxu0 0.0
      %729 = vmatmul.mubr.f32.gmra.mrb[0].mxu0 %v254
      %v730 = vpop.f32.mrb[0].mxu0
      %v731 = vadd.f32 0.0, %v730
      %v732 = vpop.f32.mrb[0].mxu0
      %733 = vdwg.mxu0
      %s734 = scalar_lea.vmem %s1, 64
      %v735 = vld [vmem:[%s734] sm:$0xff]
      %v736 = vld [vmem:[%s734 + $0x8] sm:$0xff]
      %v737 = vld [vmem:[%s734 + $0x10] sm:$0xff]
      %v738 = vld [vmem:[%s734 + $0x18] sm:$0xff]
      %v740 = vsel %vm444, %v735, 0
      %v743 = vsel %vm444, %v736, 0
      %v746 = vsel %vm444, %v737, 0
      %v749 = vsel %vm444, %v738, 0
      %751 = vmatprep.subr.mxu0 0.0
      %752 = vmatpush1.msra.mxu0 %v716
      %753 = vmatprep.subr.mxu0 0.0
      %754 = vmatpush1.msra.mxu0 %v721
      %755 = vmatprep.subr.mxu0 0.0
      %756 = vmatpush1.msra.mxu0 %v726
      %757 = vmatprep.subr.mxu0 0.0
      %758 = vmatpush1.msra.mxu0 %v731
      %759 = vmatprep.subr.mxu0 0.0
      %760 = vmatpush1.msra.mxu0 0.0
      %761 = vmatprep.subr.mxu0 0.0
      %762 = vmatpush1.msra.mxu0 0.0
      %763 = vmatprep.subr.mxu0 0.0
      %764 = vmatpush1.msra.mxu0 0.0
      %765 = vmatprep.subr.mxu0 0.0
      %766 = vmatpush1.msra.mxu0 0.0
      %767 = vmatprep.subr.mxu0 0.0
      %768 = vmatpush1.msra.mxu0 0.0
      %769 = vmatprep.subr.mxu0 0.0
      %770 = vmatpush1.msra.mxu0 0.0
      %771 = vmatprep.subr.mxu0 0.0
      %772 = vmatpush1.msra.mxu0 0.0
      %773 = vmatprep.subr.mxu0 0.0
      %774 = vmatpush1.msra.mxu0 0.0
      %775 = vmatprep.subr.mxu0 0.0
      %776 = vmatpush1.msra.mxu0 0.0
      %777 = vmatprep.subr.mxu0 0.0
      %778 = vmatpush1.msra.mxu0 0.0
      %779 = vmatprep.subr.mxu0 0.0
      %780 = vmatpush1.msra.mxu0 0.0
      %781 = vmatprep.subr.mxu0 0.0
      %782 = vmatpush1.msra.mxu0 0.0
      %783 = vmatprep.subr.mxu0 0.0
      %784 = vmatpush1.msra.mxu0 0.0
      %785 = vmatprep.subr.mxu0 0.0
      %786 = vmatpush1.msra.mxu0 0.0
      %787 = vmatprep.subr.mxu0 0.0
      %788 = vmatpush1.msra.mxu0 0.0
      %789 = vmatprep.subr.mxu0 0.0
      %790 = vmatpush1.msra.mxu0 0.0
      %791 = vmatprep.subr.mxu0 0.0
      %792 = vmatpush1.msra.mxu0 0.0
      %793 = vmatprep.subr.mxu0 0.0
      %794 = vmatpush1.msra.mxu0 0.0
      %795 = vmatprep.subr.mxu0 0.0
      %796 = vmatpush1.msra.mxu0 0.0
      %797 = vmatprep.subr.mxu0 0.0
      %798 = vmatpush1.msra.mxu0 0.0
      %799 = vmatprep.subr.mxu0 0.0
      %800 = vmatpush1.msra.mxu0 0.0
      %801 = vmatprep.subr.mxu0 0.0
      %802 = vmatpush1.msra.mxu0 0.0
      %803 = vmatprep.subr.mxu0 0.0
      %804 = vmatpush1.msra.mxu0 0.0
      %805 = vmatprep.subr.mxu0 0.0
      %806 = vmatpush1.msra.mxu0 0.0
      %807 = vmatprep.subr.mxu0 0.0
      %808 = vmatpush1.msra.mxu0 0.0
      %809 = vmatprep.subr.mxu0 0.0
      %810 = vmatpush1.msra.mxu0 0.0
      %811 = vmatprep.subr.mxu0 0.0
      %812 = vmatpush1.msra.mxu0 0.0
      %813 = vmatprep.subr.mxu0 0.0
      %814 = vmatpush1.msra.mxu0 0.0
      %815 = vmatprep.mubr.f32.mxu0 0.0
      %816 = vmatmul.mubr.f32.gmra.mrb[0].mxu0 %v740
      %v817 = vpop.f32.mrb[0].mxu0
      %v818 = vadd.f32 0.0, %v817
      %v819 = vpop.f32.mrb[0].mxu0
      %820 = vmatprep.mubr.f32.mxu0 0.0
      %821 = vmatmul.mubr.f32.gmra.mrb[0].mxu0 %v743
      %v822 = vpop.f32.mrb[0].mxu0
      %v823 = vadd.f32 0.0, %v822
      %v824 = vpop.f32.mrb[0].mxu0
      %825 = vmatprep.mubr.f32.mxu0 0.0
      %826 = vmatmul.mubr.f32.gmra.mrb[0].mxu0 %v746
      %v827 = vpop.f32.mrb[0].mxu0
      %v828 = vadd.f32 0.0, %v827
      %v829 = vpop.f32.mrb[0].mxu0
      %830 = vmatprep.mubr.f32.mxu0 0.0
      %831 = vmatmul.mubr.f32.gmra.mrb[0].mxu0 %v749
      %v832 = vpop.f32.mrb[0].mxu0
      %v833 = vadd.f32 0.0, %v832
      %v834 = vpop.f32.mrb[0].mxu0
      %835 = vdwg.mxu0
      %v836 = vadd.f32 %v621, %v818
      %v837 = vadd.f32 %v626, %v823
      %v838 = vadd.f32 %v631, %v828
      %v839 = vadd.f32 %v636, %v833
      %v840 = vld [vmem:[%s3] sm:$0xff]
      %v841 = vld [vmem:[%s3 + $0x8] sm:$0xff]
      %v842 = vld [vmem:[%s3 + $0x10] sm:$0xff]
      %v843 = vld [vmem:[%s3 + $0x18] sm:$0xff]
      %845 = vset.pattern.permute.xlu0 0
      %846 = vperm.xlu0 %845, %v840
      %v847 = vpop.permute.xlu0 %846
      %850 = vset.pattern.permute.xlu0 0
      %851 = vperm.xlu0 %850, %v841
      %v852 = vpop.permute.xlu0 %851
      %855 = vset.pattern.permute.xlu0 0
      %856 = vperm.xlu0 %855, %v842
      %v857 = vpop.permute.xlu0 %856
      %860 = vset.pattern.permute.xlu0 0
      %861 = vperm.xlu0 %860, %v843
      %v862 = vpop.permute.xlu0 %861
      %v864 = vadd.f32 %v836, %v847
      %v865 = vadd.f32 %v837, %v852
      %v866 = vadd.f32 %v838, %v857
      %v867 = vadd.f32 %v839, %v862
      %vm868 = vcmp.ge.f32.partialorder %v864, 0.0
      %vm869 = vcmp.ge.f32.partialorder %v865, 0.0
      %vm870 = vcmp.ge.f32.partialorder %v866, 0.0
      %vm871 = vcmp.ge.f32.partialorder %v867, 0.0
      %v872 = vmul.f32 %v864, 0.2
      %v873 = vmul.f32 %v865, 0.2
      %v874 = vmul.f32 %v866, 0.2
      %v875 = vmul.f32 %v867, 0.2
      %v876 = vsel %vm868, %v864, %v872
      %v877 = vsel %vm869, %v865, %v873
      %v878 = vsel %vm870, %v866, %v874
      %v879 = vsel %vm871, %v867, %v875
      %v880 = vadd.s32 %v228, 8
      %vm881 = vcmp.lt.s32.totalorder %v231, 32
      %vm882 = vmand %vm232, %vm881
      %v883 = vmul.u32 %v880, 2
      %vm884 = vcmp.eq.s32.totalorder %v231, %v883
      %v885 = vadd.s32 %v883, 1
      %vm886 = vcmp.eq.s32.totalorder %v231, %v885
      %vm887 = vmor %vm884, %vm886
      %vm888 = vmand %vm882, %vm239
      %vm889 = vmand %vm882, %vm887
      %v890 = vsel %vm888, 1, 0
      %v891 = vsel %vm889, 1, 0
      %v892 = vcvt.s32.f32 %v890
      %v893 = vcvt.s32.f32 %v891
      %vm894 = vcmask 130048
      %v896 = vsel %vm894, %v876, 0
      %v899 = vsel %vm894, %v877, 0
      %v902 = vsel %vm894, %v878, 0
      %v905 = vsel %vm894, %v879, 0
      %907 = vmatprep.subr.mxu0 0.0
      %908 = vmatpush1.msra.mxu0 %v892
      %909 = vmatprep.subr.mxu0 0.0
      %910 = vmatpush1.msra.mxu0 %v893
      %911 = vmatprep.subr.mxu0 0.0
      %912 = vmatpush1.msra.mxu0 0.0
      %913 = vmatprep.subr.mxu0 0.0
      %914 = vmatpush1.msra.mxu0 0.0
      %915 = vmatprep.subr.mxu0 0.0
      %916 = vmatpush1.msra.mxu0 0.0
      %917 = vmatprep.subr.mxu0 0.0
      %918 = vmatpush1.msra.mxu0 0.0
      %919 = vmatprep.subr.mxu0 0.0
      %920 = vmatpush1.msra.mxu0 0.0
      %921 = vmatprep.subr.mxu0 0.0
      %922 = vmatpush1.msra.mxu0 0.0
      %923 = vmatprep.subr.mxu0 0.0
      %924 = vmatpush1.msra.mxu0 0.0
      %925 = vmatprep.subr.mxu0 0.0
      %926 = vmatpush1.msra.mxu0 0.0
      %927 = vmatprep.subr.mxu0 0.0
      %928 = vmatpush1.msra.mxu0 0.0
      %929 = vmatprep.subr.mxu0 0.0
      %930 = vmatpush1.msra.mxu0 0.0
      %931 = vmatprep.subr.mxu0 0.0
      %932 = vmatpush1.msra.mxu0 0.0
      %933 = vmatprep.subr.mxu0 0.0
      %934 = vmatpush1.msra.mxu0 0.0
      %935 = vmatprep.subr.mxu0 0.0
      %936 = vmatpush1.msra.mxu0 0.0
      %937 = vmatprep.subr.mxu0 0.0
      %938 = vmatpush1.msra.mxu0 0.0
      %939 = vmatprep.subr.mxu0 0.0
      %940 = vmatpush1.msra.mxu0 0.0
      %941 = vmatprep.subr.mxu0 0.0
      %942 = vmatpush1.msra.mxu0 0.0
      %943 = vmatprep.subr.mxu0 0.0
      %944 = vmatpush1.msra.mxu0 0.0
      %945 = vmatprep.subr.mxu0 0.0
      %946 = vmatpush1.msra.mxu0 0.0
      %947 = vmatprep.subr.mxu0 0.0
      %948 = vmatpush1.msra.mxu0 0.0
      %949 = vmatprep.subr.mxu0 0.0
      %950 = vmatpush1.msra.mxu0 0.0
      %951 = vmatprep.subr.mxu0 0.0
      %952 = vmatpush1.msra.mxu0 0.0
      %953 = vmatprep.subr.mxu0 0.0
      %954 = vmatpush1.msra.mxu0 0.0
      %955 = vmatprep.subr.mxu0 0.0
      %956 = vmatpush1.msra.mxu0 0.0
      %957 = vmatprep.subr.mxu0 0.0
      %958 = vmatpush1.msra.mxu0 0.0
      %959 = vmatprep.subr.mxu0 0.0
      %960 = vmatpush1.msra.mxu0 0.0
      %961 = vmatprep.subr.mxu0 0.0
      %962 = vmatpush1.msra.mxu0 0.0
      %963 = vmatprep.subr.mxu0 0.0
      %964 = vmatpush1.msra.mxu0 0.0
      %965 = vmatprep.subr.mxu0 0.0
      %966 = vmatpush1.msra.mxu0 0.0
      %967 = vmatprep.subr.mxu0 0.0
      %968 = vmatpush1.msra.mxu0 0.0
      %969 = vmatprep.subr.mxu0 0.0
      %970 = vmatpush1.msra.mxu0 0.0
      %971 = vmatprep.mubr.f32.mxu0 0.0
      %972 = vmatmul.mubr.f32.gmra.mrb[0].mxu0 %v896
      %v973 = vpop.f32.mrb[0].mxu0
      %v974 = vadd.f32 0.0, %v973
      %v975 = vpop.f32.mrb[0].mxu0
      %976 = vmatprep.mubr.f32.mxu0 0.0
      %977 = vmatmul.mubr.f32.gmra.mrb[0].mxu0 %v899
      %v978 = vpop.f32.mrb[0].mxu0
      %v979 = vadd.f32 0.0, %v978
      %v980 = vpop.f32.mrb[0].mxu0
      %981 = vmatprep.mubr.f32.mxu0 0.0
      %982 = vmatmul.mubr.f32.gmra.mrb[0].mxu0 %v902
      %v983 = vpop.f32.mrb[0].mxu0
      %v984 = vadd.f32 0.0, %v983
      %v985 = vpop.f32.mrb[0].mxu0
      %986 = vmatprep.mubr.f32.mxu0 0.0
      %987 = vmatmul.mubr.f32.gmra.mrb[0].mxu0 %v905
      %v988 = vpop.f32.mrb[0].mxu0
      %v989 = vadd.f32 0.0, %v988
      %v990 = vpop.f32.mrb[0].mxu0
      %991 = vdwg.mxu0
      %v992 = vld [vmem:[%s2] sm:$0xff]
      %vm993 = vcmp.lt.s32.totalorder %v230, 32
      %vm994 = vmand %vm345, %vm993
      %vm995 = vcmp.eq.s32.totalorder %v230, %v883
      %vm996 = vcmp.eq.s32.totalorder %v230, %v885
      %vm997 = vmor %vm995, %vm996
      %vm998 = vmand %vm994, %vm350
      %vm999 = vmand %vm994, %vm997
      %v1000 = vsel %vm998, 1, 0
      %v1001 = vsel %vm999, 1, 0
      %v1002 = vcvt.s32.f32 %v1000
      %v1003 = vcvt.s32.f32 %v1001
      %1004 = vmatprep.subr.mxu0 0.0
      %1005 = vmatpush1.msra.mxu0 %v1002
      %1006 = vmatprep.subr.mxu0 0.0
      %1007 = vmatpush1.msra.mxu0 %v1003
      %1008 = vmatprep.subr.mxu0 0.0
      %1009 = vmatpush1.msra.mxu0 0.0
      %1010 = vmatprep.subr.mxu0 0.0
      %1011 = vmatpush1.msra.mxu0 0.0
      %1012 = vmatprep.subr.mxu0 0.0
      %1013 = vmatpush1.msra.mxu0 0.0
      %1014 = vmatprep.subr.mxu0 0.0
      %1015 = vmatpush1.msra.mxu0 0.0
      %1016 = vmatprep.subr.mxu0 0.0
      %1017 = vmatpush1.msra.mxu0 0.0
      %1018 = vmatprep.subr.mxu0 0.0
      %1019 = vmatpush1.msra.mxu0 0.0
      %1020 = vmatprep.subr.mxu0 0.0
      %1021 = vmatpush1.msra.mxu0 0.0
      %1022 = vmatprep.subr.mxu0 0.0
      %1023 = vmatpush1.msra.mxu0 0.0
      %1024 = vmatprep.subr.mxu0 0.0
      %1025 = vmatpush1.msra.mxu0 0.0
      %1026 = vmatprep.subr.mxu0 0.0
      %1027 = vmatpush1.msra.mxu0 0.0
      %1028 = vmatprep.subr.mxu0 0.0
      %1029 = vmatpush1.msra.mxu0 0.0
      %1030 = vmatprep.subr.mxu0 0.0
      %1031 = vmatpush1.msra.mxu0 0.0
      %1032 = vmatprep.subr.mxu0 0.0
      %1033 = vmatpush1.msra.mxu0 0.0
      %1034 = vmatprep.subr.mxu0 0.0
      %1035 = vmatpush1.msra.mxu0 0.0
      %1036 = vmatprep.subr.mxu0 0.0
      %1037 = vmatpush1.msra.mxu0 0.0
      %1038 = vmatprep.subr.mxu0 0.0
      %1039 = vmatpush1.msra.mxu0 0.0
      %1040 = vmatprep.subr.mxu0 0.0
      %1041 = vmatpush1.msra.mxu0 0.0
      %1042 = vmatprep.subr.mxu0 0.0
      %1043 = vmatpush1.msra.mxu0 0.0
      %1044 = vmatprep.subr.mxu0 0.0
      %1045 = vmatpush1.msra.mxu0 0.0
      %1046 = vmatprep.subr.mxu0 0.0
      %1047 = vmatpush1.msra.mxu0 0.0
      %1048 = vmatprep.subr.mxu0 0.0
      %1049 = vmatpush1.msra.mxu0 0.0
      %1050 = vmatprep.subr.mxu0 0.0
      %1051 = vmatpush1.msra.mxu0 0.0
      %1052 = vmatprep.subr.mxu0 0.0
      %1053 = vmatpush1.msra.mxu0 0.0
      %1054 = vmatprep.subr.mxu0 0.0
      %1055 = vmatpush1.msra.mxu0 0.0
      %1056 = vmatprep.subr.mxu0 0.0
      %1057 = vmatpush1.msra.mxu0 0.0
      %1058 = vmatprep.subr.mxu0 0.0
      %1059 = vmatpush1.msra.mxu0 0.0
      %1060 = vmatprep.subr.mxu0 0.0
      %1061 = vmatpush1.msra.mxu0 0.0
      %1062 = vmatprep.subr.mxu0 0.0
      %1063 = vmatpush1.msra.mxu0 0.0
      %1064 = vmatprep.subr.mxu0 0.0
      %1065 = vmatpush1.msra.mxu0 0.0
      %1066 = vmatprep.subr.mxu0 0.0
      %1067 = vmatpush1.msra.mxu0 0.0
      %1068 = vmatprep.mubr.f32.mxu0 0.0
      %1069 = vmatmul.mubr.f32.gmra.mrb[0].mxu0 %v896
      %v1070 = vpop.f32.mrb[0].mxu0
      %v1071 = vadd.f32 0.0, %v1070
      %v1072 = vpop.f32.mrb[0].mxu0
      %1073 = vmatprep.mubr.f32.mxu0 0.0
      %1074 = vmatmul.mubr.f32.gmra.mrb[0].mxu0 %v899
      %v1075 = vpop.f32.mrb[0].mxu0
      %v1076 = vadd.f32 0.0, %v1075
      %v1077 = vpop.f32.mrb[0].mxu0
      %1078 = vmatprep.mubr.f32.mxu0 0.0
      %1079 = vmatmul.mubr.f32.gmra.mrb[0].mxu0 %v902
      %v1080 = vpop.f32.mrb[0].mxu0
      %v1081 = vadd.f32 0.0, %v1080
      %v1082 = vpop.f32.mrb[0].mxu0
      %1083 = vmatprep.mubr.f32.mxu0 0.0
      %1084 = vmatmul.mubr.f32.gmra.mrb[0].mxu0 %v905
      %v1085 = vpop.f32.mrb[0].mxu0
      %v1086 = vadd.f32 0.0, %v1085
      %v1087 = vpop.f32.mrb[0].mxu0
      %1088 = vdwg.mxu0
      %s1089 = scalar_lea.vmem %s2, 8
      %v1090 = vld [vmem:[%s1089] sm:$0xff]
      %v1092 = vsel %vm444, %v1090, 0
      %1094 = vmatprep.subr.mxu0 0.0
      %1095 = vmatpush1.msra.mxu0 %v1071
      %1096 = vmatprep.subr.mxu0 0.0
      %1097 = vmatpush1.msra.mxu0 %v1076
      %1098 = vmatprep.subr.mxu0 0.0
      %1099 = vmatpush1.msra.mxu0 %v1081
      %1100 = vmatprep.subr.mxu0 0.0
      %1101 = vmatpush1.msra.mxu0 %v1086
      %1102 = vmatprep.subr.mxu0 0.0
      %1103 = vmatpush1.msra.mxu0 0.0
      %1104 = vmatprep.subr.mxu0 0.0
      %1105 = vmatpush1.msra.mxu0 0.0
      %1106 = vmatprep.subr.mxu0 0.0
      %1107 = vmatpush1.msra.mxu0 0.0
      %1108 = vmatprep.subr.mxu0 0.0
      %1109 = vmatpush1.msra.mxu0 0.0
      %1110 = vmatprep.subr.mxu0 0.0
      %1111 = vmatpush1.msra.mxu0 0.0
      %1112 = vmatprep.subr.mxu0 0.0
      %1113 = vmatpush1.msra.mxu0 0.0
      %1114 = vmatprep.subr.mxu0 0.0
      %1115 = vmatpush1.msra.mxu0 0.0
      %1116 = vmatprep.subr.mxu0 0.0
      %1117 = vmatpush1.msra.mxu0 0.0
      %1118 = vmatprep.subr.mxu0 0.0
      %1119 = vmatpush1.msra.mxu0 0.0
      %1120 = vmatprep.subr.mxu0 0.0
      %1121 = vmatpush1.msra.mxu0 0.0
      %1122 = vmatprep.subr.mxu0 0.0
      %1123 = vmatpush1.msra.mxu0 0.0
      %1124 = vmatprep.subr.mxu0 0.0
      %1125 = vmatpush1.msra.mxu0 0.0
      %1126 = vmatprep.subr.mxu0 0.0
      %1127 = vmatpush1.msra.mxu0 0.0
      %1128 = vmatprep.subr.mxu0 0.0
      %1129 = vmatpush1.msra.mxu0 0.0
      %1130 = vmatprep.subr.mxu0 0.0
      %1131 = vmatpush1.msra.mxu0 0.0
      %1132 = vmatprep.subr.mxu0 0.0
      %1133 = vmatpush1.msra.mxu0 0.0
      %1134 = vmatprep.subr.mxu0 0.0
      %1135 = vmatpush1.msra.mxu0 0.0
      %1136 = vmatprep.subr.mxu0 0.0
      %1137 = vmatpush1.msra.mxu0 0.0
      %1138 = vmatprep.subr.mxu0 0.0
      %1139 = vmatpush1.msra.mxu0 0.0
      %1140 = vmatprep.subr.mxu0 0.0
      %1141 = vmatpush1.msra.mxu0 0.0
      %1142 = vmatprep.subr.mxu0 0.0
      %1143 = vmatpush1.msra.mxu0 0.0
      %1144 = vmatprep.subr.mxu0 0.0
      %1145 = vmatpush1.msra.mxu0 0.0
      %1146 = vmatprep.subr.mxu0 0.0
      %1147 = vmatpush1.msra.mxu0 0.0
      %1148 = vmatprep.subr.mxu0 0.0
      %1149 = vmatpush1.msra.mxu0 0.0
      %1150 = vmatprep.subr.mxu0 0.0
      %1151 = vmatpush1.msra.mxu0 0.0
      %1152 = vmatprep.subr.mxu0 0.0
      %1153 = vmatpush1.msra.mxu0 0.0
      %1154 = vmatprep.subr.mxu0 0.0
      %1155 = vmatpush1.msra.mxu0 0.0
      %1156 = vmatprep.subr.mxu0 0.0
      %1157 = vmatpush1.msra.mxu0 0.0
      %1158 = vmatprep.mubr.f32.mxu0 0.0
      %1159 = vmatmul.mubr.f32.gmra.mrb[0].mxu0 %v1092
      %v1160 = vpop.f32.mrb[0].mxu0
      %v1161 = vadd.f32 0.0, %v1160
      %v1162 = vpop.f32.mrb[0].mxu0
      %1163 = vdwg.mxu0
      %v1165 = vsel %vm444, %v992, 0
      %1167 = vmatprep.subr.mxu0 0.0
      %1168 = vmatpush1.msra.mxu0 %v974
      %1169 = vmatprep.subr.mxu0 0.0
      %1170 = vmatpush1.msra.mxu0 %v979
      %1171 = vmatprep.subr.mxu0 0.0
      %1172 = vmatpush1.msra.mxu0 %v984
      %1173 = vmatprep.subr.mxu0 0.0
      %1174 = vmatpush1.msra.mxu0 %v989
      %1175 = vmatprep.subr.mxu0 0.0
      %1176 = vmatpush1.msra.mxu0 0.0
      %1177 = vmatprep.subr.mxu0 0.0
      %1178 = vmatpush1.msra.mxu0 0.0
      %1179 = vmatprep.subr.mxu0 0.0
      %1180 = vmatpush1.msra.mxu0 0.0
      %1181 = vmatprep.subr.mxu0 0.0
      %1182 = vmatpush1.msra.mxu0 0.0
      %1183 = vmatprep.subr.mxu0 0.0
      %1184 = vmatpush1.msra.mxu0 0.0
      %1185 = vmatprep.subr.mxu0 0.0
      %1186 = vmatpush1.msra.mxu0 0.0
      %1187 = vmatprep.subr.mxu0 0.0
      %1188 = vmatpush1.msra.mxu0 0.0
      %1189 = vmatprep.subr.mxu0 0.0
      %1190 = vmatpush1.msra.mxu0 0.0
      %1191 = vmatprep.subr.mxu0 0.0
      %1192 = vmatpush1.msra.mxu0 0.0
      %1193 = vmatprep.subr.mxu0 0.0
      %1194 = vmatpush1.msra.mxu0 0.0
      %1195 = vmatprep.subr.mxu0 0.0
      %1196 = vmatpush1.msra.mxu0 0.0
      %1197 = vmatprep.subr.mxu0 0.0
      %1198 = vmatpush1.msra.mxu0 0.0
      %1199 = vmatprep.subr.mxu0 0.0
      %1200 = vmatpush1.msra.mxu0 0.0
      %1201 = vmatprep.subr.mxu0 0.0
      %1202 = vmatpush1.msra.mxu0 0.0
      %1203 = vmatprep.subr.mxu0 0.0
      %1204 = vmatpush1.msra.mxu0 0.0
      %1205 = vmatprep.subr.mxu0 0.0
      %1206 = vmatpush1.msra.mxu0 0.0
      %1207 = vmatprep.subr.mxu0 0.0
      %1208 = vmatpush1.msra.mxu0 0.0
      %1209 = vmatprep.subr.mxu0 0.0
      %1210 = vmatpush1.msra.mxu0 0.0
      %1211 = vmatprep.subr.mxu0 0.0
      %1212 = vmatpush1.msra.mxu0 0.0
      %1213 = vmatprep.subr.mxu0 0.0
      %1214 = vmatpush1.msra.mxu0 0.0
      %1215 = vmatprep.subr.mxu0 0.0
      %1216 = vmatpush1.msra.mxu0 0.0
      %1217 = vmatprep.subr.mxu0 0.0
      %1218 = vmatpush1.msra.mxu0 0.0
      %1219 = vmatprep.subr.mxu0 0.0
      %1220 = vmatpush1.msra.mxu0 0.0
      %1221 = vmatprep.subr.mxu0 0.0
      %1222 = vmatpush1.msra.mxu0 0.0
      %1223 = vmatprep.subr.mxu0 0.0
      %1224 = vmatpush1.msra.mxu0 0.0
      %1225 = vmatprep.subr.mxu0 0.0
      %1226 = vmatpush1.msra.mxu0 0.0
      %1227 = vmatprep.subr.mxu0 0.0
      %1228 = vmatpush1.msra.mxu0 0.0
      %1229 = vmatprep.subr.mxu0 0.0
      %1230 = vmatpush1.msra.mxu0 0.0
      %1231 = vmatprep.mubr.f32.mxu0 0.0
      %1232 = vmatmul.mubr.f32.gmra.mrb[0].mxu0 %v1165
      %v1233 = vpop.f32.mrb[0].mxu0
      %v1234 = vadd.f32 %v1161, %v1233
      %v1235 = vpop.f32.mrb[0].mxu0
      %1236 = vdwg.mxu0
      %vm1237 = vcmp.lt.s32.totalorder %v639, 32
      %vm1238 = vmand %vm640, %vm1237
      %vm1239 = vcmp.eq.s32.totalorder %v639, %v883
      %vm1240 = vcmp.eq.s32.totalorder %v639, %v885
      %vm1241 = vmor %vm1239, %vm1240
      %vm1242 = vmand %vm1238, %vm645
      %vm1243 = vmand %vm1238, %vm1241
      %v1244 = vsel %vm1242, 1, 0
      %v1245 = vsel %vm1243, 1, 0
      %v1246 = vcvt.s32.f32 %v1244
      %v1247 = vcvt.s32.f32 %v1245
      %1248 = vmatprep.subr.mxu0 0.0
      %1249 = vmatpush1.msra.mxu0 %v1246
      %1250 = vmatprep.subr.mxu0 0.0
      %1251 = vmatpush1.msra.mxu0 %v1247
      %1252 = vmatprep.subr.mxu0 0.0
      %1253 = vmatpush1.msra.mxu0 0.0
      %1254 = vmatprep.subr.mxu0 0.0
      %1255 = vmatpush1.msra.mxu0 0.0
      %1256 = vmatprep.subr.mxu0 0.0
      %1257 = vmatpush1.msra.mxu0 0.0
      %1258 = vmatprep.subr.mxu0 0.0
      %1259 = vmatpush1.msra.mxu0 0.0
      %1260 = vmatprep.subr.mxu0 0.0
      %1261 = vmatpush1.msra.mxu0 0.0
      %1262 = vmatprep.subr.mxu0 0.0
      %1263 = vmatpush1.msra.mxu0 0.0
      %1264 = vmatprep.subr.mxu0 0.0
      %1265 = vmatpush1.msra.mxu0 0.0
      %1266 = vmatprep.subr.mxu0 0.0
      %1267 = vmatpush1.msra.mxu0 0.0
      %1268 = vmatprep.subr.mxu0 0.0
      %1269 = vmatpush1.msra.mxu0 0.0
      %1270 = vmatprep.subr.mxu0 0.0
      %1271 = vmatpush1.msra.mxu0 0.0
      %1272 = vmatprep.subr.mxu0 0.0
      %1273 = vmatpush1.msra.mxu0 0.0
      %1274 = vmatprep.subr.mxu0 0.0
      %1275 = vmatpush1.msra.mxu0 0.0
      %1276 = vmatprep.subr.mxu0 0.0
      %1277 = vmatpush1.msra.mxu0 0.0
      %1278 = vmatprep.subr.mxu0 0.0
      %1279 = vmatpush1.msra.mxu0 0.0
      %1280 = vmatprep.subr.mxu0 0.0
      %1281 = vmatpush1.msra.mxu0 0.0
      %1282 = vmatprep.subr.mxu0 0.0
      %1283 = vmatpush1.msra.mxu0 0.0
      %1284 = vmatprep.subr.mxu0 0.0
      %1285 = vmatpush1.msra.mxu0 0.0
      %1286 = vmatprep.subr.mxu0 0.0
      %1287 = vmatpush1.msra.mxu0 0.0
      %1288 = vmatprep.subr.mxu0 0.0
      %1289 = vmatpush1.msra.mxu0 0.0
      %1290 = vmatprep.subr.mxu0 0.0
      %1291 = vmatpush1.msra.mxu0 0.0
      %1292 = vmatprep.subr.mxu0 0.0
      %1293 = vmatpush1.msra.mxu0 0.0
      %1294 = vmatprep.subr.mxu0 0.0
      %1295 = vmatpush1.msra.mxu0 0.0
      %1296 = vmatprep.subr.mxu0 0.0
      %1297 = vmatpush1.msra.mxu0 0.0
      %1298 = vmatprep.subr.mxu0 0.0
      %1299 = vmatpush1.msra.mxu0 0.0
      %1300 = vmatprep.subr.mxu0 0.0
      %1301 = vmatpush1.msra.mxu0 0.0
      %1302 = vmatprep.subr.mxu0 0.0
      %1303 = vmatpush1.msra.mxu0 0.0
      %1304 = vmatprep.subr.mxu0 0.0
      %1305 = vmatpush1.msra.mxu0 0.0
      %1306 = vmatprep.subr.mxu0 0.0
      %1307 = vmatpush1.msra.mxu0 0.0
      %1308 = vmatprep.subr.mxu0 0.0
      %1309 = vmatpush1.msra.mxu0 0.0
      %1310 = vmatprep.subr.mxu0 0.0
      %1311 = vmatpush1.msra.mxu0 0.0
      %1312 = vmatprep.mubr.f32.mxu0 0.0
      %1313 = vmatmul.mubr.f32.gmra.mrb[0].mxu0 %v896
      %v1314 = vpop.f32.mrb[0].mxu0
      %v1315 = vadd.f32 0.0, %v1314
      %v1316 = vpop.f32.mrb[0].mxu0
      %1317 = vmatprep.mubr.f32.mxu0 0.0
      %1318 = vmatmul.mubr.f32.gmra.mrb[0].mxu0 %v899
      %v1319 = vpop.f32.mrb[0].mxu0
      %v1320 = vadd.f32 0.0, %v1319
      %v1321 = vpop.f32.mrb[0].mxu0
      %1322 = vmatprep.mubr.f32.mxu0 0.0
      %1323 = vmatmul.mubr.f32.gmra.mrb[0].mxu0 %v902
      %v1324 = vpop.f32.mrb[0].mxu0
      %v1325 = vadd.f32 0.0, %v1324
      %v1326 = vpop.f32.mrb[0].mxu0
      %1327 = vmatprep.mubr.f32.mxu0 0.0
      %1328 = vmatmul.mubr.f32.gmra.mrb[0].mxu0 %v905
      %v1329 = vpop.f32.mrb[0].mxu0
      %v1330 = vadd.f32 0.0, %v1329
      %v1331 = vpop.f32.mrb[0].mxu0
      %1332 = vdwg.mxu0
      %s1333 = scalar_lea.vmem %s2, 16
      %v1334 = vld [vmem:[%s1333] sm:$0xff]
      %v1336 = vsel %vm444, %v1334, 0
      %1338 = vmatprep.subr.mxu0 0.0
      %1339 = vmatpush1.msra.mxu0 %v1315
      %1340 = vmatprep.subr.mxu0 0.0
      %1341 = vmatpush1.msra.mxu0 %v1320
      %1342 = vmatprep.subr.mxu0 0.0
      %1343 = vmatpush1.msra.mxu0 %v1325
      %1344 = vmatprep.subr.mxu0 0.0
      %1345 = vmatpush1.msra.mxu0 %v1330
      %1346 = vmatprep.subr.mxu0 0.0
      %1347 = vmatpush1.msra.mxu0 0.0
      %1348 = vmatprep.subr.mxu0 0.0
      %1349 = vmatpush1.msra.mxu0 0.0
      %1350 = vmatprep.subr.mxu0 0.0
      %1351 = vmatpush1.msra.mxu0 0.0
      %1352 = vmatprep.subr.mxu0 0.0
      %1353 = vmatpush1.msra.mxu0 0.0
      %1354 = vmatprep.subr.mxu0 0.0
      %1355 = vmatpush1.msra.mxu0 0.0
      %1356 = vmatprep.subr.mxu0 0.0
      %1357 = vmatpush1.msra.mxu0 0.0
      %1358 = vmatprep.subr.mxu0 0.0
      %1359 = vmatpush1.msra.mxu0 0.0
      %1360 = vmatprep.subr.mxu0 0.0
      %1361 = vmatpush1.msra.mxu0 0.0
      %1362 = vmatprep.subr.mxu0 0.0
      %1363 = vmatpush1.msra.mxu0 0.0
      %1364 = vmatprep.subr.mxu0 0.0
      %1365 = vmatpush1.msra.mxu0 0.0
      %1366 = vmatprep.subr.mxu0 0.0
      %1367 = vmatpush1.msra.mxu0 0.0
      %1368 = vmatprep.subr.mxu0 0.0
      %1369 = vmatpush1.msra.mxu0 0.0
      %1370 = vmatprep.subr.mxu0 0.0
      %1371 = vmatpush1.msra.mxu0 0.0
      %1372 = vmatprep.subr.mxu0 0.0
      %1373 = vmatpush1.msra.mxu0 0.0
      %1374 = vmatprep.subr.mxu0 0.0
      %1375 = vmatpush1.msra.mxu0 0.0
      %1376 = vmatprep.subr.mxu0 0.0
      %1377 = vmatpush1.msra.mxu0 0.0
      %1378 = vmatprep.subr.mxu0 0.0
      %1379 = vmatpush1.msra.mxu0 0.0
      %1380 = vmatprep.subr.mxu0 0.0
      %1381 = vmatpush1.msra.mxu0 0.0
      %1382 = vmatprep.subr.mxu0 0.0
      %1383 = vmatpush1.msra.mxu0 0.0
      %1384 = vmatprep.subr.mxu0 0.0
      %1385 = vmatpush1.msra.mxu0 0.0
      %1386 = vmatprep.subr.mxu0 0.0
      %1387 = vmatpush1.msra.mxu0 0.0
      %1388 = vmatprep.subr.mxu0 0.0
      %1389 = vmatpush1.msra.mxu0 0.0
      %1390 = vmatprep.subr.mxu0 0.0
      %1391 = vmatpush1.msra.mxu0 0.0
      %1392 = vmatprep.subr.mxu0 0.0
      %1393 = vmatpush1.msra.mxu0 0.0
      %1394 = vmatprep.subr.mxu0 0.0
      %1395 = vmatpush1.msra.mxu0 0.0
      %1396 = vmatprep.subr.mxu0 0.0
      %1397 = vmatpush1.msra.mxu0 0.0
      %1398 = vmatprep.subr.mxu0 0.0
      %1399 = vmatpush1.msra.mxu0 0.0
      %1400 = vmatprep.subr.mxu0 0.0
      %1401 = vmatpush1.msra.mxu0 0.0
      %1402 = vmatprep.mubr.f32.mxu0 0.0
      %1403 = vmatmul.mubr.f32.gmra.mrb[0].mxu0 %v1336
      %v1404 = vpop.f32.mrb[0].mxu0
      %v1405 = vadd.f32 0.0, %v1404
      %v1406 = vpop.f32.mrb[0].mxu0
      %1407 = vdwg.mxu0
      %v1408 = vadd.f32 %v1234, %v1405
      %v1409 = vld [vmem:[%s4] sm:$0xff]
      %1411 = vset.pattern.permute.xlu0 0
      %1412 = vperm.xlu0 %1411, %v1409
      %v1413 = vpop.permute.xlu0 %1412
      %v1415 = vadd.f32 %v1408, %v1413
      %1416 = vst.msk [vmem:[%s222] sm:$0xff] %vm444, %v1415
      %p1417 = scmp.lt.s32.totalorder %s16, 1
      %s1418 = scalar_select %p1417, %s16, 1
      %s1419 = smul.addr %s1418, 8
      %s1420 = scalar_lea.vmem %s5, %s1419
      // Predicated region
      $region41: #{segment_generator_forward.12} parent=39 // pred_check
        %p1421 = pneg %p144
      $region42: #{segment_generator_forward.12} parent=39 // pred_check_branch
        %1423 = sbr.rel (%p1421) target = $region44
      $region43: #{segment_generator_forward.12} parent=39 // pred_region
        _
      $region44: #{segment_generator_forward.12} parent=39 // pred_fallthru
        _
    $region40: #{segment_generator_forward.12} parent=5 // pred_fallthru
      _
    %p1424 = scmp.le.s32.totalorder 2, %s11
    // Predicated region
    $region45: #{segment_generator_forward.12} parent=5 // pred_check
      %p1425 = pneg %p1424
    $region46: #{segment_generator_forward.12} parent=5 // pred_check_branch
      %1427 = sbr.rel (%p1425) target = $region48
    $region47: #{segment_generator_forward.12} parent=5 // pred_region
      %s1428 = ssub.s32 %s11, 2
      // Predicated region
      $region49: #{segment_generator_forward.12} parent=47 // pred_check
        %p1429 = pneg %p150
      $region50: #{segment_generator_forward.12} parent=47 // pred_check_branch
        %1431 = sbr.rel (%p1429) target = $region52
      $region51: #{segment_generator_forward.12} parent=47 // pred_region
        %p1432 = scmp.lt.s32.totalorder %s17, 1
        %s1433 = scalar_select %p1432, %s17, 1
        %s1434 = smul.addr %s1433, 8
        %s1435 = scalar_lea.vmem %s5, %s1434
      $region52: #{segment_generator_forward.12} parent=47 // pred_fallthru
        _
    $region48: #{segment_generator_forward.12} parent=5 // pred_fallthru
      _
  $region6: #{segment_generator_forward.12} parent=0 // loop_footer
    %s15 = sadd.s32 1, %s11
  $region7: #{segment_generator_forward.12} parent=0 // loop_footer_branch
    %10 = sbr.rel target = $region3
  $region8: #{segment_generator_forward.12} parent=0 // loop_exit
    _

// kernel: segment_generator_forward.13
$region0: #{segment_generator_forward.13}
  #allocation0 [shape = 'u32[]', space=smem, size = 0x4, offset = 0x4, fixed_abs, tag = 'smem constant byte address 0x4 - core index']
  #allocation1 [shape = 'u32[144,128]{1,0:T(1,128)}', space=vmem, size = 0x12000, scoped, tag = 'internal scratch']
  %s0 = inlined_call_operand.vmem [shape: f32[64,8], index: 0, kind: input, shape index: {}]
  %s1 = inlined_call_operand.vmem [shape: f32[64,8], index: 1, kind: input, shape index: {}]
  %s2 = inlined_call_operand.vmem [shape: f32[8,16], index: 2, kind: input, shape index: {}]
  %s3 = inlined_call_operand.vmem [shape: f32[64,16], index: 3, kind: output, shape index: {}]
  %s4 = sld [smem:[#allocation0]]
  $region22: #{segment_generator_forward.13} parent=0
    _
  %s6 = ssub.s32 1, %s4
  %s7 = scalar_select 0, %s6, %s4
  // Predicated region
  $region2: #{segment_generator_forward.13} parent=0 // pred_check
    _
  $region3: #{segment_generator_forward.13} parent=0 // pred_check_branch
    %9 = sbr.rel (0) target = $region5
  $region4: #{segment_generator_forward.13} parent=0 // pred_region
    _
  $region5: #{segment_generator_forward.13} parent=0 // pred_fallthru
    _
  // Predicated region
  $region6: #{segment_generator_forward.13} parent=0 // pred_check
    _
  $region7: #{segment_generator_forward.13} parent=0 // pred_check_branch
    %11 = sbr.rel (0) target = $region9
  $region8: #{segment_generator_forward.13} parent=0 // pred_region
    _
  $region9: #{segment_generator_forward.13} parent=0 // pred_fallthru
    _
  // Predicated region
  $region10: #{segment_generator_forward.13} parent=0 // pred_check
    _
  $region11: #{segment_generator_forward.13} parent=0 // pred_check_branch
    %13 = sbr.rel (0) target = $region13
  $region12: #{segment_generator_forward.13} parent=0 // pred_region
    _
  $region13: #{segment_generator_forward.13} parent=0 // pred_fallthru
    _
  %v14 = vld [vmem:[%s0] sm:$0xff]
  %v15 = vld [vmem:[%s0 + $0x8] sm:$0xff]
  %v16 = vld [vmem:[%s0 + $0x10] sm:$0xff]
  %v17 = vld [vmem:[%s0 + $0x18] sm:$0xff]
  %v18 = vld [vmem:[%s0 + $0x20] sm:$0xff]
  %v19 = vld [vmem:[%s0 + $0x28] sm:$0xff]
  %v20 = vld [vmem:[%s0 + $0x30] sm:$0xff]
  %v21 = vld [vmem:[%s0 + $0x38] sm:$0xff]
  %v22 = vld [vmem:[%s1] sm:$0xff]
  %v23 = vld [vmem:[%s1 + $0x8] sm:$0xff]
  %v24 = vld [vmem:[%s1 + $0x10] sm:$0xff]
  %v25 = vld [vmem:[%s1 + $0x18] sm:$0xff]
  %v26 = vld [vmem:[%s1 + $0x20] sm:$0xff]
  %v27 = vld [vmem:[%s1 + $0x28] sm:$0xff]
  %v28 = vld [vmem:[%s1 + $0x30] sm:$0xff]
  %v29 = vld [vmem:[%s1 + $0x38] sm:$0xff]
  %v30 = vadd.f32 %v14, %v22
  %v31 = vadd.f32 %v15, %v23
  %v32 = vadd.f32 %v16, %v24
  %v33 = vadd.f32 %v17, %v25
  %v34 = vadd.f32 %v18, %v26
  %v35 = vadd.f32 %v19, %v27
  %v36 = vadd.f32 %v20, %v28
  %v37 = vadd.f32 %v21, %v29
  %vm38 = vcmask 64512
  %v39 = vsel %vm38, %v30, -inf
  %40 = vmax.xlane.f32.xlu0 %v39
  %v41 = vpop.xlane.xlu0 %40
  %v42 = vsel %vm38, %v31, -inf
  %43 = vmax.xlane.f32.xlu0 %v42
  %v44 = vpop.xlane.xlu0 %43
  %v45 = vsel %vm38, %v32, -inf
  %46 = vmax.xlane.f32.xlu0 %v45
  %v47 = vpop.xlane.xlu0 %46
  %v48 = vsel %vm38, %v33, -inf
  %49 = vmax.xlane.f32.xlu0 %v48
  %v50 = vpop.xlane.xlu0 %49
  %v51 = vsel %vm38, %v34, -inf
  %52 = vmax.xlane.f32.xlu0 %v51
  %v53 = vpop.xlane.xlu0 %52
  %v54 = vsel %vm38, %v35, -inf
  %55 = vmax.xlane.f32.xlu0 %v54
  %v56 = vpop.xlane.xlu0 %55
  %v57 = vsel %vm38, %v36, -inf
  %58 = vmax.xlane.f32.xlu0 %v57
  %v59 = vpop.xlane.xlu0 %58
  %v60 = vsel %vm38, %v37, -inf
  %61 = vmax.xlane.f32.xlu0 %v60
  %v62 = vpop.xlane.xlu0 %61
  %vm63 = vcmp.eq.f32.partialorder %v30, %v41
  %vm64 = vcmp.eq.f32.partialorder %v31, %v44
  %vm65 = vcmp.eq.f32.partialorder %v32, %v47
  %vm66 = vcmp.eq.f32.partialorder %v33, %v50
  %vm67 = vcmp.eq.f32.partialorder %v34, %v53
  %vm68 = vcmp.eq.f32.partialorder %v35, %v56
  %vm69 = vcmp.eq.f32.partialorder %v36, %v59
  %vm70 = vcmp.eq.f32.partialorder %v37, %v62
  %v71 = vsel %vm63, 1, 0
  %v72 = vsel %vm64, 1, 0
  %v73 = vsel %vm65, 1, 0
  %v74 = vsel %vm66, 1, 0
  %v75 = vsel %vm67, 1, 0
  %v76 = vsel %vm68, 1, 0
  %v77 = vsel %vm69, 1, 0
  %v78 = vsel %vm70, 1, 0
  %v79 = vcvt.s32.f32 %v71
  %v80 = vcvt.s32.f32 %v72
  %v81 = vcvt.s32.f32 %v73
  %v82 = vcvt.s32.f32 %v74
  %v83 = vcvt.s32.f32 %v75
  %v84 = vcvt.s32.f32 %v76
  %v85 = vcvt.s32.f32 %v77
  %v86 = vcvt.s32.f32 %v78
  %v87 = vld [vmem:[%s2] sm:$0xff]
  %v89 = vsel %vm38, %v79, 0
  %v92 = vsel %vm38, %v80, 0
  %v95 = vsel %vm38, %v81, 0
  %v98 = vsel %vm38, %v82, 0
  %v101 = vsel %vm38, %v83, 0
  %v104 = vsel %vm38, %v84, 0
  %v107 = vsel %vm38, %v85, 0
  %v110 = vsel %vm38, %v86, 0
  %112 = vmatprep.subr.mxu0 0.0
  %113 = vmatpush1.msra.mxu0 %v87
  %114 = vmatprep.subr.mxu0 0.0
  %115 = vmatpush1.msra.mxu0 0.0
  %116 = vmatprep.subr.mxu0 0.0
  %117 = vmatpush1.msra.mxu0 0.0
  %118 = vmatprep.subr.mxu0 0.0
  %119 = vmatpush1.msra.mxu0 0.0
  %120 = vmatprep.subr.mxu0 0.0
  %121 = vmatpush1.msra.mxu0 0.0
  %122 = vmatprep.subr.mxu0 0.0
  %123 = vmatpush1.msra.mxu0 0.0
  %124 = vmatprep.subr.mxu0 0.0
  %125 = vmatpush1.msra.mxu0 0.0
  %126 = vmatprep.subr.mxu0 0.0
  %127 = vmatpush1.msra.mxu0 0.0
  %128 = vmatprep.subr.mxu0 0.0
  %129 = vmatpush1.msra.mxu0 0.0
  %130 = vmatprep.subr.mxu0 0.0
  %131 = vmatpush1.msra.mxu0 0.0
  %132 = vmatprep.subr.mxu0 0.0
  %133 = vmatpush1.msra.mxu0 0.0
  %134 = vmatprep.subr.mxu0 0.0
  %135 = vmatpush1.msra.mxu0 0.0
  %136 = vmatprep.subr.mxu0 0.0
  %137 = vmatpush1.msra.mxu0 0.0
  %138 = vmatprep.subr.mxu0 0.0
  %139 = vmatpush1.msra.mxu0 0.0
  %140 = vmatprep.subr.mxu0 0.0
  %141 = vmatpush1.msra.mxu0 0.0
  %142 = vmatprep.subr.mxu0 0.0
  %143 = vmatpush1.msra.mxu0 0.0
  %144 = vmatprep.subr.mxu0 0.0
  %145 = vmatpush1.msra.mxu0 0.0
  %146 = vmatprep.subr.mxu0 0.0
  %147 = vmatpush1.msra.mxu0 0.0
  %148 = vmatprep.subr.mxu0 0.0
  %149 = vmatpush1.msra.mxu0 0.0
  %150 = vmatprep.subr.mxu0 0.0
  %151 = vmatpush1.msra.mxu0 0.0
  %152 = vmatprep.subr.mxu0 0.0
  %153 = vmatpush1.msra.mxu0 0.0
  %154 = vmatprep.subr.mxu0 0.0
  %155 = vmatpush1.msra.mxu0 0.0
  %156 = vmatprep.subr.mxu0 0.0
  %157 = vmatpush1.msra.mxu0 0.0
  %158 = vmatprep.subr.mxu0 0.0
  %159 = vmatpush1.msra.mxu0 0.0
  %160 = vmatprep.subr.mxu0 0.0
  %161 = vmatpush1.msra.mxu0 0.0
  %162 = vmatprep.subr.mxu0 0.0
  %163 = vmatpush1.msra.mxu0 0.0
  %164 = vmatprep.subr.mxu0 0.0
  %165 = vmatpush1.msra.mxu0 0.0
  %166 = vmatprep.subr.mxu0 0.0
  %167 = vmatpush1.msra.mxu0 0.0
  %168 = vmatprep.subr.mxu0 0.0
  %169 = vmatpush1.msra.mxu0 0.0
  %170 = vmatprep.subr.mxu0 0.0
  %171 = vmatpush1.msra.mxu0 0.0
  %172 = vmatprep.subr.mxu0 0.0
  %173 = vmatpush1.msra.mxu0 0.0
  %174 = vmatprep.subr.mxu0 0.0
  %175 = vmatpush1.msra.mxu0 0.0
  %176 = vmatprep.mubr.f32.mxu0 0.0
  %177 = vmatmul.mubr.f32.gmra.mrb[0].mxu0 %v89
  %v178 = vpop.f32.mrb[0].mxu0
  %v179 = vadd.f32 0.0, %v178
  %v180 = vpop.f32.mrb[0].mxu0
  %181 = vmatprep.mubr.f32.mxu0 0.0
  %182 = vmatmul.mubr.f32.gmra.mrb[0].mxu0 %v92
  %v183 = vpop.f32.mrb[0].mxu0
  %v184 = vadd.f32 0.0, %v183
  %v185 = vpop.f32.mrb[0].mxu0
  %186 = vmatprep.mubr.f32.mxu0 0.0
  %187 = vmatmul.mubr.f32.gmra.mrb[0].mxu0 %v95
  %v188 = vpop.f32.mrb[0].mxu0
  %v189 = vadd.f32 0.0, %v188
  %v190 = vpop.f32.mrb[0].mxu0
  %191 = vmatprep.mubr.f32.mxu0 0.0
  %192 = vmatmul.mubr.f32.gmra.mrb[0].mxu0 %v98
  %v193 = vpop.f32.mrb[0].mxu0
  %v194 = vadd.f32 0.0, %v193
  %v195 = vpop.f32.mrb[0].mxu0
  %196 = vmatprep.mubr.f32.mxu0 0.0
  %197 = vmatmul.mubr.f32.gmra.mrb[0].mxu0 %v101
  %v198 = vpop.f32.mrb[0].mxu0
  %v199 = vadd.f32 0.0, %v198
  %v200 = vpop.f32.mrb[0].mxu0
  %201 = vmatprep.mubr.f32.mxu0 0.0
  %202 = vmatmul.mubr.f32.gmra.mrb[0].mxu0 %v104
  %v203 = vpop.f32.mrb[0].mxu0
  %v204 = vadd.f32 0.0, %v203
  %v205 = vpop.f32.mrb[0].mxu0
  %206 = vmatprep.mubr.f32.mxu0 0.0
  %207 = vmatmul.mubr.f32.gmra.mrb[0].mxu0 %v107
  %v208 = vpop.f32.mrb[0].mxu0
  %v209 = vadd.f32 0.0, %v208
  %v210 = vpop.f32.mrb[0].mxu0
  %211 = vmatprep.mubr.f32.mxu0 0.0
  %212 = vmatmul.mubr.f32.gmra.mrb[0].mxu0 %v110
  %v213 = vpop.f32.mrb[0].mxu0
  %v214 = vadd.f32 0.0, %v213
  %v215 = vpop.f32.mrb[0].mxu0
  %216 = vdwg.mxu0
  %vm217 = vcmask 130048
  %218 = vst.msk [vmem:[%s3] sm:$0xff] %vm217, %v179
  %219 = vst.msk [vmem:[%s3 + $0x8] sm:$0xff] %vm217, %v184
  %220 = vst.msk [vmem:[%s3 + $0x10] sm:$0xff] %vm217, %v189
  %221 = vst.msk [vmem:[%s3 + $0x18] sm:$0xff] %vm217, %v194
  %222 = vst.msk [vmem:[%s3 + $0x20] sm:$0xff] %vm217, %v199
  %223 = vst.msk [vmem:[%s3 + $0x28] sm:$0xff] %vm217, %v204
  %224 = vst.msk [vmem:[%s3 + $0x30] sm:$0xff] %vm217, %v209
  %225 = vst.msk [vmem:[%s3 + $0x38] sm:$0xff] %vm217, %v214
  // Predicated region
  $region14: #{segment_generator_forward.13} parent=0 // pred_check
    _
  $region15: #{segment_generator_forward.13} parent=0 // pred_check_branch
    %227 = sbr.rel (0) target = $region17
  $region16: #{segment_generator_forward.13} parent=0 // pred_region
    _
  $region17: #{segment_generator_forward.13} parent=0 // pred_fallthru
    _
  // Predicated region
  $region18: #{segment_generator_forward.13} parent=0 // pred_check
    _
  $region19: #{segment_generator_forward.13} parent=0 // pred_check_branch
    %229 = sbr.rel (0) target = $region21
  $region20: #{segment_generator_forward.13} parent=0 // pred_region
    _
  $region21: #{segment_generator_forward.13} parent=0 // pred_fallthru
    _

// kernel: segment_generator_forward.14
$region0: #{segment_generator_forward.14}
  #allocation0 [shape = 'u32[]', space=smem, size = 0x4, offset = 0x4, fixed_abs, tag = 'smem constant byte address 0x4 - core index']
  #allocation1 [shape = 'u32[144,128]{1,0:T(1,128)}', space=vmem, size = 0x12000, scoped, tag = 'internal scratch']
  %s0 = inlined_call_operand.vmem [shape: f32[2,64,10], index: 0, kind: input, shape index: {}]
  %s1 = inlined_call_operand.vmem [shape: f32[10,2048], index: 1, kind: input, shape index: {}]
  %s2 = inlined_call_operand.vmem [shape: bf16[32,4096], index: 2, kind: input, shape index: {}]
  %s3 = inlined_call_operand.vmem [shape: f32[2,4096], index: 3, kind: output, shape index: {}]
  %s4 = sld [smem:[#allocation0]]
  $region68: #{segment_generator_forward.14} parent=0
    _
  %s6 = ssub.s32 1, %s4
  %s7 = scalar_select 0, %s6, %s4
  $region1: #{segment_generator_forward.14} parent=0
    #allocation2 [shape = 'u8[262144]{0}', space=vmem, size = 0x40000, scoped, tag = 'input window, operand 2']
    loop: start=0, step=1, limit=4
    $region2: #{segment_generator_forward.14} parent=1 // loop_pre_header
      _
    $region3: #{segment_generator_forward.14} parent=1 // loop_header
      %s9 = sphi 0, %s13
      %p10 = scmp.ge.s32.totalorder %s9, 4
      %s19 = sphi 0, %s21
      %s22 = sphi 0, %s19
      %s23 = sphi 0, %s22
      %s39 = sphi 0, %s23
      %s43 = sphi 0, %s43
      %s45 = sphi 0, %s43
      %s46 = sphi 0, %s45
      %s60 = sphi 0, %s46
      %s66 = sphi 0, %s68
      %s69 = sphi 0, %s66
      %s70 = sphi 0, %s69
      %s86 = sphi 0, %s70
      %s92 = sphi 0, %s94
      %s95 = sphi 0, %s92
      %s96 = sphi 0, %s95
      %s112 = sphi 0, %s96
    $region4: #{segment_generator_forward.14} parent=1 // loop_header_branch
      %12 = sbr.rel (%p10) target = $region8
    $region5: #{segment_generator_forward.14} parent=1 // loop_body
      %s14 = ssub.s32 %s9, 1
      %s15 = ssub.s32 %s9, 2
      %s16 = sadd.s32 %s9, 1
      %s17 = ssub.s32 %s9, %s16
      %p18 = scmp.eq.s32.totalorder %s17, 0
      %s20 = sadd.s32 %s19, 1
      %s21 = scalar_select %p18, %s19, %s20
      %p24 = pneg %p18
      %p25 = scmp.eq.s32.totalorder %s9, 1
      %p26 = por %p24, %p25
      %p27 = scmp.ne.s32.totalorder %s19, %s22
      %p28 = scmp.eq.s32.totalorder %s9, 0
      %p29 = por %p27, %p28
      %p30 = scmp.ne.s32.totalorder %s19, %s22
      %p31 = scmp.eq.s32.totalorder %s14, 1
      %p32 = por %p30, %p31
      %p33 = scmp.ne.s32.totalorder %s22, %s23
      %p34 = scmp.eq.s32.totalorder %s14, 0
      %p35 = por %p33, %p34
      %p36 = scmp.ne.s32.totalorder %s22, %s23
      %p37 = scmp.eq.s32.totalorder %s15, 1
      %p38 = por %p36, %p37
      %p40 = scmp.ne.s32.totalorder %s23, %s39
      %p41 = scmp.eq.s32.totalorder %s15, 0
      %p42 = por %p40, %p41
      %s44 = sadd.s32 %s43, 1
      %p47 = scmp.eq.s32.totalorder %s9, 1
      %p48 = scmp.ne.s32.totalorder %s43, %s45
      %p49 = scmp.eq.s32.totalorder %s9, 0
      %p50 = por %p48, %p49
      %p51 = scmp.ne.s32.totalorder %s43, %s45
      %p52 = scmp.eq.s32.totalorder %s14, 1
      %p53 = por %p51, %p52
      %p54 = scmp.ne.s32.totalorder %s45, %s46
      %p55 = scmp.eq.s32.totalorder %s14, 0
      %p56 = por %p54, %p55
      %p57 = scmp.ne.s32.totalorder %s45, %s46
      %p58 = scmp.eq.s32.totalorder %s15, 1
      %p59 = por %p57, %p58
      %p61 = scmp.ne.s32.totalorder %s46, %s60
      %p62 = scmp.eq.s32.totalorder %s15, 0
      %p63 = por %p61, %p62
      %s64 = ssub.s32 %s9, %s16
      %p65 = scmp.eq.s32.totalorder %s64, 0
      %s67 = sadd.s32 %s66, 1
      %s68 = scalar_select %p65, %s66, %s67
      %p71 = pneg %p65
      %p72 = scmp.eq.s32.totalorder %s9, 1
      %p73 = por %p71, %p72
      %p74 = scmp.ne.s32.totalorder %s66, %s69
      %p75 = scmp.eq.s32.totalorder %s9, 0
      %p76 = por %p74, %p75
      %p77 = scmp.ne.s32.totalorder %s66, %s69
      %p78 = scmp.eq.s32.totalorder %s14, 1
      %p79 = por %p77, %p78
      %p80 = scmp.ne.s32.totalorder %s69, %s70
      %p81 = scmp.eq.s32.totalorder %s14, 0
      %p82 = por %p80, %p81
      %p83 = scmp.ne.s32.totalorder %s69, %s70
      %p84 = scmp.eq.s32.totalorder %s15, 1
      %p85 = por %p83, %p84
      %p87 = scmp.ne.s32.totalorder %s70, %s86
      %p88 = scmp.eq.s32.totalorder %s15, 0
      %p89 = por %p87, %p88
      %s90 = ssub.s32 %s9, %s16
      %p91 = scmp.eq.s32.totalorder %s90, 0
      %s93 = sadd.s32 %s92, 1
      %s94 = scalar_select %p91, %s92, %s93
      %p97 = pneg %p91
      %p98 = scmp.eq.s32.totalorder %s9, 1
      %p99 = por %p97, %p98
      %p100 = scmp.ne.s32.totalorder %s92, %s95
      %p101 = scmp.eq.s32.totalorder %s9, 0
      %p102 = por %p100, %p101
      %p103 = scmp.ne.s32.totalorder %s92, %s95
      %p104 = scmp.eq.s32.totalorder %s14, 1
      %p105 = por %p103, %p104
      %p106 = scmp.ne.s32.totalorder %s95, %s96
      %p107 = scmp.eq.s32.totalorder %s14, 0
      %p108 = por %p106, %p107
      %p109 = scmp.ne.s32.totalorder %s95, %s96
      %p110 = scmp.eq.s32.totalorder %s15, 1
      %p111 = por %p109, %p110
      %p113 = scmp.ne.s32.totalorder %s96, %s112
      %p114 = scmp.eq.s32.totalorder %s15, 0
      %p115 = por %p113, %p114
      %p116 = scmp.le.s32.totalorder 1, %s9
      %p117 = scmp.lt.s32.totalorder %s9, 3
      %p118 = pnand %p116, %p117
      %p119 = pneg %p118
      // Predicated region
      $region9: #{segment_generator_forward.14} parent=5 // pred_check
        _
      $region10: #{segment_generator_forward.14} parent=5 // pred_check_branch
        %121 = sbr.rel (%p118) target = $region12
      $region11: #{segment_generator_forward.14} parent=5 // pred_region
        %s122 = ssub.s32 %s9, 1
        // Predicated region
        $region13: #{segment_generator_forward.14} parent=11 // pred_check
          %p123 = pneg %p56
        $region14: #{segment_generator_forward.14} parent=11 // pred_check_branch
          %125 = sbr.rel (%p123) target = $region16
        $region15: #{segment_generator_forward.14} parent=11 // pred_region
          _
        $region16: #{segment_generator_forward.14} parent=11 // pred_fallthru
          _
      $region12: #{segment_generator_forward.14} parent=5 // pred_fallthru
        _
      %p126 = scmp.lt.s32.totalorder %s9, 2
      // Predicated region
      $region17: #{segment_generator_forward.14} parent=5 // pred_check
        %p127 = pneg %p126
      $region18: #{segment_generator_forward.14} parent=5 // pred_check_branch
        %129 = sbr.rel (%p127) target = $region20
      $region19: #{segment_generator_forward.14} parent=5 // pred_region
        // Predicated region
        $region21: #{segment_generator_forward.14} parent=19 // pred_check
          %p130 = pneg %p29
        $region22: #{segment_generator_forward.14} parent=19 // pred_check_branch
          %132 = sbr.rel (%p130) target = $region24
        $region23: #{segment_generator_forward.14} parent=19 // pred_region
          %p133 = scmp.lt.s32.totalorder %s9, 1
          %s134 = scalar_select %p133, %s9, 1
          %s135 = smul.addr %s134, 8
          %s136 = smul.addr %s135, 8
          %s137 = scalar_lea.vmem %s0, %s136
        $region24: #{segment_generator_forward.14} parent=19 // pred_fallthru
          _
        // Predicated region
        $region25: #{segment_generator_forward.14} parent=19 // pred_check
          %p138 = pneg %p76
        $region26: #{segment_generator_forward.14} parent=19 // pred_check_branch
          %140 = sbr.rel (%p138) target = $region28
        $region27: #{segment_generator_forward.14} parent=19 // pred_region
          %s141 = sand.u32 %s66, 1
          %s142 = sand.u32 %s66, 1
          %s143 = smul.addr %s142, 256
          %s144 = scalar_lea.vmem [#allocation2], %s143
          %s145 = smul.u32 16, %s9
          %s146 = smul.addr %s145, 4
          %s147 = scalar_lea.vmem %s2, %s146
          // Predicated region
          $region29: #{segment_generator_forward.14} parent=27 // pred_check
            _
          $region30: #{segment_generator_forward.14} parent=27 // pred_check_branch
            %149 = sbr.rel (0) target = $region32
          $region31: #{segment_generator_forward.14} parent=27 // pred_region
            // Predicated region
            $region33: #{segment_generator_forward.14} parent=31 // pred_check
              _
            $region34: #{segment_generator_forward.14} parent=31 // pred_check_branch
              %151 = sbr.rel (0) target = $region36
            $region35: #{segment_generator_forward.14} parent=31 // pred_region
              loop: start=0, step=1, limit=1
              $region37: #{segment_generator_forward.14} parent=35 // loop_pre_header
                _
              $region38: #{segment_generator_forward.14} parent=35 // loop_header
                %s153 = sphi 0, %s157
                %p154 = scmp.ge.s32.totalorder %s153, 1
                %s158 = sphi %s147, %s147
                %s159 = sphi %s144, %s144
              $region39: #{segment_generator_forward.14} parent=35 // loop_header_branch
                %156 = sbr.rel (%p154) target = $region43
              $region40: #{segment_generator_forward.14} parent=35 // loop_body
                %v160 = vld [vmem:[%s158] sm:$0xff]
                %161 = vst [vmem:[%s159] sm:$0xff] %v160
                %v162 = vld [vmem:[%s158 + $0x8] sm:$0xff]
                %163 = vst [vmem:[%s159 + $0x8] sm:$0xff] %v162
                %v164 = vld [vmem:[%s158 + $0x10] sm:$0xff]
                %165 = vst [vmem:[%s159 + $0x10] sm:$0xff] %v164
                %v166 = vld [vmem:[%s158 + $0x18] sm:$0xff]
                %167 = vst [vmem:[%s159 + $0x18] sm:$0xff] %v166
                %v168 = vld [vmem:[%s158 + $0x20] sm:$0xff]
                %169 = vst [vmem:[%s159 + $0x20] sm:$0xff] %v168
                %v170 = vld [vmem:[%s158 + $0x28] sm:$0xff]
                %171 = vst [vmem:[%s159 + $0x28] sm:$0xff] %v170
                %v172 = vld [vmem:[%s158 + $0x30] sm:$0xff]
                %173 = vst [vmem:[%s159 + $0x30] sm:$0xff] %v172
                %v174 = vld [vmem:[%s158 + $0x38] sm:$0xff]
                %175 = vst [vmem:[%s159 + $0x38] sm:$0xff] %v174
                %v176 = vld [vmem:[%s158 + $0x80] sm:$0xff]
                %177 = vst [vmem:[%s159 + $0x40] sm:$0xff] %v176
                %v178 = vld [vmem:[%s158 + $0x88] sm:$0xff]
                %179 = vst [vmem:[%s159 + $0x48] sm:$0xff] %v178
                %v180 = vld [vmem:[%s158 + $0x90] sm:$0xff]
                %181 = vst [vmem:[%s159 + $0x50] sm:$0xff] %v180
                %v182 = vld [vmem:[%s158 + $0x98] sm:$0xff]
                %183 = vst [vmem:[%s159 + $0x58] sm:$0xff] %v182
                %v184 = vld [vmem:[%s158 + $0xa0] sm:$0xff]
                %185 = vst [vmem:[%s159 + $0x60] sm:$0xff] %v184
                %v186 = vld [vmem:[%s158 + $0xa8] sm:$0xff]
                %187 = vst [vmem:[%s159 + $0x68] sm:$0xff] %v186
                %v188 = vld [vmem:[%s158 + $0xb0] sm:$0xff]
                %189 = vst [vmem:[%s159 + $0x70] sm:$0xff] %v188
                %v190 = vld [vmem:[%s158 + $0xb8] sm:$0xff]
                %191 = vst [vmem:[%s159 + $0x78] sm:$0xff] %v190
                %v192 = vld [vmem:[%s158 + $0x100] sm:$0xff]
                %193 = vst [vmem:[%s159 + $0x80] sm:$0xff] %v192
                %v194 = vld [vmem:[%s158 + $0x108] sm:$0xff]
                %195 = vst [vmem:[%s159 + $0x88] sm:$0xff] %v194
                %v196 = vld [vmem:[%s158 + $0x110] sm:$0xff]
                %197 = vst [vmem:[%s159 + $0x90] sm:$0xff] %v196
                %v198 = vld [vmem:[%s158 + $0x118] sm:$0xff]
                %199 = vst [vmem:[%s159 + $0x98] sm:$0xff] %v198
                %v200 = vld [vmem:[%s158 + $0x120] sm:$0xff]
                %201 = vst [vmem:[%s159 + $0xa0] sm:$0xff] %v200
                %v202 = vld [vmem:[%s158 + $0x128] sm:$0xff]
                %203 = vst [vmem:[%s159 + $0xa8] sm:$0xff] %v202
                %v204 = vld [vmem:[%s158 + $0x130] sm:$0xff]
                %205 = vst [vmem:[%s159 + $0xb0] sm:$0xff] %v204
                %v206 = vld [vmem:[%s158 + $0x138] sm:$0xff]
                %207 = vst [vmem:[%s159 + $0xb8] sm:$0xff] %v206
                %v208 = vld [vmem:[%s158 + $0x180] sm:$0xff]
                %209 = vst [vmem:[%s159 + $0xc0] sm:$0xff] %v208
                %v210 = vld [vmem:[%s158 + $0x188] sm:$0xff]
                %211 = vst [vmem:[%s159 + $0xc8] sm:$0xff] %v210
                %v212 = vld [vmem:[%s158 + $0x190] sm:$0xff]
                %213 = vst [vmem:[%s159 + $0xd0] sm:$0xff] %v212
                %v214 = vld [vmem:[%s158 + $0x198] sm:$0xff]
                %215 = vst [vmem:[%s159 + $0xd8] sm:$0xff] %v214
                %v216 = vld [vmem:[%s158 + $0x1a0] sm:$0xff]
                %217 = vst [vmem:[%s159 + $0xe0] sm:$0xff] %v216
                %v218 = vld [vmem:[%s158 + $0x1a8] sm:$0xff]
                %219 = vst [vmem:[%s159 + $0xe8] sm:$0xff] %v218
                %v220 = vld [vmem:[%s158 + $0x1b0] sm:$0xff]
                %221 = vst [vmem:[%s159 + $0xf0] sm:$0xff] %v220
                %v222 = vld [vmem:[%s158 + $0x1b8] sm:$0xff]
                %223 = vst [vmem:[%s159 + $0xf8] sm:$0xff] %v222
              $region41: #{segment_generator_forward.14} parent=35 // loop_footer
                %s157 = sadd.s32 1, %s153
              $region42: #{segment_generator_forward.14} parent=35 // loop_footer_branch
                %152 = sbr.rel target = $region38
              $region43: #{segment_generator_forward.14} parent=35 // loop_exit
                _
            $region36: #{segment_generator_forward.14} parent=31 // pred_fallthru
              _
            // Predicated region
            $region44: #{segment_generator_forward.14} parent=31 // pred_check
              _
            $region45: #{segment_generator_forward.14} parent=31 // pred_check_branch
              %225 = sbr.rel target = $region47
            $region46: #{segment_generator_forward.14} parent=31 // pred_region
              _
            $region47: #{segment_generator_forward.14} parent=31 // pred_fallthru
              _
          $region32: #{segment_generator_forward.14} parent=27 // pred_fallthru
            _
          %226 = vnop
        $region28: #{segment_generator_forward.14} parent=19 // pred_fallthru
          _
      $region20: #{segment_generator_forward.14} parent=5 // pred_fallthru
        _
      %p227 = scmp.le.s32.totalorder 1, %s9
      %p228 = scmp.lt.s32.totalorder %s9, 3
      %p229 = pnand %p227, %p228
      %p230 = pneg %p229
      // Predicated region
      $region48: #{segment_generator_forward.14} parent=5 // pred_check
        _
      $region49: #{segment_generator_forward.14} parent=5 // pred_check_branch
        %232 = sbr.rel (%p229) target = $region51
      $region50: #{segment_generator_forward.14} parent=5 // pred_region
        %s233 = ssub.s32 %s9, 1
        %s234 = sand.u32 %s69, 1
        %s235 = sand.u32 %s69, 1
        %s236 = smul.addr %s235, 256
        %s237 = scalar_lea.vmem [#allocation2], %s236
        // Predicated region
        $region52: #{segment_generator_forward.14} parent=50 // pred_check
          %p238 = pneg %p82
        $region53: #{segment_generator_forward.14} parent=50 // pred_check_branch
          %240 = sbr.rel (%p238) target = $region55
        $region54: #{segment_generator_forward.14} parent=50 // pred_region
          _
        $region55: #{segment_generator_forward.14} parent=50 // pred_fallthru
          _
        %p241 = scmp.lt.s32.totalorder %s14, 1
        %s242 = scalar_select %p241, %s14, 1
        %s243 = smul.addr %s242, 8
        %s244 = smul.addr %s243, 8
        %s245 = scalar_lea.vmem %s0, %s244
        %p246 = pneg %p35
        %p247 = pneg %p32
        %p248 = pneg %p56
        %p249 = pneg %p53
        %s250 = sand.u32 %s69, 1
        %s251 = sand.u32 %s69, 1
        %s252 = smul.addr %s251, 256
        %s253 = scalar_lea.vmem [#allocation2], %s252
        %p254 = pneg %p82
        %p255 = pneg %p79
        %p256 = pneg %p108
        %p257 = pneg %p105
        %s258 = smul.u32 16, %s14
        %p259 = scmp.lt.s32.totalorder %s258, 31
        %s260 = scalar_select %p259, %s258, 31
        %s261 = smul.addr %s260, 2
        %s262 = scalar_lea.vmem %s3, %s261
        %p263 = scmp.lt.s32.totalorder %s14, 1
        %s264 = scalar_select %p263, %s14, 1
        %s265 = smul.addr %s264, 8
        %s266 = smul.addr %s265, 8
        %s267 = scalar_lea.vmem %s0, %s266
        %s268 = smul.u32 16, %s14
        %s269 = smul.u32 16, %s14
        %p270 = scmp.lt.s32.totalorder %s269, 31
        %s271 = scalar_select %p270, %s269, 31
        %s272 = smul.addr %s271, 2
        %s273 = scalar_lea.vmem %s3, %s272
        %s274 = smul.u32 16, %s14
        %v275 = vld [vmem:[%s267] sm:$0xff]
        %v276 = vld [vmem:[%s267 + $0x8] sm:$0xff]
        %v277 = vld [vmem:[%s267 + $0x10] sm:$0xff]
        %v278 = vld [vmem:[%s267 + $0x18] sm:$0xff]
        %v279 = vld [vmem:[%s267 + $0x20] sm:$0xff]
        %v280 = vld [vmem:[%s267 + $0x28] sm:$0xff]
        %v281 = vld [vmem:[%s267 + $0x30] sm:$0xff]
        %v282 = vld [vmem:[%s267 + $0x38] sm:$0xff]
        %v283 = vld [vmem:[%s1] sm:$0xff]
        %v284 = vld [vmem:[%s1 + $0x8] sm:$0xff]
        %v285 = vld [vmem:[%s1 + $0x10] sm:$0xff]
        %v286 = vld [vmem:[%s1 + $0x18] sm:$0xff]
        %v287 = vld [vmem:[%s1 + $0x20] sm:$0xff]
        %v288 = vld [vmem:[%s1 + $0x28] sm:$0xff]
        %v289 = vld [vmem:[%s1 + $0x30] sm:$0xff]
        %v290 = vld [vmem:[%s1 + $0x38] sm:$0xff]
        %v291 = vld [vmem:[%s1 + $0x40] sm:$0xff]
        %v292 = vld [vmem:[%s1 + $0x48] sm:$0xff]
        %v293 = vld [vmem:[%s1 + $0x50] sm:$0xff]
        %v294 = vld [vmem:[%s1 + $0x58] sm:$0xff]
        %v295 = vld [vmem:[%s1 + $0x60] sm:$0xff]
        %v296 = vld [vmem:[%s1 + $0x68] sm:$0xff]
        %v297 = vld [vmem:[%s1 + $0x70] sm:$0xff]
        %v298 = vld [vmem:[%s1 + $0x78] sm:$0xff]
        %v299 = vld [vmem:[%s1 + $0x80] sm:$0x3]
        %v300 = vld [vmem:[%s1 + $0x88] sm:$0x3]
        %v301 = vld [vmem:[%s1 + $0x90] sm:$0x3]
        %v302 = vld [vmem:[%s1 + $0x98] sm:$0x3]
        %v303 = vld [vmem:[%s1 + $0xa0] sm:$0x3]
        %v304 = vld [vmem:[%s1 + $0xa8] sm:$0x3]
        %v305 = vld [vmem:[%s1 + $0xb0] sm:$0x3]
        %v306 = vld [vmem:[%s1 + $0xb8] sm:$0x3]
        %v307 = vld [vmem:[%s1 + $0xc0] sm:$0x3]
        %v308 = vld [vmem:[%s1 + $0xc8] sm:$0x3]
        %v309 = vld [vmem:[%s1 + $0xd0] sm:$0x3]
        %v310 = vld [vmem:[%s1 + $0xd8] sm:$0x3]
        %v311 = vld [vmem:[%s1 + $0xe0] sm:$0x3]
        %v312 = vld [vmem:[%s1 + $0xe8] sm:$0x3]
        %v313 = vld [vmem:[%s1 + $0xf0] sm:$0x3]
        %v314 = vld [vmem:[%s1 + $0xf8] sm:$0x3]
        %vm315 = vcmask 80896
        %v317 = vsel %vm315, %v275, 0
        %v320 = vsel %vm315, %v276, 0
        %v323 = vsel %vm315, %v277, 0
        %v326 = vsel %vm315, %v278, 0
        %v329 = vsel %vm315, %v279, 0
        %v332 = vsel %vm315, %v280, 0
        %v335 = vsel %vm315, %v281, 0
        %v338 = vsel %vm315, %v282, 0
        %vm340 = vcmask 1041408
        %v342 = vsel %vm340, %v299, 0
        %v345 = vsel %vm340, %v300, 0
        %v348 = vsel %vm340, %v301, 0
        %v351 = vsel %vm340, %v302, 0
        %v354 = vsel %vm340, %v303, 0
        %v357 = vsel %vm340, %v304, 0
        %v360 = vsel %vm340, %v305, 0
        %v363 = vsel %vm340, %v306, 0
        %v366 = vsel %vm340, %v307, 0
        %v369 = vsel %vm340, %v308, 0
        %v372 = vsel %vm340, %v309, 0
        %v375 = vsel %vm340, %v310, 0
        %v378 = vsel %vm340, %v311, 0
        %v381 = vsel %vm340, %v312, 0
        %v384 = vsel %vm340, %v313, 0
        %v387 = vsel %vm340, %v314, 0
        %389 = vmatprep.subr.mxu0 %v284
        %390 = vmatpush1.msra.mxu0 %v283
        %391 = vmatprep.subr.mxu0 %v345
        %392 = vmatpush1.msra.mxu0 %v342
        %393 = vmatprep.subr.mxu0 0.0
        %394 = vmatpush1.msra.mxu0 0.0
        %395 = vmatprep.subr.mxu0 0.0
        %396 = vmatpush1.msra.mxu0 0.0
        %397 = vmatprep.subr.mxu0 0.0
        %398 = vmatpush1.msra.mxu0 0.0
        %399 = vmatprep.subr.mxu0 0.0
        %400 = vmatpush1.msra.mxu0 0.0
        %401 = vmatprep.subr.mxu0 0.0
        %402 = vmatpush1.msra.mxu0 0.0
        %403 = vmatprep.subr.mxu0 0.0
        %404 = vmatpush1.msra.mxu0 0.0
        %405 = vmatprep.subr.mxu0 0.0
        %406 = vmatpush1.msra.mxu0 0.0
        %407 = vmatprep.subr.mxu0 0.0
        %408 = vmatpush1.msra.mxu0 0.0
        %409 = vmatprep.subr.mxu0 0.0
        %410 = vmatpush1.msra.mxu0 0.0
        %411 = vmatprep.subr.mxu0 0.0
        %412 = vmatpush1.msra.mxu0 0.0
        %413 = vmatprep.subr.mxu0 0.0
        %414 = vmatpush1.msra.mxu0 0.0
        %415 = vmatprep.subr.mxu0 0.0
        %416 = vmatpush1.msra.mxu0 0.0
        %417 = vmatprep.subr.mxu0 0.0
        %418 = vmatpush1.msra.mxu0 0.0
        %419 = vmatprep.subr.mxu0 0.0
        %420 = vmatpush1.msra.mxu0 0.0
        %421 = vmatprep.subr.mxu0 0.0
        %422 = vmatpush1.msra.mxu0 0.0
        %423 = vmatprep.subr.mxu0 0.0
        %424 = vmatpush1.msra.mxu0 0.0
        %425 = vmatprep.subr.mxu0 0.0
        %426 = vmatpush1.msra.mxu0 0.0
        %427 = vmatprep.subr.mxu0 0.0
        %428 = vmatpush1.msra.mxu0 0.0
        %429 = vmatprep.subr.mxu0 0.0
        %430 = vmatpush1.msra.mxu0 0.0
        %431 = vmatprep.subr.mxu0 0.0
        %432 = vmatpush1.msra.mxu0 0.0
        %433 = vmatprep.subr.mxu0 0.0
        %434 = vmatpush1.msra.mxu0 0.0
        %435 = vmatprep.subr.mxu0 0.0
        %436 = vmatpush1.msra.mxu0 0.0
        %437 = vmatprep.subr.mxu0 0.0
        %438 = vmatpush1.msra.mxu0 0.0
        %439 = vmatprep.subr.mxu0 0.0
        %440 = vmatpush1.msra.mxu0 0.0
        %441 = vmatprep.subr.mxu0 0.0
        %442 = vmatpush1.msra.mxu0 0.0
        %443 = vmatprep.subr.mxu0 0.0
        %444 = vmatpush1.msra.mxu0 0.0
        %445 = vmatprep.subr.mxu0 0.0
        %446 = vmatpush1.msra.mxu0 0.0
        %447 = vmatprep.subr.mxu0 0.0
        %448 = vmatpush1.msra.mxu0 0.0
        %449 = vmatprep.subr.mxu0 0.0
        %450 = vmatpush1.msra.mxu0 0.0
        %451 = vmatprep.subr.mxu0 0.0
        %452 = vmatpush1.msra.mxu0 0.0
        %453 = vmatprep.mubr.f32.mxu0 0.0
        %454 = vmatmul.mubr.f32.gmra.mrb[0].mxu0 %v317
        %v455 = vpop.f32.mrb[0].mxu0
        %v456 = vadd.f32 0.0, %v455
        %v457 = vpop.f32.mrb[0].mxu0
        %v458 = vadd.f32 0.0, %v457
        %459 = vmatprep.mubr.f32.mxu0 0.0
        %460 = vmatmul.mubr.f32.gmra.mrb[0].mxu0 %v320
        %v461 = vpop.f32.mrb[0].mxu0
        %v462 = vadd.f32 0.0, %v461
        %v463 = vpop.f32.mrb[0].mxu0
        %v464 = vadd.f32 0.0, %v463
        %465 = vmatprep.mubr.f32.mxu0 0.0
        %466 = vmatmul.mubr.f32.gmra.mrb[0].mxu0 %v323
        %v467 = vpop.f32.mrb[0].mxu0
        %v468 = vadd.f32 0.0, %v467
        %v469 = vpop.f32.mrb[0].mxu0
        %v470 = vadd.f32 0.0, %v469
        %471 = vmatprep.mubr.f32.mxu0 0.0
        %472 = vmatmul.mubr.f32.gmra.mrb[0].mxu0 %v326
        %v473 = vpop.f32.mrb[0].mxu0
        %v474 = vadd.f32 0.0, %v473
        %v475 = vpop.f32.mrb[0].mxu0
        %v476 = vadd.f32 0.0, %v475
        %477 = vmatprep.mubr.f32.mxu0 0.0
        %478 = vmatmul.mubr.f32.gmra.mrb[0].mxu0 %v329
        %v479 = vpop.f32.mrb[0].mxu0
        %v480 = vadd.f32 0.0, %v479
        %v481 = vpop.f32.mrb[0].mxu0
        %v482 = vadd.f32 0.0, %v481
        %483 = vmatprep.mubr.f32.mxu0 0.0
        %484 = vmatmul.mubr.f32.gmra.mrb[0].mxu0 %v332
        %v485 = vpop.f32.mrb[0].mxu0
        %v486 = vadd.f32 0.0, %v485
        %v487 = vpop.f32.mrb[0].mxu0
        %v488 = vadd.f32 0.0, %v487
        %489 = vmatprep.mubr.f32.mxu0 0.0
        %490 = vmatmul.mubr.f32.gmra.mrb[0].mxu0 %v335
        %v491 = vpop.f32.mrb[0].mxu0
        %v492 = vadd.f32 0.0, %v491
        %v493 = vpop.f32.mrb[0].mxu0
        %v494 = vadd.f32 0.0, %v493
        %495 = vmatprep.mubr.f32.mxu0 0.0
        %496 = vmatmul.mubr.f32.gmra.mrb[0].mxu0 %v338
        %v497 = vpop.f32.mrb[0].mxu0
        %v498 = vadd.f32 0.0, %v497
        %v499 = vpop.f32.mrb[0].mxu0
        %v500 = vadd.f32 0.0, %v499
        %501 = vdwg.mxu0
        %502 = vmatprep.subr.mxu0 %v286
        %503 = vmatpush1.msra.mxu0 %v285
        %504 = vmatprep.subr.mxu0 %v351
        %505 = vmatpush1.msra.mxu0 %v348
        %506 = vmatprep.subr.mxu0 0.0
        %507 = vmatpush1.msra.mxu0 0.0
        %508 = vmatprep.subr.mxu0 0.0
        %509 = vmatpush1.msra.mxu0 0.0
        %510 = vmatprep.subr.mxu0 0.0
        %511 = vmatpush1.msra.mxu0 0.0
        %512 = vmatprep.subr.mxu0 0.0
        %513 = vmatpush1.msra.mxu0 0.0
        %514 = vmatprep.subr.mxu0 0.0
        %515 = vmatpush1.msra.mxu0 0.0
        %516 = vmatprep.subr.mxu0 0.0
        %517 = vmatpush1.msra.mxu0 0.0
        %518 = vmatprep.subr.mxu0 0.0
        %519 = vmatpush1.msra.mxu0 0.0
        %520 = vmatprep.subr.mxu0 0.0
        %521 = vmatpush1.msra.mxu0 0.0
        %522 = vmatprep.subr.mxu0 0.0
        %523 = vmatpush1.msra.mxu0 0.0
        %524 = vmatprep.subr.mxu0 0.0
        %525 = vmatpush1.msra.mxu0 0.0
        %526 = vmatprep.subr.mxu0 0.0
        %527 = vmatpush1.msra.mxu0 0.0
        %528 = vmatprep.subr.mxu0 0.0
        %529 = vmatpush1.msra.mxu0 0.0
        %530 = vmatprep.subr.mxu0 0.0
        %531 = vmatpush1.msra.mxu0 0.0
        %532 = vmatprep.subr.mxu0 0.0
        %533 = vmatpush1.msra.mxu0 0.0
        %534 = vmatprep.subr.mxu0 0.0
        %535 = vmatpush1.msra.mxu0 0.0
        %536 = vmatprep.subr.mxu0 0.0
        %537 = vmatpush1.msra.mxu0 0.0
        %538 = vmatprep.subr.mxu0 0.0
        %539 = vmatpush1.msra.mxu0 0.0
        %540 = vmatprep.subr.mxu0 0.0
        %541 = vmatpush1.msra.mxu0 0.0
        %542 = vmatprep.subr.mxu0 0.0
        %543 = vmatpush1.msra.mxu0 0.0
        %544 = vmatprep.subr.mxu0 0.0
        %545 = vmatpush1.msra.mxu0 0.0
        %546 = vmatprep.subr.mxu0 0.0
        %547 = vmatpush1.msra.mxu0 0.0
        %548 = vmatprep.subr.mxu0 0.0
        %549 = vmatpush1.msra.mxu0 0.0
        %550 = vmatprep.subr.mxu0 0.0
        %551 = vmatpush1.msra.mxu0 0.0
        %552 = vmatprep.subr.mxu0 0.0
        %553 = vmatpush1.msra.mxu0 0.0
        %554 = vmatprep.subr.mxu0 0.0
        %555 = vmatpush1.msra.mxu0 0.0
        %556 = vmatprep.subr.mxu0 0.0
        %557 = vmatpush1.msra.mxu0 0.0
        %558 = vmatprep.subr.mxu0 0.0
        %559 = vmatpush1.msra.mxu0 0.0
        %560 = vmatprep.subr.mxu0 0.0
        %561 = vmatpush1.msra.mxu0 0.0
        %562 = vmatprep.subr.mxu0 0.0
        %563 = vmatpush1.msra.mxu0 0.0
        %564 = vmatprep.subr.mxu0 0.0
        %565 = vmatpush1.msra.mxu0 0.0
        %566 = vmatprep.mubr.f32.mxu0 0.0
        %567 = vmatmul.mubr.f32.gmra.mrb[0].mxu0 %v317
        %v568 = vpop.f32.mrb[0].mxu0
        %v569 = vadd.f32 0.0, %v568
        %v570 = vpop.f32.mrb[0].mxu0
        %v571 = vadd.f32 0.0, %v570
        %572 = vmatprep.mubr.f32.mxu0 0.0
        %573 = vmatmul.mubr.f32.gmra.mrb[0].mxu0 %v320
        %v574 = vpop.f32.mrb[0].mxu0
        %v575 = vadd.f32 0.0, %v574
        %v576 = vpop.f32.mrb[0].mxu0
        %v577 = vadd.f32 0.0, %v576
        %578 = vmatprep.mubr.f32.mxu0 0.0
        %579 = vmatmul.mubr.f32.gmra.mrb[0].mxu0 %v323
        %v580 = vpop.f32.mrb[0].mxu0
        %v581 = vadd.f32 0.0, %v580
        %v582 = vpop.f32.mrb[0].mxu0
        %v583 = vadd.f32 0.0, %v582
        %584 = vmatprep.mubr.f32.mxu0 0.0
        %585 = vmatmul.mubr.f32.gmra.mrb[0].mxu0 %v326
        %v586 = vpop.f32.mrb[0].mxu0
        %v587 = vadd.f32 0.0, %v586
        %v588 = vpop.f32.mrb[0].mxu0
        %v589 = vadd.f32 0.0, %v588
        %590 = vmatprep.mubr.f32.mxu0 0.0
        %591 = vmatmul.mubr.f32.gmra.mrb[0].mxu0 %v329
        %v592 = vpop.f32.mrb[0].mxu0
        %v593 = vadd.f32 0.0, %v592
        %v594 = vpop.f32.mrb[0].mxu0
        %v595 = vadd.f32 0.0, %v594
        %596 = vmatprep.mubr.f32.mxu0 0.0
        %597 = vmatmul.mubr.f32.gmra.mrb[0].mxu0 %v332
        %v598 = vpop.f32.mrb[0].mxu0
        %v599 = vadd.f32 0.0, %v598
        %v600 = vpop.f32.mrb[0].mxu0
        %v601 = vadd.f32 0.0, %v600
        %602 = vmatprep.mubr.f32.mxu0 0.0
        %603 = vmatmul.mubr.f32.gmra.mrb[0].mxu0 %v335
        %v604 = vpop.f32.mrb[0].mxu0
        %v605 = vadd.f32 0.0, %v604
        %v606 = vpop.f32.mrb[0].mxu0
        %v607 = vadd.f32 0.0, %v606
        %608 = vmatprep.mubr.f32.mxu0 0.0
        %609 = vmatmul.mubr.f32.gmra.mrb[0].mxu0 %v338
        %v610 = vpop.f32.mrb[0].mxu0
        %v611 = vadd.f32 0.0, %v610
        %v612 = vpop.f32.mrb[0].mxu0
        %v613 = vadd.f32 0.0, %v612
        %614 = vdwg.mxu0
        %615 = vmatprep.subr.mxu0 %v288
        %616 = vmatpush1.msra.mxu0 %v287
        %617 = vmatprep.subr.mxu0 %v357
        %618 = vmatpush1.msra.mxu0 %v354
        %619 = vmatprep.subr.mxu0 0.0
        %620 = vmatpush1.msra.mxu0 0.0
        %621 = vmatprep.subr.mxu0 0.0
        %622 = vmatpush1.msra.mxu0 0.0
        %623 = vmatprep.subr.mxu0 0.0
        %624 = vmatpush1.msra.mxu0 0.0
        %625 = vmatprep.subr.mxu0 0.0
        %626 = vmatpush1.msra.mxu0 0.0
        %627 = vmatprep.subr.mxu0 0.0
        %628 = vmatpush1.msra.mxu0 0.0
        %629 = vmatprep.subr.mxu0 0.0
        %630 = vmatpush1.msra.mxu0 0.0
        %631 = vmatprep.subr.mxu0 0.0
        %632 = vmatpush1.msra.mxu0 0.0
        %633 = vmatprep.subr.mxu0 0.0
        %634 = vmatpush1.msra.mxu0 0.0
        %635 = vmatprep.subr.mxu0 0.0
        %636 = vmatpush1.msra.mxu0 0.0
        %637 = vmatprep.subr.mxu0 0.0
        %638 = vmatpush1.msra.mxu0 0.0
        %639 = vmatprep.subr.mxu0 0.0
        %640 = vmatpush1.msra.mxu0 0.0
        %641 = vmatprep.subr.mxu0 0.0
        %642 = vmatpush1.msra.mxu0 0.0
        %643 = vmatprep.subr.mxu0 0.0
        %644 = vmatpush1.msra.mxu0 0.0
        %645 = vmatprep.subr.mxu0 0.0
        %646 = vmatpush1.msra.mxu0 0.0
        %647 = vmatprep.subr.mxu0 0.0
        %648 = vmatpush1.msra.mxu0 0.0
        %649 = vmatprep.subr.mxu0 0.0
        %650 = vmatpush1.msra.mxu0 0.0
        %651 = vmatprep.subr.mxu0 0.0
        %652 = vmatpush1.msra.mxu0 0.0
        %653 = vmatprep.subr.mxu0 0.0
        %654 = vmatpush1.msra.mxu0 0.0
        %655 = vmatprep.subr.mxu0 0.0
        %656 = vmatpush1.msra.mxu0 0.0
        %657 = vmatprep.subr.mxu0 0.0
        %658 = vmatpush1.msra.mxu0 0.0
        %659 = vmatprep.subr.mxu0 0.0
        %660 = vmatpush1.msra.mxu0 0.0
        %661 = vmatprep.subr.mxu0 0.0
        %662 = vmatpush1.msra.mxu0 0.0
        %663 = vmatprep.subr.mxu0 0.0
        %664 = vmatpush1.msra.mxu0 0.0
        %665 = vmatprep.subr.mxu0 0.0
        %666 = vmatpush1.msra.mxu0 0.0
        %667 = vmatprep.subr.mxu0 0.0
        %668 = vmatpush1.msra.mxu0 0.0
        %669 = vmatprep.subr.mxu0 0.0
        %670 = vmatpush1.msra.mxu0 0.0
        %671 = vmatprep.subr.mxu0 0.0
        %672 = vmatpush1.msra.mxu0 0.0
        %673 = vmatprep.subr.mxu0 0.0
        %674 = vmatpush1.msra.mxu0 0.0
        %675 = vmatprep.subr.mxu0 0.0
        %676 = vmatpush1.msra.mxu0 0.0
        %677 = vmatprep.subr.mxu0 0.0
        %678 = vmatpush1.msra.mxu0 0.0
        %679 = vmatprep.mubr.f32.mxu0 0.0
        %680 = vmatmul.mubr.f32.gmra.mrb[0].mxu0 %v317
        %v681 = vpop.f32.mrb[0].mxu0
        %v682 = vadd.f32 0.0, %v681
        %v683 = vpop.f32.mrb[0].mxu0
        %v684 = vadd.f32 0.0, %v683
        %685 = vmatprep.mubr.f32.mxu0 0.0
        %686 = vmatmul.mubr.f32.gmra.mrb[0].mxu0 %v320
        %v687 = vpop.f32.mrb[0].mxu0
        %v688 = vadd.f32 0.0, %v687
        %v689 = vpop.f32.mrb[0].mxu0
        %v690 = vadd.f32 0.0, %v689
        %691 = vmatprep.mubr.f32.mxu0 0.0
        %692 = vmatmul.mubr.f32.gmra.mrb[0].mxu0 %v323
        %v693 = vpop.f32.mrb[0].mxu0
        %v694 = vadd.f32 0.0, %v693
        %v695 = vpop.f32.mrb[0].mxu0
        %v696 = vadd.f32 0.0, %v695
        %697 = vmatprep.mubr.f32.mxu0 0.0
        %698 = vmatmul.mubr.f32.gmra.mrb[0].mxu0 %v326
        %v699 = vpop.f32.mrb[0].mxu0
        %v700 = vadd.f32 0.0, %v699
        %v701 = vpop.f32.mrb[0].mxu0
        %v702 = vadd.f32 0.0, %v701
        %703 = vmatprep.mubr.f32.mxu0 0.0
        %704 = vmatmul.mubr.f32.gmra.mrb[0].mxu0 %v329
        %v705 = vpop.f32.mrb[0].mxu0
        %v706 = vadd.f32 0.0, %v705
        %v707 = vpop.f32.mrb[0].mxu0
        %v708 = vadd.f32 0.0, %v707
        %709 = vmatprep.mubr.f32.mxu0 0.0
        %710 = vmatmul.mubr.f32.gmra.mrb[0].mxu0 %v332
        %v711 = vpop.f32.mrb[0].mxu0
        %v712 = vadd.f32 0.0, %v711
        %v713 = vpop.f32.mrb[0].mxu0
        %v714 = vadd.f32 0.0, %v713
        %715 = vmatprep.mubr.f32.mxu0 0.0
        %716 = vmatmul.mubr.f32.gmra.mrb[0].mxu0 %v335
        %v717 = vpop.f32.mrb[0].mxu0
        %v718 = vadd.f32 0.0, %v717
        %v719 = vpop.f32.mrb[0].mxu0
        %v720 = vadd.f32 0.0, %v719
        %721 = vmatprep.mubr.f32.mxu0 0.0
        %722 = vmatmul.mubr.f32.gmra.mrb[0].mxu0 %v338
        %v723 = vpop.f32.mrb[0].mxu0
        %v724 = vadd.f32 0.0, %v723
        %v725 = vpop.f32.mrb[0].mxu0
        %v726 = vadd.f32 0.0, %v725
        %727 = vdwg.mxu0
        %728 = vmatprep.subr.mxu0 %v290
        %729 = vmatpush1.msra.mxu0 %v289
        %730 = vmatprep.subr.mxu0 %v363
        %731 = vmatpush1.msra.mxu0 %v360
        %732 = vmatprep.subr.mxu0 0.0
        %733 = vmatpush1.msra.mxu0 0.0
        %734 = vmatprep.subr.mxu0 0.0
        %735 = vmatpush1.msra.mxu0 0.0
        %736 = vmatprep.subr.mxu0 0.0
        %737 = vmatpush1.msra.mxu0 0.0
        %738 = vmatprep.subr.mxu0 0.0
        %739 = vmatpush1.msra.mxu0 0.0
        %740 = vmatprep.subr.mxu0 0.0
        %741 = vmatpush1.msra.mxu0 0.0
        %742 = vmatprep.subr.mxu0 0.0
        %743 = vmatpush1.msra.mxu0 0.0
        %744 = vmatprep.subr.mxu0 0.0
        %745 = vmatpush1.msra.mxu0 0.0
        %746 = vmatprep.subr.mxu0 0.0
        %747 = vmatpush1.msra.mxu0 0.0
        %748 = vmatprep.subr.mxu0 0.0
        %749 = vmatpush1.msra.mxu0 0.0
        %750 = vmatprep.subr.mxu0 0.0
        %751 = vmatpush1.msra.mxu0 0.0
        %752 = vmatprep.subr.mxu0 0.0
        %753 = vmatpush1.msra.mxu0 0.0
        %754 = vmatprep.subr.mxu0 0.0
        %755 = vmatpush1.msra.mxu0 0.0
        %756 = vmatprep.subr.mxu0 0.0
        %757 = vmatpush1.msra.mxu0 0.0
        %758 = vmatprep.subr.mxu0 0.0
        %759 = vmatpush1.msra.mxu0 0.0
        %760 = vmatprep.subr.mxu0 0.0
        %761 = vmatpush1.msra.mxu0 0.0
        %762 = vmatprep.subr.mxu0 0.0
        %763 = vmatpush1.msra.mxu0 0.0
        %764 = vmatprep.subr.mxu0 0.0
        %765 = vmatpush1.msra.mxu0 0.0
        %766 = vmatprep.subr.mxu0 0.0
        %767 = vmatpush1.msra.mxu0 0.0
        %768 = vmatprep.subr.mxu0 0.0
        %769 = vmatpush1.msra.mxu0 0.0
        %770 = vmatprep.subr.mxu0 0.0
        %771 = vmatpush1.msra.mxu0 0.0
        %772 = vmatprep.subr.mxu0 0.0
        %773 = vmatpush1.msra.mxu0 0.0
        %774 = vmatprep.subr.mxu0 0.0
        %775 = vmatpush1.msra.mxu0 0.0
        %776 = vmatprep.subr.mxu0 0.0
        %777 = vmatpush1.msra.mxu0 0.0
        %778 = vmatprep.subr.mxu0 0.0
        %779 = vmatpush1.msra.mxu0 0.0
        %780 = vmatprep.subr.mxu0 0.0
        %781 = vmatpush1.msra.mxu0 0.0
        %782 = vmatprep.subr.mxu0 0.0
        %783 = vmatpush1.msra.mxu0 0.0
        %784 = vmatprep.subr.mxu0 0.0
        %785 = vmatpush1.msra.mxu0 0.0
        %786 = vmatprep.subr.mxu0 0.0
        %787 = vmatpush1.msra.mxu0 0.0
        %788 = vmatprep.subr.mxu0 0.0
        %789 = vmatpush1.msra.mxu0 0.0
        %790 = vmatprep.subr.mxu0 0.0
        %791 = vmatpush1.msra.mxu0 0.0
        %792 = vmatprep.mubr.f32.mxu0 0.0
        %793 = vmatmul.mubr.f32.gmra.mrb[0].mxu0 %v317
        %v794 = vpop.f32.mrb[0].mxu0
        %v795 = vadd.f32 0.0, %v794
        %v796 = vpop.f32.mrb[0].mxu0
        %v797 = vadd.f32 0.0, %v796
        %798 = vmatprep.mubr.f32.mxu0 0.0
        %799 = vmatmul.mubr.f32.gmra.mrb[0].mxu0 %v320
        %v800 = vpop.f32.mrb[0].mxu0
        %v801 = vadd.f32 0.0, %v800
        %v802 = vpop.f32.mrb[0].mxu0
        %v803 = vadd.f32 0.0, %v802
        %804 = vmatprep.mubr.f32.mxu0 0.0
        %805 = vmatmul.mubr.f32.gmra.mrb[0].mxu0 %v323
        %v806 = vpop.f32.mrb[0].mxu0
        %v807 = vadd.f32 0.0, %v806
        %v808 = vpop.f32.mrb[0].mxu0
        %v809 = vadd.f32 0.0, %v808
        %810 = vmatprep.mubr.f32.mxu0 0.0
        %811 = vmatmul.mubr.f32.gmra.mrb[0].mxu0 %v326
        %v812 = vpop.f32.mrb[0].mxu0
        %v813 = vadd.f32 0.0, %v812
        %v814 = vpop.f32.mrb[0].mxu0
        %v815 = vadd.f32 0.0, %v814
        %816 = vmatprep.mubr.f32.mxu0 0.0
        %817 = vmatmul.mubr.f32.gmra.mrb[0].mxu0 %v329
        %v818 = vpop.f32.mrb[0].mxu0
        %v819 = vadd.f32 0.0, %v818
        %v820 = vpop.f32.mrb[0].mxu0
        %v821 = vadd.f32 0.0, %v820
        %822 = vmatprep.mubr.f32.mxu0 0.0
        %823 = vmatmul.mubr.f32.gmra.mrb[0].mxu0 %v332
        %v824 = vpop.f32.mrb[0].mxu0
        %v825 = vadd.f32 0.0, %v824
        %v826 = vpop.f32.mrb[0].mxu0
        %v827 = vadd.f32 0.0, %v826
        %828 = vmatprep.mubr.f32.mxu0 0.0
        %829 = vmatmul.mubr.f32.gmra.mrb[0].mxu0 %v335
        %v830 = vpop.f32.mrb[0].mxu0
        %v831 = vadd.f32 0.0, %v830
        %v832 = vpop.f32.mrb[0].mxu0
        %v833 = vadd.f32 0.0, %v832
        %834 = vmatprep.mubr.f32.mxu0 0.0
        %835 = vmatmul.mubr.f32.gmra.mrb[0].mxu0 %v338
        %v836 = vpop.f32.mrb[0].mxu0
        %v837 = vadd.f32 0.0, %v836
        %v838 = vpop.f32.mrb[0].mxu0
        %v839 = vadd.f32 0.0, %v838
        %840 = vdwg.mxu0
        %841 = vmatprep.subr.mxu0 %v292
        %842 = vmatpush1.msra.mxu0 %v291
        %843 = vmatprep.subr.mxu0 %v369
        %844 = vmatpush1.msra.mxu0 %v366
        %845 = vmatprep.subr.mxu0 0.0
        %846 = vmatpush1.msra.mxu0 0.0
        %847 = vmatprep.subr.mxu0 0.0
        %848 = vmatpush1.msra.mxu0 0.0
        %849 = vmatprep.subr.mxu0 0.0
        %850 = vmatpush1.msra.mxu0 0.0
        %851 = vmatprep.subr.mxu0 0.0
        %852 = vmatpush1.msra.mxu0 0.0
        %853 = vmatprep.subr.mxu0 0.0
        %854 = vmatpush1.msra.mxu0 0.0
        %855 = vmatprep.subr.mxu0 0.0
        %856 = vmatpush1.msra.mxu0 0.0
        %857 = vmatprep.subr.mxu0 0.0
        %858 = vmatpush1.msra.mxu0 0.0
        %859 = vmatprep.subr.mxu0 0.0
        %860 = vmatpush1.msra.mxu0 0.0
        %861 = vmatprep.subr.mxu0 0.0
        %862 = vmatpush1.msra.mxu0 0.0
        %863 = vmatprep.subr.mxu0 0.0
        %864 = vmatpush1.msra.mxu0 0.0
        %865 = vmatprep.subr.mxu0 0.0
        %866 = vmatpush1.msra.mxu0 0.0
        %867 = vmatprep.subr.mxu0 0.0
        %868 = vmatpush1.msra.mxu0 0.0
        %869 = vmatprep.subr.mxu0 0.0
        %870 = vmatpush1.msra.mxu0 0.0
        %871 = vmatprep.subr.mxu0 0.0
        %872 = vmatpush1.msra.mxu0 0.0
        %873 = vmatprep.subr.mxu0 0.0
        %874 = vmatpush1.msra.mxu0 0.0
        %875 = vmatprep.subr.mxu0 0.0
        %876 = vmatpush1.msra.mxu0 0.0
        %877 = vmatprep.subr.mxu0 0.0
        %878 = vmatpush1.msra.mxu0 0.0
        %879 = vmatprep.subr.mxu0 0.0
        %880 = vmatpush1.msra.mxu0 0.0
        %881 = vmatprep.subr.mxu0 0.0
        %882 = vmatpush1.msra.mxu0 0.0
        %883 = vmatprep.subr.mxu0 0.0
        %884 = vmatpush1.msra.mxu0 0.0
        %885 = vmatprep.subr.mxu0 0.0
        %886 = vmatpush1.msra.mxu0 0.0
        %887 = vmatprep.subr.mxu0 0.0
        %888 = vmatpush1.msra.mxu0 0.0
        %889 = vmatprep.subr.mxu0 0.0
        %890 = vmatpush1.msra.mxu0 0.0
        %891 = vmatprep.subr.mxu0 0.0
        %892 = vmatpush1.msra.mxu0 0.0
        %893 = vmatprep.subr.mxu0 0.0
        %894 = vmatpush1.msra.mxu0 0.0
        %895 = vmatprep.subr.mxu0 0.0
        %896 = vmatpush1.msra.mxu0 0.0
        %897 = vmatprep.subr.mxu0 0.0
        %898 = vmatpush1.msra.mxu0 0.0
        %899 = vmatprep.subr.mxu0 0.0
        %900 = vmatpush1.msra.mxu0 0.0
        %901 = vmatprep.subr.mxu0 0.0
        %902 = vmatpush1.msra.mxu0 0.0
        %903 = vmatprep.subr.mxu0 0.0
        %904 = vmatpush1.msra.mxu0 0.0
        %905 = vmatprep.mubr.f32.mxu0 0.0
        %906 = vmatmul.mubr.f32.gmra.mrb[0].mxu0 %v317
        %v907 = vpop.f32.mrb[0].mxu0
        %v908 = vadd.f32 0.0, %v907
        %v909 = vpop.f32.mrb[0].mxu0
        %v910 = vadd.f32 0.0, %v909
        %911 = vmatprep.mubr.f32.mxu0 0.0
        %912 = vmatmul.mubr.f32.gmra.mrb[0].mxu0 %v320
        %v913 = vpop.f32.mrb[0].mxu0
        %v914 = vadd.f32 0.0, %v913
        %v915 = vpop.f32.mrb[0].mxu0
        %v916 = vadd.f32 0.0, %v915
        %917 = vmatprep.mubr.f32.mxu0 0.0
        %918 = vmatmul.mubr.f32.gmra.mrb[0].mxu0 %v323
        %v919 = vpop.f32.mrb[0].mxu0
        %v920 = vadd.f32 0.0, %v919
        %v921 = vpop.f32.mrb[0].mxu0
        %v922 = vadd.f32 0.0, %v921
        %923 = vmatprep.mubr.f32.mxu0 0.0
        %924 = vmatmul.mubr.f32.gmra.mrb[0].mxu0 %v326
        %v925 = vpop.f32.mrb[0].mxu0
        %v926 = vadd.f32 0.0, %v925
        %v927 = vpop.f32.mrb[0].mxu0
        %v928 = vadd.f32 0.0, %v927
        %929 = vmatprep.mubr.f32.mxu0 0.0
        %930 = vmatmul.mubr.f32.gmra.mrb[0].mxu0 %v329
        %v931 = vpop.f32.mrb[0].mxu0
        %v932 = vadd.f32 0.0, %v931
        %v933 = vpop.f32.mrb[0].mxu0
        %v934 = vadd.f32 0.0, %v933
        %935 = vmatprep.mubr.f32.mxu0 0.0
        %936 = vmatmul.mubr.f32.gmra.mrb[0].mxu0 %v332
        %v937 = vpop.f32.mrb[0].mxu0
        %v938 = vadd.f32 0.0, %v937
        %v939 = vpop.f32.mrb[0].mxu0
        %v940 = vadd.f32 0.0, %v939
        %941 = vmatprep.mubr.f32.mxu0 0.0
        %942 = vmatmul.mubr.f32.gmra.mrb[0].mxu0 %v335
        %v943 = vpop.f32.mrb[0].mxu0
        %v944 = vadd.f32 0.0, %v943
        %v945 = vpop.f32.mrb[0].mxu0
        %v946 = vadd.f32 0.0, %v945
        %947 = vmatprep.mubr.f32.mxu0 0.0
        %948 = vmatmul.mubr.f32.gmra.mrb[0].mxu0 %v338
        %v949 = vpop.f32.mrb[0].mxu0
        %v950 = vadd.f32 0.0, %v949
        %v951 = vpop.f32.mrb[0].mxu0
        %v952 = vadd.f32 0.0, %v951
        %953 = vdwg.mxu0
        %954 = vmatprep.subr.mxu0 %v294
        %955 = vmatpush1.msra.mxu0 %v293
        %956 = vmatprep.subr.mxu0 %v375
        %957 = vmatpush1.msra.mxu0 %v372
        %958 = vmatprep.subr.mxu0 0.0
        %959 = vmatpush1.msra.mxu0 0.0
        %960 = vmatprep.subr.mxu0 0.0
        %961 = vmatpush1.msra.mxu0 0.0
        %962 = vmatprep.subr.mxu0 0.0
        %963 = vmatpush1.msra.mxu0 0.0
        %964 = vmatprep.subr.mxu0 0.0
        %965 = vmatpush1.msra.mxu0 0.0
        %966 = vmatprep.subr.mxu0 0.0
        %967 = vmatpush1.msra.mxu0 0.0
        %968 = vmatprep.subr.mxu0 0.0
        %969 = vmatpush1.msra.mxu0 0.0
        %970 = vmatprep.subr.mxu0 0.0
        %971 = vmatpush1.msra.mxu0 0.0
        %972 = vmatprep.subr.mxu0 0.0
        %973 = vmatpush1.msra.mxu0 0.0
        %974 = vmatprep.subr.mxu0 0.0
        %975 = vmatpush1.msra.mxu0 0.0
        %976 = vmatprep.subr.mxu0 0.0
        %977 = vmatpush1.msra.mxu0 0.0
        %978 = vmatprep.subr.mxu0 0.0
        %979 = vmatpush1.msra.mxu0 0.0
        %980 = vmatprep.subr.mxu0 0.0
        %981 = vmatpush1.msra.mxu0 0.0
        %982 = vmatprep.subr.mxu0 0.0
        %983 = vmatpush1.msra.mxu0 0.0
        %984 = vmatprep.subr.mxu0 0.0
        %985 = vmatpush1.msra.mxu0 0.0
        %986 = vmatprep.subr.mxu0 0.0
        %987 = vmatpush1.msra.mxu0 0.0
        %988 = vmatprep.subr.mxu0 0.0
        %989 = vmatpush1.msra.mxu0 0.0
        %990 = vmatprep.subr.mxu0 0.0
        %991 = vmatpush1.msra.mxu0 0.0
        %992 = vmatprep.subr.mxu0 0.0
        %993 = vmatpush1.msra.mxu0 0.0
        %994 = vmatprep.subr.mxu0 0.0
        %995 = vmatpush1.msra.mxu0 0.0
        %996 = vmatprep.subr.mxu0 0.0
        %997 = vmatpush1.msra.mxu0 0.0
        %998 = vmatprep.subr.mxu0 0.0
        %999 = vmatpush1.msra.mxu0 0.0
        %1000 = vmatprep.subr.mxu0 0.0
        %1001 = vmatpush1.msra.mxu0 0.0
        %1002 = vmatprep.subr.mxu0 0.0
        %1003 = vmatpush1.msra.mxu0 0.0
        %1004 = vmatprep.subr.mxu0 0.0
        %1005 = vmatpush1.msra.mxu0 0.0
        %1006 = vmatprep.subr.mxu0 0.0
        %1007 = vmatpush1.msra.mxu0 0.0
        %1008 = vmatprep.subr.mxu0 0.0
        %1009 = vmatpush1.msra.mxu0 0.0
        %1010 = vmatprep.subr.mxu0 0.0
        %1011 = vmatpush1.msra.mxu0 0.0
        %1012 = vmatprep.subr.mxu0 0.0
        %1013 = vmatpush1.msra.mxu0 0.0
        %1014 = vmatprep.subr.mxu0 0.0
        %1015 = vmatpush1.msra.mxu0 0.0
        %1016 = vmatprep.subr.mxu0 0.0
        %1017 = vmatpush1.msra.mxu0 0.0
        %1018 = vmatprep.mubr.f32.mxu0 0.0
        %1019 = vmatmul.mubr.f32.gmra.mrb[0].mxu0 %v317
        %v1020 = vpop.f32.mrb[0].mxu0
        %v1021 = vadd.f32 0.0, %v1020
        %v1022 = vpop.f32.mrb[0].mxu0
        %v1023 = vadd.f32 0.0, %v1022
        %1024 = vmatprep.mubr.f32.mxu0 0.0
        %1025 = vmatmul.mubr.f32.gmra.mrb[0].mxu0 %v320
        %v1026 = vpop.f32.mrb[0].mxu0
        %v1027 = vadd.f32 0.0, %v1026
        %v1028 = vpop.f32.mrb[0].mxu0
        %v1029 = vadd.f32 0.0, %v1028
        %1030 = vmatprep.mubr.f32.mxu0 0.0
        %1031 = vmatmul.mubr.f32.gmra.mrb[0].mxu0 %v323
        %v1032 = vpop.f32.mrb[0].mxu0
        %v1033 = vadd.f32 0.0, %v1032
        %v1034 = vpop.f32.mrb[0].mxu0
        %v1035 = vadd.f32 0.0, %v1034
        %1036 = vmatprep.mubr.f32.mxu0 0.0
        %1037 = vmatmul.mubr.f32.gmra.mrb[0].mxu0 %v326
        %v1038 = vpop.f32.mrb[0].mxu0
        %v1039 = vadd.f32 0.0, %v1038
        %v1040 = vpop.f32.mrb[0].mxu0
        %v1041 = vadd.f32 0.0, %v1040
        %1042 = vmatprep.mubr.f32.mxu0 0.0
        %1043 = vmatmul.mubr.f32.gmra.mrb[0].mxu0 %v329
        %v1044 = vpop.f32.mrb[0].mxu0
        %v1045 = vadd.f32 0.0, %v1044
        %v1046 = vpop.f32.mrb[0].mxu0
        %v1047 = vadd.f32 0.0, %v1046
        %1048 = vmatprep.mubr.f32.mxu0 0.0
        %1049 = vmatmul.mubr.f32.gmra.mrb[0].mxu0 %v332
        %v1050 = vpop.f32.mrb[0].mxu0
        %v1051 = vadd.f32 0.0, %v1050
        %v1052 = vpop.f32.mrb[0].mxu0
        %v1053 = vadd.f32 0.0, %v1052
        %1054 = vmatprep.mubr.f32.mxu0 0.0
        %1055 = vmatmul.mubr.f32.gmra.mrb[0].mxu0 %v335
        %v1056 = vpop.f32.mrb[0].mxu0
        %v1057 = vadd.f32 0.0, %v1056
        %v1058 = vpop.f32.mrb[0].mxu0
        %v1059 = vadd.f32 0.0, %v1058
        %1060 = vmatprep.mubr.f32.mxu0 0.0
        %1061 = vmatmul.mubr.f32.gmra.mrb[0].mxu0 %v338
        %v1062 = vpop.f32.mrb[0].mxu0
        %v1063 = vadd.f32 0.0, %v1062
        %v1064 = vpop.f32.mrb[0].mxu0
        %v1065 = vadd.f32 0.0, %v1064
        %1066 = vdwg.mxu0
        %1067 = vmatprep.subr.mxu0 %v296
        %1068 = vmatpush1.msra.mxu0 %v295
        %1069 = vmatprep.subr.mxu0 %v381
        %1070 = vmatpush1.msra.mxu0 %v378
        %1071 = vmatprep.subr.mxu0 0.0
        %1072 = vmatpush1.msra.mxu0 0.0
        %1073 = vmatprep.subr.mxu0 0.0
        %1074 = vmatpush1.msra.mxu0 0.0
        %1075 = vmatprep.subr.mxu0 0.0
        %1076 = vmatpush1.msra.mxu0 0.0
        %1077 = vmatprep.subr.mxu0 0.0
        %1078 = vmatpush1.msra.mxu0 0.0
        %1079 = vmatprep.subr.mxu0 0.0
        %1080 = vmatpush1.msra.mxu0 0.0
        %1081 = vmatprep.subr.mxu0 0.0
        %1082 = vmatpush1.msra.mxu0 0.0
        %1083 = vmatprep.subr.mxu0 0.0
        %1084 = vmatpush1.msra.mxu0 0.0
        %1085 = vmatprep.subr.mxu0 0.0
        %1086 = vmatpush1.msra.mxu0 0.0
        %1087 = vmatprep.subr.mxu0 0.0
        %1088 = vmatpush1.msra.mxu0 0.0
        %1089 = vmatprep.subr.mxu0 0.0
        %1090 = vmatpush1.msra.mxu0 0.0
        %1091 = vmatprep.subr.mxu0 0.0
        %1092 = vmatpush1.msra.mxu0 0.0
        %1093 = vmatprep.subr.mxu0 0.0
        %1094 = vmatpush1.msra.mxu0 0.0
        %1095 = vmatprep.subr.mxu0 0.0
        %1096 = vmatpush1.msra.mxu0 0.0
        %1097 = vmatprep.subr.mxu0 0.0
        %1098 = vmatpush1.msra.mxu0 0.0
        %1099 = vmatprep.subr.mxu0 0.0
        %1100 = vmatpush1.msra.mxu0 0.0
        %1101 = vmatprep.subr.mxu0 0.0
        %1102 = vmatpush1.msra.mxu0 0.0
        %1103 = vmatprep.subr.mxu0 0.0
        %1104 = vmatpush1.msra.mxu0 0.0
        %1105 = vmatprep.subr.mxu0 0.0
        %1106 = vmatpush1.msra.mxu0 0.0
        %1107 = vmatprep.subr.mxu0 0.0
        %1108 = vmatpush1.msra.mxu0 0.0
        %1109 = vmatprep.subr.mxu0 0.0
        %1110 = vmatpush1.msra.mxu0 0.0
        %1111 = vmatprep.subr.mxu0 0.0
        %1112 = vmatpush1.msra.mxu0 0.0
        %1113 = vmatprep.subr.mxu0 0.0
        %1114 = vmatpush1.msra.mxu0 0.0
        %1115 = vmatprep.subr.mxu0 0.0
        %1116 = vmatpush1.msra.mxu0 0.0
        %1117 = vmatprep.subr.mxu0 0.0
        %1118 = vmatpush1.msra.mxu0 0.0
        %1119 = vmatprep.subr.mxu0 0.0
        %1120 = vmatpush1.msra.mxu0 0.0
        %1121 = vmatprep.subr.mxu0 0.0
        %1122 = vmatpush1.msra.mxu0 0.0
        %1123 = vmatprep.subr.mxu0 0.0
        %1124 = vmatpush1.msra.mxu0 0.0
        %1125 = vmatprep.subr.mxu0 0.0
        %1126 = vmatpush1.msra.mxu0 0.0
        %1127 = vmatprep.subr.mxu0 0.0
        %1128 = vmatpush1.msra.mxu0 0.0
        %1129 = vmatprep.subr.mxu0 0.0
        %1130 = vmatpush1.msra.mxu0 0.0
        %1131 = vmatprep.mubr.f32.mxu0 0.0
        %1132 = vmatmul.mubr.f32.gmra.mrb[0].mxu0 %v317
        %v1133 = vpop.f32.mrb[0].mxu0
        %v1134 = vadd.f32 0.0, %v1133
        %v1135 = vpop.f32.mrb[0].mxu0
        %v1136 = vadd.f32 0.0, %v1135
        %1137 = vmatprep.mubr.f32.mxu0 0.0
        %1138 = vmatmul.mubr.f32.gmra.mrb[0].mxu0 %v320
        %v1139 = vpop.f32.mrb[0].mxu0
        %v1140 = vadd.f32 0.0, %v1139
        %v1141 = vpop.f32.mrb[0].mxu0
        %v1142 = vadd.f32 0.0, %v1141
        %1143 = vmatprep.mubr.f32.mxu0 0.0
        %1144 = vmatmul.mubr.f32.gmra.mrb[0].mxu0 %v323
        %v1145 = vpop.f32.mrb[0].mxu0
        %v1146 = vadd.f32 0.0, %v1145
        %v1147 = vpop.f32.mrb[0].mxu0
        %v1148 = vadd.f32 0.0, %v1147
        %1149 = vmatprep.mubr.f32.mxu0 0.0
        %1150 = vmatmul.mubr.f32.gmra.mrb[0].mxu0 %v326
        %v1151 = vpop.f32.mrb[0].mxu0
        %v1152 = vadd.f32 0.0, %v1151
        %v1153 = vpop.f32.mrb[0].mxu0
        %v1154 = vadd.f32 0.0, %v1153
        %1155 = vmatprep.mubr.f32.mxu0 0.0
        %1156 = vmatmul.mubr.f32.gmra.mrb[0].mxu0 %v329
        %v1157 = vpop.f32.mrb[0].mxu0
        %v1158 = vadd.f32 0.0, %v1157
        %v1159 = vpop.f32.mrb[0].mxu0
        %v1160 = vadd.f32 0.0, %v1159
        %1161 = vmatprep.mubr.f32.mxu0 0.0
        %1162 = vmatmul.mubr.f32.gmra.mrb[0].mxu0 %v332
        %v1163 = vpop.f32.mrb[0].mxu0
        %v1164 = vadd.f32 0.0, %v1163
        %v1165 = vpop.f32.mrb[0].mxu0
        %v1166 = vadd.f32 0.0, %v1165
        %1167 = vmatprep.mubr.f32.mxu0 0.0
        %1168 = vmatmul.mubr.f32.gmra.mrb[0].mxu0 %v335
        %v1169 = vpop.f32.mrb[0].mxu0
        %v1170 = vadd.f32 0.0, %v1169
        %v1171 = vpop.f32.mrb[0].mxu0
        %v1172 = vadd.f32 0.0, %v1171
        %1173 = vmatprep.mubr.f32.mxu0 0.0
        %1174 = vmatmul.mubr.f32.gmra.mrb[0].mxu0 %v338
        %v1175 = vpop.f32.mrb[0].mxu0
        %v1176 = vadd.f32 0.0, %v1175
        %v1177 = vpop.f32.mrb[0].mxu0
        %v1178 = vadd.f32 0.0, %v1177
        %1179 = vdwg.mxu0
        %1180 = vmatprep.subr.mxu0 %v298
        %1181 = vmatpush1.msra.mxu0 %v297
        %1182 = vmatprep.subr.mxu0 %v387
        %1183 = vmatpush1.msra.mxu0 %v384
        %1184 = vmatprep.subr.mxu0 0.0
        %1185 = vmatpush1.msra.mxu0 0.0
        %1186 = vmatprep.subr.mxu0 0.0
        %1187 = vmatpush1.msra.mxu0 0.0
        %1188 = vmatprep.subr.mxu0 0.0
        %1189 = vmatpush1.msra.mxu0 0.0
        %1190 = vmatprep.subr.mxu0 0.0
        %1191 = vmatpush1.msra.mxu0 0.0
        %1192 = vmatprep.subr.mxu0 0.0
        %1193 = vmatpush1.msra.mxu0 0.0
        %1194 = vmatprep.subr.mxu0 0.0
        %1195 = vmatpush1.msra.mxu0 0.0
        %1196 = vmatprep.subr.mxu0 0.0
        %1197 = vmatpush1.msra.mxu0 0.0
        %1198 = vmatprep.subr.mxu0 0.0
        %1199 = vmatpush1.msra.mxu0 0.0
        %1200 = vmatprep.subr.mxu0 0.0
        %1201 = vmatpush1.msra.mxu0 0.0
        %1202 = vmatprep.subr.mxu0 0.0
        %1203 = vmatpush1.msra.mxu0 0.0
        %1204 = vmatprep.subr.mxu0 0.0
        %1205 = vmatpush1.msra.mxu0 0.0
        %1206 = vmatprep.subr.mxu0 0.0
        %1207 = vmatpush1.msra.mxu0 0.0
        %1208 = vmatprep.subr.mxu0 0.0
        %1209 = vmatpush1.msra.mxu0 0.0
        %1210 = vmatprep.subr.mxu0 0.0
        %1211 = vmatpush1.msra.mxu0 0.0
        %1212 = vmatprep.subr.mxu0 0.0
        %1213 = vmatpush1.msra.mxu0 0.0
        %1214 = vmatprep.subr.mxu0 0.0
        %1215 = vmatpush1.msra.mxu0 0.0
        %1216 = vmatprep.subr.mxu0 0.0
        %1217 = vmatpush1.msra.mxu0 0.0
        %1218 = vmatprep.subr.mxu0 0.0
        %1219 = vmatpush1.msra.mxu0 0.0
        %1220 = vmatprep.subr.mxu0 0.0
        %1221 = vmatpush1.msra.mxu0 0.0
        %1222 = vmatprep.subr.mxu0 0.0
        %1223 = vmatpush1.msra.mxu0 0.0
        %1224 = vmatprep.subr.mxu0 0.0
        %1225 = vmatpush1.msra.mxu0 0.0
        %1226 = vmatprep.subr.mxu0 0.0
        %1227 = vmatpush1.msra.mxu0 0.0
        %1228 = vmatprep.subr.mxu0 0.0
        %1229 = vmatpush1.msra.mxu0 0.0
        %1230 = vmatprep.subr.mxu0 0.0
        %1231 = vmatpush1.msra.mxu0 0.0
        %1232 = vmatprep.subr.mxu0 0.0
        %1233 = vmatpush1.msra.mxu0 0.0
        %1234 = vmatprep.subr.mxu0 0.0
        %1235 = vmatpush1.msra.mxu0 0.0
        %1236 = vmatprep.subr.mxu0 0.0
        %1237 = vmatpush1.msra.mxu0 0.0
        %1238 = vmatprep.subr.mxu0 0.0
        %1239 = vmatpush1.msra.mxu0 0.0
        %1240 = vmatprep.subr.mxu0 0.0
        %1241 = vmatpush1.msra.mxu0 0.0
        %1242 = vmatprep.subr.mxu0 0.0
        %1243 = vmatpush1.msra.mxu0 0.0
        %1244 = vmatprep.mubr.f32.mxu0 0.0
        %1245 = vmatmul.mubr.f32.gmra.mrb[0].mxu0 %v317
        %v1246 = vpop.f32.mrb[0].mxu0
        %v1247 = vadd.f32 0.0, %v1246
        %v1248 = vpop.f32.mrb[0].mxu0
        %v1249 = vadd.f32 0.0, %v1248
        %1250 = vmatprep.mubr.f32.mxu0 0.0
        %1251 = vmatmul.mubr.f32.gmra.mrb[0].mxu0 %v320
        %v1252 = vpop.f32.mrb[0].mxu0
        %v1253 = vadd.f32 0.0, %v1252
        %v1254 = vpop.f32.mrb[0].mxu0
        %v1255 = vadd.f32 0.0, %v1254
        %1256 = vmatprep.mubr.f32.mxu0 0.0
        %1257 = vmatmul.mubr.f32.gmra.mrb[0].mxu0 %v323
        %v1258 = vpop.f32.mrb[0].mxu0
        %v1259 = vadd.f32 0.0, %v1258
        %v1260 = vpop.f32.mrb[0].mxu0
        %v1261 = vadd.f32 0.0, %v1260
        %1262 = vmatprep.mubr.f32.mxu0 0.0
        %1263 = vmatmul.mubr.f32.gmra.mrb[0].mxu0 %v326
        %v1264 = vpop.f32.mrb[0].mxu0
        %v1265 = vadd.f32 0.0, %v1264
        %v1266 = vpop.f32.mrb[0].mxu0
        %v1267 = vadd.f32 0.0, %v1266
        %1268 = vmatprep.mubr.f32.mxu0 0.0
        %1269 = vmatmul.mubr.f32.gmra.mrb[0].mxu0 %v329
        %v1270 = vpop.f32.mrb[0].mxu0
        %v1271 = vadd.f32 0.0, %v1270
        %v1272 = vpop.f32.mrb[0].mxu0
        %v1273 = vadd.f32 0.0, %v1272
        %1274 = vmatprep.mubr.f32.mxu0 0.0
        %1275 = vmatmul.mubr.f32.gmra.mrb[0].mxu0 %v332
        %v1276 = vpop.f32.mrb[0].mxu0
        %v1277 = vadd.f32 0.0, %v1276
        %v1278 = vpop.f32.mrb[0].mxu0
        %v1279 = vadd.f32 0.0, %v1278
        %1280 = vmatprep.mubr.f32.mxu0 0.0
        %1281 = vmatmul.mubr.f32.gmra.mrb[0].mxu0 %v335
        %v1282 = vpop.f32.mrb[0].mxu0
        %v1283 = vadd.f32 0.0, %v1282
        %v1284 = vpop.f32.mrb[0].mxu0
        %v1285 = vadd.f32 0.0, %v1284
        %1286 = vmatprep.mubr.f32.mxu0 0.0
        %1287 = vmatmul.mubr.f32.gmra.mrb[0].mxu0 %v338
        %v1288 = vpop.f32.mrb[0].mxu0
        %v1289 = vadd.f32 0.0, %v1288
        %v1290 = vpop.f32.mrb[0].mxu0
        %v1291 = vadd.f32 0.0, %v1290
        %1292 = vdwg.mxu0
        %v1293 = vld [vmem:[%s237] sm:$0xff]
        %v1294 = vld [vmem:[%s237 + $0x8] sm:$0xff]
        %v1295 = vld [vmem:[%s237 + $0x10] sm:$0xff]
        %v1296 = vld [vmem:[%s237 + $0x18] sm:$0xff]
        %v1297 = vld [vmem:[%s237 + $0x20] sm:$0xff]
        %v1298 = vld [vmem:[%s237 + $0x28] sm:$0xff]
        %v1299 = vld [vmem:[%s237 + $0x30] sm:$0xff]
        %v1300 = vld [vmem:[%s237 + $0x38] sm:$0xff]
        %v1301 = vld [vmem:[%s237 + $0x40] sm:$0xff]
        %v1302 = vld [vmem:[%s237 + $0x48] sm:$0xff]
        %v1303 = vld [vmem:[%s237 + $0x50] sm:$0xff]
        %v1304 = vld [vmem:[%s237 + $0x58] sm:$0xff]
        %v1305 = vld [vmem:[%s237 + $0x60] sm:$0xff]
        %v1306 = vld [vmem:[%s237 + $0x68] sm:$0xff]
        %v1307 = vld [vmem:[%s237 + $0x70] sm:$0xff]
        %v1308 = vld [vmem:[%s237 + $0x78] sm:$0xff]
        %v1309 = vld [vmem:[%s237 + $0x80] sm:$0xff]
        %v1310 = vld [vmem:[%s237 + $0x88] sm:$0xff]
        %v1311 = vld [vmem:[%s237 + $0x90] sm:$0xff]
        %v1312 = vld [vmem:[%s237 + $0x98] sm:$0xff]
        %v1313 = vld [vmem:[%s237 + $0xa0] sm:$0xff]
        %v1314 = vld [vmem:[%s237 + $0xa8] sm:$0xff]
        %v1315 = vld [vmem:[%s237 + $0xb0] sm:$0xff]
        %v1316 = vld [vmem:[%s237 + $0xb8] sm:$0xff]
        %v1317 = vld [vmem:[%s237 + $0xc0] sm:$0xff]
        %v1318 = vld [vmem:[%s237 + $0xc8] sm:$0xff]
        %v1319 = vld [vmem:[%s237 + $0xd0] sm:$0xff]
        %v1320 = vld [vmem:[%s237 + $0xd8] sm:$0xff]
        %v1321 = vld [vmem:[%s237 + $0xe0] sm:$0xff]
        %v1322 = vld [vmem:[%s237 + $0xe8] sm:$0xff]
        %v1323 = vld [vmem:[%s237 + $0xf0] sm:$0xff]
        %v1324 = vld [vmem:[%s237 + $0xf8] sm:$0xff]
        %v1325 = vunpack.c.l.bf16 %v1293
        %v1326 = vunpack.c.h.bf16 %v1293
        %v1327 = vunpack.c.l.bf16 %v1294
        %v1328 = vunpack.c.h.bf16 %v1294
        %v1329 = vunpack.c.l.bf16 %v1295
        %v1330 = vunpack.c.h.bf16 %v1295
        %v1331 = vunpack.c.l.bf16 %v1296
        %v1332 = vunpack.c.h.bf16 %v1296
        %v1333 = vunpack.c.l.bf16 %v1297
        %v1334 = vunpack.c.h.bf16 %v1297
        %v1335 = vunpack.c.l.bf16 %v1298
        %v1336 = vunpack.c.h.bf16 %v1298
        %v1337 = vunpack.c.l.bf16 %v1299
        %v1338 = vunpack.c.h.bf16 %v1299
        %v1339 = vunpack.c.l.bf16 %v1300
        %v1340 = vunpack.c.h.bf16 %v1300
        %v1341 = vunpack.c.l.bf16 %v1301
        %v1342 = vunpack.c.h.bf16 %v1301
        %v1343 = vunpack.c.l.bf16 %v1302
        %v1344 = vunpack.c.h.bf16 %v1302
        %v1345 = vunpack.c.l.bf16 %v1303
        %v1346 = vunpack.c.h.bf16 %v1303
        %v1347 = vunpack.c.l.bf16 %v1304
        %v1348 = vunpack.c.h.bf16 %v1304
        %v1349 = vunpack.c.l.bf16 %v1305
        %v1350 = vunpack.c.h.bf16 %v1305
        %v1351 = vunpack.c.l.bf16 %v1306
        %v1352 = vunpack.c.h.bf16 %v1306
        %v1353 = vunpack.c.l.bf16 %v1307
        %v1354 = vunpack.c.h.bf16 %v1307
        %v1355 = vunpack.c.l.bf16 %v1308
        %v1356 = vunpack.c.h.bf16 %v1308
        %v1357 = vunpack.c.l.bf16 %v1309
        %v1358 = vunpack.c.h.bf16 %v1309
        %v1359 = vunpack.c.l.bf16 %v1310
        %v1360 = vunpack.c.h.bf16 %v1310
        %v1361 = vunpack.c.l.bf16 %v1311
        %v1362 = vunpack.c.h.bf16 %v1311
        %v1363 = vunpack.c.l.bf16 %v1312
        %v1364 = vunpack.c.h.bf16 %v1312
        %v1365 = vunpack.c.l.bf16 %v1313
        %v1366 = vunpack.c.h.bf16 %v1313
        %v1367 = vunpack.c.l.bf16 %v1314
        %v1368 = vunpack.c.h.bf16 %v1314
        %v1369 = vunpack.c.l.bf16 %v1315
        %v1370 = vunpack.c.h.bf16 %v1315
        %v1371 = vunpack.c.l.bf16 %v1316
        %v1372 = vunpack.c.h.bf16 %v1316
        %v1373 = vunpack.c.l.bf16 %v1317
        %v1374 = vunpack.c.h.bf16 %v1317
        %v1375 = vunpack.c.l.bf16 %v1318
        %v1376 = vunpack.c.h.bf16 %v1318
        %v1377 = vunpack.c.l.bf16 %v1319
        %v1378 = vunpack.c.h.bf16 %v1319
        %v1379 = vunpack.c.l.bf16 %v1320
        %v1380 = vunpack.c.h.bf16 %v1320
        %v1381 = vunpack.c.l.bf16 %v1321
        %v1382 = vunpack.c.h.bf16 %v1321
        %v1383 = vunpack.c.l.bf16 %v1322
        %v1384 = vunpack.c.h.bf16 %v1322
        %v1385 = vunpack.c.l.bf16 %v1323
        %v1386 = vunpack.c.h.bf16 %v1323
        %v1387 = vunpack.c.l.bf16 %v1324
        %v1388 = vunpack.c.h.bf16 %v1324
        %v1389 = vmul.f32 %v456, %v1325
        %v1390 = vmul.f32 %v458, %v1326
        %v1391 = vmul.f32 %v569, %v1327
        %v1392 = vmul.f32 %v571, %v1328
        %v1393 = vmul.f32 %v682, %v1329
        %v1394 = vmul.f32 %v684, %v1330
        %v1395 = vmul.f32 %v795, %v1331
        %v1396 = vmul.f32 %v797, %v1332
        %v1397 = vmul.f32 %v908, %v1333
        %v1398 = vmul.f32 %v910, %v1334
        %v1399 = vmul.f32 %v1021, %v1335
        %v1400 = vmul.f32 %v1023, %v1336
        %v1401 = vmul.f32 %v1134, %v1337
        %v1402 = vmul.f32 %v1136, %v1338
        %v1403 = vmul.f32 %v1247, %v1339
        %v1404 = vmul.f32 %v1249, %v1340
        %v1405 = vmul.f32 %v462, %v1341
        %v1406 = vmul.f32 %v464, %v1342
        %v1407 = vmul.f32 %v575, %v1343
        %v1408 = vmul.f32 %v577, %v1344
        %v1409 = vmul.f32 %v688, %v1345
        %v1410 = vmul.f32 %v690, %v1346
        %v1411 = vmul.f32 %v801, %v1347
        %v1412 = vmul.f32 %v803, %v1348
        %v1413 = vmul.f32 %v914, %v1349
        %v1414 = vmul.f32 %v916, %v1350
        %v1415 = vmul.f32 %v1027, %v1351
        %v1416 = vmul.f32 %v1029, %v1352
        %v1417 = vmul.f32 %v1140, %v1353
        %v1418 = vmul.f32 %v1142, %v1354
        %v1419 = vmul.f32 %v1253, %v1355
        %v1420 = vmul.f32 %v1255, %v1356
        %v1421 = vmul.f32 %v468, %v1357
        %v1422 = vmul.f32 %v470, %v1358
        %v1423 = vmul.f32 %v581, %v1359
        %v1424 = vmul.f32 %v583, %v1360
        %v1425 = vmul.f32 %v694, %v1361
        %v1426 = vmul.f32 %v696, %v1362
        %v1427 = vmul.f32 %v807, %v1363
        %v1428 = vmul.f32 %v809, %v1364
        %v1429 = vmul.f32 %v920, %v1365
        %v1430 = vmul.f32 %v922, %v1366
        %v1431 = vmul.f32 %v1033, %v1367
        %v1432 = vmul.f32 %v1035, %v1368
        %v1433 = vmul.f32 %v1146, %v1369
        %v1434 = vmul.f32 %v1148, %v1370
        %v1435 = vmul.f32 %v1259, %v1371
        %v1436 = vmul.f32 %v1261, %v1372
        %v1437 = vmul.f32 %v474, %v1373
        %v1438 = vmul.f32 %v476, %v1374
        %v1439 = vmul.f32 %v587, %v1375
        %v1440 = vmul.f32 %v589, %v1376
        %v1441 = vmul.f32 %v700, %v1377
        %v1442 = vmul.f32 %v702, %v1378
        %v1443 = vmul.f32 %v813, %v1379
        %v1444 = vmul.f32 %v815, %v1380
        %v1445 = vmul.f32 %v926, %v1381
        %v1446 = vmul.f32 %v928, %v1382
        %v1447 = vmul.f32 %v1039, %v1383
        %v1448 = vmul.f32 %v1041, %v1384
        %v1449 = vmul.f32 %v1152, %v1385
        %v1450 = vmul.f32 %v1154, %v1386
        %v1451 = vmul.f32 %v1265, %v1387
        %v1452 = vmul.f32 %v1267, %v1388
        %v1453 = vmul.f32 %v480, %v1325
        %v1454 = vmul.f32 %v482, %v1326
        %v1455 = vmul.f32 %v593, %v1327
        %v1456 = vmul.f32 %v595, %v1328
        %v1457 = vmul.f32 %v706, %v1329
        %v1458 = vmul.f32 %v708, %v1330
        %v1459 = vmul.f32 %v819, %v1331
        %v1460 = vmul.f32 %v821, %v1332
        %v1461 = vmul.f32 %v932, %v1333
        %v1462 = vmul.f32 %v934, %v1334
        %v1463 = vmul.f32 %v1045, %v1335
        %v1464 = vmul.f32 %v1047, %v1336
        %v1465 = vmul.f32 %v1158, %v1337
        %v1466 = vmul.f32 %v1160, %v1338
        %v1467 = vmul.f32 %v1271, %v1339
        %v1468 = vmul.f32 %v1273, %v1340
        %v1469 = vmul.f32 %v486, %v1341
        %v1470 = vmul.f32 %v488, %v1342
        %v1471 = vmul.f32 %v599, %v1343
        %v1472 = vmul.f32 %v601, %v1344
        %v1473 = vmul.f32 %v712, %v1345
        %v1474 = vmul.f32 %v714, %v1346
        %v1475 = vmul.f32 %v825, %v1347
        %v1476 = vmul.f32 %v827, %v1348
        %v1477 = vmul.f32 %v938, %v1349
        %v1478 = vmul.f32 %v940, %v1350
        %v1479 = vmul.f32 %v1051, %v1351
        %v1480 = vmul.f32 %v1053, %v1352
        %v1481 = vmul.f32 %v1164, %v1353
        %v1482 = vmul.f32 %v1166, %v1354
        %v1483 = vmul.f32 %v1277, %v1355
        %v1484 = vmul.f32 %v1279, %v1356
        %v1485 = vmul.f32 %v492, %v1357
        %v1486 = vmul.f32 %v494, %v1358
        %v1487 = vmul.f32 %v605, %v1359
        %v1488 = vmul.f32 %v607, %v1360
        %v1489 = vmul.f32 %v718, %v1361
        %v1490 = vmul.f32 %v720, %v1362
        %v1491 = vmul.f32 %v831, %v1363
        %v1492 = vmul.f32 %v833, %v1364
        %v1493 = vmul.f32 %v944, %v1365
        %v1494 = vmul.f32 %v946, %v1366
        %v1495 = vmul.f32 %v1057, %v1367
        %v1496 = vmul.f32 %v1059, %v1368
        %v1497 = vmul.f32 %v1170, %v1369
        %v1498 = vmul.f32 %v1172, %v1370
        %v1499 = vmul.f32 %v1283, %v1371
        %v1500 = vmul.f32 %v1285, %v1372
        %v1501 = vmul.f32 %v498, %v1373
        %v1502 = vmul.f32 %v500, %v1374
        %v1503 = vmul.f32 %v611, %v1375
        %v1504 = vmul.f32 %v613, %v1376
        %v1505 = vmul.f32 %v724, %v1377
        %v1506 = vmul.f32 %v726, %v1378
        %v1507 = vmul.f32 %v837, %v1379
        %v1508 = vmul.f32 %v839, %v1380
        %v1509 = vmul.f32 %v950, %v1381
        %v1510 = vmul.f32 %v952, %v1382
        %v1511 = vmul.f32 %v1063, %v1383
        %v1512 = vmul.f32 %v1065, %v1384
        %v1513 = vmul.f32 %v1176, %v1385
        %v1514 = vmul.f32 %v1178, %v1386
        %v1515 = vmul.f32 %v1289, %v1387
        %v1516 = vmul.f32 %v1291, %v1388
        %v1517 = vadd.f32 %v1389, %v1405
        %v1518 = vadd.f32 %v1517, %v1421
        %v1519 = vadd.f32 %v1518, %v1437
        %v1520 = vrot.slane %v1519, 4
        %v1521 = vadd.f32 %v1519, %v1520
        %v1522 = vrot.slane %v1521, 2
        %v1523 = vadd.f32 %v1521, %v1522
        %v1524 = vrot.slane %v1523, 1
        %v1525 = vadd.f32 %v1523, %v1524
        %v1526 = vadd.f32 %v1390, %v1406
        %v1527 = vadd.f32 %v1526, %v1422
        %v1528 = vadd.f32 %v1527, %v1438
        %v1529 = vrot.slane %v1528, 4
        %v1530 = vadd.f32 %v1528, %v1529
        %v1531 = vrot.slane %v1530, 2
        %v1532 = vadd.f32 %v1530, %v1531
        %v1533 = vrot.slane %v1532, 1
        %v1534 = vadd.f32 %v1532, %v1533
        %v1535 = vadd.f32 %v1391, %v1407
        %v1536 = vadd.f32 %v1535, %v1423
        %v1537 = vadd.f32 %v1536, %v1439
        %v1538 = vrot.slane %v1537, 4
        %v1539 = vadd.f32 %v1537, %v1538
        %v1540 = vrot.slane %v1539, 2
        %v1541 = vadd.f32 %v1539, %v1540
        %v1542 = vrot.slane %v1541, 1
        %v1543 = vadd.f32 %v1541, %v1542
        %v1544 = vadd.f32 %v1392, %v1408
        %v1545 = vadd.f32 %v1544, %v1424
        %v1546 = vadd.f32 %v1545, %v1440
        %v1547 = vrot.slane %v1546, 4
        %v1548 = vadd.f32 %v1546, %v1547
        %v1549 = vrot.slane %v1548, 2
        %v1550 = vadd.f32 %v1548, %v1549
        %v1551 = vrot.slane %v1550, 1
        %v1552 = vadd.f32 %v1550, %v1551
        %v1553 = vadd.f32 %v1393, %v1409
        %v1554 = vadd.f32 %v1553, %v1425
        %v1555 = vadd.f32 %v1554, %v1441
        %v1556 = vrot.slane %v1555, 4
        %v1557 = vadd.f32 %v1555, %v1556
        %v1558 = vrot.slane %v1557, 2
        %v1559 = vadd.f32 %v1557, %v1558
        %v1560 = vrot.slane %v1559, 1
        %v1561 = vadd.f32 %v1559, %v1560
        %v1562 = vadd.f32 %v1394, %v1410
        %v1563 = vadd.f32 %v1562, %v1426
        %v1564 = vadd.f32 %v1563, %v1442
        %v1565 = vrot.slane %v1564, 4
        %v1566 = vadd.f32 %v1564, %v1565
        %v1567 = vrot.slane %v1566, 2
        %v1568 = vadd.f32 %v1566, %v1567
        %v1569 = vrot.slane %v1568, 1
        %v1570 = vadd.f32 %v1568, %v1569
        %v1571 = vadd.f32 %v1395, %v1411
        %v1572 = vadd.f32 %v1571, %v1427
        %v1573 = vadd.f32 %v1572, %v1443
        %v1574 = vrot.slane %v1573, 4
        %v1575 = vadd.f32 %v1573, %v1574
        %v1576 = vrot.slane %v1575, 2
        %v1577 = vadd.f32 %v1575, %v1576
        %v1578 = vrot.slane %v1577, 1
        %v1579 = vadd.f32 %v1577, %v1578
        %v1580 = vadd.f32 %v1396, %v1412
        %v1581 = vadd.f32 %v1580, %v1428
        %v1582 = vadd.f32 %v1581, %v1444
        %v1583 = vrot.slane %v1582, 4
        %v1584 = vadd.f32 %v1582, %v1583
        %v1585 = vrot.slane %v1584, 2
        %v1586 = vadd.f32 %v1584, %v1585
        %v1587 = vrot.slane %v1586, 1
        %v1588 = vadd.f32 %v1586, %v1587
        %v1589 = vadd.f32 %v1397, %v1413
        %v1590 = vadd.f32 %v1589, %v1429
        %v1591 = vadd.f32 %v1590, %v1445
        %v1592 = vrot.slane %v1591, 4
        %v1593 = vadd.f32 %v1591, %v1592
        %v1594 = vrot.slane %v1593, 2
        %v1595 = vadd.f32 %v1593, %v1594
        %v1596 = vrot.slane %v1595, 1
        %v1597 = vadd.f32 %v1595, %v1596
        %v1598 = vadd.f32 %v1398, %v1414
        %v1599 = vadd.f32 %v1598, %v1430
        %v1600 = vadd.f32 %v1599, %v1446
        %v1601 = vrot.slane %v1600, 4
        %v1602 = vadd.f32 %v1600, %v1601
        %v1603 = vrot.slane %v1602, 2
        %v1604 = vadd.f32 %v1602, %v1603
        %v1605 = vrot.slane %v1604, 1
        %v1606 = vadd.f32 %v1604, %v1605
        %v1607 = vadd.f32 %v1399, %v1415
        %v1608 = vadd.f32 %v1607, %v1431
        %v1609 = vadd.f32 %v1608, %v1447
        %v1610 = vrot.slane %v1609, 4
        %v1611 = vadd.f32 %v1609, %v1610
        %v1612 = vrot.slane %v1611, 2
        %v1613 = vadd.f32 %v1611, %v1612
        %v1614 = vrot.slane %v1613, 1
        %v1615 = vadd.f32 %v1613, %v1614
        %v1616 = vadd.f32 %v1400, %v1416
        %v1617 = vadd.f32 %v1616, %v1432
        %v1618 = vadd.f32 %v1617, %v1448
        %v1619 = vrot.slane %v1618, 4
        %v1620 = vadd.f32 %v1618, %v1619
        %v1621 = vrot.slane %v1620, 2
        %v1622 = vadd.f32 %v1620, %v1621
        %v1623 = vrot.slane %v1622, 1
        %v1624 = vadd.f32 %v1622, %v1623
        %v1625 = vadd.f32 %v1401, %v1417
        %v1626 = vadd.f32 %v1625, %v1433
        %v1627 = vadd.f32 %v1626, %v1449
        %v1628 = vrot.slane %v1627, 4
        %v1629 = vadd.f32 %v1627, %v1628
        %v1630 = vrot.slane %v1629, 2
        %v1631 = vadd.f32 %v1629, %v1630
        %v1632 = vrot.slane %v1631, 1
        %v1633 = vadd.f32 %v1631, %v1632
        %v1634 = vadd.f32 %v1402, %v1418
        %v1635 = vadd.f32 %v1634, %v1434
        %v1636 = vadd.f32 %v1635, %v1450
        %v1637 = vrot.slane %v1636, 4
        %v1638 = vadd.f32 %v1636, %v1637
        %v1639 = vrot.slane %v1638, 2
        %v1640 = vadd.f32 %v1638, %v1639
        %v1641 = vrot.slane %v1640, 1
        %v1642 = vadd.f32 %v1640, %v1641
        %v1643 = vadd.f32 %v1403, %v1419
        %v1644 = vadd.f32 %v1643, %v1435
        %v1645 = vadd.f32 %v1644, %v1451
        %v1646 = vrot.slane %v1645, 4
        %v1647 = vadd.f32 %v1645, %v1646
        %v1648 = vrot.slane %v1647, 2
        %v1649 = vadd.f32 %v1647, %v1648
        %v1650 = vrot.slane %v1649, 1
        %v1651 = vadd.f32 %v1649, %v1650
        %v1652 = vadd.f32 %v1404, %v1420
        %v1653 = vadd.f32 %v1652, %v1436
        %v1654 = vadd.f32 %v1653, %v1452
        %v1655 = vrot.slane %v1654, 4
        %v1656 = vadd.f32 %v1654, %v1655
        %v1657 = vrot.slane %v1656, 2
        %v1658 = vadd.f32 %v1656, %v1657
        %v1659 = vrot.slane %v1658, 1
        %v1660 = vadd.f32 %v1658, %v1659
        %v1661 = vadd.f32 %v1453, %v1469
        %v1662 = vadd.f32 %v1661, %v1485
        %v1663 = vadd.f32 %v1662, %v1501
        %v1664 = vrot.slane %v1663, 4
        %v1665 = vadd.f32 %v1663, %v1664
        %v1666 = vrot.slane %v1665, 2
        %v1667 = vadd.f32 %v1665, %v1666
        %v1668 = vrot.slane %v1667, 1
        %v1669 = vadd.f32 %v1667, %v1668
        %v1670 = vadd.f32 %v1454, %v1470
        %v1671 = vadd.f32 %v1670, %v1486
        %v1672 = vadd.f32 %v1671, %v1502
        %v1673 = vrot.slane %v1672, 4
        %v1674 = vadd.f32 %v1672, %v1673
        %v1675 = vrot.slane %v1674, 2
        %v1676 = vadd.f32 %v1674, %v1675
        %v1677 = vrot.slane %v1676, 1
        %v1678 = vadd.f32 %v1676, %v1677
        %v1679 = vadd.f32 %v1455, %v1471
        %v1680 = vadd.f32 %v1679, %v1487
        %v1681 = vadd.f32 %v1680, %v1503
        %v1682 = vrot.slane %v1681, 4
        %v1683 = vadd.f32 %v1681, %v1682
        %v1684 = vrot.slane %v1683, 2
        %v1685 = vadd.f32 %v1683, %v1684
        %v1686 = vrot.slane %v1685, 1
        %v1687 = vadd.f32 %v1685, %v1686
        %v1688 = vadd.f32 %v1456, %v1472
        %v1689 = vadd.f32 %v1688, %v1488
        %v1690 = vadd.f32 %v1689, %v1504
        %v1691 = vrot.slane %v1690, 4
        %v1692 = vadd.f32 %v1690, %v1691
        %v1693 = vrot.slane %v1692, 2
        %v1694 = vadd.f32 %v1692, %v1693
        %v1695 = vrot.slane %v1694, 1
        %v1696 = vadd.f32 %v1694, %v1695
        %v1697 = vadd.f32 %v1457, %v1473
        %v1698 = vadd.f32 %v1697, %v1489
        %v1699 = vadd.f32 %v1698, %v1505
        %v1700 = vrot.slane %v1699, 4
        %v1701 = vadd.f32 %v1699, %v1700
        %v1702 = vrot.slane %v1701, 2
        %v1703 = vadd.f32 %v1701, %v1702
        %v1704 = vrot.slane %v1703, 1
        %v1705 = vadd.f32 %v1703, %v1704
        %v1706 = vadd.f32 %v1458, %v1474
        %v1707 = vadd.f32 %v1706, %v1490
        %v1708 = vadd.f32 %v1707, %v1506
        %v1709 = vrot.slane %v1708, 4
        %v1710 = vadd.f32 %v1708, %v1709
        %v1711 = vrot.slane %v1710, 2
        %v1712 = vadd.f32 %v1710, %v1711
        %v1713 = vrot.slane %v1712, 1
        %v1714 = vadd.f32 %v1712, %v1713
        %v1715 = vadd.f32 %v1459, %v1475
        %v1716 = vadd.f32 %v1715, %v1491
        %v1717 = vadd.f32 %v1716, %v1507
        %v1718 = vrot.slane %v1717, 4
        %v1719 = vadd.f32 %v1717, %v1718
        %v1720 = vrot.slane %v1719, 2
        %v1721 = vadd.f32 %v1719, %v1720
        %v1722 = vrot.slane %v1721, 1
        %v1723 = vadd.f32 %v1721, %v1722
        %v1724 = vadd.f32 %v1460, %v1476
        %v1725 = vadd.f32 %v1724, %v1492
        %v1726 = vadd.f32 %v1725, %v1508
        %v1727 = vrot.slane %v1726, 4
        %v1728 = vadd.f32 %v1726, %v1727
        %v1729 = vrot.slane %v1728, 2
        %v1730 = vadd.f32 %v1728, %v1729
        %v1731 = vrot.slane %v1730, 1
        %v1732 = vadd.f32 %v1730, %v1731
        %v1733 = vadd.f32 %v1461, %v1477
        %v1734 = vadd.f32 %v1733, %v1493
        %v1735 = vadd.f32 %v1734, %v1509
        %v1736 = vrot.slane %v1735, 4
        %v1737 = vadd.f32 %v1735, %v1736
        %v1738 = vrot.slane %v1737, 2
        %v1739 = vadd.f32 %v1737, %v1738
        %v1740 = vrot.slane %v1739, 1
        %v1741 = vadd.f32 %v1739, %v1740
        %v1742 = vadd.f32 %v1462, %v1478
        %v1743 = vadd.f32 %v1742, %v1494
        %v1744 = vadd.f32 %v1743, %v1510
        %v1745 = vrot.slane %v1744, 4
        %v1746 = vadd.f32 %v1744, %v1745
        %v1747 = vrot.slane %v1746, 2
        %v1748 = vadd.f32 %v1746, %v1747
        %v1749 = vrot.slane %v1748, 1
        %v1750 = vadd.f32 %v1748, %v1749
        %v1751 = vadd.f32 %v1463, %v1479
        %v1752 = vadd.f32 %v1751, %v1495
        %v1753 = vadd.f32 %v1752, %v1511
        %v1754 = vrot.slane %v1753, 4
        %v1755 = vadd.f32 %v1753, %v1754
        %v1756 = vrot.slane %v1755, 2
        %v1757 = vadd.f32 %v1755, %v1756
        %v1758 = vrot.slane %v1757, 1
        %v1759 = vadd.f32 %v1757, %v1758
        %v1760 = vadd.f32 %v1464, %v1480
        %v1761 = vadd.f32 %v1760, %v1496
        %v1762 = vadd.f32 %v1761, %v1512
        %v1763 = vrot.slane %v1762, 4
        %v1764 = vadd.f32 %v1762, %v1763
        %v1765 = vrot.slane %v1764, 2
        %v1766 = vadd.f32 %v1764, %v1765
        %v1767 = vrot.slane %v1766, 1
        %v1768 = vadd.f32 %v1766, %v1767
        %v1769 = vadd.f32 %v1465, %v1481
        %v1770 = vadd.f32 %v1769, %v1497
        %v1771 = vadd.f32 %v1770, %v1513
        %v1772 = vrot.slane %v1771, 4
        %v1773 = vadd.f32 %v1771, %v1772
        %v1774 = vrot.slane %v1773, 2
        %v1775 = vadd.f32 %v1773, %v1774
        %v1776 = vrot.slane %v1775, 1
        %v1777 = vadd.f32 %v1775, %v1776
        %v1778 = vadd.f32 %v1466, %v1482
        %v1779 = vadd.f32 %v1778, %v1498
        %v1780 = vadd.f32 %v1779, %v1514
        %v1781 = vrot.slane %v1780, 4
        %v1782 = vadd.f32 %v1780, %v1781
        %v1783 = vrot.slane %v1782, 2
        %v1784 = vadd.f32 %v1782, %v1783
        %v1785 = vrot.slane %v1784, 1
        %v1786 = vadd.f32 %v1784, %v1785
        %v1787 = vadd.f32 %v1467, %v1483
        %v1788 = vadd.f32 %v1787, %v1499
        %v1789 = vadd.f32 %v1788, %v1515
        %v1790 = vrot.slane %v1789, 4
        %v1791 = vadd.f32 %v1789, %v1790
        %v1792 = vrot.slane %v1791, 2
        %v1793 = vadd.f32 %v1791, %v1792
        %v1794 = vrot.slane %v1793, 1
        %v1795 = vadd.f32 %v1793, %v1794
        %v1796 = vadd.f32 %v1468, %v1484
        %v1797 = vadd.f32 %v1796, %v1500
        %v1798 = vadd.f32 %v1797, %v1516
        %v1799 = vrot.slane %v1798, 4
        %v1800 = vadd.f32 %v1798, %v1799
        %v1801 = vrot.slane %v1800, 2
        %v1802 = vadd.f32 %v1800, %v1801
        %v1803 = vrot.slane %v1802, 1
        %v1804 = vadd.f32 %v1802, %v1803
        %v1805 = vmul.f32 %v1525, 0.03125
        %v1806 = vmul.f32 %v1534, 0.03125
        %v1807 = vmul.f32 %v1543, 0.03125
        %v1808 = vmul.f32 %v1552, 0.03125
        %v1809 = vmul.f32 %v1561, 0.03125
        %v1810 = vmul.f32 %v1570, 0.03125
        %v1811 = vmul.f32 %v1579, 0.03125
        %v1812 = vmul.f32 %v1588, 0.03125
        %v1813 = vmul.f32 %v1597, 0.03125
        %v1814 = vmul.f32 %v1606, 0.03125
        %v1815 = vmul.f32 %v1615, 0.03125
        %v1816 = vmul.f32 %v1624, 0.03125
        %v1817 = vmul.f32 %v1633, 0.03125
        %v1818 = vmul.f32 %v1642, 0.03125
        %v1819 = vmul.f32 %v1651, 0.03125
        %v1820 = vmul.f32 %v1660, 0.03125
        %v1821 = vmul.f32 %v1669, 0.03125
        %v1822 = vmul.f32 %v1678, 0.03125
        %v1823 = vmul.f32 %v1687, 0.03125
        %v1824 = vmul.f32 %v1696, 0.03125
        %v1825 = vmul.f32 %v1705, 0.03125
        %v1826 = vmul.f32 %v1714, 0.03125
        %v1827 = vmul.f32 %v1723, 0.03125
        %v1828 = vmul.f32 %v1732, 0.03125
        %v1829 = vmul.f32 %v1741, 0.03125
        %v1830 = vmul.f32 %v1750, 0.03125
        %v1831 = vmul.f32 %v1759, 0.03125
        %v1832 = vmul.f32 %v1768, 0.03125
        %v1833 = vmul.f32 %v1777, 0.03125
        %v1834 = vmul.f32 %v1786, 0.03125
        %v1835 = vmul.f32 %v1795, 0.03125
        %v1836 = vmul.f32 %v1804, 0.03125
        %v1869 = vcombine.low %v1805, %v1806
        %v1870 = vcombine.low %v1807, %v1808
        %v1872 = vunpack.c.l.s4 1983009808
        %v1873 = vunpack.c.0.s8 %v1872
        %v1874 = vlaneseq
        %v1875 = vshrl.u32 %v1874, 7
        %v1876 = vsub.s32 %v1873, %v1875
        %v1877 = vrot.slane %v1869, %v1876
        %v1879 = vunpack.c.l.s4 1983009808
        %v1880 = vunpack.c.0.s8 %v1879
        %v1881 = vlaneseq
        %v1882 = vshrl.u32 %v1881, 7
        %v1883 = vsub.s32 %v1880, %v1882
        %v1884 = vrot.slane %v1870, %v1883
        %v1885 = vcombine.low %v1877, %v1884
        %v1886 = vcombine.low %v1809, %v1810
        %v1887 = vcombine.low %v1811, %v1812
        %v1889 = vunpack.c.l.s4 1983009808
        %v1890 = vunpack.c.0.s8 %v1889
        %v1891 = vlaneseq
        %v1892 = vshrl.u32 %v1891, 7
        %v1893 = vsub.s32 %v1890, %v1892
        %v1894 = vrot.slane %v1886, %v1893
        %v1896 = vunpack.c.l.s4 1983009808
        %v1897 = vunpack.c.0.s8 %v1896
        %v1898 = vlaneseq
        %v1899 = vshrl.u32 %v1898, 7
        %v1900 = vsub.s32 %v1897, %v1899
        %v1901 = vrot.slane %v1887, %v1900
        %v1902 = vcombine.low %v1894, %v1901
        %v1903 = vcombine.low %v1813, %v1814
        %v1904 = vcombine.low %v1815, %v1816
        %v1906 = vunpack.c.l.s4 1983009808
        %v1907 = vunpack.c.0.s8 %v1906
        %v1908 = vlaneseq
        %v1909 = vshrl.u32 %v1908, 7
        %v1910 = vsub.s32 %v1907, %v1909
        %v1911 = vrot.slane %v1903, %v1910
        %v1913 = vunpack.c.l.s4 1983009808
        %v1914 = vunpack.c.0.s8 %v1913
        %v1915 = vlaneseq
        %v1916 = vshrl.u32 %v1915, 7
        %v1917 = vsub.s32 %v1914, %v1916
        %v1918 = vrot.slane %v1904, %v1917
        %v1919 = vcombine.low %v1911, %v1918
        %v1920 = vcombine.low %v1817, %v1818
        %v1921 = vcombine.low %v1819, %v1820
        %v1923 = vunpack.c.l.s4 1983009808
        %v1924 = vunpack.c.0.s8 %v1923
        %v1925 = vlaneseq
        %v1926 = vshrl.u32 %v1925, 7
        %v1927 = vsub.s32 %v1924, %v1926
        %v1928 = vrot.slane %v1920, %v1927
        %v1930 = vunpack.c.l.s4 1983009808
        %v1931 = vunpack.c.0.s8 %v1930
        %v1932 = vlaneseq
        %v1933 = vshrl.u32 %v1932, 7
        %v1934 = vsub.s32 %v1931, %v1933
        %v1935 = vrot.slane %v1921, %v1934
        %v1936 = vcombine.low %v1928, %v1935
        %v1937 = vcombine.low %v1821, %v1822
        %v1938 = vcombine.low %v1823, %v1824
        %v1940 = vunpack.c.l.s4 1983009808
        %v1941 = vunpack.c.0.s8 %v1940
        %v1942 = vlaneseq
        %v1943 = vshrl.u32 %v1942, 7
        %v1944 = vsub.s32 %v1941, %v1943
        %v1945 = vrot.slane %v1937, %v1944
        %v1947 = vunpack.c.l.s4 1983009808
        %v1948 = vunpack.c.0.s8 %v1947
        %v1949 = vlaneseq
        %v1950 = vshrl.u32 %v1949, 7
        %v1951 = vsub.s32 %v1948, %v1950
        %v1952 = vrot.slane %v1938, %v1951
        %v1953 = vcombine.low %v1945, %v1952
        %v1954 = vcombine.low %v1825, %v1826
        %v1955 = vcombine.low %v1827, %v1828
        %v1957 = vunpack.c.l.s4 1983009808
        %v1958 = vunpack.c.0.s8 %v1957
        %v1959 = vlaneseq
        %v1960 = vshrl.u32 %v1959, 7
        %v1961 = vsub.s32 %v1958, %v1960
        %v1962 = vrot.slane %v1954, %v1961
        %v1964 = vunpack.c.l.s4 1983009808
        %v1965 = vunpack.c.0.s8 %v1964
        %v1966 = vlaneseq
        %v1967 = vshrl.u32 %v1966, 7
        %v1968 = vsub.s32 %v1965, %v1967
        %v1969 = vrot.slane %v1955, %v1968
        %v1970 = vcombine.low %v1962, %v1969
        %v1971 = vcombine.low %v1829, %v1830
        %v1972 = vcombine.low %v1831, %v1832
        %v1974 = vunpack.c.l.s4 1983009808
        %v1975 = vunpack.c.0.s8 %v1974
        %v1976 = vlaneseq
        %v1977 = vshrl.u32 %v1976, 7
        %v1978 = vsub.s32 %v1975, %v1977
        %v1979 = vrot.slane %v1971, %v1978
        %v1981 = vunpack.c.l.s4 1983009808
        %v1982 = vunpack.c.0.s8 %v1981
        %v1983 = vlaneseq
        %v1984 = vshrl.u32 %v1983, 7
        %v1985 = vsub.s32 %v1982, %v1984
        %v1986 = vrot.slane %v1972, %v1985
        %v1987 = vcombine.low %v1979, %v1986
        %v1988 = vcombine.low %v1833, %v1834
        %v1989 = vcombine.low %v1835, %v1836
        %v1991 = vunpack.c.l.s4 1983009808
        %v1992 = vunpack.c.0.s8 %v1991
        %v1993 = vlaneseq
        %v1994 = vshrl.u32 %v1993, 7
        %v1995 = vsub.s32 %v1992, %v1994
        %v1996 = vrot.slane %v1988, %v1995
        %v1998 = vunpack.c.l.s4 1983009808
        %v1999 = vunpack.c.0.s8 %v1998
        %v2000 = vlaneseq
        %v2001 = vshrl.u32 %v2000, 7
        %v2002 = vsub.s32 %v1999, %v2001
        %v2003 = vrot.slane %v1989, %v2002
        %v2004 = vcombine.low %v1996, %v2003
        %vm2005 = vcmask 1044484
        %v2006 = vsel %vm2005, %v1885, %v1885
        %vm2007 = vcmask 1046534
        %v2008 = vsel %vm2007, %v1885, %v2006
        %v2009 = vrot.slane %v1953, 7
        %vm2010 = vcmask 1041409
        %v2011 = vsel %vm2010, %v2009, %v2008
        %vm2012 = vcmask 1043459
        %v2013 = vsel %vm2012, %v2009, %v2011
        %vm2014 = vcmask 1045509
        %v2015 = vsel %vm2014, %v2009, %v2013
        %vm2016 = vcmask 1047559
        %v2017 = vsel %vm2016, %v2009, %v2015
        %v2018 = vsel %vm2005, %v1902, %v1902
        %v2019 = vsel %vm2007, %v1902, %v2018
        %v2020 = vrot.slane %v1970, 7
        %v2021 = vsel %vm2010, %v2020, %v2019
        %v2022 = vsel %vm2012, %v2020, %v2021
        %v2023 = vsel %vm2014, %v2020, %v2022
        %v2024 = vsel %vm2016, %v2020, %v2023
        %v2025 = vsel %vm2005, %v1919, %v1919
        %v2026 = vsel %vm2007, %v1919, %v2025
        %v2027 = vrot.slane %v1987, 7
        %v2028 = vsel %vm2010, %v2027, %v2026
        %v2029 = vsel %vm2012, %v2027, %v2028
        %v2030 = vsel %vm2014, %v2027, %v2029
        %v2031 = vsel %vm2016, %v2027, %v2030
        %v2032 = vsel %vm2005, %v1936, %v1936
        %v2033 = vsel %vm2007, %v1936, %v2032
        %v2034 = vrot.slane %v2004, 7
        %v2035 = vsel %vm2010, %v2034, %v2033
        %v2036 = vsel %vm2012, %v2034, %v2035
        %v2037 = vsel %vm2014, %v2034, %v2036
        %v2038 = vsel %vm2016, %v2034, %v2037
        %2043 = vst [vmem:[%s273] sm:$0xff] %v2017
        %2044 = vst [vmem:[%s273 + $0x8] sm:$0xff] %v2024
        %2045 = vst [vmem:[%s273 + $0x10] sm:$0xff] %v2031
        %2046 = vst [vmem:[%s273 + $0x18] sm:$0xff] %v2038
        %s2047 = smul.u32 16, %s14
        %p2048 = scmp.lt.s32.totalorder %s2047, 31
        %s2049 = scalar_select %p2048, %s2047, 31
        %s2050 = smul.addr %s2049, 2
        %s2051 = scalar_lea.vmem %s3, %s2050
        // Predicated region
        $region56: #{segment_generator_forward.14} parent=50 // pred_check
          %p2052 = pneg %p105
        $region57: #{segment_generator_forward.14} parent=50 // pred_check_branch
          %2054 = sbr.rel (%p2052) target = $region59
        $region58: #{segment_generator_forward.14} parent=50 // pred_region
          %s2055 = smul.u32 16, %s14
        $region59: #{segment_generator_forward.14} parent=50 // pred_fallthru
          _
      $region51: #{segment_generator_forward.14} parent=5 // pred_fallthru
        _
      %p2056 = scmp.le.s32.totalorder 2, %s9
      // Predicated region
      $region60: #{segment_generator_forward.14} parent=5 // pred_check
        %p2057 = pneg %p2056
      $region61: #{segment_generator_forward.14} parent=5 // pred_check_branch
        %2059 = sbr.rel (%p2057) target = $region63
      $region62: #{segment_generator_forward.14} parent=5 // pred_region
        %s2060 = ssub.s32 %s9, 2
        // Predicated region
        $region64: #{segment_generator_forward.14} parent=62 // pred_check
          %p2061 = pneg %p111
        $region65: #{segment_generator_forward.14} parent=62 // pred_check_branch
          %2063 = sbr.rel (%p2061) target = $region67
        $region66: #{segment_generator_forward.14} parent=62 // pred_region
          %s2064 = smul.u32 16, %s15
          %p2065 = scmp.lt.s32.totalorder %s2064, 31
          %s2066 = scalar_select %p2065, %s2064, 31
          %s2067 = smul.addr %s2066, 2
          %s2068 = scalar_lea.vmem %s3, %s2067
        $region67: #{segment_generator_forward.14} parent=62 // pred_fallthru
          _
      $region63: #{segment_generator_forward.14} parent=5 // pred_fallthru
        _
    $region6: #{segment_generator_forward.14} parent=1 // loop_footer
      %s13 = sadd.s32 1, %s9
    $region7: #{segment_generator_forward.14} parent=1 // loop_footer_branch
      %8 = sbr.rel target = $region3
    $region8: #{segment_generator_forward.14} parent=1 // loop_exit
      _

// kernel: reverse.3
$region0: #{reverse.3}
  %s0 = inlined_call_operand.vmem [shape: f32[2,4096], index: 0, kind: input, shape index: {}]
  %s1 = inlined_call_operand.vmem [shape: f32[2,4096], index: 1, kind: output, shape index: {}]
  %v2 = vlaneseq
  %v3 = vsub.s32 127, %v2
  %4 = vset.pattern.permute.xlu0 %v3
  $region1: #{reverse.3} parent=0
    #allocation0 [shape = 'u8[4096]{0}', space=vmem, size = 0x1000, scoped, tag = 'operand span for operand 0']
    #allocation1 [shape = 'u8[2048]{0}', space=vmem, size = 0x800, scoped, tag = 'packed  for operand 0']
    #allocation2 [shape = 'u8[4096]{0}', space=vmem, size = 0x1000, scoped, tag = 'operand span for operand 1']
    #allocation3 [shape = 'u8[2048]{0}', space=vmem, size = 0x800, scoped, tag = 'packed  for operand 1']
    loop: start=0, step=1, limit=34
    $region2: #{reverse.3} parent=1 // loop_pre_header
      _
    $region3: #{reverse.3} parent=1 // loop_header
      %s6 = sphi 0, %s10
      %p7 = scmp.ge.s32.totalorder %s6, 34
      %s13 = sphi 0, %s25
      %s14 = sphi 0, %s21
      %s15 = sphi 0, %s13
      %s16 = sphi 0, %s14
      %s17 = sphi 0, %s15
      %s18 = sphi 0, %s16
    $region4: #{reverse.3} parent=1 // loop_header_branch
      %9 = sbr.rel (%p7) target = $region8
    $region5: #{reverse.3} parent=1 // loop_body
      %s11 = ssub.s32 %s6, 1
      %s12 = ssub.s32 %s6, 2
      %s19 = sadd.s32 1, %s14
      %p20 = scmp.ge.s32.totalorder %s19, 32
      %s21 = scalar_select %p20, 0, %s19
      %s22 = sadd.s32 1, %s13
      %s23 = scalar_select %p20, %s22, %s13
      %p24 = scmp.ge.s32.totalorder %s23, 1
      %s25 = scalar_select %p24, 0, %s23
      %p26 = scmp.le.s32.totalorder 1, %s6
      %p27 = scmp.lt.s32.totalorder %s6, 33
      %p28 = pnand %p26, %p27
      %p29 = pneg %p28
      // Predicated region
      $region9: #{reverse.3} parent=5 // pred_check
        _
      $region10: #{reverse.3} parent=5 // pred_check_branch
        %31 = sbr.rel (%p28) target = $region12
      $region11: #{reverse.3} parent=5 // pred_region
        %s32 = ssub.s32 %s6, 1
      $region12: #{reverse.3} parent=5 // pred_fallthru
        _
      %p33 = scmp.lt.s32.totalorder %s6, 32
      // Predicated region
      $region13: #{reverse.3} parent=5 // pred_check
        %p34 = pneg %p33
      $region14: #{reverse.3} parent=5 // pred_check_branch
        %36 = sbr.rel (%p34) target = $region16
      $region15: #{reverse.3} parent=5 // pred_region
        %s37 = sand.u32 %s6, 1
        %s38 = sand.u32 %s6, 1
        %s39 = smul.addr %s38, 2
        %s40 = scalar_lea.vmem [#allocation1], %s39
        %s41 = ssub.s32 31, %s14
        %s42 = smul.addr %s13, 32
        %s43 = sadd.s32 %s41, %s42
        %s44 = smul.addr %s43, 2
        %s45 = scalar_lea.vmem %s0, %s44
        // Predicated region
        $region17: #{reverse.3} parent=15 // pred_check
          _
        $region18: #{reverse.3} parent=15 // pred_check_branch
          %47 = sbr.rel (0) target = $region20
        $region19: #{reverse.3} parent=15 // pred_region
          // Predicated region
          $region21: #{reverse.3} parent=19 // pred_check
            _
          $region22: #{reverse.3} parent=19 // pred_check_branch
            %49 = sbr.rel target = $region24
          $region23: #{reverse.3} parent=19 // pred_region
            // Predicated region
            $region36: #{reverse.3} parent=23 // pred_check
              _
            $region37: #{reverse.3} parent=23 // pred_check_branch
              %64 = sbr.rel (0) target = $region39
            $region38: #{reverse.3} parent=23 // pred_region
              loop: start=0, step=1, limit=1
              $region40: #{reverse.3} parent=38 // loop_pre_header
                _
              $region41: #{reverse.3} parent=38 // loop_header
                %s67 = sphi 0, %s71
                %p68 = scmp.ge.s32.totalorder %s67, 1
                %s72 = sphi %s45, %s45
                %s73 = sphi %s40, %s40
              $region42: #{reverse.3} parent=38 // loop_header_branch
                %70 = sbr.rel (%p68) target = $region46
              $region43: #{reverse.3} parent=38 // loop_body
                %v74 = vld [vmem:[%s72] sm:$0x3]
                %75 = vst [vmem:[%s73] sm:$0x3] %v74
              $region44: #{reverse.3} parent=38 // loop_footer
                %s71 = sadd.s32 1, %s67
              $region45: #{reverse.3} parent=38 // loop_footer_branch
                %66 = sbr.rel target = $region41
              $region46: #{reverse.3} parent=38 // loop_exit
                _
            $region39: #{reverse.3} parent=23 // pred_fallthru
              _
          $region24: #{reverse.3} parent=19 // pred_fallthru
            _
          // Predicated region
          $region25: #{reverse.3} parent=19 // pred_check
            _
          $region26: #{reverse.3} parent=19 // pred_check_branch
            %51 = sbr.rel (0) target = $region28
          $region27: #{reverse.3} parent=19 // pred_region
            loop: start=0, step=1, limit=1
            $region29: #{reverse.3} parent=27 // loop_pre_header
              _
            $region30: #{reverse.3} parent=27 // loop_header
              %s54 = sphi 0, %s58
              %p55 = scmp.ge.s32.totalorder %s54, 1
              %s59 = sphi %s45, %s45
              %s60 = sphi %s40, %s40
            $region31: #{reverse.3} parent=27 // loop_header_branch
              %57 = sbr.rel (%p55) target = $region35
            $region32: #{reverse.3} parent=27 // loop_body
              %v61 = vld [vmem:[%s59] sm:$0x3]
              %62 = vst [vmem:[%s60] sm:$0x3] %v61
            $region33: #{reverse.3} parent=27 // loop_footer
              %s58 = sadd.s32 1, %s54
            $region34: #{reverse.3} parent=27 // loop_footer_branch
              %53 = sbr.rel target = $region30
            $region35: #{reverse.3} parent=27 // loop_exit
              _
          $region28: #{reverse.3} parent=19 // pred_fallthru
            _
        $region20: #{reverse.3} parent=15 // pred_fallthru
          _
        %76 = vnop
      $region16: #{reverse.3} parent=5 // pred_fallthru
        _
      %p77 = scmp.le.s32.totalorder 1, %s6
      %p78 = scmp.lt.s32.totalorder %s6, 33
      %p79 = pnand %p77, %p78
      %p80 = pneg %p79
      // Predicated region
      $region47: #{reverse.3} parent=5 // pred_check
        _
      $region48: #{reverse.3} parent=5 // pred_check_branch
        %82 = sbr.rel (%p79) target = $region50
      $region49: #{reverse.3} parent=5 // pred_region
        %s83 = ssub.s32 %s6, 1
        %s84 = sand.u32 %s11, 1
        %s85 = sand.u32 %s11, 1
        %s86 = smul.addr %s85, 2
        %s87 = scalar_lea.vmem [#allocation1], %s86
        %s88 = sand.u32 %s11, 1
        %s89 = sand.u32 %s11, 1
        %s90 = smul.addr %s89, 2
        %s91 = scalar_lea.vmem [#allocation1], %s90
        %s92 = sand.u32 %s11, 1
        %s93 = sand.u32 %s11, 1
        %s94 = smul.addr %s93, 2
        %s95 = scalar_lea.vmem [#allocation3], %s94
        %s97 = sshllo.u32 0, 2
        %v98 = vld [vmem:[%s91] sm:%s97]
        %99 = vst [vmem:[#allocation0] sm:%s97] %v98
        %s100 = ssub.s32 31, %s16
        %v101 = vld [vmem:[#allocation0] sm:$0xff]
        %102 = vperm.xlu0 %4, %v101
        %v103 = vpop.permute.xlu0 %102
        %104 = vst [vmem:[#allocation2] sm:$0xff] %v103
        %s106 = sshllo.u32 0, 2
        %v108 = vld [vmem:[#allocation2] sm:%s106]
        %s109 = sshllo.u32 0, 2
        %110 = vst [vmem:[%s95] sm:%s109] %v108
        %s111 = sand.u32 %s11, 1
        %s112 = sand.u32 %s11, 1
        %s113 = smul.addr %s112, 2
        %s114 = scalar_lea.vmem [#allocation3], %s113
        %s115 = smul.addr %s15, 32
        %s116 = sadd.s32 %s16, %s115
        %s117 = smul.addr %s116, 2
        %s118 = scalar_lea.vmem %s1, %s117
        // Predicated region
        $region51: #{reverse.3} parent=49 // pred_check
          _
        $region52: #{reverse.3} parent=49 // pred_check_branch
          %120 = sbr.rel (0) target = $region54
        $region53: #{reverse.3} parent=49 // pred_region
          // Predicated region
          $region55: #{reverse.3} parent=53 // pred_check
            _
          $region56: #{reverse.3} parent=53 // pred_check_branch
            %122 = sbr.rel target = $region58
          $region57: #{reverse.3} parent=53 // pred_region
            // Predicated region
            $region70: #{reverse.3} parent=57 // pred_check
              _
            $region71: #{reverse.3} parent=57 // pred_check_branch
              %137 = sbr.rel (0) target = $region73
            $region72: #{reverse.3} parent=57 // pred_region
              loop: start=0, step=1, limit=1
              $region74: #{reverse.3} parent=72 // loop_pre_header
                _
              $region75: #{reverse.3} parent=72 // loop_header
                %s140 = sphi 0, %s144
                %p141 = scmp.ge.s32.totalorder %s140, 1
                %s145 = sphi %s114, %s114
                %s146 = sphi %s118, %s118
              $region76: #{reverse.3} parent=72 // loop_header_branch
                %143 = sbr.rel (%p141) target = $region80
              $region77: #{reverse.3} parent=72 // loop_body
                %v147 = vld [vmem:[%s145] sm:$0x3]
                %148 = vst [vmem:[%s146] sm:$0x3] %v147
              $region78: #{reverse.3} parent=72 // loop_footer
                %s144 = sadd.s32 1, %s140
              $region79: #{reverse.3} parent=72 // loop_footer_branch
                %139 = sbr.rel target = $region75
              $region80: #{reverse.3} parent=72 // loop_exit
                _
            $region73: #{reverse.3} parent=57 // pred_fallthru
              _
          $region58: #{reverse.3} parent=53 // pred_fallthru
            _
          // Predicated region
          $region59: #{reverse.3} parent=53 // pred_check
            _
          $region60: #{reverse.3} parent=53 // pred_check_branch
            %124 = sbr.rel (0) target = $region62
          $region61: #{reverse.3} parent=53 // pred_region
            loop: start=0, step=1, limit=1
            $region63: #{reverse.3} parent=61 // loop_pre_header
              _
            $region64: #{reverse.3} parent=61 // loop_header
              %s127 = sphi 0, %s131
              %p128 = scmp.ge.s32.totalorder %s127, 1
              %s132 = sphi %s114, %s114
              %s133 = sphi %s118, %s118
            $region65: #{reverse.3} parent=61 // loop_header_branch
              %130 = sbr.rel (%p128) target = $region69
            $region66: #{reverse.3} parent=61 // loop_body
              %v134 = vld [vmem:[%s132] sm:$0x3]
              %135 = vst [vmem:[%s133] sm:$0x3] %v134
            $region67: #{reverse.3} parent=61 // loop_footer
              %s131 = sadd.s32 1, %s127
            $region68: #{reverse.3} parent=61 // loop_footer_branch
              %126 = sbr.rel target = $region64
            $region69: #{reverse.3} parent=61 // loop_exit
              _
          $region62: #{reverse.3} parent=53 // pred_fallthru
            _
        $region54: #{reverse.3} parent=49 // pred_fallthru
          _
        %149 = vnop
      $region50: #{reverse.3} parent=5 // pred_fallthru
        _
      %p150 = scmp.le.s32.totalorder 2, %s6
      // Predicated region
      $region81: #{reverse.3} parent=5 // pred_check
        %p151 = pneg %p150
      $region82: #{reverse.3} parent=5 // pred_check_branch
        %153 = sbr.rel (%p151) target = $region84
      $region83: #{reverse.3} parent=5 // pred_region
        %s154 = ssub.s32 %s6, 2
        %s155 = sand.u32 %s12, 1
        %s156 = sand.u32 %s12, 1
        %s157 = smul.addr %s156, 2
        %s158 = scalar_lea.vmem [#allocation3], %s157
      $region84: #{reverse.3} parent=5 // pred_fallthru
        _
    $region6: #{reverse.3} parent=1 // loop_footer
      %s10 = sadd.s32 1, %s6
    $region7: #{reverse.3} parent=1 // loop_footer_branch
      %5 = sbr.rel target = $region3
    $region8: #{reverse.3} parent=1 // loop_exit
      _

// kernel: segment_generator_forward.15
$region0: #{segment_generator_forward.15}
  #allocation0 [shape = 'u32[]', space=smem, size = 0x4, offset = 0x4, fixed_abs, tag = 'smem constant byte address 0x4 - core index']
  #allocation1 [shape = 'u32[144,128]{1,0:T(1,128)}', space=vmem, size = 0x12000, scoped, tag = 'internal scratch']
  %s0 = inlined_call_operand.vmem [shape: f32[2,4097], index: 0, kind: input, shape index: {}]
  %s1 = inlined_call_operand.vmem [shape: f32[2,4097], index: 1, kind: input, shape index: {}]
  %s2 = inlined_call_operand.vmem [shape: f32[2,4097], index: 2, kind: input, shape index: {}]
  %s3 = inlined_call_operand.vmem [shape: f32[2,4097], index: 3, kind: input, shape index: {}]
  %s4 = inlined_call_operand.vmem [shape: f32[2,4097], index: 4, kind: output, shape index: {0}]
  %s5 = inlined_call_operand.vmem [shape: f32[2,4097], index: 5, kind: output, shape index: {1}]
  %6 = xla_tuple %s4, %s5
  %s7 = sld [smem:[#allocation0]]
  $region34: #{segment_generator_forward.15} parent=0
    _
  %s9 = ssub.s32 1, %s7
  %s10 = scalar_select 0, %s9, %s7
  // Predicated region
  $region2: #{segment_generator_forward.15} parent=0 // pred_check
    _
  $region3: #{segment_generator_forward.15} parent=0 // pred_check_branch
    %12 = sbr.rel (0) target = $region5
  $region4: #{segment_generator_forward.15} parent=0 // pred_region
    _
  $region5: #{segment_generator_forward.15} parent=0 // pred_fallthru
    _
  // Predicated region
  $region6: #{segment_generator_forward.15} parent=0 // pred_check
    _
  $region7: #{segment_generator_forward.15} parent=0 // pred_check_branch
    %14 = sbr.rel (0) target = $region9
  $region8: #{segment_generator_forward.15} parent=0 // pred_region
    _
  $region9: #{segment_generator_forward.15} parent=0 // pred_fallthru
    _
  // Predicated region
  $region10: #{segment_generator_forward.15} parent=0 // pred_check
    _
  $region11: #{segment_generator_forward.15} parent=0 // pred_check_branch
    %16 = sbr.rel (0) target = $region13
  $region12: #{segment_generator_forward.15} parent=0 // pred_region
    _
  $region13: #{segment_generator_forward.15} parent=0 // pred_fallthru
    _
  // Predicated region
  $region14: #{segment_generator_forward.15} parent=0 // pred_check
    _
  $region15: #{segment_generator_forward.15} parent=0 // pred_check_branch
    %18 = sbr.rel (0) target = $region17
  $region16: #{segment_generator_forward.15} parent=0 // pred_region
    _
  $region17: #{segment_generator_forward.15} parent=0 // pred_fallthru
    _
  %v19 = vld [vmem:[%s0] sm:$0xff]
  %v20 = vld [vmem:[%s0 + $0x8] sm:$0xff]
  %v21 = vld [vmem:[%s0 + $0x10] sm:$0xff]
  %v22 = vld [vmem:[%s0 + $0x18] sm:$0xff]
  %v23 = vld [vmem:[%s0 + $0x20] sm:$0xff]
  %v24 = vld [vmem:[%s0 + $0x28] sm:$0xff]
  %v25 = vld [vmem:[%s0 + $0x30] sm:$0xff]
  %v26 = vld [vmem:[%s0 + $0x38] sm:$0xff]
  %v27 = vld [vmem:[%s0 + $0x40] sm:$0x3]
  %v28 = vld [vmem:[%s1] sm:$0xff]
  %v29 = vld [vmem:[%s1 + $0x8] sm:$0xff]
  %v30 = vld [vmem:[%s1 + $0x10] sm:$0xff]
  %v31 = vld [vmem:[%s1 + $0x18] sm:$0xff]
  %v32 = vld [vmem:[%s1 + $0x20] sm:$0xff]
  %v33 = vld [vmem:[%s1 + $0x28] sm:$0xff]
  %v34 = vld [vmem:[%s1 + $0x30] sm:$0xff]
  %v35 = vld [vmem:[%s1 + $0x38] sm:$0xff]
  %v36 = vld [vmem:[%s1 + $0x40] sm:$0x3]
  %v37 = vld [vmem:[%s2] sm:$0xff]
  %v38 = vld [vmem:[%s2 + $0x8] sm:$0xff]
  %v39 = vld [vmem:[%s2 + $0x10] sm:$0xff]
  %v40 = vld [vmem:[%s2 + $0x18] sm:$0xff]
  %v41 = vld [vmem:[%s2 + $0x20] sm:$0xff]
  %v42 = vld [vmem:[%s2 + $0x28] sm:$0xff]
  %v43 = vld [vmem:[%s2 + $0x30] sm:$0xff]
  %v44 = vld [vmem:[%s2 + $0x38] sm:$0xff]
  %v45 = vld [vmem:[%s2 + $0x40] sm:$0x3]
  %v46 = vld [vmem:[%s3] sm:$0xff]
  %v47 = vld [vmem:[%s3 + $0x8] sm:$0xff]
  %v48 = vld [vmem:[%s3 + $0x10] sm:$0xff]
  %v49 = vld [vmem:[%s3 + $0x18] sm:$0xff]
  %v50 = vld [vmem:[%s3 + $0x20] sm:$0xff]
  %v51 = vld [vmem:[%s3 + $0x28] sm:$0xff]
  %v52 = vld [vmem:[%s3 + $0x30] sm:$0xff]
  %v53 = vld [vmem:[%s3 + $0x38] sm:$0xff]
  %v54 = vld [vmem:[%s3 + $0x40] sm:$0x3]
  %v55 = vmul.f32 %v19, %v37
  %v56 = vmul.f32 %v20, %v38
  %v57 = vmul.f32 %v21, %v39
  %v58 = vmul.f32 %v22, %v40
  %v59 = vmul.f32 %v23, %v41
  %v60 = vmul.f32 %v24, %v42
  %v61 = vmul.f32 %v25, %v43
  %v62 = vmul.f32 %v26, %v44
  %v63 = vmul.f32 %v27, %v45
  %v64 = vmul.f32 %v28, %v46
  %v65 = vmul.f32 %v29, %v47
  %v66 = vmul.f32 %v30, %v48
  %v67 = vmul.f32 %v31, %v49
  %v68 = vmul.f32 %v32, %v50
  %v69 = vmul.f32 %v33, %v51
  %v70 = vmul.f32 %v34, %v52
  %v71 = vmul.f32 %v35, %v53
  %v72 = vmul.f32 %v36, %v54
  %v73 = vsub.f32 %v55, %v64
  %v74 = vsub.f32 %v56, %v65
  %v75 = vsub.f32 %v57, %v66
  %v76 = vsub.f32 %v58, %v67
  %v77 = vsub.f32 %v59, %v68
  %v78 = vsub.f32 %v60, %v69
  %v79 = vsub.f32 %v61, %v70
  %v80 = vsub.f32 %v62, %v71
  %v81 = vsub.f32 %v63, %v72
  %82 = vst [vmem:[%s4] sm:$0xff] %v73
  %83 = vst [vmem:[%s4 + $0x8] sm:$0xff] %v74
  %84 = vst [vmem:[%s4 + $0x10] sm:$0xff] %v75
  %85 = vst [vmem:[%s4 + $0x18] sm:$0xff] %v76
  %86 = vst [vmem:[%s4 + $0x20] sm:$0xff] %v77
  %87 = vst [vmem:[%s4 + $0x28] sm:$0xff] %v78
  %88 = vst [vmem:[%s4 + $0x30] sm:$0xff] %v79
  %89 = vst [vmem:[%s4 + $0x38] sm:$0xff] %v80
  %vm90 = vcmask 1024
  %91 = vst.msk [vmem:[%s4 + $0x40] sm:$0x3] %vm90, %v81
  %v92 = vmul.f32 %v19, %v46
  %v93 = vmul.f32 %v20, %v47
  %v94 = vmul.f32 %v21, %v48
  %v95 = vmul.f32 %v22, %v49
  %v96 = vmul.f32 %v23, %v50
  %v97 = vmul.f32 %v24, %v51
  %v98 = vmul.f32 %v25, %v52
  %v99 = vmul.f32 %v26, %v53
  %v100 = vmul.f32 %v27, %v54
  %v101 = vmul.f32 %v28, %v37
  %v102 = vmul.f32 %v29, %v38
  %v103 = vmul.f32 %v30, %v39
  %v104 = vmul.f32 %v31, %v40
  %v105 = vmul.f32 %v32, %v41
  %v106 = vmul.f32 %v33, %v42
  %v107 = vmul.f32 %v34, %v43
  %v108 = vmul.f32 %v35, %v44
  %v109 = vmul.f32 %v36, %v45
  %v110 = vadd.f32 %v92, %v101
  %v111 = vadd.f32 %v93, %v102
  %v112 = vadd.f32 %v94, %v103
  %v113 = vadd.f32 %v95, %v104
  %v114 = vadd.f32 %v96, %v105
  %v115 = vadd.f32 %v97, %v106
  %v116 = vadd.f32 %v98, %v107
  %v117 = vadd.f32 %v99, %v108
  %v118 = vadd.f32 %v100, %v109
  %119 = vst [vmem:[%s5] sm:$0xff] %v110
  %120 = vst [vmem:[%s5 + $0x8] sm:$0xff] %v111
  %121 = vst [vmem:[%s5 + $0x10] sm:$0xff] %v112
  %122 = vst [vmem:[%s5 + $0x18] sm:$0xff] %v113
  %123 = vst [vmem:[%s5 + $0x20] sm:$0xff] %v114
  %124 = vst [vmem:[%s5 + $0x28] sm:$0xff] %v115
  %125 = vst [vmem:[%s5 + $0x30] sm:$0xff] %v116
  %126 = vst [vmem:[%s5 + $0x38] sm:$0xff] %v117
  %127 = vst.msk [vmem:[%s5 + $0x40] sm:$0x3] %vm90, %v118
  // Predicated region
  $region18: #{segment_generator_forward.15} parent=0 // pred_check
    _
  $region19: #{segment_generator_forward.15} parent=0 // pred_check_branch
    %129 = sbr.rel (0) target = $region21
  $region20: #{segment_generator_forward.15} parent=0 // pred_region
    _
  $region21: #{segment_generator_forward.15} parent=0 // pred_fallthru
    _
  // Predicated region
  $region22: #{segment_generator_forward.15} parent=0 // pred_check
    _
  $region23: #{segment_generator_forward.15} parent=0 // pred_check_branch
    %131 = sbr.rel (0) target = $region25
  $region24: #{segment_generator_forward.15} parent=0 // pred_region
    _
  $region25: #{segment_generator_forward.15} parent=0 // pred_fallthru
    _
  // Predicated region
  $region26: #{segment_generator_forward.15} parent=0 // pred_check
    _
  $region27: #{segment_generator_forward.15} parent=0 // pred_check_branch
    %133 = sbr.rel (0) target = $region29
  $region28: #{segment_generator_forward.15} parent=0 // pred_region
    _
  $region29: #{segment_generator_forward.15} parent=0 // pred_fallthru
    _
  // Predicated region
  $region30: #{segment_generator_forward.15} parent=0 // pred_check
    _
  $region31: #{segment_generator_forward.15} parent=0 // pred_check_branch
    %135 = sbr.rel (0) target = $region33
  $region32: #{segment_generator_forward.15} parent=0 // pred_region
    _
  $region33: #{segment_generator_forward.15} parent=0 // pred_fallthru
    _

</llo_original>
